<compile_context>
chip_gen: v7x
topology: tpu7x:2x2x1
jax: 0.10.0
libtpu: 0.0.40
codegen_flags: <defaults>
</compile_context>

<pallas_src>
import math

import jax
import jax.numpy as jnp
from jax.experimental import pallas as pl
from jax.experimental.pallas import tpu as pltpu

_MXU_DTYPE = jnp.bfloat16      # MXU operand dtype (f32 accumulation kept)
_W_DTYPE = jnp.bfloat16        # storage dtype of matmul weights
_ACT_DTYPE = jnp.bfloat16      # inter-kernel activation dtype
_LN_EPS = 1e-5
_VMEM_LIMIT = 48 * 1024 * 1024  # explicit scoped-VMEM budget (fits v7x 64 MiB)


def _pick_tile(dim, preferred, granule):
    """Largest tile <= `preferred` that divides `dim` and is a multiple of
    `granule`; falls back to the full dim (block == array extent is always
    legal under the (8,128) tiling rule)."""
    if dim <= preferred:
        return dim
    best = None
    t = granule
    while t <= preferred:
        if dim % t == 0:
            best = t
        t += granule
    return best if best is not None else dim


def _weight_spec(block_shape, index_map, n_steps):
    """Weight-stream BlockSpec.  Depth-3 buffering when the weight is actually
    streamed over >=3 tiles (hides weight DMA behind short MXU bursts on the
    small-M decoder matmuls; most valuable on v5e's slower HBM)."""
    if n_steps >= 3:
        return pl.BlockSpec(block_shape, index_map, pipeline_mode=pl.Buffered(3))
    return pl.BlockSpec(block_shape, index_map)


# ---------------------------------------------------------------------------
# Kernel 1: tiled matmul with f32 VMEM accumulator (bias / GELU / residual)
# ---------------------------------------------------------------------------

def _make_matmul_kernel(activation, has_residual):
    def body(x_ref, w_ref, b_ref, r_ref, o_ref, acc_ref):
        @pl.when(pl.program_id(2) == 0)
        def _():
            acc_ref[...] = jnp.zeros_like(acc_ref)

        acc_ref[...] += jnp.dot(x_ref[...].astype(_MXU_DTYPE),
                                w_ref[...].astype(_MXU_DTYPE),
                                preferred_element_type=jnp.float32)

        @pl.when(pl.program_id(2) == pl.num_programs(2) - 1)
        def _():
            y = acc_ref[...] + b_ref[...]
            if activation == 'gelu':
                # TODO(synk): timm ViT / GPT-2 use exact-erf GELU; tanh
                # approximation used for a Mosaic-friendly (EUP) lowering.
                y = jax.nn.gelu(y, approximate=True)
            if has_residual:
                y = y + r_ref[...].astype(jnp.float32)
            o_ref[...] = y.astype(o_ref.dtype)

    if has_residual:
        return body
    return lambda x, w, b, o, acc: body(x, w, b, None, o, acc)


def pallas_matmul(x, w, b, *, activation=None, residual=None,
                  out_dtype=_ACT_DTYPE, tile_m=512, tile_n=512, tile_k=512):
    """out = act(x @ w + b) [+ residual], tiled over (M, N, K) with a VMEM f32
    accumulator.  M/N axes 'parallel' (megacore), K 'arbitrary'."""
    M, K = x.shape
    N = w.shape[1]
    tm = _pick_tile(M, tile_m, 16)      # bf16 sublane packing granule
    tn = _pick_tile(N, tile_n, 128)
    tk = _pick_tile(K, tile_k, 128)
    grid = (M // tm, N // tn, K // tk)

    in_specs = [pl.BlockSpec((tm, tk), lambda i, j, k: (i, k)),
                _weight_spec((tk, tn), lambda i, j, k: (k, j),
                             n_steps=grid[1] * grid[2]),
                pl.BlockSpec((1, tn), lambda i, j, k: (0, j))]
    operands = [x, w, b.reshape(1, N)]
    if residual is not None:
        in_specs.append(pl.BlockSpec((tm, tn), lambda i, j, k: (i, j)))
        operands.append(residual)

    return pl.pallas_call(
        _make_matmul_kernel(activation, residual is not None),
        out_shape=jax.ShapeDtypeStruct((M, N), out_dtype),
        grid=grid,
        in_specs=in_specs,
        out_specs=pl.BlockSpec((tm, tn), lambda i, j, k: (i, j)),
        scratch_shapes=[pltpu.VMEM((tm, tn), jnp.float32)],
        compiler_params=pltpu.CompilerParams(
            dimension_semantics=("parallel", "parallel", "arbitrary"),
            vmem_limit_bytes=_VMEM_LIMIT),
    )(*operands)


# ---------------------------------------------------------------------------
# Kernel 2: fused LayerNorm + matmul (LN cached in VMEM across N tiles)
# ---------------------------------------------------------------------------

def _make_ln_matmul_kernel(activation):
    def kern(x_ref, g_ref, beta_ref, w_ref, b_ref, o_ref, xn_ref):
        # LayerNorm computed once per row block (first N tile) and cached in a
        # VMEM bf16 scratch; reused for every subsequent N (vocab / fc1) tile.
        @pl.when(pl.program_id(1) == 0)
        def _():
            x = x_ref[...].astype(jnp.float32)
            mu = jnp.mean(x, axis=-1, keepdims=True)
            var = jnp.mean(jnp.square(x - mu), axis=-1, keepdims=True)
            xn = (x - mu) * jax.lax.rsqrt(var + _LN_EPS)
            xn_ref[...] = (xn * g_ref[...] + beta_ref[...]).astype(_MXU_DTYPE)

        y = jnp.dot(xn_ref[...], w_ref[...].astype(_MXU_DTYPE),
                    preferred_element_type=jnp.float32)
        y = y + b_ref[...]
        if activation == 'gelu':
            y = jax.nn.gelu(y, approximate=True)
        o_ref[...] = y.astype(o_ref.dtype)
    return kern


def pallas_ln_matmul(x, gamma, beta, w, b, *, activation=None,
                     out_dtype=_ACT_DTYPE, tile_m=512, tile_n=1024):
    """Fused LayerNorm(x) @ w + b (optionally GELU), tiled over (M, N).
    K (the LN feature dim) stays whole in the block because LayerNorm needs
    the full row; it is small (n_embd / vis_dim) in this model.  The N axis
    must be 'arbitrary' so the per-core LN scratch is valid across N tiles."""
    M, K = x.shape
    N = w.shape[1]
    tm = _pick_tile(M, tile_m, 16)
    tn = _pick_tile(N, tile_n, 128)
    grid = (M // tm, N // tn)

    return pl.pallas_call(
        _make_ln_matmul_kernel(activation),
        out_shape=jax.ShapeDtypeStruct((M, N), out_dtype),
        grid=grid,
        in_specs=[pl.BlockSpec((tm, K), lambda i, j: (i, 0)),
                  pl.BlockSpec((1, K), lambda i, j: (0, 0)),
                  pl.BlockSpec((1, K), lambda i, j: (0, 0)),
                  _weight_spec((K, tn), lambda i, j: (0, j), n_steps=grid[1]),
                  pl.BlockSpec((1, tn), lambda i, j: (0, j))],
        out_specs=pl.BlockSpec((tm, tn), lambda i, j: (i, j)),
        scratch_shapes=[pltpu.VMEM((tm, K), _MXU_DTYPE)],
        compiler_params=pltpu.CompilerParams(
            dimension_semantics=("parallel", "arbitrary"),
            vmem_limit_bytes=_VMEM_LIMIT),
    )(x, gamma.reshape(1, K), beta.reshape(1, K), w, b.reshape(1, N))


# ---------------------------------------------------------------------------
# Kernel 3: per-(batch, head) attention -- contiguous head-major tiles
# ---------------------------------------------------------------------------

def _make_attn_kernel(causal, scale):
    def kern(q_ref, k_ref, v_ref, o_ref):
        q = q_ref[0, 0]                       # (T, hd) bf16, contiguous tile
        k = k_ref[0, 0]                       # (S, hd)
        v = v_ref[0, 0]                       # (S, hd)
        s = jax.lax.dot_general(q, k, (((1,), (1,)), ((), ())),
                                preferred_element_type=jnp.float32) * scale
        if causal:
            T, S = s.shape
            row = jax.lax.broadcasted_iota(jnp.int32, (T, S), 0)
            col = jax.lax.broadcasted_iota(jnp.int32, (T, S), 1)
            s = jnp.where(row >= col, s, -1e9)
        m = jnp.max(s, axis=-1, keepdims=True)
        p = jnp.exp(s - m)
        # EUP reciprocal instead of a VALU divide for the softmax norm.
        p = p * pl.reciprocal(jnp.sum(p, axis=-1, keepdims=True), approx=True)
        ctx = jnp.dot(p.astype(v.dtype), v, preferred_element_type=jnp.float32)
        o_ref[0, 0] = ctx.astype(o_ref.dtype)
    return kern


def pallas_attention(q, k, v, *, causal):
    """q:(B,H,T,hd)  k,v:(B,H,S,hd)  -> ctx:(B,H,T,hd).  Grid (B,H), both
    'parallel' (feeds both v7x TensorCores even at small batch)."""
    B, H, T, hd = q.shape
    S = k.shape[2]
    scale = 1.0 / math.sqrt(hd)
    return pl.pallas_call(
        _make_attn_kernel(causal, scale),
        out_shape=jax.ShapeDtypeStruct((B, H, T, hd), q.dtype),
        grid=(B, H),
        in_specs=[pl.BlockSpec((1, 1, T, hd), lambda b, h: (b, h, 0, 0)),
                  pl.BlockSpec((1, 1, S, hd), lambda b, h: (b, h, 0, 0)),
                  pl.BlockSpec((1, 1, S, hd), lambda b, h: (b, h, 0, 0))],
        out_specs=pl.BlockSpec((1, 1, T, hd), lambda b, h: (b, h, 0, 0)),
        compiler_params=pltpu.CompilerParams(
            dimension_semantics=("parallel", "parallel"),
            vmem_limit_bytes=_VMEM_LIMIT),
    )(q, k, v)


# ---------------------------------------------------------------------------
# Plain-JAX glue: head split / merge (one HBM relayout instead of per-head
# lane slicing inside the attention kernel)
# ---------------------------------------------------------------------------

def _split_qkv(packed, B, T, n_heads, n_groups):
    """(B*T, n_groups*D) -> list of n_groups arrays shaped (B, H, T, hd)."""
    D = packed.shape[-1] // n_groups
    hd = D // n_heads
    g = packed.reshape(B, T, n_groups, n_heads, hd).transpose(2, 0, 3, 1, 4)
    return [g[i] for i in range(n_groups)]


def _split_heads(x, B, T, n_heads):
    D = x.shape[-1]
    return x.reshape(B, T, n_heads, D // n_heads).transpose(0, 2, 1, 3)


def _merge_heads(x):
    B, H, T, hd = x.shape
    return x.transpose(0, 2, 1, 3).reshape(B * T, H * hd)


# ---------------------------------------------------------------------------
# Model pieces
# ---------------------------------------------------------------------------

def vit_block(x, p, n_heads):
    B, T, D = x.shape
    x_flat = x.reshape(B * T, D)
    # fused: LN1 + QKV projection (single (D, 3D) matmul)
    qkv = pallas_ln_matmul(x_flat, p['ln1_g'], p['ln1_b'],
                           p['attn']['wqkv'], p['attn']['bqkv'])
    q, k, v = _split_qkv(qkv, B, T, n_heads, 3)
    ctx = pallas_attention(q, k, v, causal=False)
    # Wo as a single full-K (D x D) contraction fused with the residual add.
    x_flat = pallas_matmul(_merge_heads(ctx), p['attn']['wo'], p['attn']['bo'],
                           residual=x_flat)
    # fused: LN2 + fc1 + GELU
    h = pallas_ln_matmul(x_flat, p['ln2_g'], p['ln2_b'],
                         p['fc1_w'], p['fc1_b'], activation='gelu')
    # fc2 + bias + residual
    x_flat = pallas_matmul(h, p['fc2_w'], p['fc2_b'], residual=x_flat)
    return x_flat.reshape(B, T, D)


def decoder_block(x, enc, p, n_heads):
    B, T, D = x.shape
    S = enc.shape[1]
    x_flat = x.reshape(B * T, D)
    # --- causal self-attention ---
    qkv = pallas_ln_matmul(x_flat, p['ln1_g'], p['ln1_b'],
                           p['self_attn']['wqkv'], p['self_attn']['bqkv'])
    q, k, v = _split_qkv(qkv, B, T, n_heads, 3)
    ctx = pallas_attention(q, k, v, causal=True)
    x_flat = pallas_matmul(_merge_heads(ctx), p['self_attn']['wo'],
                           p['self_attn']['bo'], residual=x_flat)
    # --- cross attention to the image embedding ---
    q = pallas_ln_matmul(x_flat, p['ln2_g'], p['ln2_b'],
                         p['cross_attn']['wq'], p['cross_attn']['bq'])
    q = _split_heads(q, B, T, n_heads)
    kv = pallas_matmul(enc.reshape(B * S, D), p['cross_attn']['wkv'],
                       p['cross_attn']['bkv'])
    k, v = _split_qkv(kv, B, S, n_heads, 2)
    ctx = pallas_attention(q, k, v, causal=False)
    x_flat = pallas_matmul(_merge_heads(ctx), p['cross_attn']['wo'],
                           p['cross_attn']['bo'], residual=x_flat)
    # --- MLP ---
    h = pallas_ln_matmul(x_flat, p['ln3_g'], p['ln3_b'],
                         p['fc1_w'], p['fc1_b'], activation='gelu')
    x_flat = pallas_matmul(h, p['fc2_w'], p['fc2_b'], residual=x_flat)
    return x_flat.reshape(B, T, D)


def vit_forward_features(images, enc, cfg):
    """timm forward_features(): patch-embed -> +cls -> +pos -> blocks.
    (The final LayerNorm is fused into the projection-layer kernel.)"""
    B, C, H, W = images.shape
    ps, Dv = cfg['patch'], cfg['vis_dim']
    nph, npw = H // ps, W // ps
    patches = images.reshape(B, C, nph, ps, npw, ps).transpose(0, 2, 4, 1, 3, 5)
    patches = patches.reshape(B * nph * npw, C * ps * ps).astype(_ACT_DTYPE)
    x = pallas_matmul(patches, enc['patch_w'], enc['patch_b'])
    x = x.reshape(B, nph * npw, Dv)
    cls = jnp.broadcast_to(enc['cls'], (B, 1, Dv)).astype(x.dtype)
    x = jnp.concatenate([cls, x], axis=1)
    x = (x.astype(jnp.float32) + enc['pos'][None]).astype(_ACT_DTYPE)
    for blk in enc['blocks']:
        x = vit_block(x, blk, cfg['vis_heads'])
    return x


def decoder_forward(token_id, img_embed, p, cfg):
    B, K = token_id.shape
    D = cfg['n_embd']
    tok = jnp.take(p['wte'], token_id, axis=0)          # f32 embedding gather
    x = (tok + p['wpe'][:K][None]).astype(_ACT_DTYPE)
    for blk in p['blocks']:
        x = decoder_block(x, img_embed, blk, cfg['dec_heads'])
    # Final LayerNorm fused with the weight-tied lm_head.  The tied weight is
    # a pre-transposed, vocab-PADDED (D, Vpad) bf16 matrix so the vocab axis
    # tiles cleanly even for the prime GPT-2 vocab (no >VMEM full-extent block
    # on v7x, no per-tile XLU transpose).
    logits = pallas_ln_matmul(x.reshape(B * K, D), p['lnf_g'], p['lnf_b'],
                              p['lm_head_w'], p['lm_head_b'],
                              out_dtype=jnp.float32, tile_n=2048)
    vpad = p['lm_head_w'].shape[1]
    return logits.reshape(B, K, vpad)[:, :, :cfg['vocab']]


def image_caption_forward(params, token_id, images, cfg):
    """== ImageCaptionModel.forward(token_id, images) -> output_prob (logits)."""
    enc = params['encoder']
    feat = vit_forward_features(images, enc, cfg)              # (B, T, Dv)
    B, T, Dv = feat.shape
    # fused: ViT final LayerNorm + projection nn.Linear(vis_dim, n_embd)
    img_embed = pallas_ln_matmul(
        feat.reshape(B * T, Dv), enc['lnf_g'], enc['lnf_b'],
        params['proj_w'], params['proj_b']).reshape(B, T, cfg['n_embd'])
    return decoder_forward(token_id, img_embed, params['decoder'], cfg)


# ---------------------------------------------------------------------------
# Deterministic parameter init (synthetic; no checkpoint loading)
# ---------------------------------------------------------------------------

def _dense_init(key, fin, fout):
    w = (0.02 * jax.random.normal(key, (fin, fout), jnp.float32)).astype(_W_DTYPE)
    return w, jnp.zeros((fout,), jnp.float32)


def _init_self_attn(key, d_model):
    k = jax.random.split(key, 2)
    wqkv, bqkv = _dense_init(k[0], d_model, 3 * d_model)   # fused q/k/v
    wo, bo = _dense_init(k[1], d_model, d_model)
    return dict(wqkv=wqkv, bqkv=bqkv, wo=wo, bo=bo)


def _init_cross_attn(key, d_model):
    k = jax.random.split(key, 3)
    wq, bq = _dense_init(k[0], d_model, d_model)
    wkv, bkv = _dense_init(k[1], d_model, 2 * d_model)     # fused k/v
    wo, bo = _dense_init(k[2], d_model, d_model)
    return dict(wq=wq, bq=bq, wkv=wkv, bkv=bkv, wo=wo, bo=bo)


def init_params(key, cfg):
    keys = jax.random.split(key, 8)
    ps, Dv, D = cfg['patch'], cfg['vis_dim'], cfg['n_embd']

    # --- visual encoder (ViT) ---
    enc = {}
    enc['patch_w'], enc['patch_b'] = _dense_init(keys[0], 3 * ps * ps, Dv)
    enc['cls'] = 0.02 * jax.random.normal(keys[1], (1, Dv), jnp.float32)
    n_tok = (cfg['img'] // ps) ** 2 + 1
    enc['pos'] = 0.02 * jax.random.normal(keys[2], (n_tok, Dv), jnp.float32)
    enc['blocks'] = []
    for bk in jax.random.split(keys[3], cfg['vis_blocks']):
        k = jax.random.split(bk, 3)
        blk = dict(ln1_g=jnp.ones((Dv,), jnp.float32), ln1_b=jnp.zeros((Dv,), jnp.float32),
                   ln2_g=jnp.ones((Dv,), jnp.float32), ln2_b=jnp.zeros((Dv,), jnp.float32),
                   attn=_init_self_attn(k[0], Dv))
        blk['fc1_w'], blk['fc1_b'] = _dense_init(k[1], Dv, 4 * Dv)
        blk['fc2_w'], blk['fc2_b'] = _dense_init(k[2], 4 * Dv, Dv)
        enc['blocks'].append(blk)
    enc['lnf_g'], enc['lnf_b'] = jnp.ones((Dv,), jnp.float32), jnp.zeros((Dv,), jnp.float32)

    # --- projection layer (real model: nn.Linear(1024, n_embd)) ---
    proj_w, proj_b = _dense_init(keys[4], Dv, D)

    # --- text decoder (GPT-2-ish w/ cross attention) ---
    dec = {}
    dec['wte'] = 0.02 * jax.random.normal(keys[5], (cfg['vocab'], D), jnp.float32)
    dec['wpe'] = 0.02 * jax.random.normal(keys[6], (cfg['block_size'], D), jnp.float32)
    dec['blocks'] = []
    for bk in jax.random.split(keys[7], cfg['dec_blocks']):
        k = jax.random.split(bk, 4)
        blk = dict(ln1_g=jnp.ones((D,), jnp.float32), ln1_b=jnp.zeros((D,), jnp.float32),
                   ln2_g=jnp.ones((D,), jnp.float32), ln2_b=jnp.zeros((D,), jnp.float32),
                   ln3_g=jnp.ones((D,), jnp.float32), ln3_b=jnp.zeros((D,), jnp.float32),
                   self_attn=_init_self_attn(k[0], D),
                   cross_attn=_init_cross_attn(k[1], D))
        blk['fc1_w'], blk['fc1_b'] = _dense_init(k[2], D, 4 * D)
        blk['fc2_w'], blk['fc2_b'] = _dense_init(k[3], 4 * D, D)
        dec['blocks'].append(blk)
    dec['lnf_g'], dec['lnf_b'] = jnp.ones((D,), jnp.float32), jnp.zeros((D,), jnp.float32)
    # GPT-2 weight tying: lm_head is wte^T, materialized once, vocab padded to
    # a multiple of 128 so the vocab axis always tiles (GPT-2 vocab is prime).
    vpad = ((cfg['vocab'] + 127) // 128) * 128
    dec['lm_head_w'] = jnp.pad(dec['wte'].T,
                               ((0, 0), (0, vpad - cfg['vocab']))).astype(_W_DTYPE)
    dec['lm_head_b'] = jnp.zeros((vpad,), jnp.float32)
    return dict(encoder=enc, proj_w=proj_w, proj_b=proj_b, decoder=dec)


# ---------------------------------------------------------------------------

if __name__ == "__main__":
    # Small shapes, same structure as the real model (head_dim = 64 like GPT-2;
    # vocab deliberately NOT a multiple of 128 to exercise the padded lm_head).
    cfg = dict(img=32, patch=16, vis_dim=128, vis_heads=2, vis_blocks=2,
               n_embd=128, dec_heads=2, dec_blocks=2, vocab=509, block_size=16)

    key = jax.random.PRNGKey(0)
    kp, ki, kt = jax.random.split(key, 3)
    params = init_params(kp, cfg)

    B, K = 2, 8
    images = jax.random.normal(ki, (B, 3, cfg['img'], cfg['img']), jnp.float32)   # NCHW
    token_id = jax.random.randint(kt, (B, K), 0, cfg['vocab'], dtype=jnp.int32)

    fwd = jax.jit(lambda p, t, im: image_caption_forward(p, t, im, cfg))
    out = fwd(params, token_id, images)
    out = jax.block_until_ready(out)
    assert out.shape == (B, K, cfg['vocab']) and out.dtype == jnp.float32
    print("KERNEL_OK")
</pallas_src>

<mosaic_0001>
module attributes {stable_mosaic.version = 11 : i64} {
  func.func @_lambda_(%arg0: i32, %arg1: i32, %arg2: i32, %arg3: memref<8x384xbf16, #tpu.memory_space<vmem>>, %arg4: memref<384x128xbf16, #tpu.memory_space<vmem>>, %arg5: memref<1x128xf32, #tpu.memory_space<vmem>>, %arg6: memref<8x128xbf16, #tpu.memory_space<vmem>>, %arg7: memref<8x128xf32, #tpu.memory_space<vmem>>) attributes {dimension_semantics = [#tpu.dimension_semantics<parallel>, #tpu.dimension_semantics<parallel>, #tpu.dimension_semantics<arbitrary>], iteration_bounds = array<i64: 1, 1, 2>, scalar_prefetch = 0 : i64, scratch_operands = 1 : i64, tpu.core_type = #tpu.core_type<tc>, window_params = [{transform_indices = @transform_0, window_bounds = array<i64: 8, 384>}, {transform_indices = @transform_1, window_bounds = array<i64: 384, 128>}, {transform_indices = @transform_2, window_bounds = array<i64: 1, 128>}, {transform_indices = @transform_3, window_bounds = array<i64: 8, 128>}]} {
    %c0_i32 = arith.constant 0 : i32
    %0 = arith.cmpi eq, %arg2, %c0_i32 : i32
    %1 = arith.extui %0 : i1 to i32
    %c0_i32_0 = arith.constant 0 : i32
    %2 = arith.cmpi ne, %1, %c0_i32_0 : i32
    scf.if %2 {
      %cst_9 = arith.constant 0.000000e+00 : f32
      %12 = vector.broadcast %cst_9 : f32 to vector<8x128xf32>
      %c0_10 = arith.constant 0 : index
      %c0_11 = arith.constant 0 : index
      %13 = vector.load %arg7[%c0_10, %c0_11] : memref<8x128xf32, #tpu.memory_space<vmem>>, vector<8x128xf32>
      tpu.vector_store %arg7[%c0_10, %c0_11], %12 {strides = array<i32>} : memref<8x128xf32, #tpu.memory_space<vmem>>, vector<8x128xf32>,
    } else {
    }
    %c0 = arith.constant 0 : index
    %c0_1 = arith.constant 0 : index
    %3 = vector.load %arg7[%c0, %c0_1] : memref<8x128xf32, #tpu.memory_space<vmem>>, vector<8x128xf32>
    %c0_2 = arith.constant 0 : index
    %c0_3 = arith.constant 0 : index
    %4 = vector.load %arg3[%c0_2, %c0_3] : memref<8x384xbf16, #tpu.memory_space<vmem>>, vector<8x384xbf16>
    %c0_4 = arith.constant 0 : index
    %c0_5 = arith.constant 0 : index
    %5 = vector.load %arg4[%c0_4, %c0_5] : memref<384x128xbf16, #tpu.memory_space<vmem>>, vector<384x128xbf16>
    %cst = arith.constant dense<0.000000e+00> : vector<8x128xf32>
    %6 = tpu.matmul %4, %5, %cst {dimension_numbers = #tpu.dot_dimension_numbers<[1], [0], [0], [1], [0, 0, 1, 1], [], []>} : vector<8x384xbf16>, vector<384x128xbf16>, vector<8x128xf32> -> vector<8x128xf32>
    %7 = arith.addf %3, %6 : vector<8x128xf32>
    %c0_6 = arith.constant 0 : index
    %c0_7 = arith.constant 0 : index
    %8 = vector.load %arg7[%c0_6, %c0_7] : memref<8x128xf32, #tpu.memory_space<vmem>>, vector<8x128xf32>
    tpu.vector_store %arg7[%c0_6, %c0_7], %7 {strides = array<i32>} : memref<8x128xf32, #tpu.memory_space<vmem>>, vector<8x128xf32>,
    %c1_i32 = arith.constant 1 : i32
    %9 = arith.cmpi eq, %arg2, %c1_i32 : i32
    %10 = arith.extui %9 : i1 to i32
    %c0_i32_8 = arith.constant 0 : i32
    %11 = arith.cmpi ne, %10, %c0_i32_8 : i32
    scf.if %11 {
      %c0_9 = arith.constant 0 : index
      %c0_10 = arith.constant 0 : index
      %12 = vector.load %arg7[%c0_9, %c0_10] : memref<8x128xf32, #tpu.memory_space<vmem>>, vector<8x128xf32>
      %c0_11 = arith.constant 0 : index
      %c0_12 = arith.constant 0 : index
      %13 = vector.load %arg5[%c0_11, %c0_12] : memref<1x128xf32, #tpu.memory_space<vmem>>, vector<1x128xf32>
      %14 = vector.broadcast %13 : vector<1x128xf32> to vector<8x128xf32>
      %15 = arith.addf %12, %14 : vector<8x128xf32>
      %16 = arith.truncf %15 : vector<8x128xf32> to vector<8x128xbf16>
      %c0_13 = arith.constant 0 : index
      %c0_14 = arith.constant 0 : index
      %17 = vector.load %arg6[%c0_13, %c0_14] : memref<8x128xbf16, #tpu.memory_space<vmem>>, vector<8x128xbf16>
      tpu.vector_store %arg6[%c0_13, %c0_14], %16 {strides = array<i32>} : memref<8x128xbf16, #tpu.memory_space<vmem>>, vector<8x128xbf16>,
    } else {
    }
    return
  }
  func.func @transform_0(%arg0: i32, %arg1: i32, %arg2: i32) -> (i32, i32) {
    %c0_i32 = arith.constant 0 : i32
    return %arg0, %arg2 : i32, i32
  }
  func.func @transform_1(%arg0: i32, %arg1: i32, %arg2: i32) -> (i32, i32) {
    %c0_i32 = arith.constant 0 : i32
    return %arg2, %arg1 : i32, i32
  }
  func.func @transform_2(%arg0: i32, %arg1: i32, %arg2: i32) -> (i32, i32) {
    %c0_i32 = arith.constant 0 : i32
    %c0_i32_0 = arith.constant 0 : i32
    return %c0_i32, %arg1 : i32, i32
  }
  func.func @transform_3(%arg0: i32, %arg1: i32, %arg2: i32) -> (i32, i32) {
    %c0_i32 = arith.constant 0 : i32
    return %arg0, %arg1 : i32, i32
  }
}

module attributes {stable_mosaic.version = 11 : i64} {
  func.func @kern(%arg0: i32, %arg1: i32, %arg2: memref<10x128xbf16, #tpu.memory_space<vmem>>, %arg3: memref<1x128xf32, #tpu.memory_space<vmem>>, %arg4: memref<1x128xf32, #tpu.memory_space<vmem>>, %arg5: memref<128x384xbf16, #tpu.memory_space<vmem>>, %arg6: memref<1x384xf32, #tpu.memory_space<vmem>>, %arg7: memref<10x384xbf16, #tpu.memory_space<vmem>>, %arg8: memref<10x128xbf16, #tpu.memory_space<vmem>>) attributes {dimension_semantics = [#tpu.dimension_semantics<parallel>, #tpu.dimension_semantics<arbitrary>], iteration_bounds = array<i64: 1, 1>, scalar_prefetch = 0 : i64, scratch_operands = 1 : i64, tpu.core_type = #tpu.core_type<tc>, window_params = [{transform_indices = @transform_0, window_bounds = array<i64: 10, 128>}, {pipeline_mode = #tpu.pipeline_mode<synchronous>, transform_indices = @transform_1, window_bounds = array<i64: 1, 128>}, {pipeline_mode = #tpu.pipeline_mode<synchronous>, transform_indices = @transform_2, window_bounds = array<i64: 1, 128>}, {transform_indices = @transform_3, window_bounds = array<i64: 128, 384>}, {transform_indices = @transform_4, window_bounds = array<i64: 1, 384>}, {transform_indices = @transform_5, window_bounds = array<i64: 10, 384>}]} {
    %c0_i32 = arith.constant 0 : i32
    %0 = arith.cmpi eq, %arg1, %c0_i32 : i32
    %1 = arith.extui %0 : i1 to i32
    %c0_i32_0 = arith.constant 0 : i32
    %2 = arith.cmpi ne, %1, %c0_i32_0 : i32
    scf.if %2 {
      %c0_8 = arith.constant 0 : index
      %c0_9 = arith.constant 0 : index
      %11 = vector.load %arg2[%c0_8, %c0_9] : memref<10x128xbf16, #tpu.memory_space<vmem>>, vector<10x128xbf16>
      %12 = arith.extf %11 : vector<10x128xbf16> to vector<10x128xf32>
      %cst_10 = arith.constant dense<0.000000e+00> : vector<10xf32>
      %13 = vector.multi_reduction <add>, %12, %cst_10 [1] : vector<10x128xf32> to vector<10xf32>
      %14 = vector.shape_cast %13 : vector<10xf32> to vector<10x1xf32>
      %cst_11 = arith.constant 1.280000e+02 : f32
      %15 = vector.broadcast %cst_11 : f32 to vector<10x1xf32>
      %16 = arith.divf %14, %15 : vector<10x1xf32>
      %17 = vector.broadcast %16 : vector<10x1xf32> to vector<10x128xf32>
      %18 = arith.subf %12, %17 : vector<10x128xf32>
      %19 = arith.mulf %18, %18 : vector<10x128xf32>
      %cst_12 = arith.constant dense<0.000000e+00> : vector<10xf32>
      %20 = vector.multi_reduction <add>, %19, %cst_12 [1] : vector<10x128xf32> to vector<10xf32>
      %21 = vector.shape_cast %20 : vector<10xf32> to vector<10x1xf32>
      %cst_13 = arith.constant 1.280000e+02 : f32
      %22 = vector.broadcast %cst_13 : f32 to vector<10x1xf32>
      %23 = arith.divf %21, %22 : vector<10x1xf32>
      %24 = vector.broadcast %16 : vector<10x1xf32> to vector<10x128xf32>
      %25 = arith.subf %12, %24 : vector<10x128xf32>
      %cst_14 = arith.constant 9.99999974E-6 : f32
      %26 = vector.broadcast %cst_14 : f32 to vector<10x1xf32>
      %27 = arith.addf %23, %26 : vector<10x1xf32>
      %28 = math.rsqrt %27 : vector<10x1xf32>
      %29 = vector.broadcast %28 : vector<10x1xf32> to vector<10x128xf32>
      %30 = arith.mulf %25, %29 : vector<10x128xf32>
      %c0_15 = arith.constant 0 : index
      %c0_16 = arith.constant 0 : index
      %31 = vector.load %arg3[%c0_15, %c0_16] : memref<1x128xf32, #tpu.memory_space<vmem>>, vector<1x128xf32>
      %32 = vector.broadcast %31 : vector<1x128xf32> to vector<10x128xf32>
      %33 = arith.mulf %30, %32 : vector<10x128xf32>
      %c0_17 = arith.constant 0 : index
      %c0_18 = arith.constant 0 : index
      %34 = vector.load %arg4[%c0_17, %c0_18] : memref<1x128xf32, #tpu.memory_space<vmem>>, vector<1x128xf32>
      %35 = vector.broadcast %34 : vector<1x128xf32> to vector<10x128xf32>
      %36 = arith.addf %33, %35 : vector<10x128xf32>
      %37 = arith.truncf %36 : vector<10x128xf32> to vector<10x128xbf16>
      %c0_19 = arith.constant 0 : index
      %c0_20 = arith.constant 0 : index
      %38 = vector.load %arg8[%c0_19, %c0_20] : memref<10x128xbf16, #tpu.memory_space<vmem>>, vector<10x128xbf16>
      tpu.vector_store %arg8[%c0_19, %c0_20], %37 {strides = array<i32>} : memref<10x128xbf16, #tpu.memory_space<vmem>>, vector<10x128xbf16>,
    } else {
    }
    %c0 = arith.constant 0 : index
    %c0_1 = arith.constant 0 : index
    %3 = vector.load %arg8[%c0, %c0_1] : memref<10x128xbf16, #tpu.memory_space<vmem>>, vector<10x128xbf16>
    %c0_2 = arith.constant 0 : index
    %c0_3 = arith.constant 0 : index
    %4 = vector.load %arg5[%c0_2, %c0_3] : memref<128x384xbf16, #tpu.memory_space<vmem>>, vector<128x384xbf16>
    %cst = arith.constant dense<0.000000e+00> : vector<10x384xf32>
    %5 = tpu.matmul %3, %4, %cst {dimension_numbers = #tpu.dot_dimension_numbers<[1], [0], [0], [1], [0, 0, 1, 1], [], []>} : vector<10x128xbf16>, vector<128x384xbf16>, vector<10x384xf32> -> vector<10x384xf32>
    %c0_4 = arith.constant 0 : index
    %c0_5 = arith.constant 0 : index
    %6 = vector.load %arg6[%c0_4, %c0_5] : memref<1x384xf32, #tpu.memory_space<vmem>>, vector<1x384xf32>
    %7 = vector.broadcast %6 : vector<1x384xf32> to vector<10x384xf32>
    %8 = arith.addf %5, %7 : vector<10x384xf32>
    %9 = arith.truncf %8 : vector<10x384xf32> to vector<10x384xbf16>
    %c0_6 = arith.constant 0 : index
    %c0_7 = arith.constant 0 : index
    %10 = vector.load %arg7[%c0_6, %c0_7] : memref<10x384xbf16, #tpu.memory_space<vmem>>, vector<10x384xbf16>
    tpu.vector_store %arg7[%c0_6, %c0_7], %9 {strides = array<i32>} : memref<10x384xbf16, #tpu.memory_space<vmem>>, vector<10x384xbf16>,
    return
  }
  func.func @transform_0(%arg0: i32, %arg1: i32) -> (i32, i32) {
    %c0_i32 = arith.constant 0 : i32
    %c0_i32_0 = arith.constant 0 : i32
    return %arg0, %c0_i32 : i32, i32
  }
  func.func @transform_1(%arg0: i32, %arg1: i32) -> (i32, i32) {
    %c0_i32 = arith.constant 0 : i32
    %c0_i32_0 = arith.constant 0 : i32
    %c0_i32_1 = arith.constant 0 : i32
    return %c0_i32, %c0_i32_0 : i32, i32
  }
  func.func @transform_2(%arg0: i32, %arg1: i32) -> (i32, i32) {
    %c0_i32 = arith.constant 0 : i32
    %c0_i32_0 = arith.constant 0 : i32
    %c0_i32_1 = arith.constant 0 : i32
    return %c0_i32, %c0_i32_0 : i32, i32
  }
  func.func @transform_3(%arg0: i32, %arg1: i32) -> (i32, i32) {
    %c0_i32 = arith.constant 0 : i32
    %c0_i32_0 = arith.constant 0 : i32
    return %c0_i32, %arg1 : i32, i32
  }
  func.func @transform_4(%arg0: i32, %arg1: i32) -> (i32, i32) {
    %c0_i32 = arith.constant 0 : i32
    %c0_i32_0 = arith.constant 0 : i32
    return %c0_i32, %arg1 : i32, i32
  }
  func.func @transform_5(%arg0: i32, %arg1: i32) -> (i32, i32) {
    %c0_i32 = arith.constant 0 : i32
    return %arg0, %arg1 : i32, i32
  }
}

module attributes {stable_mosaic.version = 11 : i64} {
  func.func @kern(%arg0: i32, %arg1: i32, %arg2: memref<1x1x5x64xbf16, #tpu.memory_space<vmem>>, %arg3: memref<1x1x5x64xbf16, #tpu.memory_space<vmem>>, %arg4: memref<1x1x5x64xbf16, #tpu.memory_space<vmem>>, %arg5: memref<1x1x5x64xbf16, #tpu.memory_space<vmem>>) attributes {dimension_semantics = [#tpu.dimension_semantics<parallel>, #tpu.dimension_semantics<parallel>], iteration_bounds = array<i64: 2, 2>, scalar_prefetch = 0 : i64, scratch_operands = 0 : i64, tpu.core_type = #tpu.core_type<tc>, window_params = [{transform_indices = @transform_0, window_bounds = array<i64: 1, 1, 5, 64>}, {transform_indices = @transform_1, window_bounds = array<i64: 1, 1, 5, 64>}, {transform_indices = @transform_2, window_bounds = array<i64: 1, 1, 5, 64>}, {transform_indices = @transform_3, window_bounds = array<i64: 1, 1, 5, 64>}]} {
    %c0 = arith.constant 0 : index
    %c0_0 = arith.constant 0 : index
    %c0_1 = arith.constant 0 : index
    %c0_2 = arith.constant 0 : index
    %0 = vector.load %arg2[%c0, %c0_0, %c0_1, %c0_2] : memref<1x1x5x64xbf16, #tpu.memory_space<vmem>>, vector<1x1x5x64xbf16>
    %1 = vector.shape_cast %0 : vector<1x1x5x64xbf16> to vector<5x64xbf16>
    %c0_3 = arith.constant 0 : index
    %c0_4 = arith.constant 0 : index
    %c0_5 = arith.constant 0 : index
    %c0_6 = arith.constant 0 : index
    %2 = vector.load %arg3[%c0_3, %c0_4, %c0_5, %c0_6] : memref<1x1x5x64xbf16, #tpu.memory_space<vmem>>, vector<1x1x5x64xbf16>
    %3 = vector.shape_cast %2 : vector<1x1x5x64xbf16> to vector<5x64xbf16>
    %c0_7 = arith.constant 0 : index
    %c0_8 = arith.constant 0 : index
    %c0_9 = arith.constant 0 : index
    %c0_10 = arith.constant 0 : index
    %4 = vector.load %arg4[%c0_7, %c0_8, %c0_9, %c0_10] : memref<1x1x5x64xbf16, #tpu.memory_space<vmem>>, vector<1x1x5x64xbf16>
    %5 = vector.shape_cast %4 : vector<1x1x5x64xbf16> to vector<5x64xbf16>
    %cst = arith.constant dense<0.000000e+00> : vector<5x5xf32>
    %6 = tpu.matmul %1, %3, %cst {dimension_numbers = #tpu.dot_dimension_numbers<[1], [1], [0], [0], [0, 0, 1, 0], [], []>} : vector<5x64xbf16>, vector<5x64xbf16>, vector<5x5xf32> -> vector<5x5xf32>
    %cst_11 = arith.constant 1.250000e-01 : f32
    %7 = vector.broadcast %cst_11 : f32 to vector<5x5xf32>
    %8 = arith.mulf %6, %7 : vector<5x5xf32>
    %cst_12 = arith.constant dense<0xFF800000> : vector<5xf32>
    %9 = vector.multi_reduction <maximumf>, %8, %cst_12 [1] : vector<5x5xf32> to vector<5xf32>
    %10 = vector.shape_cast %9 : vector<5xf32> to vector<5x1xf32>
    %11 = vector.broadcast %10 : vector<5x1xf32> to vector<5x5xf32>
    %12 = arith.subf %8, %11 : vector<5x5xf32>
    %13 = math.exp %12 : vector<5x5xf32>
    %cst_13 = arith.constant dense<0.000000e+00> : vector<5xf32>
    %14 = vector.multi_reduction <add>, %13, %cst_13 [1] : vector<5x5xf32> to vector<5xf32>
    %15 = vector.shape_cast %14 : vector<5xf32> to vector<5x1xf32>
    %16 = tpu.reciprocal %15 {approx = true} : vector<5x1xf32> -> vector<5x1xf32>
    %17 = vector.broadcast %16 : vector<5x1xf32> to vector<5x5xf32>
    %18 = arith.mulf %13, %17 : vector<5x5xf32>
    %19 = arith.truncf %18 : vector<5x5xf32> to vector<5x5xbf16>
    %cst_14 = arith.constant dense<0.000000e+00> : vector<5x64xf32>
    %20 = tpu.matmul %19, %5, %cst_14 {dimension_numbers = #tpu.dot_dimension_numbers<[1], [0], [0], [1], [0, 0, 1, 1], [], []>} : vector<5x5xbf16>, vector<5x64xbf16>, vector<5x64xf32> -> vector<5x64xf32>
    %21 = arith.truncf %20 : vector<5x64xf32> to vector<5x64xbf16>
    %c0_15 = arith.constant 0 : index
    %c0_16 = arith.constant 0 : index
    %c0_17 = arith.constant 0 : index
    %c0_18 = arith.constant 0 : index
    %22 = vector.load %arg5[%c0_15, %c0_16, %c0_17, %c0_18] : memref<1x1x5x64xbf16, #tpu.memory_space<vmem>>, vector<1x1x5x64xbf16>
    %23 = vector.shape_cast %22 : vector<1x1x5x64xbf16> to vector<5x64xbf16>
    %24 = vector.shape_cast %21 : vector<5x64xbf16> to vector<1x1x5x64xbf16>
    tpu.vector_store %arg5[%c0_15, %c0_16, %c0_17, %c0_18], %24 {strides = array<i32>} : memref<1x1x5x64xbf16, #tpu.memory_space<vmem>>, vector<1x1x5x64xbf16>,
    return
  }
  func.func @transform_0(%arg0: i32, %arg1: i32) -> (i32, i32, i32, i32) {
    %c0_i32 = arith.constant 0 : i32
    %c0_i32_0 = arith.constant 0 : i32
    %c0_i32_1 = arith.constant 0 : i32
    return %arg0, %arg1, %c0_i32, %c0_i32_0 : i32, i32, i32, i32
  }
  func.func @transform_1(%arg0: i32, %arg1: i32) -> (i32, i32, i32, i32) {
    %c0_i32 = arith.constant 0 : i32
    %c0_i32_0 = arith.constant 0 : i32
    %c0_i32_1 = arith.constant 0 : i32
    return %arg0, %arg1, %c0_i32, %c0_i32_0 : i32, i32, i32, i32
  }
  func.func @transform_2(%arg0: i32, %arg1: i32) -> (i32, i32, i32, i32) {
    %c0_i32 = arith.constant 0 : i32
    %c0_i32_0 = arith.constant 0 : i32
    %c0_i32_1 = arith.constant 0 : i32
    return %arg0, %arg1, %c0_i32, %c0_i32_0 : i32, i32, i32, i32
  }
  func.func @transform_3(%arg0: i32, %arg1: i32) -> (i32, i32, i32, i32) {
    %c0_i32 = arith.constant 0 : i32
    %c0_i32_0 = arith.constant 0 : i32
    %c0_i32_1 = arith.constant 0 : i32
    return %arg0, %arg1, %c0_i32, %c0_i32_0 : i32, i32, i32, i32
  }
}

module attributes {stable_mosaic.version = 11 : i64} {
  func.func @body(%arg0: i32, %arg1: i32, %arg2: i32, %arg3: memref<10x128xbf16, #tpu.memory_space<vmem>>, %arg4: memref<128x128xbf16, #tpu.memory_space<vmem>>, %arg5: memref<1x128xf32, #tpu.memory_space<vmem>>, %arg6: memref<10x128xbf16, #tpu.memory_space<vmem>>, %arg7: memref<10x128xbf16, #tpu.memory_space<vmem>>, %arg8: memref<10x128xf32, #tpu.memory_space<vmem>>) attributes {dimension_semantics = [#tpu.dimension_semantics<parallel>, #tpu.dimension_semantics<parallel>, #tpu.dimension_semantics<arbitrary>], iteration_bounds = array<i64: 1, 1, 1>, scalar_prefetch = 0 : i64, scratch_operands = 1 : i64, tpu.core_type = #tpu.core_type<tc>, window_params = [{transform_indices = @transform_0, window_bounds = array<i64: 10, 128>}, {transform_indices = @transform_1, window_bounds = array<i64: 128, 128>}, {transform_indices = @transform_2, window_bounds = array<i64: 1, 128>}, {transform_indices = @transform_3, window_bounds = array<i64: 10, 128>}, {transform_indices = @transform_4, window_bounds = array<i64: 10, 128>}]} {
    %c0_i32 = arith.constant 0 : i32
    %0 = arith.cmpi eq, %arg2, %c0_i32 : i32
    %1 = arith.extui %0 : i1 to i32
    %c0_i32_0 = arith.constant 0 : i32
    %2 = arith.cmpi ne, %1, %c0_i32_0 : i32
    scf.if %2 {
      %cst_10 = arith.constant 0.000000e+00 : f32
      %12 = vector.broadcast %cst_10 : f32 to vector<10x128xf32>
      %c0_11 = arith.constant 0 : index
      %c0_12 = arith.constant 0 : index
      %13 = vector.load %arg8[%c0_11, %c0_12] : memref<10x128xf32, #tpu.memory_space<vmem>>, vector<10x128xf32>
      tpu.vector_store %arg8[%c0_11, %c0_12], %12 {strides = array<i32>} : memref<10x128xf32, #tpu.memory_space<vmem>>, vector<10x128xf32>,
    } else {
    }
    %c0 = arith.constant 0 : index
    %c0_1 = arith.constant 0 : index
    %3 = vector.load %arg8[%c0, %c0_1] : memref<10x128xf32, #tpu.memory_space<vmem>>, vector<10x128xf32>
    %c0_2 = arith.constant 0 : index
    %c0_3 = arith.constant 0 : index
    %4 = vector.load %arg3[%c0_2, %c0_3] : memref<10x128xbf16, #tpu.memory_space<vmem>>, vector<10x128xbf16>
    %c0_4 = arith.constant 0 : index
    %c0_5 = arith.constant 0 : index
    %5 = vector.load %arg4[%c0_4, %c0_5] : memref<128x128xbf16, #tpu.memory_space<vmem>>, vector<128x128xbf16>
    %cst = arith.constant dense<0.000000e+00> : vector<10x128xf32>
    %6 = tpu.matmul %4, %5, %cst {dimension_numbers = #tpu.dot_dimension_numbers<[1], [0], [0], [1], [0, 0, 1, 1], [], []>} : vector<10x128xbf16>, vector<128x128xbf16>, vector<10x128xf32> -> vector<10x128xf32>
    %7 = arith.addf %3, %6 : vector<10x128xf32>
    %c0_6 = arith.constant 0 : index
    %c0_7 = arith.constant 0 : index
    %8 = vector.load %arg8[%c0_6, %c0_7] : memref<10x128xf32, #tpu.memory_space<vmem>>, vector<10x128xf32>
    tpu.vector_store %arg8[%c0_6, %c0_7], %7 {strides = array<i32>} : memref<10x128xf32, #tpu.memory_space<vmem>>, vector<10x128xf32>,
    %c0_i32_8 = arith.constant 0 : i32
    %9 = arith.cmpi eq, %arg2, %c0_i32_8 : i32
    %10 = arith.extui %9 : i1 to i32
    %c0_i32_9 = arith.constant 0 : i32
    %11 = arith.cmpi ne, %10, %c0_i32_9 : i32
    scf.if %11 {
      %c0_10 = arith.constant 0 : index
      %c0_11 = arith.constant 0 : index
      %12 = vector.load %arg8[%c0_10, %c0_11] : memref<10x128xf32, #tpu.memory_space<vmem>>, vector<10x128xf32>
      %c0_12 = arith.constant 0 : index
      %c0_13 = arith.constant 0 : index
      %13 = vector.load %arg5[%c0_12, %c0_13] : memref<1x128xf32, #tpu.memory_space<vmem>>, vector<1x128xf32>
      %14 = vector.broadcast %13 : vector<1x128xf32> to vector<10x128xf32>
      %15 = arith.addf %12, %14 : vector<10x128xf32>
      %c0_14 = arith.constant 0 : index
      %c0_15 = arith.constant 0 : index
      %16 = vector.load %arg6[%c0_14, %c0_15] : memref<10x128xbf16, #tpu.memory_space<vmem>>, vector<10x128xbf16>
      %17 = arith.extf %16 : vector<10x128xbf16> to vector<10x128xf32>
      %18 = arith.addf %15, %17 : vector<10x128xf32>
      %19 = arith.truncf %18 : vector<10x128xf32> to vector<10x128xbf16>
      %c0_16 = arith.constant 0 : index
      %c0_17 = arith.constant 0 : index
      %20 = vector.load %arg7[%c0_16, %c0_17] : memref<10x128xbf16, #tpu.memory_space<vmem>>, vector<10x128xbf16>
      tpu.vector_store %arg7[%c0_16, %c0_17], %19 {strides = array<i32>} : memref<10x128xbf16, #tpu.memory_space<vmem>>, vector<10x128xbf16>,
    } else {
    }
    return
  }
  func.func @transform_0(%arg0: i32, %arg1: i32, %arg2: i32) -> (i32, i32) {
    %c0_i32 = arith.constant 0 : i32
    return %arg0, %arg2 : i32, i32
  }
  func.func @transform_1(%arg0: i32, %arg1: i32, %arg2: i32) -> (i32, i32) {
    %c0_i32 = arith.constant 0 : i32
    return %arg2, %arg1 : i32, i32
  }
  func.func @transform_2(%arg0: i32, %arg1: i32, %arg2: i32) -> (i32, i32) {
    %c0_i32 = arith.constant 0 : i32
    %c0_i32_0 = arith.constant 0 : i32
    return %c0_i32, %arg1 : i32, i32
  }
  func.func @transform_3(%arg0: i32, %arg1: i32, %arg2: i32) -> (i32, i32) {
    %c0_i32 = arith.constant 0 : i32
    return %arg0, %arg1 : i32, i32
  }
  func.func @transform_4(%arg0: i32, %arg1: i32, %arg2: i32) -> (i32, i32) {
    %c0_i32 = arith.constant 0 : i32
    return %arg0, %arg1 : i32, i32
  }
}

module attributes {stable_mosaic.version = 11 : i64} {
  func.func @kern(%arg0: i32, %arg1: i32, %arg2: memref<10x128xbf16, #tpu.memory_space<vmem>>, %arg3: memref<1x128xf32, #tpu.memory_space<vmem>>, %arg4: memref<1x128xf32, #tpu.memory_space<vmem>>, %arg5: memref<128x512xbf16, #tpu.memory_space<vmem>>, %arg6: memref<1x512xf32, #tpu.memory_space<vmem>>, %arg7: memref<10x512xbf16, #tpu.memory_space<vmem>>, %arg8: memref<10x128xbf16, #tpu.memory_space<vmem>>) attributes {dimension_semantics = [#tpu.dimension_semantics<parallel>, #tpu.dimension_semantics<arbitrary>], iteration_bounds = array<i64: 1, 1>, scalar_prefetch = 0 : i64, scratch_operands = 1 : i64, tpu.core_type = #tpu.core_type<tc>, window_params = [{transform_indices = @transform_0, window_bounds = array<i64: 10, 128>}, {pipeline_mode = #tpu.pipeline_mode<synchronous>, transform_indices = @transform_1, window_bounds = array<i64: 1, 128>}, {pipeline_mode = #tpu.pipeline_mode<synchronous>, transform_indices = @transform_2, window_bounds = array<i64: 1, 128>}, {transform_indices = @transform_3, window_bounds = array<i64: 128, 512>}, {transform_indices = @transform_4, window_bounds = array<i64: 1, 512>}, {transform_indices = @transform_5, window_bounds = array<i64: 10, 512>}]} {
    %c0_i32 = arith.constant 0 : i32
    %0 = arith.cmpi eq, %arg1, %c0_i32 : i32
    %1 = arith.extui %0 : i1 to i32
    %c0_i32_0 = arith.constant 0 : i32
    %2 = arith.cmpi ne, %1, %c0_i32_0 : i32
    scf.if %2 {
      %c0_12 = arith.constant 0 : index
      %c0_13 = arith.constant 0 : index
      %24 = vector.load %arg2[%c0_12, %c0_13] : memref<10x128xbf16, #tpu.memory_space<vmem>>, vector<10x128xbf16>
      %25 = arith.extf %24 : vector<10x128xbf16> to vector<10x128xf32>
      %cst_14 = arith.constant dense<0.000000e+00> : vector<10xf32>
      %26 = vector.multi_reduction <add>, %25, %cst_14 [1] : vector<10x128xf32> to vector<10xf32>
      %27 = vector.shape_cast %26 : vector<10xf32> to vector<10x1xf32>
      %cst_15 = arith.constant 1.280000e+02 : f32
      %28 = vector.broadcast %cst_15 : f32 to vector<10x1xf32>
      %29 = arith.divf %27, %28 : vector<10x1xf32>
      %30 = vector.broadcast %29 : vector<10x1xf32> to vector<10x128xf32>
      %31 = arith.subf %25, %30 : vector<10x128xf32>
      %32 = arith.mulf %31, %31 : vector<10x128xf32>
      %cst_16 = arith.constant dense<0.000000e+00> : vector<10xf32>
      %33 = vector.multi_reduction <add>, %32, %cst_16 [1] : vector<10x128xf32> to vector<10xf32>
      %34 = vector.shape_cast %33 : vector<10xf32> to vector<10x1xf32>
      %cst_17 = arith.constant 1.280000e+02 : f32
      %35 = vector.broadcast %cst_17 : f32 to vector<10x1xf32>
      %36 = arith.divf %34, %35 : vector<10x1xf32>
      %37 = vector.broadcast %29 : vector<10x1xf32> to vector<10x128xf32>
      %38 = arith.subf %25, %37 : vector<10x128xf32>
      %cst_18 = arith.constant 9.99999974E-6 : f32
      %39 = vector.broadcast %cst_18 : f32 to vector<10x1xf32>
      %40 = arith.addf %36, %39 : vector<10x1xf32>
      %41 = math.rsqrt %40 : vector<10x1xf32>
      %42 = vector.broadcast %41 : vector<10x1xf32> to vector<10x128xf32>
      %43 = arith.mulf %38, %42 : vector<10x128xf32>
      %c0_19 = arith.constant 0 : index
      %c0_20 = arith.constant 0 : index
      %44 = vector.load %arg3[%c0_19, %c0_20] : memref<1x128xf32, #tpu.memory_space<vmem>>, vector<1x128xf32>
      %45 = vector.broadcast %44 : vector<1x128xf32> to vector<10x128xf32>
      %46 = arith.mulf %43, %45 : vector<10x128xf32>
      %c0_21 = arith.constant 0 : index
      %c0_22 = arith.constant 0 : index
      %47 = vector.load %arg4[%c0_21, %c0_22] : memref<1x128xf32, #tpu.memory_space<vmem>>, vector<1x128xf32>
      %48 = vector.broadcast %47 : vector<1x128xf32> to vector<10x128xf32>
      %49 = arith.addf %46, %48 : vector<10x128xf32>
      %50 = arith.truncf %49 : vector<10x128xf32> to vector<10x128xbf16>
      %c0_23 = arith.constant 0 : index
      %c0_24 = arith.constant 0 : index
      %51 = vector.load %arg8[%c0_23, %c0_24] : memref<10x128xbf16, #tpu.memory_space<vmem>>, vector<10x128xbf16>
      tpu.vector_store %arg8[%c0_23, %c0_24], %50 {strides = array<i32>} : memref<10x128xbf16, #tpu.memory_space<vmem>>, vector<10x128xbf16>,
    } else {
    }
    %c0 = arith.constant 0 : index
    %c0_1 = arith.constant 0 : index
    %3 = vector.load %arg8[%c0, %c0_1] : memref<10x128xbf16, #tpu.memory_space<vmem>>, vector<10x128xbf16>
    %c0_2 = arith.constant 0 : index
    %c0_3 = arith.constant 0 : index
    %4 = vector.load %arg5[%c0_2, %c0_3] : memref<128x512xbf16, #tpu.memory_space<vmem>>, vector<128x512xbf16>
    %cst = arith.constant dense<0.000000e+00> : vector<10x512xf32>
    %5 = tpu.matmul %3, %4, %cst {dimension_numbers = #tpu.dot_dimension_numbers<[1], [0], [0], [1], [0, 0, 1, 1], [], []>} : vector<10x128xbf16>, vector<128x512xbf16>, vector<10x512xf32> -> vector<10x512xf32>
    %c0_4 = arith.constant 0 : index
    %c0_5 = arith.constant 0 : index
    %6 = vector.load %arg6[%c0_4, %c0_5] : memref<1x512xf32, #tpu.memory_space<vmem>>, vector<1x512xf32>
    %7 = vector.broadcast %6 : vector<1x512xf32> to vector<10x512xf32>
    %8 = arith.addf %5, %7 : vector<10x512xf32>
    %9 = arith.mulf %8, %8 : vector<10x512xf32>
    %10 = arith.mulf %8, %9 : vector<10x512xf32>
    %cst_6 = arith.constant 4.471500e-02 : f32
    %11 = vector.broadcast %cst_6 : f32 to vector<10x512xf32>
    %12 = arith.mulf %11, %10 : vector<10x512xf32>
    %13 = arith.addf %8, %12 : vector<10x512xf32>
    %cst_7 = arith.constant 0.797884583 : f32
    %14 = vector.broadcast %cst_7 : f32 to vector<10x512xf32>
    %15 = arith.mulf %14, %13 : vector<10x512xf32>
    %16 = math.tanh %15 : vector<10x512xf32>
    %cst_8 = arith.constant 1.000000e+00 : f32
    %17 = vector.broadcast %cst_8 : f32 to vector<10x512xf32>
    %18 = arith.addf %17, %16 : vector<10x512xf32>
    %cst_9 = arith.constant 5.000000e-01 : f32
    %19 = vector.broadcast %cst_9 : f32 to vector<10x512xf32>
    %20 = arith.mulf %19, %18 : vector<10x512xf32>
    %21 = arith.mulf %8, %20 : vector<10x512xf32>
    %22 = arith.truncf %21 : vector<10x512xf32> to vector<10x512xbf16>
    %c0_10 = arith.constant 0 : index
    %c0_11 = arith.constant 0 : index
    %23 = vector.load %arg7[%c0_10, %c0_11] : memref<10x512xbf16, #tpu.memory_space<vmem>>, vector<10x512xbf16>
    tpu.vector_store %arg7[%c0_10, %c0_11], %22 {strides = array<i32>} : memref<10x512xbf16, #tpu.memory_space<vmem>>, vector<10x512xbf16>,
    return
  }
  func.func @transform_0(%arg0: i32, %arg1: i32) -> (i32, i32) {
    %c0_i32 = arith.constant 0 : i32
    %c0_i32_0 = arith.constant 0 : i32
    return %arg0, %c0_i32 : i32, i32
  }
  func.func @transform_1(%arg0: i32, %arg1: i32) -> (i32, i32) {
    %c0_i32 = arith.constant 0 : i32
    %c0_i32_0 = arith.constant 0 : i32
    %c0_i32_1 = arith.constant 0 : i32
    return %c0_i32, %c0_i32_0 : i32, i32
  }
  func.func @transform_2(%arg0: i32, %arg1: i32) -> (i32, i32) {
    %c0_i32 = arith.constant 0 : i32
    %c0_i32_0 = arith.constant 0 : i32
    %c0_i32_1 = arith.constant 0 : i32
    return %c0_i32, %c0_i32_0 : i32, i32
  }
  func.func @transform_3(%arg0: i32, %arg1: i32) -> (i32, i32) {
    %c0_i32 = arith.constant 0 : i32
    %c0_i32_0 = arith.constant 0 : i32
    return %c0_i32, %arg1 : i32, i32
  }
  func.func @transform_4(%arg0: i32, %arg1: i32) -> (i32, i32) {
    %c0_i32 = arith.constant 0 : i32
    %c0_i32_0 = arith.constant 0 : i32
    return %c0_i32, %arg1 : i32, i32
  }
  func.func @transform_5(%arg0: i32, %arg1: i32) -> (i32, i32) {
    %c0_i32 = arith.constant 0 : i32
    return %arg0, %arg1 : i32, i32
  }
}

module attributes {stable_mosaic.version = 11 : i64} {
  func.func @_lambda_(%arg0: i32, %arg1: i32, %arg2: i32, %arg3: memref<10x128xbf16, #tpu.memory_space<vmem>>, %arg4: memref<128x256xbf16, #tpu.memory_space<vmem>>, %arg5: memref<1x256xf32, #tpu.memory_space<vmem>>, %arg6: memref<10x256xbf16, #tpu.memory_space<vmem>>, %arg7: memref<10x256xf32, #tpu.memory_space<vmem>>) attributes {dimension_semantics = [#tpu.dimension_semantics<parallel>, #tpu.dimension_semantics<parallel>, #tpu.dimension_semantics<arbitrary>], iteration_bounds = array<i64: 1, 1, 1>, scalar_prefetch = 0 : i64, scratch_operands = 1 : i64, tpu.core_type = #tpu.core_type<tc>, window_params = [{transform_indices = @transform_0, window_bounds = array<i64: 10, 128>}, {transform_indices = @transform_1, window_bounds = array<i64: 128, 256>}, {transform_indices = @transform_2, window_bounds = array<i64: 1, 256>}, {transform_indices = @transform_3, window_bounds = array<i64: 10, 256>}]} {
    %c0_i32 = arith.constant 0 : i32
    %0 = arith.cmpi eq, %arg2, %c0_i32 : i32
    %1 = arith.extui %0 : i1 to i32
    %c0_i32_0 = arith.constant 0 : i32
    %2 = arith.cmpi ne, %1, %c0_i32_0 : i32
    scf.if %2 {
      %cst_10 = arith.constant 0.000000e+00 : f32
      %12 = vector.broadcast %cst_10 : f32 to vector<10x256xf32>
      %c0_11 = arith.constant 0 : index
      %c0_12 = arith.constant 0 : index
      %13 = vector.load %arg7[%c0_11, %c0_12] : memref<10x256xf32, #tpu.memory_space<vmem>>, vector<10x256xf32>
      tpu.vector_store %arg7[%c0_11, %c0_12], %12 {strides = array<i32>} : memref<10x256xf32, #tpu.memory_space<vmem>>, vector<10x256xf32>,
    } else {
    }
    %c0 = arith.constant 0 : index
    %c0_1 = arith.constant 0 : index
    %3 = vector.load %arg7[%c0, %c0_1] : memref<10x256xf32, #tpu.memory_space<vmem>>, vector<10x256xf32>
    %c0_2 = arith.constant 0 : index
    %c0_3 = arith.constant 0 : index
    %4 = vector.load %arg3[%c0_2, %c0_3] : memref<10x128xbf16, #tpu.memory_space<vmem>>, vector<10x128xbf16>
    %c0_4 = arith.constant 0 : index
    %c0_5 = arith.constant 0 : index
    %5 = vector.load %arg4[%c0_4, %c0_5] : memref<128x256xbf16, #tpu.memory_space<vmem>>, vector<128x256xbf16>
    %cst = arith.constant dense<0.000000e+00> : vector<10x256xf32>
    %6 = tpu.matmul %4, %5, %cst {dimension_numbers = #tpu.dot_dimension_numbers<[1], [0], [0], [1], [0, 0, 1, 1], [], []>} : vector<10x128xbf16>, vector<128x256xbf16>, vector<10x256xf32> -> vector<10x256xf32>
    %7 = arith.addf %3, %6 : vector<10x256xf32>
    %c0_6 = arith.constant 0 : index
    %c0_7 = arith.constant 0 : index
    %8 = vector.load %arg7[%c0_6, %c0_7] : memref<10x256xf32, #tpu.memory_space<vmem>>, vector<10x256xf32>
    tpu.vector_store %arg7[%c0_6, %c0_7], %7 {strides = array<i32>} : memref<10x256xf32, #tpu.memory_space<vmem>>, vector<10x256xf32>,
    %c0_i32_8 = arith.constant 0 : i32
    %9 = arith.cmpi eq, %arg2, %c0_i32_8 : i32
    %10 = arith.extui %9 : i1 to i32
    %c0_i32_9 = arith.constant 0 : i32
    %11 = arith.cmpi ne, %10, %c0_i32_9 : i32
    scf.if %11 {
      %c0_10 = arith.constant 0 : index
      %c0_11 = arith.constant 0 : index
      %12 = vector.load %arg7[%c0_10, %c0_11] : memref<10x256xf32, #tpu.memory_space<vmem>>, vector<10x256xf32>
      %c0_12 = arith.constant 0 : index
      %c0_13 = arith.constant 0 : index
      %13 = vector.load %arg5[%c0_12, %c0_13] : memref<1x256xf32, #tpu.memory_space<vmem>>, vector<1x256xf32>
      %14 = vector.broadcast %13 : vector<1x256xf32> to vector<10x256xf32>
      %15 = arith.addf %12, %14 : vector<10x256xf32>
      %16 = arith.truncf %15 : vector<10x256xf32> to vector<10x256xbf16>
      %c0_14 = arith.constant 0 : index
      %c0_15 = arith.constant 0 : index
      %17 = vector.load %arg6[%c0_14, %c0_15] : memref<10x256xbf16, #tpu.memory_space<vmem>>, vector<10x256xbf16>
      tpu.vector_store %arg6[%c0_14, %c0_15], %16 {strides = array<i32>} : memref<10x256xbf16, #tpu.memory_space<vmem>>, vector<10x256xbf16>,
    } else {
    }
    return
  }
  func.func @transform_0(%arg0: i32, %arg1: i32, %arg2: i32) -> (i32, i32) {
    %c0_i32 = arith.constant 0 : i32
    return %arg0, %arg2 : i32, i32
  }
  func.func @transform_1(%arg0: i32, %arg1: i32, %arg2: i32) -> (i32, i32) {
    %c0_i32 = arith.constant 0 : i32
    return %arg2, %arg1 : i32, i32
  }
  func.func @transform_2(%arg0: i32, %arg1: i32, %arg2: i32) -> (i32, i32) {
    %c0_i32 = arith.constant 0 : i32
    %c0_i32_0 = arith.constant 0 : i32
    return %c0_i32, %arg1 : i32, i32
  }
  func.func @transform_3(%arg0: i32, %arg1: i32, %arg2: i32) -> (i32, i32) {
    %c0_i32 = arith.constant 0 : i32
    return %arg0, %arg1 : i32, i32
  }
}

module attributes {stable_mosaic.version = 11 : i64} {
  func.func @body(%arg0: i32, %arg1: i32, %arg2: i32, %arg3: memref<10x512xbf16, #tpu.memory_space<vmem>>, %arg4: memref<512x128xbf16, #tpu.memory_space<vmem>>, %arg5: memref<1x128xf32, #tpu.memory_space<vmem>>, %arg6: memref<10x128xbf16, #tpu.memory_space<vmem>>, %arg7: memref<10x128xbf16, #tpu.memory_space<vmem>>, %arg8: memref<10x128xf32, #tpu.memory_space<vmem>>) attributes {dimension_semantics = [#tpu.dimension_semantics<parallel>, #tpu.dimension_semantics<parallel>, #tpu.dimension_semantics<arbitrary>], iteration_bounds = array<i64: 1, 1, 1>, scalar_prefetch = 0 : i64, scratch_operands = 1 : i64, tpu.core_type = #tpu.core_type<tc>, window_params = [{transform_indices = @transform_0, window_bounds = array<i64: 10, 512>}, {transform_indices = @transform_1, window_bounds = array<i64: 512, 128>}, {transform_indices = @transform_2, window_bounds = array<i64: 1, 128>}, {transform_indices = @transform_3, window_bounds = array<i64: 10, 128>}, {transform_indices = @transform_4, window_bounds = array<i64: 10, 128>}]} {
    %c0_i32 = arith.constant 0 : i32
    %0 = arith.cmpi eq, %arg2, %c0_i32 : i32
    %1 = arith.extui %0 : i1 to i32
    %c0_i32_0 = arith.constant 0 : i32
    %2 = arith.cmpi ne, %1, %c0_i32_0 : i32
    scf.if %2 {
      %cst_10 = arith.constant 0.000000e+00 : f32
      %12 = vector.broadcast %cst_10 : f32 to vector<10x128xf32>
      %c0_11 = arith.constant 0 : index
      %c0_12 = arith.constant 0 : index
      %13 = vector.load %arg8[%c0_11, %c0_12] : memref<10x128xf32, #tpu.memory_space<vmem>>, vector<10x128xf32>
      tpu.vector_store %arg8[%c0_11, %c0_12], %12 {strides = array<i32>} : memref<10x128xf32, #tpu.memory_space<vmem>>, vector<10x128xf32>,
    } else {
    }
    %c0 = arith.constant 0 : index
    %c0_1 = arith.constant 0 : index
    %3 = vector.load %arg8[%c0, %c0_1] : memref<10x128xf32, #tpu.memory_space<vmem>>, vector<10x128xf32>
    %c0_2 = arith.constant 0 : index
    %c0_3 = arith.constant 0 : index
    %4 = vector.load %arg3[%c0_2, %c0_3] : memref<10x512xbf16, #tpu.memory_space<vmem>>, vector<10x512xbf16>
    %c0_4 = arith.constant 0 : index
    %c0_5 = arith.constant 0 : index
    %5 = vector.load %arg4[%c0_4, %c0_5] : memref<512x128xbf16, #tpu.memory_space<vmem>>, vector<512x128xbf16>
    %cst = arith.constant dense<0.000000e+00> : vector<10x128xf32>
    %6 = tpu.matmul %4, %5, %cst {dimension_numbers = #tpu.dot_dimension_numbers<[1], [0], [0], [1], [0, 0, 1, 1], [], []>} : vector<10x512xbf16>, vector<512x128xbf16>, vector<10x128xf32> -> vector<10x128xf32>
    %7 = arith.addf %3, %6 : vector<10x128xf32>
    %c0_6 = arith.constant 0 : index
    %c0_7 = arith.constant 0 : index
    %8 = vector.load %arg8[%c0_6, %c0_7] : memref<10x128xf32, #tpu.memory_space<vmem>>, vector<10x128xf32>
    tpu.vector_store %arg8[%c0_6, %c0_7], %7 {strides = array<i32>} : memref<10x128xf32, #tpu.memory_space<vmem>>, vector<10x128xf32>,
    %c0_i32_8 = arith.constant 0 : i32
    %9 = arith.cmpi eq, %arg2, %c0_i32_8 : i32
    %10 = arith.extui %9 : i1 to i32
    %c0_i32_9 = arith.constant 0 : i32
    %11 = arith.cmpi ne, %10, %c0_i32_9 : i32
    scf.if %11 {
      %c0_10 = arith.constant 0 : index
      %c0_11 = arith.constant 0 : index
      %12 = vector.load %arg8[%c0_10, %c0_11] : memref<10x128xf32, #tpu.memory_space<vmem>>, vector<10x128xf32>
      %c0_12 = arith.constant 0 : index
      %c0_13 = arith.constant 0 : index
      %13 = vector.load %arg5[%c0_12, %c0_13] : memref<1x128xf32, #tpu.memory_space<vmem>>, vector<1x128xf32>
      %14 = vector.broadcast %13 : vector<1x128xf32> to vector<10x128xf32>
      %15 = arith.addf %12, %14 : vector<10x128xf32>
      %c0_14 = arith.constant 0 : index
      %c0_15 = arith.constant 0 : index
      %16 = vector.load %arg6[%c0_14, %c0_15] : memref<10x128xbf16, #tpu.memory_space<vmem>>, vector<10x128xbf16>
      %17 = arith.extf %16 : vector<10x128xbf16> to vector<10x128xf32>
      %18 = arith.addf %15, %17 : vector<10x128xf32>
      %19 = arith.truncf %18 : vector<10x128xf32> to vector<10x128xbf16>
      %c0_16 = arith.constant 0 : index
      %c0_17 = arith.constant 0 : index
      %20 = vector.load %arg7[%c0_16, %c0_17] : memref<10x128xbf16, #tpu.memory_space<vmem>>, vector<10x128xbf16>
      tpu.vector_store %arg7[%c0_16, %c0_17], %19 {strides = array<i32>} : memref<10x128xbf16, #tpu.memory_space<vmem>>, vector<10x128xbf16>,
    } else {
    }
    return
  }
  func.func @transform_0(%arg0: i32, %arg1: i32, %arg2: i32) -> (i32, i32) {
    %c0_i32 = arith.constant 0 : i32
    return %arg0, %arg2 : i32, i32
  }
  func.func @transform_1(%arg0: i32, %arg1: i32, %arg2: i32) -> (i32, i32) {
    %c0_i32 = arith.constant 0 : i32
    return %arg2, %arg1 : i32, i32
  }
  func.func @transform_2(%arg0: i32, %arg1: i32, %arg2: i32) -> (i32, i32) {
    %c0_i32 = arith.constant 0 : i32
    %c0_i32_0 = arith.constant 0 : i32
    return %c0_i32, %arg1 : i32, i32
  }
  func.func @transform_3(%arg0: i32, %arg1: i32, %arg2: i32) -> (i32, i32) {
    %c0_i32 = arith.constant 0 : i32
    return %arg0, %arg1 : i32, i32
  }
  func.func @transform_4(%arg0: i32, %arg1: i32, %arg2: i32) -> (i32, i32) {
    %c0_i32 = arith.constant 0 : i32
    return %arg0, %arg1 : i32, i32
  }
}

module attributes {stable_mosaic.version = 11 : i64} {
  func.func @kern(%arg0: i32, %arg1: i32, %arg2: memref<10x128xbf16, #tpu.memory_space<vmem>>, %arg3: memref<1x128xf32, #tpu.memory_space<vmem>>, %arg4: memref<1x128xf32, #tpu.memory_space<vmem>>, %arg5: memref<128x128xbf16, #tpu.memory_space<vmem>>, %arg6: memref<1x128xf32, #tpu.memory_space<vmem>>, %arg7: memref<10x128xbf16, #tpu.memory_space<vmem>>, %arg8: memref<10x128xbf16, #tpu.memory_space<vmem>>) attributes {dimension_semantics = [#tpu.dimension_semantics<parallel>, #tpu.dimension_semantics<arbitrary>], iteration_bounds = array<i64: 1, 1>, scalar_prefetch = 0 : i64, scratch_operands = 1 : i64, tpu.core_type = #tpu.core_type<tc>, window_params = [{transform_indices = @transform_0, window_bounds = array<i64: 10, 128>}, {pipeline_mode = #tpu.pipeline_mode<synchronous>, transform_indices = @transform_1, window_bounds = array<i64: 1, 128>}, {pipeline_mode = #tpu.pipeline_mode<synchronous>, transform_indices = @transform_2, window_bounds = array<i64: 1, 128>}, {transform_indices = @transform_3, window_bounds = array<i64: 128, 128>}, {transform_indices = @transform_4, window_bounds = array<i64: 1, 128>}, {transform_indices = @transform_5, window_bounds = array<i64: 10, 128>}]} {
    %c0_i32 = arith.constant 0 : i32
    %0 = arith.cmpi eq, %arg1, %c0_i32 : i32
    %1 = arith.extui %0 : i1 to i32
    %c0_i32_0 = arith.constant 0 : i32
    %2 = arith.cmpi ne, %1, %c0_i32_0 : i32
    scf.if %2 {
      %c0_8 = arith.constant 0 : index
      %c0_9 = arith.constant 0 : index
      %11 = vector.load %arg2[%c0_8, %c0_9] : memref<10x128xbf16, #tpu.memory_space<vmem>>, vector<10x128xbf16>
      %12 = arith.extf %11 : vector<10x128xbf16> to vector<10x128xf32>
      %cst_10 = arith.constant dense<0.000000e+00> : vector<10xf32>
      %13 = vector.multi_reduction <add>, %12, %cst_10 [1] : vector<10x128xf32> to vector<10xf32>
      %14 = vector.shape_cast %13 : vector<10xf32> to vector<10x1xf32>
      %cst_11 = arith.constant 1.280000e+02 : f32
      %15 = vector.broadcast %cst_11 : f32 to vector<10x1xf32>
      %16 = arith.divf %14, %15 : vector<10x1xf32>
      %17 = vector.broadcast %16 : vector<10x1xf32> to vector<10x128xf32>
      %18 = arith.subf %12, %17 : vector<10x128xf32>
      %19 = arith.mulf %18, %18 : vector<10x128xf32>
      %cst_12 = arith.constant dense<0.000000e+00> : vector<10xf32>
      %20 = vector.multi_reduction <add>, %19, %cst_12 [1] : vector<10x128xf32> to vector<10xf32>
      %21 = vector.shape_cast %20 : vector<10xf32> to vector<10x1xf32>
      %cst_13 = arith.constant 1.280000e+02 : f32
      %22 = vector.broadcast %cst_13 : f32 to vector<10x1xf32>
      %23 = arith.divf %21, %22 : vector<10x1xf32>
      %24 = vector.broadcast %16 : vector<10x1xf32> to vector<10x128xf32>
      %25 = arith.subf %12, %24 : vector<10x128xf32>
      %cst_14 = arith.constant 9.99999974E-6 : f32
      %26 = vector.broadcast %cst_14 : f32 to vector<10x1xf32>
      %27 = arith.addf %23, %26 : vector<10x1xf32>
      %28 = math.rsqrt %27 : vector<10x1xf32>
      %29 = vector.broadcast %28 : vector<10x1xf32> to vector<10x128xf32>
      %30 = arith.mulf %25, %29 : vector<10x128xf32>
      %c0_15 = arith.constant 0 : index
      %c0_16 = arith.constant 0 : index
      %31 = vector.load %arg3[%c0_15, %c0_16] : memref<1x128xf32, #tpu.memory_space<vmem>>, vector<1x128xf32>
      %32 = vector.broadcast %31 : vector<1x128xf32> to vector<10x128xf32>
      %33 = arith.mulf %30, %32 : vector<10x128xf32>
      %c0_17 = arith.constant 0 : index
      %c0_18 = arith.constant 0 : index
      %34 = vector.load %arg4[%c0_17, %c0_18] : memref<1x128xf32, #tpu.memory_space<vmem>>, vector<1x128xf32>
      %35 = vector.broadcast %34 : vector<1x128xf32> to vector<10x128xf32>
      %36 = arith.addf %33, %35 : vector<10x128xf32>
      %37 = arith.truncf %36 : vector<10x128xf32> to vector<10x128xbf16>
      %c0_19 = arith.constant 0 : index
      %c0_20 = arith.constant 0 : index
      %38 = vector.load %arg8[%c0_19, %c0_20] : memref<10x128xbf16, #tpu.memory_space<vmem>>, vector<10x128xbf16>
      tpu.vector_store %arg8[%c0_19, %c0_20], %37 {strides = array<i32>} : memref<10x128xbf16, #tpu.memory_space<vmem>>, vector<10x128xbf16>,
    } else {
    }
    %c0 = arith.constant 0 : index
    %c0_1 = arith.constant 0 : index
    %3 = vector.load %arg8[%c0, %c0_1] : memref<10x128xbf16, #tpu.memory_space<vmem>>, vector<10x128xbf16>
    %c0_2 = arith.constant 0 : index
    %c0_3 = arith.constant 0 : index
    %4 = vector.load %arg5[%c0_2, %c0_3] : memref<128x128xbf16, #tpu.memory_space<vmem>>, vector<128x128xbf16>
    %cst = arith.constant dense<0.000000e+00> : vector<10x128xf32>
    %5 = tpu.matmul %3, %4, %cst {dimension_numbers = #tpu.dot_dimension_numbers<[1], [0], [0], [1], [0, 0, 1, 1], [], []>} : vector<10x128xbf16>, vector<128x128xbf16>, vector<10x128xf32> -> vector<10x128xf32>
    %c0_4 = arith.constant 0 : index
    %c0_5 = arith.constant 0 : index
    %6 = vector.load %arg6[%c0_4, %c0_5] : memref<1x128xf32, #tpu.memory_space<vmem>>, vector<1x128xf32>
    %7 = vector.broadcast %6 : vector<1x128xf32> to vector<10x128xf32>
    %8 = arith.addf %5, %7 : vector<10x128xf32>
    %9 = arith.truncf %8 : vector<10x128xf32> to vector<10x128xbf16>
    %c0_6 = arith.constant 0 : index
    %c0_7 = arith.constant 0 : index
    %10 = vector.load %arg7[%c0_6, %c0_7] : memref<10x128xbf16, #tpu.memory_space<vmem>>, vector<10x128xbf16>
    tpu.vector_store %arg7[%c0_6, %c0_7], %9 {strides = array<i32>} : memref<10x128xbf16, #tpu.memory_space<vmem>>, vector<10x128xbf16>,
    return
  }
  func.func @transform_0(%arg0: i32, %arg1: i32) -> (i32, i32) {
    %c0_i32 = arith.constant 0 : i32
    %c0_i32_0 = arith.constant 0 : i32
    return %arg0, %c0_i32 : i32, i32
  }
  func.func @transform_1(%arg0: i32, %arg1: i32) -> (i32, i32) {
    %c0_i32 = arith.constant 0 : i32
    %c0_i32_0 = arith.constant 0 : i32
    %c0_i32_1 = arith.constant 0 : i32
    return %c0_i32, %c0_i32_0 : i32, i32
  }
  func.func @transform_2(%arg0: i32, %arg1: i32) -> (i32, i32) {
    %c0_i32 = arith.constant 0 : i32
    %c0_i32_0 = arith.constant 0 : i32
    %c0_i32_1 = arith.constant 0 : i32
    return %c0_i32, %c0_i32_0 : i32, i32
  }
  func.func @transform_3(%arg0: i32, %arg1: i32) -> (i32, i32) {
    %c0_i32 = arith.constant 0 : i32
    %c0_i32_0 = arith.constant 0 : i32
    return %c0_i32, %arg1 : i32, i32
  }
  func.func @transform_4(%arg0: i32, %arg1: i32) -> (i32, i32) {
    %c0_i32 = arith.constant 0 : i32
    %c0_i32_0 = arith.constant 0 : i32
    return %c0_i32, %arg1 : i32, i32
  }
  func.func @transform_5(%arg0: i32, %arg1: i32) -> (i32, i32) {
    %c0_i32 = arith.constant 0 : i32
    return %arg0, %arg1 : i32, i32
  }
}

module attributes {stable_mosaic.version = 11 : i64} {
  func.func @kern(%arg0: i32, %arg1: i32, %arg2: memref<16x128xbf16, #tpu.memory_space<vmem>>, %arg3: memref<1x128xf32, #tpu.memory_space<vmem>>, %arg4: memref<1x128xf32, #tpu.memory_space<vmem>>, %arg5: memref<128x384xbf16, #tpu.memory_space<vmem>>, %arg6: memref<1x384xf32, #tpu.memory_space<vmem>>, %arg7: memref<16x384xbf16, #tpu.memory_space<vmem>>, %arg8: memref<16x128xbf16, #tpu.memory_space<vmem>>) attributes {dimension_semantics = [#tpu.dimension_semantics<parallel>, #tpu.dimension_semantics<arbitrary>], iteration_bounds = array<i64: 1, 1>, scalar_prefetch = 0 : i64, scratch_operands = 1 : i64, tpu.core_type = #tpu.core_type<tc>, window_params = [{transform_indices = @transform_0, window_bounds = array<i64: 16, 128>}, {pipeline_mode = #tpu.pipeline_mode<synchronous>, transform_indices = @transform_1, window_bounds = array<i64: 1, 128>}, {pipeline_mode = #tpu.pipeline_mode<synchronous>, transform_indices = @transform_2, window_bounds = array<i64: 1, 128>}, {transform_indices = @transform_3, window_bounds = array<i64: 128, 384>}, {transform_indices = @transform_4, window_bounds = array<i64: 1, 384>}, {transform_indices = @transform_5, window_bounds = array<i64: 16, 384>}]} {
    %c0_i32 = arith.constant 0 : i32
    %0 = arith.cmpi eq, %arg1, %c0_i32 : i32
    %1 = arith.extui %0 : i1 to i32
    %c0_i32_0 = arith.constant 0 : i32
    %2 = arith.cmpi ne, %1, %c0_i32_0 : i32
    scf.if %2 {
      %c0_8 = arith.constant 0 : index
      %c0_9 = arith.constant 0 : index
      %11 = vector.load %arg2[%c0_8, %c0_9] : memref<16x128xbf16, #tpu.memory_space<vmem>>, vector<16x128xbf16>
      %12 = arith.extf %11 : vector<16x128xbf16> to vector<16x128xf32>
      %cst_10 = arith.constant dense<0.000000e+00> : vector<16xf32>
      %13 = vector.multi_reduction <add>, %12, %cst_10 [1] : vector<16x128xf32> to vector<16xf32>
      %14 = vector.shape_cast %13 : vector<16xf32> to vector<16x1xf32>
      %cst_11 = arith.constant 1.280000e+02 : f32
      %15 = vector.broadcast %cst_11 : f32 to vector<16x1xf32>
      %16 = arith.divf %14, %15 : vector<16x1xf32>
      %17 = vector.broadcast %16 : vector<16x1xf32> to vector<16x128xf32>
      %18 = arith.subf %12, %17 : vector<16x128xf32>
      %19 = arith.mulf %18, %18 : vector<16x128xf32>
      %cst_12 = arith.constant dense<0.000000e+00> : vector<16xf32>
      %20 = vector.multi_reduction <add>, %19, %cst_12 [1] : vector<16x128xf32> to vector<16xf32>
      %21 = vector.shape_cast %20 : vector<16xf32> to vector<16x1xf32>
      %cst_13 = arith.constant 1.280000e+02 : f32
      %22 = vector.broadcast %cst_13 : f32 to vector<16x1xf32>
      %23 = arith.divf %21, %22 : vector<16x1xf32>
      %24 = vector.broadcast %16 : vector<16x1xf32> to vector<16x128xf32>
      %25 = arith.subf %12, %24 : vector<16x128xf32>
      %cst_14 = arith.constant 9.99999974E-6 : f32
      %26 = vector.broadcast %cst_14 : f32 to vector<16x1xf32>
      %27 = arith.addf %23, %26 : vector<16x1xf32>
      %28 = math.rsqrt %27 : vector<16x1xf32>
      %29 = vector.broadcast %28 : vector<16x1xf32> to vector<16x128xf32>
      %30 = arith.mulf %25, %29 : vector<16x128xf32>
      %c0_15 = arith.constant 0 : index
      %c0_16 = arith.constant 0 : index
      %31 = vector.load %arg3[%c0_15, %c0_16] : memref<1x128xf32, #tpu.memory_space<vmem>>, vector<1x128xf32>
      %32 = vector.broadcast %31 : vector<1x128xf32> to vector<16x128xf32>
      %33 = arith.mulf %30, %32 : vector<16x128xf32>
      %c0_17 = arith.constant 0 : index
      %c0_18 = arith.constant 0 : index
      %34 = vector.load %arg4[%c0_17, %c0_18] : memref<1x128xf32, #tpu.memory_space<vmem>>, vector<1x128xf32>
      %35 = vector.broadcast %34 : vector<1x128xf32> to vector<16x128xf32>
      %36 = arith.addf %33, %35 : vector<16x128xf32>
      %37 = arith.truncf %36 : vector<16x128xf32> to vector<16x128xbf16>
      %c0_19 = arith.constant 0 : index
      %c0_20 = arith.constant 0 : index
      %38 = vector.load %arg8[%c0_19, %c0_20] : memref<16x128xbf16, #tpu.memory_space<vmem>>, vector<16x128xbf16>
      tpu.vector_store %arg8[%c0_19, %c0_20], %37 {strides = array<i32>} : memref<16x128xbf16, #tpu.memory_space<vmem>>, vector<16x128xbf16>,
    } else {
    }
    %c0 = arith.constant 0 : index
    %c0_1 = arith.constant 0 : index
    %3 = vector.load %arg8[%c0, %c0_1] : memref<16x128xbf16, #tpu.memory_space<vmem>>, vector<16x128xbf16>
    %c0_2 = arith.constant 0 : index
    %c0_3 = arith.constant 0 : index
    %4 = vector.load %arg5[%c0_2, %c0_3] : memref<128x384xbf16, #tpu.memory_space<vmem>>, vector<128x384xbf16>
    %cst = arith.constant dense<0.000000e+00> : vector<16x384xf32>
    %5 = tpu.matmul %3, %4, %cst {dimension_numbers = #tpu.dot_dimension_numbers<[1], [0], [0], [1], [0, 0, 1, 1], [], []>} : vector<16x128xbf16>, vector<128x384xbf16>, vector<16x384xf32> -> vector<16x384xf32>
    %c0_4 = arith.constant 0 : index
    %c0_5 = arith.constant 0 : index
    %6 = vector.load %arg6[%c0_4, %c0_5] : memref<1x384xf32, #tpu.memory_space<vmem>>, vector<1x384xf32>
    %7 = vector.broadcast %6 : vector<1x384xf32> to vector<16x384xf32>
    %8 = arith.addf %5, %7 : vector<16x384xf32>
    %9 = arith.truncf %8 : vector<16x384xf32> to vector<16x384xbf16>
    %c0_6 = arith.constant 0 : index
    %c0_7 = arith.constant 0 : index
    %10 = vector.load %arg7[%c0_6, %c0_7] : memref<16x384xbf16, #tpu.memory_space<vmem>>, vector<16x384xbf16>
    tpu.vector_store %arg7[%c0_6, %c0_7], %9 {strides = array<i32>} : memref<16x384xbf16, #tpu.memory_space<vmem>>, vector<16x384xbf16>,
    return
  }
  func.func @transform_0(%arg0: i32, %arg1: i32) -> (i32, i32) {
    %c0_i32 = arith.constant 0 : i32
    %c0_i32_0 = arith.constant 0 : i32
    return %arg0, %c0_i32 : i32, i32
  }
  func.func @transform_1(%arg0: i32, %arg1: i32) -> (i32, i32) {
    %c0_i32 = arith.constant 0 : i32
    %c0_i32_0 = arith.constant 0 : i32
    %c0_i32_1 = arith.constant 0 : i32
    return %c0_i32, %c0_i32_0 : i32, i32
  }
  func.func @transform_2(%arg0: i32, %arg1: i32) -> (i32, i32) {
    %c0_i32 = arith.constant 0 : i32
    %c0_i32_0 = arith.constant 0 : i32
    %c0_i32_1 = arith.constant 0 : i32
    return %c0_i32, %c0_i32_0 : i32, i32
  }
  func.func @transform_3(%arg0: i32, %arg1: i32) -> (i32, i32) {
    %c0_i32 = arith.constant 0 : i32
    %c0_i32_0 = arith.constant 0 : i32
    return %c0_i32, %arg1 : i32, i32
  }
  func.func @transform_4(%arg0: i32, %arg1: i32) -> (i32, i32) {
    %c0_i32 = arith.constant 0 : i32
    %c0_i32_0 = arith.constant 0 : i32
    return %c0_i32, %arg1 : i32, i32
  }
  func.func @transform_5(%arg0: i32, %arg1: i32) -> (i32, i32) {
    %c0_i32 = arith.constant 0 : i32
    return %arg0, %arg1 : i32, i32
  }
}

module attributes {stable_mosaic.version = 11 : i64} {
  func.func @kern(%arg0: i32, %arg1: i32, %arg2: memref<1x1x8x64xbf16, #tpu.memory_space<vmem>>, %arg3: memref<1x1x8x64xbf16, #tpu.memory_space<vmem>>, %arg4: memref<1x1x8x64xbf16, #tpu.memory_space<vmem>>, %arg5: memref<1x1x8x64xbf16, #tpu.memory_space<vmem>>) attributes {dimension_semantics = [#tpu.dimension_semantics<parallel>, #tpu.dimension_semantics<parallel>], iteration_bounds = array<i64: 2, 2>, scalar_prefetch = 0 : i64, scratch_operands = 0 : i64, tpu.core_type = #tpu.core_type<tc>, window_params = [{transform_indices = @transform_0, window_bounds = array<i64: 1, 1, 8, 64>}, {transform_indices = @transform_1, window_bounds = array<i64: 1, 1, 8, 64>}, {transform_indices = @transform_2, window_bounds = array<i64: 1, 1, 8, 64>}, {transform_indices = @transform_3, window_bounds = array<i64: 1, 1, 8, 64>}]} {
    %c0 = arith.constant 0 : index
    %c0_0 = arith.constant 0 : index
    %c0_1 = arith.constant 0 : index
    %c0_2 = arith.constant 0 : index
    %0 = vector.load %arg2[%c0, %c0_0, %c0_1, %c0_2] : memref<1x1x8x64xbf16, #tpu.memory_space<vmem>>, vector<1x1x8x64xbf16>
    %1 = vector.shape_cast %0 : vector<1x1x8x64xbf16> to vector<8x64xbf16>
    %c0_3 = arith.constant 0 : index
    %c0_4 = arith.constant 0 : index
    %c0_5 = arith.constant 0 : index
    %c0_6 = arith.constant 0 : index
    %2 = vector.load %arg3[%c0_3, %c0_4, %c0_5, %c0_6] : memref<1x1x8x64xbf16, #tpu.memory_space<vmem>>, vector<1x1x8x64xbf16>
    %3 = vector.shape_cast %2 : vector<1x1x8x64xbf16> to vector<8x64xbf16>
    %c0_7 = arith.constant 0 : index
    %c0_8 = arith.constant 0 : index
    %c0_9 = arith.constant 0 : index
    %c0_10 = arith.constant 0 : index
    %4 = vector.load %arg4[%c0_7, %c0_8, %c0_9, %c0_10] : memref<1x1x8x64xbf16, #tpu.memory_space<vmem>>, vector<1x1x8x64xbf16>
    %5 = vector.shape_cast %4 : vector<1x1x8x64xbf16> to vector<8x64xbf16>
    %cst = arith.constant dense<0.000000e+00> : vector<8x8xf32>
    %6 = tpu.matmul %1, %3, %cst {dimension_numbers = #tpu.dot_dimension_numbers<[1], [1], [0], [0], [0, 0, 1, 0], [], []>} : vector<8x64xbf16>, vector<8x64xbf16>, vector<8x8xf32> -> vector<8x8xf32>
    %cst_11 = arith.constant 1.250000e-01 : f32
    %7 = vector.broadcast %cst_11 : f32 to vector<8x8xf32>
    %8 = arith.mulf %6, %7 : vector<8x8xf32>
    %9 = tpu.iota {dimensions = array<i32: 0>} : vector<8x8xi32>
    %10 = tpu.iota {dimensions = array<i32: 1>} : vector<8x8xi32>
    %11 = arith.cmpi sge, %9, %10 : vector<8x8xi32>
    %cst_12 = arith.constant -1.000000e+09 : f32
    %12 = vector.broadcast %cst_12 : f32 to vector<8x8xf32>
    %13 = arith.select %11, %8, %12 : vector<8x8xi1>, vector<8x8xf32>
    %cst_13 = arith.constant dense<0xFF800000> : vector<8xf32>
    %14 = vector.multi_reduction <maximumf>, %13, %cst_13 [1] : vector<8x8xf32> to vector<8xf32>
    %15 = vector.shape_cast %14 : vector<8xf32> to vector<8x1xf32>
    %16 = vector.broadcast %15 : vector<8x1xf32> to vector<8x8xf32>
    %17 = arith.subf %13, %16 : vector<8x8xf32>
    %18 = math.exp %17 : vector<8x8xf32>
    %cst_14 = arith.constant dense<0.000000e+00> : vector<8xf32>
    %19 = vector.multi_reduction <add>, %18, %cst_14 [1] : vector<8x8xf32> to vector<8xf32>
    %20 = vector.shape_cast %19 : vector<8xf32> to vector<8x1xf32>
    %21 = tpu.reciprocal %20 {approx = true} : vector<8x1xf32> -> vector<8x1xf32>
    %22 = vector.broadcast %21 : vector<8x1xf32> to vector<8x8xf32>
    %23 = arith.mulf %18, %22 : vector<8x8xf32>
    %24 = arith.truncf %23 : vector<8x8xf32> to vector<8x8xbf16>
    %cst_15 = arith.constant dense<0.000000e+00> : vector<8x64xf32>
    %25 = tpu.matmul %24, %5, %cst_15 {dimension_numbers = #tpu.dot_dimension_numbers<[1], [0], [0], [1], [0, 0, 1, 1], [], []>} : vector<8x8xbf16>, vector<8x64xbf16>, vector<8x64xf32> -> vector<8x64xf32>
    %26 = arith.truncf %25 : vector<8x64xf32> to vector<8x64xbf16>
    %c0_16 = arith.constant 0 : index
    %c0_17 = arith.constant 0 : index
    %c0_18 = arith.constant 0 : index
    %c0_19 = arith.constant 0 : index
    %27 = vector.load %arg5[%c0_16, %c0_17, %c0_18, %c0_19] : memref<1x1x8x64xbf16, #tpu.memory_space<vmem>>, vector<1x1x8x64xbf16>
    %28 = vector.shape_cast %27 : vector<1x1x8x64xbf16> to vector<8x64xbf16>
    %29 = vector.shape_cast %26 : vector<8x64xbf16> to vector<1x1x8x64xbf16>
    tpu.vector_store %arg5[%c0_16, %c0_17, %c0_18, %c0_19], %29 {strides = array<i32>} : memref<1x1x8x64xbf16, #tpu.memory_space<vmem>>, vector<1x1x8x64xbf16>,
    return
  }
  func.func @transform_0(%arg0: i32, %arg1: i32) -> (i32, i32, i32, i32) {
    %c0_i32 = arith.constant 0 : i32
    %c0_i32_0 = arith.constant 0 : i32
    %c0_i32_1 = arith.constant 0 : i32
    return %arg0, %arg1, %c0_i32, %c0_i32_0 : i32, i32, i32, i32
  }
  func.func @transform_1(%arg0: i32, %arg1: i32) -> (i32, i32, i32, i32) {
    %c0_i32 = arith.constant 0 : i32
    %c0_i32_0 = arith.constant 0 : i32
    %c0_i32_1 = arith.constant 0 : i32
    return %arg0, %arg1, %c0_i32, %c0_i32_0 : i32, i32, i32, i32
  }
  func.func @transform_2(%arg0: i32, %arg1: i32) -> (i32, i32, i32, i32) {
    %c0_i32 = arith.constant 0 : i32
    %c0_i32_0 = arith.constant 0 : i32
    %c0_i32_1 = arith.constant 0 : i32
    return %arg0, %arg1, %c0_i32, %c0_i32_0 : i32, i32, i32, i32
  }
  func.func @transform_3(%arg0: i32, %arg1: i32) -> (i32, i32, i32, i32) {
    %c0_i32 = arith.constant 0 : i32
    %c0_i32_0 = arith.constant 0 : i32
    %c0_i32_1 = arith.constant 0 : i32
    return %arg0, %arg1, %c0_i32, %c0_i32_0 : i32, i32, i32, i32
  }
}

module attributes {stable_mosaic.version = 11 : i64} {
  func.func @kern(%arg0: i32, %arg1: i32, %arg2: memref<16x128xbf16, #tpu.memory_space<vmem>>, %arg3: memref<1x128xf32, #tpu.memory_space<vmem>>, %arg4: memref<1x128xf32, #tpu.memory_space<vmem>>, %arg5: memref<128x128xbf16, #tpu.memory_space<vmem>>, %arg6: memref<1x128xf32, #tpu.memory_space<vmem>>, %arg7: memref<16x128xbf16, #tpu.memory_space<vmem>>, %arg8: memref<16x128xbf16, #tpu.memory_space<vmem>>) attributes {dimension_semantics = [#tpu.dimension_semantics<parallel>, #tpu.dimension_semantics<arbitrary>], iteration_bounds = array<i64: 1, 1>, scalar_prefetch = 0 : i64, scratch_operands = 1 : i64, tpu.core_type = #tpu.core_type<tc>, window_params = [{transform_indices = @transform_0, window_bounds = array<i64: 16, 128>}, {pipeline_mode = #tpu.pipeline_mode<synchronous>, transform_indices = @transform_1, window_bounds = array<i64: 1, 128>}, {pipeline_mode = #tpu.pipeline_mode<synchronous>, transform_indices = @transform_2, window_bounds = array<i64: 1, 128>}, {transform_indices = @transform_3, window_bounds = array<i64: 128, 128>}, {transform_indices = @transform_4, window_bounds = array<i64: 1, 128>}, {transform_indices = @transform_5, window_bounds = array<i64: 16, 128>}]} {
    %c0_i32 = arith.constant 0 : i32
    %0 = arith.cmpi eq, %arg1, %c0_i32 : i32
    %1 = arith.extui %0 : i1 to i32
    %c0_i32_0 = arith.constant 0 : i32
    %2 = arith.cmpi ne, %1, %c0_i32_0 : i32
    scf.if %2 {
      %c0_8 = arith.constant 0 : index
      %c0_9 = arith.constant 0 : index
      %11 = vector.load %arg2[%c0_8, %c0_9] : memref<16x128xbf16, #tpu.memory_space<vmem>>, vector<16x128xbf16>
      %12 = arith.extf %11 : vector<16x128xbf16> to vector<16x128xf32>
      %cst_10 = arith.constant dense<0.000000e+00> : vector<16xf32>
      %13 = vector.multi_reduction <add>, %12, %cst_10 [1] : vector<16x128xf32> to vector<16xf32>
      %14 = vector.shape_cast %13 : vector<16xf32> to vector<16x1xf32>
      %cst_11 = arith.constant 1.280000e+02 : f32
      %15 = vector.broadcast %cst_11 : f32 to vector<16x1xf32>
      %16 = arith.divf %14, %15 : vector<16x1xf32>
      %17 = vector.broadcast %16 : vector<16x1xf32> to vector<16x128xf32>
      %18 = arith.subf %12, %17 : vector<16x128xf32>
      %19 = arith.mulf %18, %18 : vector<16x128xf32>
      %cst_12 = arith.constant dense<0.000000e+00> : vector<16xf32>
      %20 = vector.multi_reduction <add>, %19, %cst_12 [1] : vector<16x128xf32> to vector<16xf32>
      %21 = vector.shape_cast %20 : vector<16xf32> to vector<16x1xf32>
      %cst_13 = arith.constant 1.280000e+02 : f32
      %22 = vector.broadcast %cst_13 : f32 to vector<16x1xf32>
      %23 = arith.divf %21, %22 : vector<16x1xf32>
      %24 = vector.broadcast %16 : vector<16x1xf32> to vector<16x128xf32>
      %25 = arith.subf %12, %24 : vector<16x128xf32>
      %cst_14 = arith.constant 9.99999974E-6 : f32
      %26 = vector.broadcast %cst_14 : f32 to vector<16x1xf32>
      %27 = arith.addf %23, %26 : vector<16x1xf32>
      %28 = math.rsqrt %27 : vector<16x1xf32>
      %29 = vector.broadcast %28 : vector<16x1xf32> to vector<16x128xf32>
      %30 = arith.mulf %25, %29 : vector<16x128xf32>
      %c0_15 = arith.constant 0 : index
      %c0_16 = arith.constant 0 : index
      %31 = vector.load %arg3[%c0_15, %c0_16] : memref<1x128xf32, #tpu.memory_space<vmem>>, vector<1x128xf32>
      %32 = vector.broadcast %31 : vector<1x128xf32> to vector<16x128xf32>
      %33 = arith.mulf %30, %32 : vector<16x128xf32>
      %c0_17 = arith.constant 0 : index
      %c0_18 = arith.constant 0 : index
      %34 = vector.load %arg4[%c0_17, %c0_18] : memref<1x128xf32, #tpu.memory_space<vmem>>, vector<1x128xf32>
      %35 = vector.broadcast %34 : vector<1x128xf32> to vector<16x128xf32>
      %36 = arith.addf %33, %35 : vector<16x128xf32>
      %37 = arith.truncf %36 : vector<16x128xf32> to vector<16x128xbf16>
      %c0_19 = arith.constant 0 : index
      %c0_20 = arith.constant 0 : index
      %38 = vector.load %arg8[%c0_19, %c0_20] : memref<16x128xbf16, #tpu.memory_space<vmem>>, vector<16x128xbf16>
      tpu.vector_store %arg8[%c0_19, %c0_20], %37 {strides = array<i32>} : memref<16x128xbf16, #tpu.memory_space<vmem>>, vector<16x128xbf16>,
    } else {
    }
    %c0 = arith.constant 0 : index
    %c0_1 = arith.constant 0 : index
    %3 = vector.load %arg8[%c0, %c0_1] : memref<16x128xbf16, #tpu.memory_space<vmem>>, vector<16x128xbf16>
    %c0_2 = arith.constant 0 : index
    %c0_3 = arith.constant 0 : index
    %4 = vector.load %arg5[%c0_2, %c0_3] : memref<128x128xbf16, #tpu.memory_space<vmem>>, vector<128x128xbf16>
    %cst = arith.constant dense<0.000000e+00> : vector<16x128xf32>
    %5 = tpu.matmul %3, %4, %cst {dimension_numbers = #tpu.dot_dimension_numbers<[1], [0], [0], [1], [0, 0, 1, 1], [], []>} : vector<16x128xbf16>, vector<128x128xbf16>, vector<16x128xf32> -> vector<16x128xf32>
    %c0_4 = arith.constant 0 : index
    %c0_5 = arith.constant 0 : index
    %6 = vector.load %arg6[%c0_4, %c0_5] : memref<1x128xf32, #tpu.memory_space<vmem>>, vector<1x128xf32>
    %7 = vector.broadcast %6 : vector<1x128xf32> to vector<16x128xf32>
    %8 = arith.addf %5, %7 : vector<16x128xf32>
    %9 = arith.truncf %8 : vector<16x128xf32> to vector<16x128xbf16>
    %c0_6 = arith.constant 0 : index
    %c0_7 = arith.constant 0 : index
    %10 = vector.load %arg7[%c0_6, %c0_7] : memref<16x128xbf16, #tpu.memory_space<vmem>>, vector<16x128xbf16>
    tpu.vector_store %arg7[%c0_6, %c0_7], %9 {strides = array<i32>} : memref<16x128xbf16, #tpu.memory_space<vmem>>, vector<16x128xbf16>,
    return
  }
  func.func @transform_0(%arg0: i32, %arg1: i32) -> (i32, i32) {
    %c0_i32 = arith.constant 0 : i32
    %c0_i32_0 = arith.constant 0 : i32
    return %arg0, %c0_i32 : i32, i32
  }
  func.func @transform_1(%arg0: i32, %arg1: i32) -> (i32, i32) {
    %c0_i32 = arith.constant 0 : i32
    %c0_i32_0 = arith.constant 0 : i32
    %c0_i32_1 = arith.constant 0 : i32
    return %c0_i32, %c0_i32_0 : i32, i32
  }
  func.func @transform_2(%arg0: i32, %arg1: i32) -> (i32, i32) {
    %c0_i32 = arith.constant 0 : i32
    %c0_i32_0 = arith.constant 0 : i32
    %c0_i32_1 = arith.constant 0 : i32
    return %c0_i32, %c0_i32_0 : i32, i32
  }
  func.func @transform_3(%arg0: i32, %arg1: i32) -> (i32, i32) {
    %c0_i32 = arith.constant 0 : i32
    %c0_i32_0 = arith.constant 0 : i32
    return %c0_i32, %arg1 : i32, i32
  }
  func.func @transform_4(%arg0: i32, %arg1: i32) -> (i32, i32) {
    %c0_i32 = arith.constant 0 : i32
    %c0_i32_0 = arith.constant 0 : i32
    return %c0_i32, %arg1 : i32, i32
  }
  func.func @transform_5(%arg0: i32, %arg1: i32) -> (i32, i32) {
    %c0_i32 = arith.constant 0 : i32
    return %arg0, %arg1 : i32, i32
  }
}

module attributes {stable_mosaic.version = 11 : i64} {
  func.func @body(%arg0: i32, %arg1: i32, %arg2: i32, %arg3: memref<16x128xbf16, #tpu.memory_space<vmem>>, %arg4: memref<128x128xbf16, #tpu.memory_space<vmem>>, %arg5: memref<1x128xf32, #tpu.memory_space<vmem>>, %arg6: memref<16x128xbf16, #tpu.memory_space<vmem>>, %arg7: memref<16x128xbf16, #tpu.memory_space<vmem>>, %arg8: memref<16x128xf32, #tpu.memory_space<vmem>>) attributes {dimension_semantics = [#tpu.dimension_semantics<parallel>, #tpu.dimension_semantics<parallel>, #tpu.dimension_semantics<arbitrary>], iteration_bounds = array<i64: 1, 1, 1>, scalar_prefetch = 0 : i64, scratch_operands = 1 : i64, tpu.core_type = #tpu.core_type<tc>, window_params = [{transform_indices = @transform_0, window_bounds = array<i64: 16, 128>}, {transform_indices = @transform_1, window_bounds = array<i64: 128, 128>}, {transform_indices = @transform_2, window_bounds = array<i64: 1, 128>}, {transform_indices = @transform_3, window_bounds = array<i64: 16, 128>}, {transform_indices = @transform_4, window_bounds = array<i64: 16, 128>}]} {
    %c0_i32 = arith.constant 0 : i32
    %0 = arith.cmpi eq, %arg2, %c0_i32 : i32
    %1 = arith.extui %0 : i1 to i32
    %c0_i32_0 = arith.constant 0 : i32
    %2 = arith.cmpi ne, %1, %c0_i32_0 : i32
    scf.if %2 {
      %cst_10 = arith.constant 0.000000e+00 : f32
      %12 = vector.broadcast %cst_10 : f32 to vector<16x128xf32>
      %c0_11 = arith.constant 0 : index
      %c0_12 = arith.constant 0 : index
      %13 = vector.load %arg8[%c0_11, %c0_12] : memref<16x128xf32, #tpu.memory_space<vmem>>, vector<16x128xf32>
      tpu.vector_store %arg8[%c0_11, %c0_12], %12 {strides = array<i32>} : memref<16x128xf32, #tpu.memory_space<vmem>>, vector<16x128xf32>,
    } else {
    }
    %c0 = arith.constant 0 : index
    %c0_1 = arith.constant 0 : index
    %3 = vector.load %arg8[%c0, %c0_1] : memref<16x128xf32, #tpu.memory_space<vmem>>, vector<16x128xf32>
    %c0_2 = arith.constant 0 : index
    %c0_3 = arith.constant 0 : index
    %4 = vector.load %arg3[%c0_2, %c0_3] : memref<16x128xbf16, #tpu.memory_space<vmem>>, vector<16x128xbf16>
    %c0_4 = arith.constant 0 : index
    %c0_5 = arith.constant 0 : index
    %5 = vector.load %arg4[%c0_4, %c0_5] : memref<128x128xbf16, #tpu.memory_space<vmem>>, vector<128x128xbf16>
    %cst = arith.constant dense<0.000000e+00> : vector<16x128xf32>
    %6 = tpu.matmul %4, %5, %cst {dimension_numbers = #tpu.dot_dimension_numbers<[1], [0], [0], [1], [0, 0, 1, 1], [], []>} : vector<16x128xbf16>, vector<128x128xbf16>, vector<16x128xf32> -> vector<16x128xf32>
    %7 = arith.addf %3, %6 : vector<16x128xf32>
    %c0_6 = arith.constant 0 : index
    %c0_7 = arith.constant 0 : index
    %8 = vector.load %arg8[%c0_6, %c0_7] : memref<16x128xf32, #tpu.memory_space<vmem>>, vector<16x128xf32>
    tpu.vector_store %arg8[%c0_6, %c0_7], %7 {strides = array<i32>} : memref<16x128xf32, #tpu.memory_space<vmem>>, vector<16x128xf32>,
    %c0_i32_8 = arith.constant 0 : i32
    %9 = arith.cmpi eq, %arg2, %c0_i32_8 : i32
    %10 = arith.extui %9 : i1 to i32
    %c0_i32_9 = arith.constant 0 : i32
    %11 = arith.cmpi ne, %10, %c0_i32_9 : i32
    scf.if %11 {
      %c0_10 = arith.constant 0 : index
      %c0_11 = arith.constant 0 : index
      %12 = vector.load %arg8[%c0_10, %c0_11] : memref<16x128xf32, #tpu.memory_space<vmem>>, vector<16x128xf32>
      %c0_12 = arith.constant 0 : index
      %c0_13 = arith.constant 0 : index
      %13 = vector.load %arg5[%c0_12, %c0_13] : memref<1x128xf32, #tpu.memory_space<vmem>>, vector<1x128xf32>
      %14 = vector.broadcast %13 : vector<1x128xf32> to vector<16x128xf32>
      %15 = arith.addf %12, %14 : vector<16x128xf32>
      %c0_14 = arith.constant 0 : index
      %c0_15 = arith.constant 0 : index
      %16 = vector.load %arg6[%c0_14, %c0_15] : memref<16x128xbf16, #tpu.memory_space<vmem>>, vector<16x128xbf16>
      %17 = arith.extf %16 : vector<16x128xbf16> to vector<16x128xf32>
      %18 = arith.addf %15, %17 : vector<16x128xf32>
      %19 = arith.truncf %18 : vector<16x128xf32> to vector<16x128xbf16>
      %c0_16 = arith.constant 0 : index
      %c0_17 = arith.constant 0 : index
      %20 = vector.load %arg7[%c0_16, %c0_17] : memref<16x128xbf16, #tpu.memory_space<vmem>>, vector<16x128xbf16>
      tpu.vector_store %arg7[%c0_16, %c0_17], %19 {strides = array<i32>} : memref<16x128xbf16, #tpu.memory_space<vmem>>, vector<16x128xbf16>,
    } else {
    }
    return
  }
  func.func @transform_0(%arg0: i32, %arg1: i32, %arg2: i32) -> (i32, i32) {
    %c0_i32 = arith.constant 0 : i32
    return %arg0, %arg2 : i32, i32
  }
  func.func @transform_1(%arg0: i32, %arg1: i32, %arg2: i32) -> (i32, i32) {
    %c0_i32 = arith.constant 0 : i32
    return %arg2, %arg1 : i32, i32
  }
  func.func @transform_2(%arg0: i32, %arg1: i32, %arg2: i32) -> (i32, i32) {
    %c0_i32 = arith.constant 0 : i32
    %c0_i32_0 = arith.constant 0 : i32
    return %c0_i32, %arg1 : i32, i32
  }
  func.func @transform_3(%arg0: i32, %arg1: i32, %arg2: i32) -> (i32, i32) {
    %c0_i32 = arith.constant 0 : i32
    return %arg0, %arg1 : i32, i32
  }
  func.func @transform_4(%arg0: i32, %arg1: i32, %arg2: i32) -> (i32, i32) {
    %c0_i32 = arith.constant 0 : i32
    return %arg0, %arg1 : i32, i32
  }
}

module attributes {stable_mosaic.version = 11 : i64} {
  func.func @kern(%arg0: i32, %arg1: i32, %arg2: memref<16x128xbf16, #tpu.memory_space<vmem>>, %arg3: memref<1x128xf32, #tpu.memory_space<vmem>>, %arg4: memref<1x128xf32, #tpu.memory_space<vmem>>, %arg5: memref<128x512xbf16, #tpu.memory_space<vmem>>, %arg6: memref<1x512xf32, #tpu.memory_space<vmem>>, %arg7: memref<16x512xbf16, #tpu.memory_space<vmem>>, %arg8: memref<16x128xbf16, #tpu.memory_space<vmem>>) attributes {dimension_semantics = [#tpu.dimension_semantics<parallel>, #tpu.dimension_semantics<arbitrary>], iteration_bounds = array<i64: 1, 1>, scalar_prefetch = 0 : i64, scratch_operands = 1 : i64, tpu.core_type = #tpu.core_type<tc>, window_params = [{transform_indices = @transform_0, window_bounds = array<i64: 16, 128>}, {pipeline_mode = #tpu.pipeline_mode<synchronous>, transform_indices = @transform_1, window_bounds = array<i64: 1, 128>}, {pipeline_mode = #tpu.pipeline_mode<synchronous>, transform_indices = @transform_2, window_bounds = array<i64: 1, 128>}, {transform_indices = @transform_3, window_bounds = array<i64: 128, 512>}, {transform_indices = @transform_4, window_bounds = array<i64: 1, 512>}, {transform_indices = @transform_5, window_bounds = array<i64: 16, 512>}]} {
    %c0_i32 = arith.constant 0 : i32
    %0 = arith.cmpi eq, %arg1, %c0_i32 : i32
    %1 = arith.extui %0 : i1 to i32
    %c0_i32_0 = arith.constant 0 : i32
    %2 = arith.cmpi ne, %1, %c0_i32_0 : i32
    scf.if %2 {
      %c0_12 = arith.constant 0 : index
      %c0_13 = arith.constant 0 : index
      %24 = vector.load %arg2[%c0_12, %c0_13] : memref<16x128xbf16, #tpu.memory_space<vmem>>, vector<16x128xbf16>
      %25 = arith.extf %24 : vector<16x128xbf16> to vector<16x128xf32>
      %cst_14 = arith.constant dense<0.000000e+00> : vector<16xf32>
      %26 = vector.multi_reduction <add>, %25, %cst_14 [1] : vector<16x128xf32> to vector<16xf32>
      %27 = vector.shape_cast %26 : vector<16xf32> to vector<16x1xf32>
      %cst_15 = arith.constant 1.280000e+02 : f32
      %28 = vector.broadcast %cst_15 : f32 to vector<16x1xf32>
      %29 = arith.divf %27, %28 : vector<16x1xf32>
      %30 = vector.broadcast %29 : vector<16x1xf32> to vector<16x128xf32>
      %31 = arith.subf %25, %30 : vector<16x128xf32>
      %32 = arith.mulf %31, %31 : vector<16x128xf32>
      %cst_16 = arith.constant dense<0.000000e+00> : vector<16xf32>
      %33 = vector.multi_reduction <add>, %32, %cst_16 [1] : vector<16x128xf32> to vector<16xf32>
      %34 = vector.shape_cast %33 : vector<16xf32> to vector<16x1xf32>
      %cst_17 = arith.constant 1.280000e+02 : f32
      %35 = vector.broadcast %cst_17 : f32 to vector<16x1xf32>
      %36 = arith.divf %34, %35 : vector<16x1xf32>
      %37 = vector.broadcast %29 : vector<16x1xf32> to vector<16x128xf32>
      %38 = arith.subf %25, %37 : vector<16x128xf32>
      %cst_18 = arith.constant 9.99999974E-6 : f32
      %39 = vector.broadcast %cst_18 : f32 to vector<16x1xf32>
      %40 = arith.addf %36, %39 : vector<16x1xf32>
      %41 = math.rsqrt %40 : vector<16x1xf32>
      %42 = vector.broadcast %41 : vector<16x1xf32> to vector<16x128xf32>
      %43 = arith.mulf %38, %42 : vector<16x128xf32>
      %c0_19 = arith.constant 0 : index
      %c0_20 = arith.constant 0 : index
      %44 = vector.load %arg3[%c0_19, %c0_20] : memref<1x128xf32, #tpu.memory_space<vmem>>, vector<1x128xf32>
      %45 = vector.broadcast %44 : vector<1x128xf32> to vector<16x128xf32>
      %46 = arith.mulf %43, %45 : vector<16x128xf32>
      %c0_21 = arith.constant 0 : index
      %c0_22 = arith.constant 0 : index
      %47 = vector.load %arg4[%c0_21, %c0_22] : memref<1x128xf32, #tpu.memory_space<vmem>>, vector<1x128xf32>
      %48 = vector.broadcast %47 : vector<1x128xf32> to vector<16x128xf32>
      %49 = arith.addf %46, %48 : vector<16x128xf32>
      %50 = arith.truncf %49 : vector<16x128xf32> to vector<16x128xbf16>
      %c0_23 = arith.constant 0 : index
      %c0_24 = arith.constant 0 : index
      %51 = vector.load %arg8[%c0_23, %c0_24] : memref<16x128xbf16, #tpu.memory_space<vmem>>, vector<16x128xbf16>
      tpu.vector_store %arg8[%c0_23, %c0_24], %50 {strides = array<i32>} : memref<16x128xbf16, #tpu.memory_space<vmem>>, vector<16x128xbf16>,
    } else {
    }
    %c0 = arith.constant 0 : index
    %c0_1 = arith.constant 0 : index
    %3 = vector.load %arg8[%c0, %c0_1] : memref<16x128xbf16, #tpu.memory_space<vmem>>, vector<16x128xbf16>
    %c0_2 = arith.constant 0 : index
    %c0_3 = arith.constant 0 : index
    %4 = vector.load %arg5[%c0_2, %c0_3] : memref<128x512xbf16, #tpu.memory_space<vmem>>, vector<128x512xbf16>
    %cst = arith.constant dense<0.000000e+00> : vector<16x512xf32>
    %5 = tpu.matmul %3, %4, %cst {dimension_numbers = #tpu.dot_dimension_numbers<[1], [0], [0], [1], [0, 0, 1, 1], [], []>} : vector<16x128xbf16>, vector<128x512xbf16>, vector<16x512xf32> -> vector<16x512xf32>
    %c0_4 = arith.constant 0 : index
    %c0_5 = arith.constant 0 : index
    %6 = vector.load %arg6[%c0_4, %c0_5] : memref<1x512xf32, #tpu.memory_space<vmem>>, vector<1x512xf32>
    %7 = vector.broadcast %6 : vector<1x512xf32> to vector<16x512xf32>
    %8 = arith.addf %5, %7 : vector<16x512xf32>
    %9 = arith.mulf %8, %8 : vector<16x512xf32>
    %10 = arith.mulf %8, %9 : vector<16x512xf32>
    %cst_6 = arith.constant 4.471500e-02 : f32
    %11 = vector.broadcast %cst_6 : f32 to vector<16x512xf32>
    %12 = arith.mulf %11, %10 : vector<16x512xf32>
    %13 = arith.addf %8, %12 : vector<16x512xf32>
    %cst_7 = arith.constant 0.797884583 : f32
    %14 = vector.broadcast %cst_7 : f32 to vector<16x512xf32>
    %15 = arith.mulf %14, %13 : vector<16x512xf32>
    %16 = math.tanh %15 : vector<16x512xf32>
    %cst_8 = arith.constant 1.000000e+00 : f32
    %17 = vector.broadcast %cst_8 : f32 to vector<16x512xf32>
    %18 = arith.addf %17, %16 : vector<16x512xf32>
    %cst_9 = arith.constant 5.000000e-01 : f32
    %19 = vector.broadcast %cst_9 : f32 to vector<16x512xf32>
    %20 = arith.mulf %19, %18 : vector<16x512xf32>
    %21 = arith.mulf %8, %20 : vector<16x512xf32>
    %22 = arith.truncf %21 : vector<16x512xf32> to vector<16x512xbf16>
    %c0_10 = arith.constant 0 : index
    %c0_11 = arith.constant 0 : index
    %23 = vector.load %arg7[%c0_10, %c0_11] : memref<16x512xbf16, #tpu.memory_space<vmem>>, vector<16x512xbf16>
    tpu.vector_store %arg7[%c0_10, %c0_11], %22 {strides = array<i32>} : memref<16x512xbf16, #tpu.memory_space<vmem>>, vector<16x512xbf16>,
    return
  }
  func.func @transform_0(%arg0: i32, %arg1: i32) -> (i32, i32) {
    %c0_i32 = arith.constant 0 : i32
    %c0_i32_0 = arith.constant 0 : i32
    return %arg0, %c0_i32 : i32, i32
  }
  func.func @transform_1(%arg0: i32, %arg1: i32) -> (i32, i32) {
    %c0_i32 = arith.constant 0 : i32
    %c0_i32_0 = arith.constant 0 : i32
    %c0_i32_1 = arith.constant 0 : i32
    return %c0_i32, %c0_i32_0 : i32, i32
  }
  func.func @transform_2(%arg0: i32, %arg1: i32) -> (i32, i32) {
    %c0_i32 = arith.constant 0 : i32
    %c0_i32_0 = arith.constant 0 : i32
    %c0_i32_1 = arith.constant 0 : i32
    return %c0_i32, %c0_i32_0 : i32, i32
  }
  func.func @transform_3(%arg0: i32, %arg1: i32) -> (i32, i32) {
    %c0_i32 = arith.constant 0 : i32
    %c0_i32_0 = arith.constant 0 : i32
    return %c0_i32, %arg1 : i32, i32
  }
  func.func @transform_4(%arg0: i32, %arg1: i32) -> (i32, i32) {
    %c0_i32 = arith.constant 0 : i32
    %c0_i32_0 = arith.constant 0 : i32
    return %c0_i32, %arg1 : i32, i32
  }
  func.func @transform_5(%arg0: i32, %arg1: i32) -> (i32, i32) {
    %c0_i32 = arith.constant 0 : i32
    return %arg0, %arg1 : i32, i32
  }
}

module attributes {stable_mosaic.version = 11 : i64} {
  func.func @kern(%arg0: i32, %arg1: i32, %arg2: memref<1x1x8x64xbf16, #tpu.memory_space<vmem>>, %arg3: memref<1x1x5x64xbf16, #tpu.memory_space<vmem>>, %arg4: memref<1x1x5x64xbf16, #tpu.memory_space<vmem>>, %arg5: memref<1x1x8x64xbf16, #tpu.memory_space<vmem>>) attributes {dimension_semantics = [#tpu.dimension_semantics<parallel>, #tpu.dimension_semantics<parallel>], iteration_bounds = array<i64: 2, 2>, scalar_prefetch = 0 : i64, scratch_operands = 0 : i64, tpu.core_type = #tpu.core_type<tc>, window_params = [{transform_indices = @transform_0, window_bounds = array<i64: 1, 1, 8, 64>}, {transform_indices = @transform_1, window_bounds = array<i64: 1, 1, 5, 64>}, {transform_indices = @transform_2, window_bounds = array<i64: 1, 1, 5, 64>}, {transform_indices = @transform_3, window_bounds = array<i64: 1, 1, 8, 64>}]} {
    %c0 = arith.constant 0 : index
    %c0_0 = arith.constant 0 : index
    %c0_1 = arith.constant 0 : index
    %c0_2 = arith.constant 0 : index
    %0 = vector.load %arg2[%c0, %c0_0, %c0_1, %c0_2] : memref<1x1x8x64xbf16, #tpu.memory_space<vmem>>, vector<1x1x8x64xbf16>
    %1 = vector.shape_cast %0 : vector<1x1x8x64xbf16> to vector<8x64xbf16>
    %c0_3 = arith.constant 0 : index
    %c0_4 = arith.constant 0 : index
    %c0_5 = arith.constant 0 : index
    %c0_6 = arith.constant 0 : index
    %2 = vector.load %arg3[%c0_3, %c0_4, %c0_5, %c0_6] : memref<1x1x5x64xbf16, #tpu.memory_space<vmem>>, vector<1x1x5x64xbf16>
    %3 = vector.shape_cast %2 : vector<1x1x5x64xbf16> to vector<5x64xbf16>
    %c0_7 = arith.constant 0 : index
    %c0_8 = arith.constant 0 : index
    %c0_9 = arith.constant 0 : index
    %c0_10 = arith.constant 0 : index
    %4 = vector.load %arg4[%c0_7, %c0_8, %c0_9, %c0_10] : memref<1x1x5x64xbf16, #tpu.memory_space<vmem>>, vector<1x1x5x64xbf16>
    %5 = vector.shape_cast %4 : vector<1x1x5x64xbf16> to vector<5x64xbf16>
    %cst = arith.constant dense<0.000000e+00> : vector<8x5xf32>
    %6 = tpu.matmul %1, %3, %cst {dimension_numbers = #tpu.dot_dimension_numbers<[1], [1], [0], [0], [0, 0, 1, 0], [], []>} : vector<8x64xbf16>, vector<5x64xbf16>, vector<8x5xf32> -> vector<8x5xf32>
    %cst_11 = arith.constant 1.250000e-01 : f32
    %7 = vector.broadcast %cst_11 : f32 to vector<8x5xf32>
    %8 = arith.mulf %6, %7 : vector<8x5xf32>
    %cst_12 = arith.constant dense<0xFF800000> : vector<8xf32>
    %9 = vector.multi_reduction <maximumf>, %8, %cst_12 [1] : vector<8x5xf32> to vector<8xf32>
    %10 = vector.shape_cast %9 : vector<8xf32> to vector<8x1xf32>
    %11 = vector.broadcast %10 : vector<8x1xf32> to vector<8x5xf32>
    %12 = arith.subf %8, %11 : vector<8x5xf32>
    %13 = math.exp %12 : vector<8x5xf32>
    %cst_13 = arith.constant dense<0.000000e+00> : vector<8xf32>
    %14 = vector.multi_reduction <add>, %13, %cst_13 [1] : vector<8x5xf32> to vector<8xf32>
    %15 = vector.shape_cast %14 : vector<8xf32> to vector<8x1xf32>
    %16 = tpu.reciprocal %15 {approx = true} : vector<8x1xf32> -> vector<8x1xf32>
    %17 = vector.broadcast %16 : vector<8x1xf32> to vector<8x5xf32>
    %18 = arith.mulf %13, %17 : vector<8x5xf32>
    %19 = arith.truncf %18 : vector<8x5xf32> to vector<8x5xbf16>
    %cst_14 = arith.constant dense<0.000000e+00> : vector<8x64xf32>
    %20 = tpu.matmul %19, %5, %cst_14 {dimension_numbers = #tpu.dot_dimension_numbers<[1], [0], [0], [1], [0, 0, 1, 1], [], []>} : vector<8x5xbf16>, vector<5x64xbf16>, vector<8x64xf32> -> vector<8x64xf32>
    %21 = arith.truncf %20 : vector<8x64xf32> to vector<8x64xbf16>
    %c0_15 = arith.constant 0 : index
    %c0_16 = arith.constant 0 : index
    %c0_17 = arith.constant 0 : index
    %c0_18 = arith.constant 0 : index
    %22 = vector.load %arg5[%c0_15, %c0_16, %c0_17, %c0_18] : memref<1x1x8x64xbf16, #tpu.memory_space<vmem>>, vector<1x1x8x64xbf16>
    %23 = vector.shape_cast %22 : vector<1x1x8x64xbf16> to vector<8x64xbf16>
    %24 = vector.shape_cast %21 : vector<8x64xbf16> to vector<1x1x8x64xbf16>
    tpu.vector_store %arg5[%c0_15, %c0_16, %c0_17, %c0_18], %24 {strides = array<i32>} : memref<1x1x8x64xbf16, #tpu.memory_space<vmem>>, vector<1x1x8x64xbf16>,
    return
  }
  func.func @transform_0(%arg0: i32, %arg1: i32) -> (i32, i32, i32, i32) {
    %c0_i32 = arith.constant 0 : i32
    %c0_i32_0 = arith.constant 0 : i32
    %c0_i32_1 = arith.constant 0 : i32
    return %arg0, %arg1, %c0_i32, %c0_i32_0 : i32, i32, i32, i32
  }
  func.func @transform_1(%arg0: i32, %arg1: i32) -> (i32, i32, i32, i32) {
    %c0_i32 = arith.constant 0 : i32
    %c0_i32_0 = arith.constant 0 : i32
    %c0_i32_1 = arith.constant 0 : i32
    return %arg0, %arg1, %c0_i32, %c0_i32_0 : i32, i32, i32, i32
  }
  func.func @transform_2(%arg0: i32, %arg1: i32) -> (i32, i32, i32, i32) {
    %c0_i32 = arith.constant 0 : i32
    %c0_i32_0 = arith.constant 0 : i32
    %c0_i32_1 = arith.constant 0 : i32
    return %arg0, %arg1, %c0_i32, %c0_i32_0 : i32, i32, i32, i32
  }
  func.func @transform_3(%arg0: i32, %arg1: i32) -> (i32, i32, i32, i32) {
    %c0_i32 = arith.constant 0 : i32
    %c0_i32_0 = arith.constant 0 : i32
    %c0_i32_1 = arith.constant 0 : i32
    return %arg0, %arg1, %c0_i32, %c0_i32_0 : i32, i32, i32, i32
  }
}

module attributes {stable_mosaic.version = 11 : i64} {
  func.func @body(%arg0: i32, %arg1: i32, %arg2: i32, %arg3: memref<16x512xbf16, #tpu.memory_space<vmem>>, %arg4: memref<512x128xbf16, #tpu.memory_space<vmem>>, %arg5: memref<1x128xf32, #tpu.memory_space<vmem>>, %arg6: memref<16x128xbf16, #tpu.memory_space<vmem>>, %arg7: memref<16x128xbf16, #tpu.memory_space<vmem>>, %arg8: memref<16x128xf32, #tpu.memory_space<vmem>>) attributes {dimension_semantics = [#tpu.dimension_semantics<parallel>, #tpu.dimension_semantics<parallel>, #tpu.dimension_semantics<arbitrary>], iteration_bounds = array<i64: 1, 1, 1>, scalar_prefetch = 0 : i64, scratch_operands = 1 : i64, tpu.core_type = #tpu.core_type<tc>, window_params = [{transform_indices = @transform_0, window_bounds = array<i64: 16, 512>}, {transform_indices = @transform_1, window_bounds = array<i64: 512, 128>}, {transform_indices = @transform_2, window_bounds = array<i64: 1, 128>}, {transform_indices = @transform_3, window_bounds = array<i64: 16, 128>}, {transform_indices = @transform_4, window_bounds = array<i64: 16, 128>}]} {
    %c0_i32 = arith.constant 0 : i32
    %0 = arith.cmpi eq, %arg2, %c0_i32 : i32
    %1 = arith.extui %0 : i1 to i32
    %c0_i32_0 = arith.constant 0 : i32
    %2 = arith.cmpi ne, %1, %c0_i32_0 : i32
    scf.if %2 {
      %cst_10 = arith.constant 0.000000e+00 : f32
      %12 = vector.broadcast %cst_10 : f32 to vector<16x128xf32>
      %c0_11 = arith.constant 0 : index
      %c0_12 = arith.constant 0 : index
      %13 = vector.load %arg8[%c0_11, %c0_12] : memref<16x128xf32, #tpu.memory_space<vmem>>, vector<16x128xf32>
      tpu.vector_store %arg8[%c0_11, %c0_12], %12 {strides = array<i32>} : memref<16x128xf32, #tpu.memory_space<vmem>>, vector<16x128xf32>,
    } else {
    }
    %c0 = arith.constant 0 : index
    %c0_1 = arith.constant 0 : index
    %3 = vector.load %arg8[%c0, %c0_1] : memref<16x128xf32, #tpu.memory_space<vmem>>, vector<16x128xf32>
    %c0_2 = arith.constant 0 : index
    %c0_3 = arith.constant 0 : index
    %4 = vector.load %arg3[%c0_2, %c0_3] : memref<16x512xbf16, #tpu.memory_space<vmem>>, vector<16x512xbf16>
    %c0_4 = arith.constant 0 : index
    %c0_5 = arith.constant 0 : index
    %5 = vector.load %arg4[%c0_4, %c0_5] : memref<512x128xbf16, #tpu.memory_space<vmem>>, vector<512x128xbf16>
    %cst = arith.constant dense<0.000000e+00> : vector<16x128xf32>
    %6 = tpu.matmul %4, %5, %cst {dimension_numbers = #tpu.dot_dimension_numbers<[1], [0], [0], [1], [0, 0, 1, 1], [], []>} : vector<16x512xbf16>, vector<512x128xbf16>, vector<16x128xf32> -> vector<16x128xf32>
    %7 = arith.addf %3, %6 : vector<16x128xf32>
    %c0_6 = arith.constant 0 : index
    %c0_7 = arith.constant 0 : index
    %8 = vector.load %arg8[%c0_6, %c0_7] : memref<16x128xf32, #tpu.memory_space<vmem>>, vector<16x128xf32>
    tpu.vector_store %arg8[%c0_6, %c0_7], %7 {strides = array<i32>} : memref<16x128xf32, #tpu.memory_space<vmem>>, vector<16x128xf32>,
    %c0_i32_8 = arith.constant 0 : i32
    %9 = arith.cmpi eq, %arg2, %c0_i32_8 : i32
    %10 = arith.extui %9 : i1 to i32
    %c0_i32_9 = arith.constant 0 : i32
    %11 = arith.cmpi ne, %10, %c0_i32_9 : i32
    scf.if %11 {
      %c0_10 = arith.constant 0 : index
      %c0_11 = arith.constant 0 : index
      %12 = vector.load %arg8[%c0_10, %c0_11] : memref<16x128xf32, #tpu.memory_space<vmem>>, vector<16x128xf32>
      %c0_12 = arith.constant 0 : index
      %c0_13 = arith.constant 0 : index
      %13 = vector.load %arg5[%c0_12, %c0_13] : memref<1x128xf32, #tpu.memory_space<vmem>>, vector<1x128xf32>
      %14 = vector.broadcast %13 : vector<1x128xf32> to vector<16x128xf32>
      %15 = arith.addf %12, %14 : vector<16x128xf32>
      %c0_14 = arith.constant 0 : index
      %c0_15 = arith.constant 0 : index
      %16 = vector.load %arg6[%c0_14, %c0_15] : memref<16x128xbf16, #tpu.memory_space<vmem>>, vector<16x128xbf16>
      %17 = arith.extf %16 : vector<16x128xbf16> to vector<16x128xf32>
      %18 = arith.addf %15, %17 : vector<16x128xf32>
      %19 = arith.truncf %18 : vector<16x128xf32> to vector<16x128xbf16>
      %c0_16 = arith.constant 0 : index
      %c0_17 = arith.constant 0 : index
      %20 = vector.load %arg7[%c0_16, %c0_17] : memref<16x128xbf16, #tpu.memory_space<vmem>>, vector<16x128xbf16>
      tpu.vector_store %arg7[%c0_16, %c0_17], %19 {strides = array<i32>} : memref<16x128xbf16, #tpu.memory_space<vmem>>, vector<16x128xbf16>,
    } else {
    }
    return
  }
  func.func @transform_0(%arg0: i32, %arg1: i32, %arg2: i32) -> (i32, i32) {
    %c0_i32 = arith.constant 0 : i32
    return %arg0, %arg2 : i32, i32
  }
  func.func @transform_1(%arg0: i32, %arg1: i32, %arg2: i32) -> (i32, i32) {
    %c0_i32 = arith.constant 0 : i32
    return %arg2, %arg1 : i32, i32
  }
  func.func @transform_2(%arg0: i32, %arg1: i32, %arg2: i32) -> (i32, i32) {
    %c0_i32 = arith.constant 0 : i32
    %c0_i32_0 = arith.constant 0 : i32
    return %c0_i32, %arg1 : i32, i32
  }
  func.func @transform_3(%arg0: i32, %arg1: i32, %arg2: i32) -> (i32, i32) {
    %c0_i32 = arith.constant 0 : i32
    return %arg0, %arg1 : i32, i32
  }
  func.func @transform_4(%arg0: i32, %arg1: i32, %arg2: i32) -> (i32, i32) {
    %c0_i32 = arith.constant 0 : i32
    return %arg0, %arg1 : i32, i32
  }
}

module attributes {stable_mosaic.version = 11 : i64} {
  func.func @kern(%arg0: i32, %arg1: i32, %arg2: memref<16x128xbf16, #tpu.memory_space<vmem>>, %arg3: memref<1x128xf32, #tpu.memory_space<vmem>>, %arg4: memref<1x128xf32, #tpu.memory_space<vmem>>, %arg5: memref<128x512xbf16, #tpu.memory_space<vmem>>, %arg6: memref<1x512xf32, #tpu.memory_space<vmem>>, %arg7: memref<16x512xf32, #tpu.memory_space<vmem>>, %arg8: memref<16x128xbf16, #tpu.memory_space<vmem>>) attributes {dimension_semantics = [#tpu.dimension_semantics<parallel>, #tpu.dimension_semantics<arbitrary>], iteration_bounds = array<i64: 1, 1>, scalar_prefetch = 0 : i64, scratch_operands = 1 : i64, tpu.core_type = #tpu.core_type<tc>, window_params = [{transform_indices = @transform_0, window_bounds = array<i64: 16, 128>}, {pipeline_mode = #tpu.pipeline_mode<synchronous>, transform_indices = @transform_1, window_bounds = array<i64: 1, 128>}, {pipeline_mode = #tpu.pipeline_mode<synchronous>, transform_indices = @transform_2, window_bounds = array<i64: 1, 128>}, {transform_indices = @transform_3, window_bounds = array<i64: 128, 512>}, {transform_indices = @transform_4, window_bounds = array<i64: 1, 512>}, {transform_indices = @transform_5, window_bounds = array<i64: 16, 512>}]} {
    %c0_i32 = arith.constant 0 : i32
    %0 = arith.cmpi eq, %arg1, %c0_i32 : i32
    %1 = arith.extui %0 : i1 to i32
    %c0_i32_0 = arith.constant 0 : i32
    %2 = arith.cmpi ne, %1, %c0_i32_0 : i32
    scf.if %2 {
      %c0_8 = arith.constant 0 : index
      %c0_9 = arith.constant 0 : index
      %10 = vector.load %arg2[%c0_8, %c0_9] : memref<16x128xbf16, #tpu.memory_space<vmem>>, vector<16x128xbf16>
      %11 = arith.extf %10 : vector<16x128xbf16> to vector<16x128xf32>
      %cst_10 = arith.constant dense<0.000000e+00> : vector<16xf32>
      %12 = vector.multi_reduction <add>, %11, %cst_10 [1] : vector<16x128xf32> to vector<16xf32>
      %13 = vector.shape_cast %12 : vector<16xf32> to vector<16x1xf32>
      %cst_11 = arith.constant 1.280000e+02 : f32
      %14 = vector.broadcast %cst_11 : f32 to vector<16x1xf32>
      %15 = arith.divf %13, %14 : vector<16x1xf32>
      %16 = vector.broadcast %15 : vector<16x1xf32> to vector<16x128xf32>
      %17 = arith.subf %11, %16 : vector<16x128xf32>
      %18 = arith.mulf %17, %17 : vector<16x128xf32>
      %cst_12 = arith.constant dense<0.000000e+00> : vector<16xf32>
      %19 = vector.multi_reduction <add>, %18, %cst_12 [1] : vector<16x128xf32> to vector<16xf32>
      %20 = vector.shape_cast %19 : vector<16xf32> to vector<16x1xf32>
      %cst_13 = arith.constant 1.280000e+02 : f32
      %21 = vector.broadcast %cst_13 : f32 to vector<16x1xf32>
      %22 = arith.divf %20, %21 : vector<16x1xf32>
      %23 = vector.broadcast %15 : vector<16x1xf32> to vector<16x128xf32>
      %24 = arith.subf %11, %23 : vector<16x128xf32>
      %cst_14 = arith.constant 9.99999974E-6 : f32
      %25 = vector.broadcast %cst_14 : f32 to vector<16x1xf32>
      %26 = arith.addf %22, %25 : vector<16x1xf32>
      %27 = math.rsqrt %26 : vector<16x1xf32>
      %28 = vector.broadcast %27 : vector<16x1xf32> to vector<16x128xf32>
      %29 = arith.mulf %24, %28 : vector<16x128xf32>
      %c0_15 = arith.constant 0 : index
      %c0_16 = arith.constant 0 : index
      %30 = vector.load %arg3[%c0_15, %c0_16] : memref<1x128xf32, #tpu.memory_space<vmem>>, vector<1x128xf32>
      %31 = vector.broadcast %30 : vector<1x128xf32> to vector<16x128xf32>
      %32 = arith.mulf %29, %31 : vector<16x128xf32>
      %c0_17 = arith.constant 0 : index
      %c0_18 = arith.constant 0 : index
      %33 = vector.load %arg4[%c0_17, %c0_18] : memref<1x128xf32, #tpu.memory_space<vmem>>, vector<1x128xf32>
      %34 = vector.broadcast %33 : vector<1x128xf32> to vector<16x128xf32>
      %35 = arith.addf %32, %34 : vector<16x128xf32>
      %36 = arith.truncf %35 : vector<16x128xf32> to vector<16x128xbf16>
      %c0_19 = arith.constant 0 : index
      %c0_20 = arith.constant 0 : index
      %37 = vector.load %arg8[%c0_19, %c0_20] : memref<16x128xbf16, #tpu.memory_space<vmem>>, vector<16x128xbf16>
      tpu.vector_store %arg8[%c0_19, %c0_20], %36 {strides = array<i32>} : memref<16x128xbf16, #tpu.memory_space<vmem>>, vector<16x128xbf16>,
    } else {
    }
    %c0 = arith.constant 0 : index
    %c0_1 = arith.constant 0 : index
    %3 = vector.load %arg8[%c0, %c0_1] : memref<16x128xbf16, #tpu.memory_space<vmem>>, vector<16x128xbf16>
    %c0_2 = arith.constant 0 : index
    %c0_3 = arith.constant 0 : index
    %4 = vector.load %arg5[%c0_2, %c0_3] : memref<128x512xbf16, #tpu.memory_space<vmem>>, vector<128x512xbf16>
    %cst = arith.constant dense<0.000000e+00> : vector<16x512xf32>
    %5 = tpu.matmul %3, %4, %cst {dimension_numbers = #tpu.dot_dimension_numbers<[1], [0], [0], [1], [0, 0, 1, 1], [], []>} : vector<16x128xbf16>, vector<128x512xbf16>, vector<16x512xf32> -> vector<16x512xf32>
    %c0_4 = arith.constant 0 : index
    %c0_5 = arith.constant 0 : index
    %6 = vector.load %arg6[%c0_4, %c0_5] : memref<1x512xf32, #tpu.memory_space<vmem>>, vector<1x512xf32>
    %7 = vector.broadcast %6 : vector<1x512xf32> to vector<16x512xf32>
    %8 = arith.addf %5, %7 : vector<16x512xf32>
    %c0_6 = arith.constant 0 : index
    %c0_7 = arith.constant 0 : index
    %9 = vector.load %arg7[%c0_6, %c0_7] : memref<16x512xf32, #tpu.memory_space<vmem>>, vector<16x512xf32>
    tpu.vector_store %arg7[%c0_6, %c0_7], %8 {strides = array<i32>} : memref<16x512xf32, #tpu.memory_space<vmem>>, vector<16x512xf32>,
    return
  }
  func.func @transform_0(%arg0: i32, %arg1: i32) -> (i32, i32) {
    %c0_i32 = arith.constant 0 : i32
    %c0_i32_0 = arith.constant 0 : i32
    return %arg0, %c0_i32 : i32, i32
  }
  func.func @transform_1(%arg0: i32, %arg1: i32) -> (i32, i32) {
    %c0_i32 = arith.constant 0 : i32
    %c0_i32_0 = arith.constant 0 : i32
    %c0_i32_1 = arith.constant 0 : i32
    return %c0_i32, %c0_i32_0 : i32, i32
  }
  func.func @transform_2(%arg0: i32, %arg1: i32) -> (i32, i32) {
    %c0_i32 = arith.constant 0 : i32
    %c0_i32_0 = arith.constant 0 : i32
    %c0_i32_1 = arith.constant 0 : i32
    return %c0_i32, %c0_i32_0 : i32, i32
  }
  func.func @transform_3(%arg0: i32, %arg1: i32) -> (i32, i32) {
    %c0_i32 = arith.constant 0 : i32
    %c0_i32_0 = arith.constant 0 : i32
    return %c0_i32, %arg1 : i32, i32
  }
  func.func @transform_4(%arg0: i32, %arg1: i32) -> (i32, i32) {
    %c0_i32 = arith.constant 0 : i32
    %c0_i32_0 = arith.constant 0 : i32
    return %c0_i32, %arg1 : i32, i32
  }
  func.func @transform_5(%arg0: i32, %arg1: i32) -> (i32, i32) {
    %c0_i32 = arith.constant 0 : i32
    return %arg0, %arg1 : i32, i32
  }
}

</mosaic_0001>

<llo_original>
// kernel: _lambda_.33
$region0: #{_lambda_.33}
  #allocation0 [shape = 'u32[]', space=smem, size = 0x4, offset = 0x4, fixed_abs, tag = 'smem constant byte address 0x4 - core index']
  #allocation1 [shape = 'u32[144,128]{1,0:T(1,128)}', space=vmem, size = 0x12000, scoped, tag = 'internal scratch']
  %s0 = inlined_call_operand.vmem [shape: bf16[2,2,5,64], index: 0, kind: input, shape index: {}]
  %s1 = inlined_call_operand.vmem [shape: bf16[2,2,5,64], index: 1, kind: input, shape index: {}]
  %s2 = inlined_call_operand.vmem [shape: bf16[2,2,5,64], index: 2, kind: input, shape index: {}]
  %s3 = inlined_call_operand.vmem [shape: bf16[2,2,5,64], index: 3, kind: output, shape index: {}]
  %s4 = sld [smem:[#allocation0]]
  $region45: #{_lambda_.33} parent=0
    _
  %s6 = ssub.s32 1, %s4
  %s7 = scalar_select 0, %s6, %s4
  loop: start=0, step=1, limit=6
  $region2: #{_lambda_.33} parent=0 // loop_pre_header
    _
  $region3: #{_lambda_.33} parent=0 // loop_header
    %s9 = sphi 0, %s13
    %p10 = scmp.ge.s32.totalorder %s9, 6
    %s16 = sphi 0, %s28
    %s17 = sphi 0, %s24
    %s18 = sphi 0, %s16
    %s19 = sphi 0, %s17
    %s20 = sphi 0, %s18
    %s21 = sphi 0, %s19
    %s33 = sphi 0, %s35
    %s36 = sphi 0, %s33
    %s37 = sphi 0, %s36
    %s53 = sphi 0, %s37
    %s61 = sphi 0, %s63
    %s64 = sphi 0, %s61
    %s65 = sphi 0, %s64
    %s81 = sphi 0, %s65
    %s89 = sphi 0, %s91
    %s92 = sphi 0, %s89
    %s93 = sphi 0, %s92
    %s109 = sphi 0, %s93
    %s117 = sphi 0, %s119
    %s120 = sphi 0, %s117
    %s121 = sphi 0, %s120
    %s137 = sphi 0, %s121
  $region4: #{_lambda_.33} parent=0 // loop_header_branch
    %12 = sbr.rel (%p10) target = $region8
  $region5: #{_lambda_.33} parent=0 // loop_body
    %s14 = ssub.s32 %s9, 1
    %s15 = ssub.s32 %s9, 2
    %s22 = sadd.s32 1, %s17
    %p23 = scmp.ge.s32.totalorder %s22, 2
    %s24 = scalar_select %p23, 0, %s22
    %s25 = sadd.s32 1, %s16
    %s26 = scalar_select %p23, %s25, %s16
    %p27 = scmp.ge.s32.totalorder %s26, 2
    %s28 = scalar_select %p27, 0, %s26
    %s29 = ssub.s32 %s16, %s28
    %s30 = ssub.s32 %s17, %s24
    %s31 = sor.u32 %s29, %s30
    %p32 = scmp.eq.s32.totalorder %s31, 0
    %s34 = sadd.s32 %s33, 1
    %s35 = scalar_select %p32, %s33, %s34
    %p38 = pneg %p32
    %p39 = scmp.eq.s32.totalorder %s9, 3
    %p40 = por %p38, %p39
    %p41 = scmp.ne.s32.totalorder %s33, %s36
    %p42 = scmp.eq.s32.totalorder %s9, 0
    %p43 = por %p41, %p42
    %p44 = scmp.ne.s32.totalorder %s33, %s36
    %p45 = scmp.eq.s32.totalorder %s14, 3
    %p46 = por %p44, %p45
    %p47 = scmp.ne.s32.totalorder %s36, %s37
    %p48 = scmp.eq.s32.totalorder %s14, 0
    %p49 = por %p47, %p48
    %p50 = scmp.ne.s32.totalorder %s36, %s37
    %p51 = scmp.eq.s32.totalorder %s15, 3
    %p52 = por %p50, %p51
    %p54 = scmp.ne.s32.totalorder %s37, %s53
    %p55 = scmp.eq.s32.totalorder %s15, 0
    %p56 = por %p54, %p55
    %s57 = ssub.s32 %s16, %s28
    %s58 = ssub.s32 %s17, %s24
    %s59 = sor.u32 %s57, %s58
    %p60 = scmp.eq.s32.totalorder %s59, 0
    %s62 = sadd.s32 %s61, 1
    %s63 = scalar_select %p60, %s61, %s62
    %p66 = pneg %p60
    %p67 = scmp.eq.s32.totalorder %s9, 3
    %p68 = por %p66, %p67
    %p69 = scmp.ne.s32.totalorder %s61, %s64
    %p70 = scmp.eq.s32.totalorder %s9, 0
    %p71 = por %p69, %p70
    %p72 = scmp.ne.s32.totalorder %s61, %s64
    %p73 = scmp.eq.s32.totalorder %s14, 3
    %p74 = por %p72, %p73
    %p75 = scmp.ne.s32.totalorder %s64, %s65
    %p76 = scmp.eq.s32.totalorder %s14, 0
    %p77 = por %p75, %p76
    %p78 = scmp.ne.s32.totalorder %s64, %s65
    %p79 = scmp.eq.s32.totalorder %s15, 3
    %p80 = por %p78, %p79
    %p82 = scmp.ne.s32.totalorder %s65, %s81
    %p83 = scmp.eq.s32.totalorder %s15, 0
    %p84 = por %p82, %p83
    %s85 = ssub.s32 %s16, %s28
    %s86 = ssub.s32 %s17, %s24
    %s87 = sor.u32 %s85, %s86
    %p88 = scmp.eq.s32.totalorder %s87, 0
    %s90 = sadd.s32 %s89, 1
    %s91 = scalar_select %p88, %s89, %s90
    %p94 = pneg %p88
    %p95 = scmp.eq.s32.totalorder %s9, 3
    %p96 = por %p94, %p95
    %p97 = scmp.ne.s32.totalorder %s89, %s92
    %p98 = scmp.eq.s32.totalorder %s9, 0
    %p99 = por %p97, %p98
    %p100 = scmp.ne.s32.totalorder %s89, %s92
    %p101 = scmp.eq.s32.totalorder %s14, 3
    %p102 = por %p100, %p101
    %p103 = scmp.ne.s32.totalorder %s92, %s93
    %p104 = scmp.eq.s32.totalorder %s14, 0
    %p105 = por %p103, %p104
    %p106 = scmp.ne.s32.totalorder %s92, %s93
    %p107 = scmp.eq.s32.totalorder %s15, 3
    %p108 = por %p106, %p107
    %p110 = scmp.ne.s32.totalorder %s93, %s109
    %p111 = scmp.eq.s32.totalorder %s15, 0
    %p112 = por %p110, %p111
    %s113 = ssub.s32 %s16, %s28
    %s114 = ssub.s32 %s17, %s24
    %s115 = sor.u32 %s113, %s114
    %p116 = scmp.eq.s32.totalorder %s115, 0
    %s118 = sadd.s32 %s117, 1
    %s119 = scalar_select %p116, %s117, %s118
    %p122 = pneg %p116
    %p123 = scmp.eq.s32.totalorder %s9, 3
    %p124 = por %p122, %p123
    %p125 = scmp.ne.s32.totalorder %s117, %s120
    %p126 = scmp.eq.s32.totalorder %s9, 0
    %p127 = por %p125, %p126
    %p128 = scmp.ne.s32.totalorder %s117, %s120
    %p129 = scmp.eq.s32.totalorder %s14, 3
    %p130 = por %p128, %p129
    %p131 = scmp.ne.s32.totalorder %s120, %s121
    %p132 = scmp.eq.s32.totalorder %s14, 0
    %p133 = por %p131, %p132
    %p134 = scmp.ne.s32.totalorder %s120, %s121
    %p135 = scmp.eq.s32.totalorder %s15, 3
    %p136 = por %p134, %p135
    %p138 = scmp.ne.s32.totalorder %s121, %s137
    %p139 = scmp.eq.s32.totalorder %s15, 0
    %p140 = por %p138, %p139
    %p141 = scmp.le.s32.totalorder 1, %s9
    %p142 = scmp.lt.s32.totalorder %s9, 5
    %p143 = pnand %p141, %p142
    %p144 = pneg %p143
    // Predicated region
    $region9: #{_lambda_.33} parent=5 // pred_check
      _
    $region10: #{_lambda_.33} parent=5 // pred_check_branch
      %146 = sbr.rel (%p143) target = $region12
    $region11: #{_lambda_.33} parent=5 // pred_region
      %s147 = ssub.s32 %s9, 1
    $region12: #{_lambda_.33} parent=5 // pred_fallthru
      _
    %p148 = scmp.lt.s32.totalorder %s9, 4
    // Predicated region
    $region13: #{_lambda_.33} parent=5 // pred_check
      %p149 = pneg %p148
    $region14: #{_lambda_.33} parent=5 // pred_check_branch
      %151 = sbr.rel (%p149) target = $region16
    $region15: #{_lambda_.33} parent=5 // pred_region
      // Predicated region
      $region17: #{_lambda_.33} parent=15 // pred_check
        %p152 = pneg %p43
      $region18: #{_lambda_.33} parent=15 // pred_check_branch
        %154 = sbr.rel (%p152) target = $region20
      $region19: #{_lambda_.33} parent=15 // pred_region
        %p155 = scmp.lt.s32.totalorder %s16, 1
        %s156 = scalar_select %p155, %s16, 1
        %p157 = scmp.lt.s32.totalorder %s17, 1
        %s158 = scalar_select %p157, %s17, 1
        %s159 = smul.addr %s156, 2
        %s160 = sadd.s32 %s158, %s159
        %s161 = smul.addr %s160, 4
        %s162 = scalar_lea.vmem %s0, %s161
      $region20: #{_lambda_.33} parent=15 // pred_fallthru
        _
      // Predicated region
      $region21: #{_lambda_.33} parent=15 // pred_check
        %p163 = pneg %p71
      $region22: #{_lambda_.33} parent=15 // pred_check_branch
        %165 = sbr.rel (%p163) target = $region24
      $region23: #{_lambda_.33} parent=15 // pred_region
        %p166 = scmp.lt.s32.totalorder %s16, 1
        %s167 = scalar_select %p166, %s16, 1
        %p168 = scmp.lt.s32.totalorder %s17, 1
        %s169 = scalar_select %p168, %s17, 1
        %s170 = smul.addr %s167, 2
        %s171 = sadd.s32 %s169, %s170
        %s172 = smul.addr %s171, 4
        %s173 = scalar_lea.vmem %s1, %s172
      $region24: #{_lambda_.33} parent=15 // pred_fallthru
        _
      // Predicated region
      $region25: #{_lambda_.33} parent=15 // pred_check
        %p174 = pneg %p99
      $region26: #{_lambda_.33} parent=15 // pred_check_branch
        %176 = sbr.rel (%p174) target = $region28
      $region27: #{_lambda_.33} parent=15 // pred_region
        %p177 = scmp.lt.s32.totalorder %s16, 1
        %s178 = scalar_select %p177, %s16, 1
        %p179 = scmp.lt.s32.totalorder %s17, 1
        %s180 = scalar_select %p179, %s17, 1
        %s181 = smul.addr %s178, 2
        %s182 = sadd.s32 %s180, %s181
        %s183 = smul.addr %s182, 4
        %s184 = scalar_lea.vmem %s2, %s183
      $region28: #{_lambda_.33} parent=15 // pred_fallthru
        _
    $region16: #{_lambda_.33} parent=5 // pred_fallthru
      _
    %p185 = scmp.le.s32.totalorder 1, %s9
    %p186 = scmp.lt.s32.totalorder %s9, 5
    %p187 = pnand %p185, %p186
    %p188 = pneg %p187
    // Predicated region
    $region29: #{_lambda_.33} parent=5 // pred_check
      _
    $region30: #{_lambda_.33} parent=5 // pred_check_branch
      %190 = sbr.rel (%p187) target = $region32
    $region31: #{_lambda_.33} parent=5 // pred_region
      %s191 = ssub.s32 %s9, 1
      %p192 = scmp.lt.s32.totalorder %s18, 1
      %s193 = scalar_select %p192, %s18, 1
      %p194 = scmp.lt.s32.totalorder %s19, 1
      %s195 = scalar_select %p194, %s19, 1
      %s196 = smul.addr %s193, 2
      %s197 = sadd.s32 %s195, %s196
      %s198 = smul.addr %s197, 4
      %s199 = scalar_lea.vmem %s0, %s198
      %p200 = pneg %p49
      %p201 = pneg %p46
      %p202 = scmp.lt.s32.totalorder %s18, 1
      %s203 = scalar_select %p202, %s18, 1
      %p204 = scmp.lt.s32.totalorder %s19, 1
      %s205 = scalar_select %p204, %s19, 1
      %s206 = smul.addr %s203, 2
      %s207 = sadd.s32 %s205, %s206
      %s208 = smul.addr %s207, 4
      %s209 = scalar_lea.vmem %s1, %s208
      %p210 = pneg %p77
      %p211 = pneg %p74
      %p212 = scmp.lt.s32.totalorder %s18, 1
      %s213 = scalar_select %p212, %s18, 1
      %p214 = scmp.lt.s32.totalorder %s19, 1
      %s215 = scalar_select %p214, %s19, 1
      %s216 = smul.addr %s213, 2
      %s217 = sadd.s32 %s215, %s216
      %s218 = smul.addr %s217, 4
      %s219 = scalar_lea.vmem %s2, %s218
      %p220 = pneg %p105
      %p221 = pneg %p102
      %p222 = pneg %p133
      %p223 = pneg %p130
      %p224 = scmp.lt.s32.totalorder %s18, 1
      %s225 = scalar_select %p224, %s18, 1
      %p226 = scmp.lt.s32.totalorder %s19, 1
      %s227 = scalar_select %p226, %s19, 1
      %s228 = smul.addr %s225, 2
      %s229 = sadd.s32 %s227, %s228
      %s230 = smul.addr %s229, 4
      %s231 = scalar_lea.vmem %s3, %s230
      %p232 = scmp.lt.s32.totalorder %s18, 1
      %s233 = scalar_select %p232, %s18, 1
      %p234 = scmp.lt.s32.totalorder %s19, 1
      %s235 = scalar_select %p234, %s19, 1
      %s236 = smul.addr %s233, 2
      %s237 = sadd.s32 %s235, %s236
      %s238 = smul.addr %s237, 4
      %s239 = scalar_lea.vmem %s0, %s238
      %p240 = scmp.lt.s32.totalorder %s18, 1
      %s241 = scalar_select %p240, %s18, 1
      %p242 = scmp.lt.s32.totalorder %s19, 1
      %s243 = scalar_select %p242, %s19, 1
      %s244 = smul.addr %s241, 2
      %s245 = sadd.s32 %s243, %s244
      %s246 = smul.addr %s245, 4
      %s247 = scalar_lea.vmem %s1, %s246
      %p248 = scmp.lt.s32.totalorder %s18, 1
      %s249 = scalar_select %p248, %s18, 1
      %p250 = scmp.lt.s32.totalorder %s19, 1
      %s251 = scalar_select %p250, %s19, 1
      %s252 = smul.addr %s249, 2
      %s253 = sadd.s32 %s251, %s252
      %s254 = smul.addr %s253, 4
      %s255 = scalar_lea.vmem %s2, %s254
      %p256 = scmp.lt.s32.totalorder %s18, 1
      %s257 = scalar_select %p256, %s18, 1
      %p258 = scmp.lt.s32.totalorder %s19, 1
      %s259 = scalar_select %p258, %s19, 1
      %s260 = smul.addr %s257, 2
      %s261 = sadd.s32 %s259, %s260
      %s262 = smul.addr %s261, 4
      %s263 = scalar_lea.vmem %s3, %s262
      %v265 = vld [vmem:[%s239] sm:$0x7]
      %v266 = vld [vmem:[%s247] sm:$0x7]
      %v267 = vld [vmem:[%s255] sm:$0x7]
      %vm268 = vcmask 523264
      %v270 = vsel %vm268, %v265, 0
      %v273 = vsel %vm268, %v266, 0
      %275 = vmatprep.subr.bf16.mxu0 0
      %276 = vmatpush1.bf16.xpose.msra.mxu0 %v273
      %277 = vmatprep.subr.bf16.mxu0 0
      %278 = vmatpush1.bf16.xpose.msra.mxu0 0
      %279 = vmatprep.subr.bf16.mxu0 0
      %280 = vmatpush1.bf16.xpose.msra.mxu0 0
      %281 = vmatprep.subr.bf16.mxu0 0
      %282 = vmatpush1.bf16.xpose.msra.mxu0 0
      %283 = vmatprep.subr.bf16.mxu0 0
      %284 = vmatpush1.bf16.xpose.msra.mxu0 0
      %285 = vmatprep.subr.bf16.mxu0 0
      %286 = vmatpush1.bf16.xpose.msra.mxu0 0
      %287 = vmatprep.subr.bf16.mxu0 0
      %288 = vmatpush1.bf16.xpose.msra.mxu0 0
      %289 = vmatprep.subr.bf16.mxu0 0
      %290 = vmatpush1.bf16.xpose.msra.mxu0 0
      %291 = vmatprep.subr.bf16.mxu0 0
      %292 = vmatpush1.bf16.xpose.msra.mxu0 0
      %293 = vmatprep.subr.bf16.mxu0 0
      %294 = vmatpush1.bf16.xpose.msra.mxu0 0
      %295 = vmatprep.subr.bf16.mxu0 0
      %296 = vmatpush1.bf16.xpose.msra.mxu0 0
      %297 = vmatprep.subr.bf16.mxu0 0
      %298 = vmatpush1.bf16.xpose.msra.mxu0 0
      %299 = vmatprep.subr.bf16.mxu0 0
      %300 = vmatpush1.bf16.xpose.msra.mxu0 0
      %301 = vmatprep.subr.bf16.mxu0 0
      %302 = vmatpush1.bf16.xpose.msra.mxu0 0
      %303 = vmatprep.subr.bf16.mxu0 0
      %304 = vmatpush1.bf16.xpose.msra.mxu0 0
      %305 = vmatprep.subr.bf16.mxu0 0
      %306 = vmatpush1.bf16.xpose.msra.mxu0 0
      %307 = vmatprep.mubr.bf16.mxu0 0
      %308 = vmatmul.mubr.bf16.gmra.mrb[0].mxu0 %v270
      %v309 = vpop.f32.mrb[0].mxu0
      %v310 = vadd.f32 0.0, %v309
      %v311 = vpop.f32.mrb[0].mxu0
      %v312 = vpop.f32.mrb[0].mxu0
      %v313 = vpop.f32.mrb[0].mxu0
      %314 = vdwg.mxu0
      %v315 = vmul.f32 %v310, 0.125
      %vm316 = vcmask 36864
      %v317 = vsel %vm316, %v315, -inf
      %318 = vmax.xlane.f32.xlu0 %v317
      %v319 = vpop.xlane.xlu0 %318
      %v320 = vsub.f32 %v315, %v319
      %v321 = vmul.f32 %v320, 1.442695
      %v322 = vpow.pop %v321
      %v323 = vsel %vm316, %v322, 0.0
      %324 = vadd.xlane.f32.xlu0 %v323
      %v325 = vpop.xlane.xlu0 %324
      %v326 = vrcp.pop %v325
      %v327 = vmul.f32 %v322, %v326
      %v328 = vpack.c.bf16 %v327, %v327
      %vm329 = vcmask 39936
      %v331 = vsel %vm329, %v328, 0
      %vm333 = vcmask 1041408
      %vm334 = vcmask 1042432
      %v335 = vsel %vm333, 4294967295, 65535
      %v336 = vsel %vm334, %v335, 0
      %v338 = vand.u32 %v267, %v336
      %340 = vmatprep.subr.bf16.mxu0 0
      %341 = vmatpush1.bf16.msra.mxu0 %v338
      %342 = vmatprep.subr.bf16.mxu0 0
      %343 = vmatpush1.bf16.msra.mxu0 0
      %344 = vmatprep.subr.bf16.mxu0 0
      %345 = vmatpush1.bf16.msra.mxu0 0
      %346 = vmatprep.subr.bf16.mxu0 0
      %347 = vmatpush1.bf16.msra.mxu0 0
      %348 = vmatprep.subr.bf16.mxu0 0
      %349 = vmatpush1.bf16.msra.mxu0 0
      %350 = vmatprep.subr.bf16.mxu0 0
      %351 = vmatpush1.bf16.msra.mxu0 0
      %352 = vmatprep.subr.bf16.mxu0 0
      %353 = vmatpush1.bf16.msra.mxu0 0
      %354 = vmatprep.subr.bf16.mxu0 0
      %355 = vmatpush1.bf16.msra.mxu0 0
      %356 = vmatprep.subr.bf16.mxu0 0
      %357 = vmatpush1.bf16.msra.mxu0 0
      %358 = vmatprep.subr.bf16.mxu0 0
      %359 = vmatpush1.bf16.msra.mxu0 0
      %360 = vmatprep.subr.bf16.mxu0 0
      %361 = vmatpush1.bf16.msra.mxu0 0
      %362 = vmatprep.subr.bf16.mxu0 0
      %363 = vmatpush1.bf16.msra.mxu0 0
      %364 = vmatprep.subr.bf16.mxu0 0
      %365 = vmatpush1.bf16.msra.mxu0 0
      %366 = vmatprep.subr.bf16.mxu0 0
      %367 = vmatpush1.bf16.msra.mxu0 0
      %368 = vmatprep.subr.bf16.mxu0 0
      %369 = vmatpush1.bf16.msra.mxu0 0
      %370 = vmatprep.subr.bf16.mxu0 0
      %371 = vmatpush1.bf16.msra.mxu0 0
      %372 = vmatprep.mubr.bf16.mxu0 0
      %373 = vmatmul.mubr.bf16.gmra.mrb[0].mxu0 %v331
      %v374 = vpop.f32.mrb[0].mxu0
      %v375 = vadd.f32 0.0, %v374
      %v376 = vpop.f32.mrb[0].mxu0
      %v377 = vpop.f32.mrb[0].mxu0
      %v378 = vpop.f32.mrb[0].mxu0
      %379 = vdwg.mxu0
      %v380 = vpack.c.bf16 %v375, %v375
      %vm381 = vcmask 518144
      %vm382 = vsmask.f32 2304
      %vm383 = vmand %vm381, %vm382
      %v384 = vld [vmem:[%s263] sm:$0x7]
      %v385 = vsel %vm383, %v380, %v384
      %386 = vst [vmem:[%s263] sm:$0x7] %v385
      %p387 = scmp.lt.s32.totalorder %s18, 1
      %s388 = scalar_select %p387, %s18, 1
      %p389 = scmp.lt.s32.totalorder %s19, 1
      %s390 = scalar_select %p389, %s19, 1
      %s391 = smul.addr %s388, 2
      %s392 = sadd.s32 %s390, %s391
      %s393 = smul.addr %s392, 4
      %s394 = scalar_lea.vmem %s3, %s393
      // Predicated region
      $region33: #{_lambda_.33} parent=31 // pred_check
        %p395 = pneg %p130
      $region34: #{_lambda_.33} parent=31 // pred_check_branch
        %397 = sbr.rel (%p395) target = $region36
      $region35: #{_lambda_.33} parent=31 // pred_region
        _
      $region36: #{_lambda_.33} parent=31 // pred_fallthru
        _
    $region32: #{_lambda_.33} parent=5 // pred_fallthru
      _
    %p398 = scmp.le.s32.totalorder 2, %s9
    // Predicated region
    $region37: #{_lambda_.33} parent=5 // pred_check
      %p399 = pneg %p398
    $region38: #{_lambda_.33} parent=5 // pred_check_branch
      %401 = sbr.rel (%p399) target = $region40
    $region39: #{_lambda_.33} parent=5 // pred_region
      %s402 = ssub.s32 %s9, 2
      // Predicated region
      $region41: #{_lambda_.33} parent=39 // pred_check
        %p403 = pneg %p136
      $region42: #{_lambda_.33} parent=39 // pred_check_branch
        %405 = sbr.rel (%p403) target = $region44
      $region43: #{_lambda_.33} parent=39 // pred_region
        %p406 = scmp.lt.s32.totalorder %s20, 1
        %s407 = scalar_select %p406, %s20, 1
        %p408 = scmp.lt.s32.totalorder %s21, 1
        %s409 = scalar_select %p408, %s21, 1
        %s410 = smul.addr %s407, 2
        %s411 = sadd.s32 %s409, %s410
        %s412 = smul.addr %s411, 4
        %s413 = scalar_lea.vmem %s3, %s412
      $region44: #{_lambda_.33} parent=39 // pred_fallthru
        _
    $region40: #{_lambda_.33} parent=5 // pred_fallthru
      _
  $region6: #{_lambda_.33} parent=0 // loop_footer
    %s13 = sadd.s32 1, %s9
  $region7: #{_lambda_.33} parent=0 // loop_footer_branch
    %8 = sbr.rel target = $region3
  $region8: #{_lambda_.33} parent=0 // loop_exit
    _

// kernel: _lambda_.34
$region0: #{_lambda_.34}
  #allocation0 [shape = 'u32[]', space=smem, size = 0x4, offset = 0x4, fixed_abs, tag = 'smem constant byte address 0x4 - core index']
  #allocation1 [shape = 'u32[144,128]{1,0:T(1,128)}', space=vmem, size = 0x12000, scoped, tag = 'internal scratch']
  #allocation2 [shape = 'f32[10,128]{1,0:T(8,128)}', space=vmem, size = 0x2000, scoped, tag = 'scratch operand']
  %s0 = inlined_call_operand.vmem [shape: bf16[10,128], index: 0, kind: input, shape index: {}]
  %s1 = inlined_call_operand.vmem [shape: bf16[128,128], index: 1, kind: input, shape index: {}]
  %s2 = inlined_call_operand.vmem [shape: f32[1,128], index: 2, kind: input, shape index: {}]
  %s3 = inlined_call_operand.vmem [shape: bf16[10,128], index: 3, kind: input, shape index: {}]
  %s4 = inlined_call_operand.vmem [shape: bf16[10,128], index: 4, kind: output, shape index: {}]
  %s5 = sld [smem:[#allocation0]]
  $region34: #{_lambda_.34} parent=0
    _
  %s7 = ssub.s32 1, %s5
  %s8 = scalar_select 0, %s7, %s5
  // Predicated region
  $region2: #{_lambda_.34} parent=0 // pred_check
    _
  $region3: #{_lambda_.34} parent=0 // pred_check_branch
    %10 = sbr.rel (0) target = $region5
  $region4: #{_lambda_.34} parent=0 // pred_region
    _
  $region5: #{_lambda_.34} parent=0 // pred_fallthru
    _
  // Predicated region
  $region6: #{_lambda_.34} parent=0 // pred_check
    _
  $region7: #{_lambda_.34} parent=0 // pred_check_branch
    %12 = sbr.rel (0) target = $region9
  $region8: #{_lambda_.34} parent=0 // pred_region
    _
  $region9: #{_lambda_.34} parent=0 // pred_fallthru
    _
  // Predicated region
  $region10: #{_lambda_.34} parent=0 // pred_check
    _
  $region11: #{_lambda_.34} parent=0 // pred_check_branch
    %14 = sbr.rel (0) target = $region13
  $region12: #{_lambda_.34} parent=0 // pred_region
    _
  $region13: #{_lambda_.34} parent=0 // pred_fallthru
    _
  // Predicated region
  $region14: #{_lambda_.34} parent=0 // pred_check
    _
  $region15: #{_lambda_.34} parent=0 // pred_check_branch
    %16 = sbr.rel (0) target = $region17
  $region16: #{_lambda_.34} parent=0 // pred_region
    _
  $region17: #{_lambda_.34} parent=0 // pred_fallthru
    _
  %p18 = scmp.eq.s32.totalorder 0, 0
  // Predicated region
  $region18: #{_lambda_.34} parent=0 // pred_check
    %p19 = pneg %p18
  $region19: #{_lambda_.34} parent=0 // pred_check_branch
    %21 = sbr.rel (%p19) target = $region21
  $region20: #{_lambda_.34} parent=0 // pred_region
    %22 = vst [vmem:[#allocation2] sm:$0xff] 0.0
    %23 = vst [vmem:[#allocation2 + $0x8] sm:$0x3] 0.0
  $region21: #{_lambda_.34} parent=0 // pred_fallthru
    _
  %v24 = vld [vmem:[#allocation2] sm:$0xff]
  %v25 = vld [vmem:[#allocation2 + $0x8] sm:$0x3]
  %v26 = vld [vmem:[%s0] sm:$0xf]
  %v27 = vld [vmem:[%s0 + $0x4] sm:$0x1]
  %v28 = vld [vmem:[%s1] sm:$0xf]
  %v29 = vld [vmem:[%s1 + $0x4] sm:$0xf]
  %v30 = vld [vmem:[%s1 + $0x8] sm:$0xf]
  %v31 = vld [vmem:[%s1 + $0xc] sm:$0xf]
  %v32 = vld [vmem:[%s1 + $0x10] sm:$0xf]
  %v33 = vld [vmem:[%s1 + $0x14] sm:$0xf]
  %v34 = vld [vmem:[%s1 + $0x18] sm:$0xf]
  %v35 = vld [vmem:[%s1 + $0x1c] sm:$0xf]
  %v36 = vld [vmem:[%s1 + $0x20] sm:$0xf]
  %v37 = vld [vmem:[%s1 + $0x24] sm:$0xf]
  %v38 = vld [vmem:[%s1 + $0x28] sm:$0xf]
  %v39 = vld [vmem:[%s1 + $0x2c] sm:$0xf]
  %v40 = vld [vmem:[%s1 + $0x30] sm:$0xf]
  %v41 = vld [vmem:[%s1 + $0x34] sm:$0xf]
  %v42 = vld [vmem:[%s1 + $0x38] sm:$0xf]
  %v43 = vld [vmem:[%s1 + $0x3c] sm:$0xf]
  %v46 = vunpack.c.l.b16 %v26
  %v47 = vunpack.c.l.b16 %v27
  %v48 = vpack.c.b16 %v47, %v46
  %v66 = vunpack.c.l.b16 %v28
  %v67 = vunpack.c.l.b16 %v29
  %v68 = vunpack.c.l.b16 %v30
  %v69 = vunpack.c.l.b16 %v31
  %v70 = vunpack.c.l.b16 %v32
  %v71 = vunpack.c.l.b16 %v33
  %v72 = vunpack.c.l.b16 %v34
  %v73 = vunpack.c.l.b16 %v35
  %v74 = vunpack.c.l.b16 %v36
  %v75 = vunpack.c.l.b16 %v37
  %v76 = vunpack.c.l.b16 %v38
  %v77 = vunpack.c.l.b16 %v39
  %v78 = vunpack.c.l.b16 %v40
  %v79 = vunpack.c.l.b16 %v41
  %v80 = vunpack.c.l.b16 %v42
  %v81 = vunpack.c.l.b16 %v43
  %v82 = vpack.c.b16 %v67, %v66
  %v83 = vpack.c.b16 %v69, %v68
  %v84 = vpack.c.b16 %v71, %v70
  %v85 = vpack.c.b16 %v73, %v72
  %v86 = vpack.c.b16 %v75, %v74
  %v87 = vpack.c.b16 %v77, %v76
  %v88 = vpack.c.b16 %v79, %v78
  %v89 = vpack.c.b16 %v81, %v80
  %98 = vmatprep.subr.bf16.mxu0 0
  %99 = vmatpush1.bf16.msra.mxu0 %v82
  %100 = vmatprep.subr.bf16.mxu0 0
  %101 = vmatpush1.bf16.msra.mxu0 %v83
  %102 = vmatprep.subr.bf16.mxu0 0
  %103 = vmatpush1.bf16.msra.mxu0 %v84
  %104 = vmatprep.subr.bf16.mxu0 0
  %105 = vmatpush1.bf16.msra.mxu0 %v85
  %106 = vmatprep.subr.bf16.mxu0 0
  %107 = vmatpush1.bf16.msra.mxu0 %v86
  %108 = vmatprep.subr.bf16.mxu0 0
  %109 = vmatpush1.bf16.msra.mxu0 %v87
  %110 = vmatprep.subr.bf16.mxu0 0
  %111 = vmatpush1.bf16.msra.mxu0 %v88
  %112 = vmatprep.subr.bf16.mxu0 0
  %113 = vmatpush1.bf16.msra.mxu0 %v89
  %114 = vmatprep.subr.bf16.mxu0 0
  %115 = vmatpush1.bf16.msra.mxu0 0
  %116 = vmatprep.subr.bf16.mxu0 0
  %117 = vmatpush1.bf16.msra.mxu0 0
  %118 = vmatprep.subr.bf16.mxu0 0
  %119 = vmatpush1.bf16.msra.mxu0 0
  %120 = vmatprep.subr.bf16.mxu0 0
  %121 = vmatpush1.bf16.msra.mxu0 0
  %122 = vmatprep.subr.bf16.mxu0 0
  %123 = vmatpush1.bf16.msra.mxu0 0
  %124 = vmatprep.subr.bf16.mxu0 0
  %125 = vmatpush1.bf16.msra.mxu0 0
  %126 = vmatprep.subr.bf16.mxu0 0
  %127 = vmatpush1.bf16.msra.mxu0 0
  %128 = vmatprep.subr.bf16.mxu0 0
  %129 = vmatpush1.bf16.msra.mxu0 0
  %130 = vmatprep.mubr.bf16.mxu0 0
  %131 = vmatmul.mubr.bf16.gmra.mrb[0].mxu0 %v48
  %v132 = vpop.f32.mrb[0].mxu0
  %v133 = vadd.f32 0.0, %v132
  %v134 = vpop.f32.mrb[0].mxu0
  %v135 = vpop.f32.mrb[0].mxu0
  %v136 = vadd.f32 0.0, %v135
  %v137 = vpop.f32.mrb[0].mxu0
  %138 = vdwg.mxu0
  %v139 = vadd.f32 %v24, %v133
  %v140 = vadd.f32 %v25, %v136
  %141 = vst [vmem:[#allocation2] sm:$0xff] %v139
  %142 = vst [vmem:[#allocation2 + $0x8] sm:$0x3] %v140
  // Predicated region
  $region22: #{_lambda_.34} parent=0 // pred_check
    %p143 = pneg %p18
  $region23: #{_lambda_.34} parent=0 // pred_check_branch
    %145 = sbr.rel (%p143) target = $region25
  $region24: #{_lambda_.34} parent=0 // pred_region
    %v146 = vld [vmem:[#allocation2] sm:$0xff]
    %v147 = vld [vmem:[#allocation2 + $0x8] sm:$0x3]
    %v148 = vld [vmem:[%s2] sm:$0x1]
    %v150 = vlaneseq
    %v151 = vshrl.u32 %v150, 7
    %v152 = vsub.s32 0, %v151
    %v153 = vrot.slane %v148, %v152
    %v155 = vadd.f32 %v146, %v153
    %v156 = vadd.f32 %v147, %v153
    %v157 = vld [vmem:[%s3] sm:$0xf]
    %v158 = vld [vmem:[%s3 + $0x4] sm:$0x1]
    %v159 = vunpack.c.l.bf16 %v157
    %v160 = vunpack.c.l.bf16 %v158
    %v161 = vadd.f32 %v155, %v159
    %v162 = vadd.f32 %v156, %v160
    %v163 = vpack.c.bf16 %v162, %v161
    %v165 = vunpack.c.l.b16 %v163
    %v166 = vunpack.c.h.b16 %v163
    %v167 = vpack.c.b16 %v165, %v165
    %v168 = vpack.c.b16 %v166, %v166
    %171 = vst [vmem:[%s4] sm:$0xf] %v167
    %172 = vst [vmem:[%s4 + $0x4] sm:$0x1] %v168
  $region25: #{_lambda_.34} parent=0 // pred_fallthru
    _
  // Predicated region
  $region26: #{_lambda_.34} parent=0 // pred_check
    _
  $region27: #{_lambda_.34} parent=0 // pred_check_branch
    %174 = sbr.rel (0) target = $region29
  $region28: #{_lambda_.34} parent=0 // pred_region
    _
  $region29: #{_lambda_.34} parent=0 // pred_fallthru
    _
  // Predicated region
  $region30: #{_lambda_.34} parent=0 // pred_check
    _
  $region31: #{_lambda_.34} parent=0 // pred_check_branch
    %176 = sbr.rel (0) target = $region33
  $region32: #{_lambda_.34} parent=0 // pred_region
    _
  $region33: #{_lambda_.34} parent=0 // pred_fallthru
    _

// kernel: _lambda_.31
$region0: #{_lambda_.31}
  #allocation0 [shape = 'u32[]', space=smem, size = 0x4, offset = 0x4, fixed_abs, tag = 'smem constant byte address 0x4 - core index']
  #allocation1 [shape = 'u32[144,128]{1,0:T(1,128)}', space=vmem, size = 0x12000, scoped, tag = 'internal scratch']
  #allocation2 [shape = 'f32[8,128]{1,0:T(8,128)}', space=vmem, size = 0x1000, scoped, tag = 'scratch operand']
  %s0 = inlined_call_operand.vmem [shape: bf16[8,768], index: 0, kind: input, shape index: {}]
  %s1 = inlined_call_operand.vmem [shape: bf16[768,128], index: 1, kind: input, shape index: {}]
  %s2 = inlined_call_operand.vmem [shape: f32[1,128], index: 2, kind: input, shape index: {}]
  %s3 = inlined_call_operand.vmem [shape: bf16[8,128], index: 3, kind: output, shape index: {}]
  %s4 = sld [smem:[#allocation0]]
  $region53: #{_lambda_.31} parent=0
    _
  %s6 = ssub.s32 1, %s4
  %s7 = scalar_select 0, %s6, %s4
  loop: start=0, step=1, limit=4
  $region2: #{_lambda_.31} parent=0 // loop_pre_header
    _
  $region3: #{_lambda_.31} parent=0 // loop_header
    %s9 = sphi 0, %s13
    %p10 = scmp.ge.s32.totalorder %s9, 4
    %s16 = sphi 0, %s35
    %s17 = sphi 0, %s31
    %s18 = sphi 0, %s27
    %s19 = sphi 0, %s16
    %s20 = sphi 0, %s17
    %s21 = sphi 0, %s18
    %s22 = sphi 0, %s19
    %s23 = sphi 0, %s20
    %s24 = sphi 0, %s21
    %s40 = sphi 0, %s42
    %s43 = sphi 0, %s40
    %s44 = sphi 0, %s43
    %s60 = sphi 0, %s44
    %s68 = sphi 0, %s70
    %s71 = sphi 0, %s68
    %s72 = sphi 0, %s71
    %s88 = sphi 0, %s72
    %s94 = sphi 0, %s96
    %s97 = sphi 0, %s94
    %s98 = sphi 0, %s97
    %s114 = sphi 0, %s98
    %s122 = sphi 0, %s124
    %s125 = sphi 0, %s122
    %s126 = sphi 0, %s125
    %s142 = sphi 0, %s126
  $region4: #{_lambda_.31} parent=0 // loop_header_branch
    %12 = sbr.rel (%p10) target = $region8
  $region5: #{_lambda_.31} parent=0 // loop_body
    %s14 = ssub.s32 %s9, 1
    %s15 = ssub.s32 %s9, 2
    %s25 = sadd.s32 1, %s18
    %p26 = scmp.ge.s32.totalorder %s25, 2
    %s27 = scalar_select %p26, 0, %s25
    %s28 = sadd.s32 1, %s17
    %s29 = scalar_select %p26, %s28, %s17
    %p30 = scmp.ge.s32.totalorder %s29, 1
    %s31 = scalar_select %p30, 0, %s29
    %s32 = sadd.s32 1, %s16
    %s33 = scalar_select %p30, %s32, %s16
    %p34 = scmp.ge.s32.totalorder %s33, 1
    %s35 = scalar_select %p34, 0, %s33
    %s36 = ssub.s32 %s16, %s35
    %s37 = ssub.s32 %s18, %s27
    %s38 = sor.u32 %s36, %s37
    %p39 = scmp.eq.s32.totalorder %s38, 0
    %s41 = sadd.s32 %s40, 1
    %s42 = scalar_select %p39, %s40, %s41
    %p45 = pneg %p39
    %p46 = scmp.eq.s32.totalorder %s9, 1
    %p47 = por %p45, %p46
    %p48 = scmp.ne.s32.totalorder %s40, %s43
    %p49 = scmp.eq.s32.totalorder %s9, 0
    %p50 = por %p48, %p49
    %p51 = scmp.ne.s32.totalorder %s40, %s43
    %p52 = scmp.eq.s32.totalorder %s14, 1
    %p53 = por %p51, %p52
    %p54 = scmp.ne.s32.totalorder %s43, %s44
    %p55 = scmp.eq.s32.totalorder %s14, 0
    %p56 = por %p54, %p55
    %p57 = scmp.ne.s32.totalorder %s43, %s44
    %p58 = scmp.eq.s32.totalorder %s15, 1
    %p59 = por %p57, %p58
    %p61 = scmp.ne.s32.totalorder %s44, %s60
    %p62 = scmp.eq.s32.totalorder %s15, 0
    %p63 = por %p61, %p62
    %s64 = ssub.s32 %s18, %s27
    %s65 = ssub.s32 %s17, %s31
    %s66 = sor.u32 %s64, %s65
    %p67 = scmp.eq.s32.totalorder %s66, 0
    %s69 = sadd.s32 %s68, 1
    %s70 = scalar_select %p67, %s68, %s69
    %p73 = pneg %p67
    %p74 = scmp.eq.s32.totalorder %s9, 1
    %p75 = por %p73, %p74
    %p76 = scmp.ne.s32.totalorder %s68, %s71
    %p77 = scmp.eq.s32.totalorder %s9, 0
    %p78 = por %p76, %p77
    %p79 = scmp.ne.s32.totalorder %s68, %s71
    %p80 = scmp.eq.s32.totalorder %s14, 1
    %p81 = por %p79, %p80
    %p82 = scmp.ne.s32.totalorder %s71, %s72
    %p83 = scmp.eq.s32.totalorder %s14, 0
    %p84 = por %p82, %p83
    %p85 = scmp.ne.s32.totalorder %s71, %s72
    %p86 = scmp.eq.s32.totalorder %s15, 1
    %p87 = por %p85, %p86
    %p89 = scmp.ne.s32.totalorder %s72, %s88
    %p90 = scmp.eq.s32.totalorder %s15, 0
    %p91 = por %p89, %p90
    %s92 = ssub.s32 %s17, %s31
    %p93 = scmp.eq.s32.totalorder %s92, 0
    %s95 = sadd.s32 %s94, 1
    %s96 = scalar_select %p93, %s94, %s95
    %p99 = pneg %p93
    %p100 = scmp.eq.s32.totalorder %s9, 1
    %p101 = por %p99, %p100
    %p102 = scmp.ne.s32.totalorder %s94, %s97
    %p103 = scmp.eq.s32.totalorder %s9, 0
    %p104 = por %p102, %p103
    %p105 = scmp.ne.s32.totalorder %s94, %s97
    %p106 = scmp.eq.s32.totalorder %s14, 1
    %p107 = por %p105, %p106
    %p108 = scmp.ne.s32.totalorder %s97, %s98
    %p109 = scmp.eq.s32.totalorder %s14, 0
    %p110 = por %p108, %p109
    %p111 = scmp.ne.s32.totalorder %s97, %s98
    %p112 = scmp.eq.s32.totalorder %s15, 1
    %p113 = por %p111, %p112
    %p115 = scmp.ne.s32.totalorder %s98, %s114
    %p116 = scmp.eq.s32.totalorder %s15, 0
    %p117 = por %p115, %p116
    %s118 = ssub.s32 %s16, %s35
    %s119 = ssub.s32 %s17, %s31
    %s120 = sor.u32 %s118, %s119
    %p121 = scmp.eq.s32.totalorder %s120, 0
    %s123 = sadd.s32 %s122, 1
    %s124 = scalar_select %p121, %s122, %s123
    %p127 = pneg %p121
    %p128 = scmp.eq.s32.totalorder %s9, 1
    %p129 = por %p127, %p128
    %p130 = scmp.ne.s32.totalorder %s122, %s125
    %p131 = scmp.eq.s32.totalorder %s9, 0
    %p132 = por %p130, %p131
    %p133 = scmp.ne.s32.totalorder %s122, %s125
    %p134 = scmp.eq.s32.totalorder %s14, 1
    %p135 = por %p133, %p134
    %p136 = scmp.ne.s32.totalorder %s125, %s126
    %p137 = scmp.eq.s32.totalorder %s14, 0
    %p138 = por %p136, %p137
    %p139 = scmp.ne.s32.totalorder %s125, %s126
    %p140 = scmp.eq.s32.totalorder %s15, 1
    %p141 = por %p139, %p140
    %p143 = scmp.ne.s32.totalorder %s126, %s142
    %p144 = scmp.eq.s32.totalorder %s15, 0
    %p145 = por %p143, %p144
    %p146 = scmp.le.s32.totalorder 1, %s9
    %p147 = scmp.lt.s32.totalorder %s9, 3
    %p148 = pnand %p146, %p147
    %p149 = pneg %p148
    // Predicated region
    $region9: #{_lambda_.31} parent=5 // pred_check
      _
    $region10: #{_lambda_.31} parent=5 // pred_check_branch
      %151 = sbr.rel (%p148) target = $region12
    $region11: #{_lambda_.31} parent=5 // pred_region
      %s152 = ssub.s32 %s9, 1
      // Predicated region
      $region13: #{_lambda_.31} parent=11 // pred_check
        %p153 = pneg %p110
      $region14: #{_lambda_.31} parent=11 // pred_check_branch
        %155 = sbr.rel (%p153) target = $region16
      $region15: #{_lambda_.31} parent=11 // pred_region
        %p156 = scmp.lt.s32.totalorder %s20, 0
        %s157 = scalar_select %p156, %s20, 0
        %s158 = scalar_lea.vmem %s2, %s157
      $region16: #{_lambda_.31} parent=11 // pred_fallthru
        _
    $region12: #{_lambda_.31} parent=5 // pred_fallthru
      _
    %p159 = scmp.lt.s32.totalorder %s9, 2
    // Predicated region
    $region17: #{_lambda_.31} parent=5 // pred_check
      %p160 = pneg %p159
    $region18: #{_lambda_.31} parent=5 // pred_check_branch
      %162 = sbr.rel (%p160) target = $region20
    $region19: #{_lambda_.31} parent=5 // pred_region
      // Predicated region
      $region21: #{_lambda_.31} parent=19 // pred_check
        %p163 = pneg %p50
      $region22: #{_lambda_.31} parent=19 // pred_check_branch
        %165 = sbr.rel (%p163) target = $region24
      $region23: #{_lambda_.31} parent=19 // pred_region
        %s166 = smul.u32 3, %s18
        %p167 = scmp.lt.s32.totalorder %s16, 0
        %s168 = scalar_select %p167, %s16, 0
        %p169 = scmp.lt.s32.totalorder %s166, 5
        %s170 = scalar_select %p169, %s166, 5
        %s171 = smul.addr %s168, 6
        %s172 = sadd.s32 %s170, %s171
        %s173 = smul.addr %s172, 4
        %s174 = scalar_lea.vmem %s0, %s173
        %s175 = smul.u32 3, %s18
      $region24: #{_lambda_.31} parent=19 // pred_fallthru
        _
      // Predicated region
      $region25: #{_lambda_.31} parent=19 // pred_check
        %p176 = pneg %p78
      $region26: #{_lambda_.31} parent=19 // pred_check_branch
        %178 = sbr.rel (%p176) target = $region28
      $region27: #{_lambda_.31} parent=19 // pred_region
        %s179 = smul.u32 48, %s18
        %p180 = scmp.lt.s32.totalorder %s179, 95
        %s181 = scalar_select %p180, %s179, 95
        %p182 = scmp.lt.s32.totalorder %s17, 0
        %s183 = scalar_select %p182, %s17, 0
        %s184 = sadd.s32 %s183, %s181
        %s185 = smul.addr %s184, 4
        %s186 = scalar_lea.vmem %s1, %s185
        %s187 = smul.u32 48, %s18
      $region28: #{_lambda_.31} parent=19 // pred_fallthru
        _
    $region20: #{_lambda_.31} parent=5 // pred_fallthru
      _
    %p188 = scmp.le.s32.totalorder 1, %s9
    %p189 = scmp.lt.s32.totalorder %s9, 3
    %p190 = pnand %p188, %p189
    %p191 = pneg %p190
    // Predicated region
    $region29: #{_lambda_.31} parent=5 // pred_check
      _
    $region30: #{_lambda_.31} parent=5 // pred_check_branch
      %193 = sbr.rel (%p190) target = $region32
    $region31: #{_lambda_.31} parent=5 // pred_region
      %s194 = ssub.s32 %s9, 1
      %s195 = smul.u32 3, %s21
      %p196 = scmp.lt.s32.totalorder %s19, 0
      %s197 = scalar_select %p196, %s19, 0
      %p198 = scmp.lt.s32.totalorder %s195, 5
      %s199 = scalar_select %p198, %s195, 5
      %s200 = smul.addr %s197, 6
      %s201 = sadd.s32 %s199, %s200
      %s202 = smul.addr %s201, 4
      %s203 = scalar_lea.vmem %s0, %s202
      %p204 = pneg %p56
      %p205 = pneg %p53
      %s206 = smul.u32 48, %s21
      %p207 = scmp.lt.s32.totalorder %s206, 95
      %s208 = scalar_select %p207, %s206, 95
      %p209 = scmp.lt.s32.totalorder %s20, 0
      %s210 = scalar_select %p209, %s20, 0
      %s211 = sadd.s32 %s210, %s208
      %s212 = smul.addr %s211, 4
      %s213 = scalar_lea.vmem %s1, %s212
      %p214 = pneg %p84
      %p215 = pneg %p81
      %p216 = scmp.lt.s32.totalorder %s20, 0
      %s217 = scalar_select %p216, %s20, 0
      %s218 = scalar_lea.vmem %s2, %s217
      %p219 = pneg %p110
      %p220 = pneg %p107
      %p221 = pneg %p138
      %p222 = pneg %p135
      %p223 = scmp.lt.s32.totalorder %s19, 0
      %s224 = scalar_select %p223, %s19, 0
      %p225 = scmp.lt.s32.totalorder %s20, 0
      %s226 = scalar_select %p225, %s20, 0
      %s227 = sadd.s32 %s226, %s224
      %s228 = smul.addr %s227, 4
      %s229 = scalar_lea.vmem %s3, %s228
      %s230 = smul.u32 3, %s21
      %p231 = scmp.lt.s32.totalorder %s19, 0
      %s232 = scalar_select %p231, %s19, 0
      %p233 = scmp.lt.s32.totalorder %s230, 5
      %s234 = scalar_select %p233, %s230, 5
      %s235 = smul.addr %s232, 6
      %s236 = sadd.s32 %s234, %s235
      %s237 = smul.addr %s236, 4
      %s238 = scalar_lea.vmem %s0, %s237
      %s239 = smul.u32 3, %s21
      %s240 = smul.u32 48, %s21
      %p241 = scmp.lt.s32.totalorder %s240, 95
      %s242 = scalar_select %p241, %s240, 95
      %p243 = scmp.lt.s32.totalorder %s20, 0
      %s244 = scalar_select %p243, %s20, 0
      %s245 = sadd.s32 %s244, %s242
      %s246 = smul.addr %s245, 4
      %s247 = scalar_lea.vmem %s1, %s246
      %s248 = smul.u32 48, %s21
      %p249 = scmp.lt.s32.totalorder %s20, 0
      %s250 = scalar_select %p249, %s20, 0
      %s251 = scalar_lea.vmem %s2, %s250
      %p252 = scmp.lt.s32.totalorder %s19, 0
      %s253 = scalar_select %p252, %s19, 0
      %p254 = scmp.lt.s32.totalorder %s20, 0
      %s255 = scalar_select %p254, %s20, 0
      %s256 = sadd.s32 %s255, %s253
      %s257 = smul.addr %s256, 4
      %s258 = scalar_lea.vmem %s3, %s257
      %p260 = scmp.eq.s32.totalorder %s21, 0
      // Predicated region
      $region33: #{_lambda_.31} parent=31 // pred_check
        %p261 = pneg %p260
      $region34: #{_lambda_.31} parent=31 // pred_check_branch
        %263 = sbr.rel (%p261) target = $region36
      $region35: #{_lambda_.31} parent=31 // pred_region
        %264 = vst [vmem:[#allocation2] sm:$0xff] 0.0
      $region36: #{_lambda_.31} parent=31 // pred_fallthru
        _
      %v265 = vld [vmem:[#allocation2] sm:$0xff]
      %v266 = vld [vmem:[%s238] sm:$0xff]
      %v267 = vld [vmem:[%s238 + $0x8] sm:$0xf]
      %v268 = vld [vmem:[%s247] sm:$0xf]
      %v269 = vld [vmem:[%s247 + $0x4] sm:$0xf]
      %v270 = vld [vmem:[%s247 + $0x8] sm:$0xf]
      %v271 = vld [vmem:[%s247 + $0xc] sm:$0xf]
      %v272 = vld [vmem:[%s247 + $0x10] sm:$0xf]
      %v273 = vld [vmem:[%s247 + $0x14] sm:$0xf]
      %v274 = vld [vmem:[%s247 + $0x18] sm:$0xf]
      %v275 = vld [vmem:[%s247 + $0x1c] sm:$0xf]
      %v276 = vld [vmem:[%s247 + $0x20] sm:$0xf]
      %v277 = vld [vmem:[%s247 + $0x24] sm:$0xf]
      %v278 = vld [vmem:[%s247 + $0x28] sm:$0xf]
      %v279 = vld [vmem:[%s247 + $0x2c] sm:$0xf]
      %v280 = vld [vmem:[%s247 + $0x30] sm:$0xf]
      %v281 = vld [vmem:[%s247 + $0x34] sm:$0xf]
      %v282 = vld [vmem:[%s247 + $0x38] sm:$0xf]
      %v283 = vld [vmem:[%s247 + $0x3c] sm:$0xf]
      %v284 = vld [vmem:[%s247 + $0x40] sm:$0xf]
      %v285 = vld [vmem:[%s247 + $0x44] sm:$0xf]
      %v286 = vld [vmem:[%s247 + $0x48] sm:$0xf]
      %v287 = vld [vmem:[%s247 + $0x4c] sm:$0xf]
      %v288 = vld [vmem:[%s247 + $0x50] sm:$0xf]
      %v289 = vld [vmem:[%s247 + $0x54] sm:$0xf]
      %v290 = vld [vmem:[%s247 + $0x58] sm:$0xf]
      %v291 = vld [vmem:[%s247 + $0x5c] sm:$0xf]
      %v292 = vld [vmem:[%s247 + $0x60] sm:$0xf]
      %v293 = vld [vmem:[%s247 + $0x64] sm:$0xf]
      %v294 = vld [vmem:[%s247 + $0x68] sm:$0xf]
      %v295 = vld [vmem:[%s247 + $0x6c] sm:$0xf]
      %v296 = vld [vmem:[%s247 + $0x70] sm:$0xf]
      %v297 = vld [vmem:[%s247 + $0x74] sm:$0xf]
      %v298 = vld [vmem:[%s247 + $0x78] sm:$0xf]
      %v299 = vld [vmem:[%s247 + $0x7c] sm:$0xf]
      %v300 = vld [vmem:[%s247 + $0x80] sm:$0xf]
      %v301 = vld [vmem:[%s247 + $0x84] sm:$0xf]
      %v302 = vld [vmem:[%s247 + $0x88] sm:$0xf]
      %v303 = vld [vmem:[%s247 + $0x8c] sm:$0xf]
      %v304 = vld [vmem:[%s247 + $0x90] sm:$0xf]
      %v305 = vld [vmem:[%s247 + $0x94] sm:$0xf]
      %v306 = vld [vmem:[%s247 + $0x98] sm:$0xf]
      %v307 = vld [vmem:[%s247 + $0x9c] sm:$0xf]
      %v308 = vld [vmem:[%s247 + $0xa0] sm:$0xf]
      %v309 = vld [vmem:[%s247 + $0xa4] sm:$0xf]
      %v310 = vld [vmem:[%s247 + $0xa8] sm:$0xf]
      %v311 = vld [vmem:[%s247 + $0xac] sm:$0xf]
      %v312 = vld [vmem:[%s247 + $0xb0] sm:$0xf]
      %v313 = vld [vmem:[%s247 + $0xb4] sm:$0xf]
      %v314 = vld [vmem:[%s247 + $0xb8] sm:$0xf]
      %v315 = vld [vmem:[%s247 + $0xbc] sm:$0xf]
      %v318 = vunpack.c.l.b16 %v266
      %v319 = vunpack.c.h.b16 %v266
      %v320 = vunpack.c.l.b16 %v267
      %v321 = vpack.c.b16 %v318, %v318
      %v322 = vpack.c.b16 %v319, %v319
      %v323 = vpack.c.b16 %v320, %v320
      %v375 = vunpack.c.l.b16 %v268
      %v376 = vunpack.c.l.b16 %v269
      %v377 = vunpack.c.l.b16 %v270
      %v378 = vunpack.c.l.b16 %v271
      %v379 = vunpack.c.l.b16 %v272
      %v380 = vunpack.c.l.b16 %v273
      %v381 = vunpack.c.l.b16 %v274
      %v382 = vunpack.c.l.b16 %v275
      %v383 = vunpack.c.l.b16 %v276
      %v384 = vunpack.c.l.b16 %v277
      %v385 = vunpack.c.l.b16 %v278
      %v386 = vunpack.c.l.b16 %v279
      %v387 = vunpack.c.l.b16 %v280
      %v388 = vunpack.c.l.b16 %v281
      %v389 = vunpack.c.l.b16 %v282
      %v390 = vunpack.c.l.b16 %v283
      %v391 = vunpack.c.l.b16 %v284
      %v392 = vunpack.c.l.b16 %v285
      %v393 = vunpack.c.l.b16 %v286
      %v394 = vunpack.c.l.b16 %v287
      %v395 = vunpack.c.l.b16 %v288
      %v396 = vunpack.c.l.b16 %v289
      %v397 = vunpack.c.l.b16 %v290
      %v398 = vunpack.c.l.b16 %v291
      %v399 = vunpack.c.l.b16 %v292
      %v400 = vunpack.c.l.b16 %v293
      %v401 = vunpack.c.l.b16 %v294
      %v402 = vunpack.c.l.b16 %v295
      %v403 = vunpack.c.l.b16 %v296
      %v404 = vunpack.c.l.b16 %v297
      %v405 = vunpack.c.l.b16 %v298
      %v406 = vunpack.c.l.b16 %v299
      %v407 = vunpack.c.l.b16 %v300
      %v408 = vunpack.c.l.b16 %v301
      %v409 = vunpack.c.l.b16 %v302
      %v410 = vunpack.c.l.b16 %v303
      %v411 = vunpack.c.l.b16 %v304
      %v412 = vunpack.c.l.b16 %v305
      %v413 = vunpack.c.l.b16 %v306
      %v414 = vunpack.c.l.b16 %v307
      %v415 = vunpack.c.l.b16 %v308
      %v416 = vunpack.c.l.b16 %v309
      %v417 = vunpack.c.l.b16 %v310
      %v418 = vunpack.c.l.b16 %v311
      %v419 = vunpack.c.l.b16 %v312
      %v420 = vunpack.c.l.b16 %v313
      %v421 = vunpack.c.l.b16 %v314
      %v422 = vunpack.c.l.b16 %v315
      %v423 = vpack.c.b16 %v376, %v375
      %v424 = vpack.c.b16 %v378, %v377
      %v425 = vpack.c.b16 %v380, %v379
      %v426 = vpack.c.b16 %v382, %v381
      %v427 = vpack.c.b16 %v384, %v383
      %v428 = vpack.c.b16 %v386, %v385
      %v429 = vpack.c.b16 %v388, %v387
      %v430 = vpack.c.b16 %v390, %v389
      %v431 = vpack.c.b16 %v392, %v391
      %v432 = vpack.c.b16 %v394, %v393
      %v433 = vpack.c.b16 %v396, %v395
      %v434 = vpack.c.b16 %v398, %v397
      %v435 = vpack.c.b16 %v400, %v399
      %v436 = vpack.c.b16 %v402, %v401
      %v437 = vpack.c.b16 %v404, %v403
      %v438 = vpack.c.b16 %v406, %v405
      %v439 = vpack.c.b16 %v408, %v407
      %v440 = vpack.c.b16 %v410, %v409
      %v441 = vpack.c.b16 %v412, %v411
      %v442 = vpack.c.b16 %v414, %v413
      %v443 = vpack.c.b16 %v416, %v415
      %v444 = vpack.c.b16 %v418, %v417
      %v445 = vpack.c.b16 %v420, %v419
      %v446 = vpack.c.b16 %v422, %v421
      %471 = vmatprep.subr.bf16.mxu0 0
      %472 = vmatpush1.bf16.msra.mxu0 %v423
      %473 = vmatprep.subr.bf16.mxu0 0
      %474 = vmatpush1.bf16.msra.mxu0 %v424
      %475 = vmatprep.subr.bf16.mxu0 0
      %476 = vmatpush1.bf16.msra.mxu0 %v425
      %477 = vmatprep.subr.bf16.mxu0 0
      %478 = vmatpush1.bf16.msra.mxu0 %v426
      %479 = vmatprep.subr.bf16.mxu0 0
      %480 = vmatpush1.bf16.msra.mxu0 %v427
      %481 = vmatprep.subr.bf16.mxu0 0
      %482 = vmatpush1.bf16.msra.mxu0 %v428
      %483 = vmatprep.subr.bf16.mxu0 0
      %484 = vmatpush1.bf16.msra.mxu0 %v429
      %485 = vmatprep.subr.bf16.mxu0 0
      %486 = vmatpush1.bf16.msra.mxu0 %v430
      %487 = vmatprep.subr.bf16.mxu0 0
      %488 = vmatpush1.bf16.msra.mxu0 %v431
      %489 = vmatprep.subr.bf16.mxu0 0
      %490 = vmatpush1.bf16.msra.mxu0 %v432
      %491 = vmatprep.subr.bf16.mxu0 0
      %492 = vmatpush1.bf16.msra.mxu0 %v433
      %493 = vmatprep.subr.bf16.mxu0 0
      %494 = vmatpush1.bf16.msra.mxu0 %v434
      %495 = vmatprep.subr.bf16.mxu0 0
      %496 = vmatpush1.bf16.msra.mxu0 %v435
      %497 = vmatprep.subr.bf16.mxu0 0
      %498 = vmatpush1.bf16.msra.mxu0 %v436
      %499 = vmatprep.subr.bf16.mxu0 0
      %500 = vmatpush1.bf16.msra.mxu0 %v437
      %501 = vmatprep.subr.bf16.mxu0 0
      %502 = vmatpush1.bf16.msra.mxu0 %v438
      %503 = vmatprep.mubr.bf16.mxu0 %v322
      %504 = vmatmul.mubr.bf16.gmra.mrb[0].mxu0 %v321
      %v505 = vpop.f32.mrb[0].mxu0
      %v506 = vadd.f32 0.0, %v505
      %v507 = vpop.f32.mrb[0].mxu0
      %v508 = vpop.f32.mrb[0].mxu0
      %v509 = vpop.f32.mrb[0].mxu0
      %510 = vdwg.mxu0
      %511 = vmatprep.subr.bf16.mxu0 0
      %512 = vmatpush1.bf16.msra.mxu0 %v439
      %513 = vmatprep.subr.bf16.mxu0 0
      %514 = vmatpush1.bf16.msra.mxu0 %v440
      %515 = vmatprep.subr.bf16.mxu0 0
      %516 = vmatpush1.bf16.msra.mxu0 %v441
      %517 = vmatprep.subr.bf16.mxu0 0
      %518 = vmatpush1.bf16.msra.mxu0 %v442
      %519 = vmatprep.subr.bf16.mxu0 0
      %520 = vmatpush1.bf16.msra.mxu0 %v443
      %521 = vmatprep.subr.bf16.mxu0 0
      %522 = vmatpush1.bf16.msra.mxu0 %v444
      %523 = vmatprep.subr.bf16.mxu0 0
      %524 = vmatpush1.bf16.msra.mxu0 %v445
      %525 = vmatprep.subr.bf16.mxu0 0
      %526 = vmatpush1.bf16.msra.mxu0 %v446
      %527 = vmatprep.subr.bf16.mxu0 0
      %528 = vmatpush1.bf16.msra.mxu0 0
      %529 = vmatprep.subr.bf16.mxu0 0
      %530 = vmatpush1.bf16.msra.mxu0 0
      %531 = vmatprep.subr.bf16.mxu0 0
      %532 = vmatpush1.bf16.msra.mxu0 0
      %533 = vmatprep.subr.bf16.mxu0 0
      %534 = vmatpush1.bf16.msra.mxu0 0
      %535 = vmatprep.subr.bf16.mxu0 0
      %536 = vmatpush1.bf16.msra.mxu0 0
      %537 = vmatprep.subr.bf16.mxu0 0
      %538 = vmatpush1.bf16.msra.mxu0 0
      %539 = vmatprep.subr.bf16.mxu0 0
      %540 = vmatpush1.bf16.msra.mxu0 0
      %541 = vmatprep.subr.bf16.mxu0 0
      %542 = vmatpush1.bf16.msra.mxu0 0
      %543 = vmatprep.mubr.bf16.mxu0 0
      %544 = vmatmul.mubr.bf16.gmra.mrb[0].mxu0 %v323
      %v545 = vpop.f32.mrb[0].mxu0
      %v546 = vadd.f32 %v506, %v545
      %v547 = vpop.f32.mrb[0].mxu0
      %v548 = vpop.f32.mrb[0].mxu0
      %v549 = vpop.f32.mrb[0].mxu0
      %550 = vdwg.mxu0
      %v551 = vadd.f32 %v265, %v546
      %552 = vst [vmem:[#allocation2] sm:$0xff] %v551
      %p553 = scmp.eq.s32.totalorder %s21, 1
      // Predicated region
      $region37: #{_lambda_.31} parent=31 // pred_check
        %p554 = pneg %p553
      $region38: #{_lambda_.31} parent=31 // pred_check_branch
        %556 = sbr.rel (%p554) target = $region40
      $region39: #{_lambda_.31} parent=31 // pred_region
        %v557 = vld [vmem:[#allocation2] sm:$0xff]
        %v558 = vld [vmem:[%s251] sm:$0x1]
        %v560 = vlaneseq
        %v561 = vshrl.u32 %v560, 7
        %v562 = vsub.s32 0, %v561
        %v563 = vrot.slane %v558, %v562
        %v565 = vadd.f32 %v557, %v563
        %v566 = vpack.c.bf16 %v565, %v565
        %567 = vst [vmem:[%s258] sm:$0xf] %v566
      $region40: #{_lambda_.31} parent=31 // pred_fallthru
        _
      %p568 = scmp.lt.s32.totalorder %s19, 0
      %s569 = scalar_select %p568, %s19, 0
      %p570 = scmp.lt.s32.totalorder %s20, 0
      %s571 = scalar_select %p570, %s20, 0
      %s572 = sadd.s32 %s571, %s569
      %s573 = smul.addr %s572, 4
      %s574 = scalar_lea.vmem %s3, %s573
      // Predicated region
      $region41: #{_lambda_.31} parent=31 // pred_check
        %p575 = pneg %p135
      $region42: #{_lambda_.31} parent=31 // pred_check_branch
        %577 = sbr.rel (%p575) target = $region44
      $region43: #{_lambda_.31} parent=31 // pred_region
        _
      $region44: #{_lambda_.31} parent=31 // pred_fallthru
        _
      // Predicated region
      $region45: #{_lambda_.31} parent=31 // pred_check
        %p578 = pneg %p135
      $region46: #{_lambda_.31} parent=31 // pred_check_branch
        %580 = sbr.rel (%p578) target = $region48
      $region47: #{_lambda_.31} parent=31 // pred_region
        %p581 = scmp.lt.s32.totalorder %s19, 0
        %s582 = scalar_select %p581, %s19, 0
        %p583 = scmp.lt.s32.totalorder %s20, 0
        %s584 = scalar_select %p583, %s20, 0
        %s585 = sadd.s32 %s584, %s582
        %s586 = smul.addr %s585, 4
        %s587 = scalar_lea.vmem %s3, %s586
      $region48: #{_lambda_.31} parent=31 // pred_fallthru
        _
    $region32: #{_lambda_.31} parent=5 // pred_fallthru
      _
    %p588 = scmp.le.s32.totalorder 2, %s9
    // Predicated region
    $region49: #{_lambda_.31} parent=5 // pred_check
      %p589 = pneg %p588
    $region50: #{_lambda_.31} parent=5 // pred_check_branch
      %591 = sbr.rel (%p589) target = $region52
    $region51: #{_lambda_.31} parent=5 // pred_region
      %s592 = ssub.s32 %s9, 2
    $region52: #{_lambda_.31} parent=5 // pred_fallthru
      _
  $region6: #{_lambda_.31} parent=0 // loop_footer
    %s13 = sadd.s32 1, %s9
  $region7: #{_lambda_.31} parent=0 // loop_footer_branch
    %8 = sbr.rel target = $region3
  $region8: #{_lambda_.31} parent=0 // loop_exit
    _

// kernel: _lambda_.32
$region0: #{_lambda_.32}
  #allocation0 [shape = 'u32[]', space=smem, size = 0x4, offset = 0x4, fixed_abs, tag = 'smem constant byte address 0x4 - core index']
  #allocation1 [shape = 'u32[144,128]{1,0:T(1,128)}', space=vmem, size = 0x12000, scoped, tag = 'internal scratch']
  #allocation2 [shape = 'bf16[10,128]{1,0:T(8,128)(2,1)}', space=vmem, size = 0x1000, scoped, tag = 'scratch operand']
  %s0 = inlined_call_operand.vmem [shape: bf16[10,128], index: 0, kind: input, shape index: {}]
  %s1 = inlined_call_operand.vmem [shape: f32[1,128], index: 1, kind: input, shape index: {}]
  %s2 = inlined_call_operand.vmem [shape: f32[1,128], index: 2, kind: input, shape index: {}]
  %s3 = inlined_call_operand.vmem [shape: bf16[128,384], index: 3, kind: input, shape index: {}]
  %s4 = inlined_call_operand.vmem [shape: f32[1,384], index: 4, kind: input, shape index: {}]
  %s5 = inlined_call_operand.vmem [shape: bf16[10,384], index: 5, kind: output, shape index: {}]
  %s6 = sld [smem:[#allocation0]]
  $region34: #{_lambda_.32} parent=0
    _
  %s8 = ssub.s32 1, %s6
  %s9 = scalar_select 0, %s8, %s6
  // Predicated region
  $region2: #{_lambda_.32} parent=0 // pred_check
    _
  $region3: #{_lambda_.32} parent=0 // pred_check_branch
    %11 = sbr.rel (0) target = $region5
  $region4: #{_lambda_.32} parent=0 // pred_region
    _
  $region5: #{_lambda_.32} parent=0 // pred_fallthru
    _
  // Predicated region
  $region6: #{_lambda_.32} parent=0 // pred_check
    _
  $region7: #{_lambda_.32} parent=0 // pred_check_branch
    %13 = sbr.rel (0) target = $region9
  $region8: #{_lambda_.32} parent=0 // pred_region
    _
  $region9: #{_lambda_.32} parent=0 // pred_fallthru
    _
  // Predicated region
  $region10: #{_lambda_.32} parent=0 // pred_check
    _
  $region11: #{_lambda_.32} parent=0 // pred_check_branch
    %15 = sbr.rel (0) target = $region13
  $region12: #{_lambda_.32} parent=0 // pred_region
    _
  $region13: #{_lambda_.32} parent=0 // pred_fallthru
    _
  // Predicated region
  $region14: #{_lambda_.32} parent=0 // pred_check
    _
  $region15: #{_lambda_.32} parent=0 // pred_check_branch
    %17 = sbr.rel (0) target = $region17
  $region16: #{_lambda_.32} parent=0 // pred_region
    _
  $region17: #{_lambda_.32} parent=0 // pred_fallthru
    _
  // Predicated region
  $region18: #{_lambda_.32} parent=0 // pred_check
    _
  $region19: #{_lambda_.32} parent=0 // pred_check_branch
    %19 = sbr.rel (0) target = $region21
  $region20: #{_lambda_.32} parent=0 // pred_region
    _
  $region21: #{_lambda_.32} parent=0 // pred_fallthru
    _
  %p21 = scmp.eq.s32.totalorder 0, 0
  // Predicated region
  $region22: #{_lambda_.32} parent=0 // pred_check
    %p22 = pneg %p21
  $region23: #{_lambda_.32} parent=0 // pred_check_branch
    %24 = sbr.rel (%p22) target = $region25
  $region24: #{_lambda_.32} parent=0 // pred_region
    %v25 = vld [vmem:[%s0] sm:$0xf]
    %v26 = vld [vmem:[%s0 + $0x4] sm:$0x1]
    %v27 = vunpack.c.l.bf16 %v25
    %v28 = vunpack.c.l.bf16 %v26
    %29 = vadd.xlane.f32.xlu0 %v27
    %v30 = vpop.xlane.xlu0 %29
    %vm31 = vcmask 1041408
    %v32 = vsel %vm31, %v28, 0.0
    %33 = vadd.xlane.f32.xlu0 %v32
    %v34 = vpop.xlane.xlu0 %33
    %v35 = vrcp.pop 128.0
    %v36 = vmul.f32 %v30, %v35
    %v37 = vmul.f32 %v34, %v35
    %v38 = vsub.f32 %v27, %v36
    %v39 = vsub.f32 %v28, %v37
    %v40 = vmul.f32 %v38, %v38
    %v41 = vmul.f32 %v39, %v39
    %42 = vadd.xlane.f32.xlu0 %v40
    %v43 = vpop.xlane.xlu0 %42
    %v44 = vsel %vm31, %v41, 0.0
    %45 = vadd.xlane.f32.xlu0 %v44
    %v46 = vpop.xlane.xlu0 %45
    %v47 = vmul.f32 %v43, %v35
    %v48 = vmul.f32 %v46, %v35
    %v49 = vadd.f32 %v47, 1e-05
    %v50 = vadd.f32 %v48, 1e-05
    %v51 = vrsqrt.pop %v49
    %v52 = vrsqrt.pop %v50
    %v53 = vmul.f32 %v38, %v51
    %v54 = vmul.f32 %v39, %v52
    %v55 = vld [vmem:[%s1] sm:$0x1]
    %v57 = vlaneseq
    %v58 = vshrl.u32 %v57, 7
    %v59 = vsub.s32 0, %v58
    %v60 = vrot.slane %v55, %v59
    %v62 = vmul.f32 %v53, %v60
    %v63 = vmul.f32 %v54, %v60
    %v64 = vld [vmem:[%s2] sm:$0x1]
    %v66 = vlaneseq
    %v67 = vshrl.u32 %v66, 7
    %v68 = vsub.s32 0, %v67
    %v69 = vrot.slane %v64, %v68
    %v71 = vadd.f32 %v62, %v69
    %v72 = vadd.f32 %v63, %v69
    %v73 = vpack.c.bf16 %v72, %v71
    %v75 = vunpack.c.l.b16 %v73
    %v76 = vunpack.c.h.b16 %v73
    %v77 = vpack.c.b16 %v75, %v75
    %v78 = vpack.c.b16 %v76, %v76
    %81 = vst [vmem:[#allocation2] sm:$0xf] %v77
    %82 = vst [vmem:[#allocation2 + $0x4] sm:$0x1] %v78
  $region25: #{_lambda_.32} parent=0 // pred_fallthru
    _
  %v83 = vld [vmem:[#allocation2] sm:$0xf]
  %v84 = vld [vmem:[#allocation2 + $0x4] sm:$0x1]
  %v85 = vld [vmem:[%s3] sm:$0xff]
  %v86 = vld [vmem:[%s3 + $0x8] sm:$0xf]
  %v87 = vld [vmem:[%s3 + $0xc] sm:$0xff]
  %v88 = vld [vmem:[%s3 + $0x14] sm:$0xf]
  %v89 = vld [vmem:[%s3 + $0x18] sm:$0xff]
  %v90 = vld [vmem:[%s3 + $0x20] sm:$0xf]
  %v91 = vld [vmem:[%s3 + $0x24] sm:$0xff]
  %v92 = vld [vmem:[%s3 + $0x2c] sm:$0xf]
  %v93 = vld [vmem:[%s3 + $0x30] sm:$0xff]
  %v94 = vld [vmem:[%s3 + $0x38] sm:$0xf]
  %v95 = vld [vmem:[%s3 + $0x3c] sm:$0xff]
  %v96 = vld [vmem:[%s3 + $0x44] sm:$0xf]
  %v97 = vld [vmem:[%s3 + $0x48] sm:$0xff]
  %v98 = vld [vmem:[%s3 + $0x50] sm:$0xf]
  %v99 = vld [vmem:[%s3 + $0x54] sm:$0xff]
  %v100 = vld [vmem:[%s3 + $0x5c] sm:$0xf]
  %v101 = vld [vmem:[%s3 + $0x60] sm:$0xff]
  %v102 = vld [vmem:[%s3 + $0x68] sm:$0xf]
  %v103 = vld [vmem:[%s3 + $0x6c] sm:$0xff]
  %v104 = vld [vmem:[%s3 + $0x74] sm:$0xf]
  %v105 = vld [vmem:[%s3 + $0x78] sm:$0xff]
  %v106 = vld [vmem:[%s3 + $0x80] sm:$0xf]
  %v107 = vld [vmem:[%s3 + $0x84] sm:$0xff]
  %v108 = vld [vmem:[%s3 + $0x8c] sm:$0xf]
  %v109 = vld [vmem:[%s3 + $0x90] sm:$0xff]
  %v110 = vld [vmem:[%s3 + $0x98] sm:$0xf]
  %v111 = vld [vmem:[%s3 + $0x9c] sm:$0xff]
  %v112 = vld [vmem:[%s3 + $0xa4] sm:$0xf]
  %v113 = vld [vmem:[%s3 + $0xa8] sm:$0xff]
  %v114 = vld [vmem:[%s3 + $0xb0] sm:$0xf]
  %v115 = vld [vmem:[%s3 + $0xb4] sm:$0xff]
  %v116 = vld [vmem:[%s3 + $0xbc] sm:$0xf]
  %v117 = vld [vmem:[%s4] sm:$0x7]
  %v119 = vlaneseq
  %v120 = vshrl.u32 %v119, 7
  %v121 = vsub.s32 0, %v120
  %v122 = vrot.slane %v117, %v121
  %v123 = vlaneseq
  %v124 = vshrl.u32 %v123, 7
  %v125 = vsub.s32 1, %v124
  %v126 = vrot.slane %v117, %v125
  %v127 = vlaneseq
  %v128 = vshrl.u32 %v127, 7
  %v129 = vsub.s32 2, %v128
  %v130 = vrot.slane %v117, %v129
  %v136 = vunpack.c.l.b16 %v83
  %v137 = vunpack.c.l.b16 %v84
  %v138 = vpack.c.b16 %v137, %v136
  %v172 = vunpack.c.l.b16 %v85
  %v173 = vunpack.c.h.b16 %v85
  %v174 = vunpack.c.l.b16 %v86
  %v175 = vunpack.c.l.b16 %v87
  %v176 = vunpack.c.h.b16 %v87
  %v177 = vunpack.c.l.b16 %v88
  %v178 = vunpack.c.l.b16 %v89
  %v179 = vunpack.c.h.b16 %v89
  %v180 = vunpack.c.l.b16 %v90
  %v181 = vunpack.c.l.b16 %v91
  %v182 = vunpack.c.h.b16 %v91
  %v183 = vunpack.c.l.b16 %v92
  %v184 = vunpack.c.l.b16 %v93
  %v185 = vunpack.c.h.b16 %v93
  %v186 = vunpack.c.l.b16 %v94
  %v187 = vunpack.c.l.b16 %v95
  %v188 = vunpack.c.h.b16 %v95
  %v189 = vunpack.c.l.b16 %v96
  %v190 = vunpack.c.l.b16 %v97
  %v191 = vunpack.c.h.b16 %v97
  %v192 = vunpack.c.l.b16 %v98
  %v193 = vunpack.c.l.b16 %v99
  %v194 = vunpack.c.h.b16 %v99
  %v195 = vunpack.c.l.b16 %v100
  %v196 = vunpack.c.l.b16 %v101
  %v197 = vunpack.c.h.b16 %v101
  %v198 = vunpack.c.l.b16 %v102
  %v199 = vunpack.c.l.b16 %v103
  %v200 = vunpack.c.h.b16 %v103
  %v201 = vunpack.c.l.b16 %v104
  %v202 = vunpack.c.l.b16 %v105
  %v203 = vunpack.c.h.b16 %v105
  %v204 = vunpack.c.l.b16 %v106
  %v205 = vunpack.c.l.b16 %v107
  %v206 = vunpack.c.h.b16 %v107
  %v207 = vunpack.c.l.b16 %v108
  %v208 = vunpack.c.l.b16 %v109
  %v209 = vunpack.c.h.b16 %v109
  %v210 = vunpack.c.l.b16 %v110
  %v211 = vunpack.c.l.b16 %v111
  %v212 = vunpack.c.h.b16 %v111
  %v213 = vunpack.c.l.b16 %v112
  %v214 = vunpack.c.l.b16 %v113
  %v215 = vunpack.c.h.b16 %v113
  %v216 = vunpack.c.l.b16 %v114
  %v217 = vunpack.c.l.b16 %v115
  %v218 = vunpack.c.h.b16 %v115
  %v219 = vunpack.c.l.b16 %v116
  %v220 = vpack.c.b16 %v175, %v172
  %v221 = vpack.c.b16 %v176, %v173
  %v222 = vpack.c.b16 %v177, %v174
  %v223 = vpack.c.b16 %v181, %v178
  %v224 = vpack.c.b16 %v182, %v179
  %v225 = vpack.c.b16 %v183, %v180
  %v226 = vpack.c.b16 %v187, %v184
  %v227 = vpack.c.b16 %v188, %v185
  %v228 = vpack.c.b16 %v189, %v186
  %v229 = vpack.c.b16 %v193, %v190
  %v230 = vpack.c.b16 %v194, %v191
  %v231 = vpack.c.b16 %v195, %v192
  %v232 = vpack.c.b16 %v199, %v196
  %v233 = vpack.c.b16 %v200, %v197
  %v234 = vpack.c.b16 %v201, %v198
  %v235 = vpack.c.b16 %v205, %v202
  %v236 = vpack.c.b16 %v206, %v203
  %v237 = vpack.c.b16 %v207, %v204
  %v238 = vpack.c.b16 %v211, %v208
  %v239 = vpack.c.b16 %v212, %v209
  %v240 = vpack.c.b16 %v213, %v210
  %v241 = vpack.c.b16 %v217, %v214
  %v242 = vpack.c.b16 %v218, %v215
  %v243 = vpack.c.b16 %v219, %v216
  %268 = vmatprep.subr.bf16.mxu0 %v221
  %269 = vmatpush1.bf16.msra.mxu0 %v220
  %270 = vmatprep.subr.bf16.mxu0 %v224
  %271 = vmatpush1.bf16.msra.mxu0 %v223
  %272 = vmatprep.subr.bf16.mxu0 %v227
  %273 = vmatpush1.bf16.msra.mxu0 %v226
  %274 = vmatprep.subr.bf16.mxu0 %v230
  %275 = vmatpush1.bf16.msra.mxu0 %v229
  %276 = vmatprep.subr.bf16.mxu0 %v233
  %277 = vmatpush1.bf16.msra.mxu0 %v232
  %278 = vmatprep.subr.bf16.mxu0 %v236
  %279 = vmatpush1.bf16.msra.mxu0 %v235
  %280 = vmatprep.subr.bf16.mxu0 %v239
  %281 = vmatpush1.bf16.msra.mxu0 %v238
  %282 = vmatprep.subr.bf16.mxu0 %v242
  %283 = vmatpush1.bf16.msra.mxu0 %v241
  %284 = vmatprep.subr.bf16.mxu0 0
  %285 = vmatpush1.bf16.msra.mxu0 0
  %286 = vmatprep.subr.bf16.mxu0 0
  %287 = vmatpush1.bf16.msra.mxu0 0
  %288 = vmatprep.subr.bf16.mxu0 0
  %289 = vmatpush1.bf16.msra.mxu0 0
  %290 = vmatprep.subr.bf16.mxu0 0
  %291 = vmatpush1.bf16.msra.mxu0 0
  %292 = vmatprep.subr.bf16.mxu0 0
  %293 = vmatpush1.bf16.msra.mxu0 0
  %294 = vmatprep.subr.bf16.mxu0 0
  %295 = vmatpush1.bf16.msra.mxu0 0
  %296 = vmatprep.subr.bf16.mxu0 0
  %297 = vmatpush1.bf16.msra.mxu0 0
  %298 = vmatprep.subr.bf16.mxu0 0
  %299 = vmatpush1.bf16.msra.mxu0 0
  %300 = vmatprep.mubr.bf16.mxu0 0
  %301 = vmatmul.mubr.bf16.gmra.mrb[0].mxu0 %v138
  %v302 = vpop.f32.mrb[0].mxu0
  %v303 = vadd.f32 %v122, %v302
  %v304 = vpop.f32.mrb[0].mxu0
  %v305 = vadd.f32 %v126, %v304
  %v306 = vpop.f32.mrb[0].mxu0
  %v307 = vadd.f32 %v122, %v306
  %v308 = vpop.f32.mrb[0].mxu0
  %v309 = vadd.f32 %v126, %v308
  %310 = vdwg.mxu0
  %311 = vmatprep.subr.bf16.mxu0 0
  %312 = vmatpush1.bf16.msra.mxu0 %v222
  %313 = vmatprep.subr.bf16.mxu0 0
  %314 = vmatpush1.bf16.msra.mxu0 %v225
  %315 = vmatprep.subr.bf16.mxu0 0
  %316 = vmatpush1.bf16.msra.mxu0 %v228
  %317 = vmatprep.subr.bf16.mxu0 0
  %318 = vmatpush1.bf16.msra.mxu0 %v231
  %319 = vmatprep.subr.bf16.mxu0 0
  %320 = vmatpush1.bf16.msra.mxu0 %v234
  %321 = vmatprep.subr.bf16.mxu0 0
  %322 = vmatpush1.bf16.msra.mxu0 %v237
  %323 = vmatprep.subr.bf16.mxu0 0
  %324 = vmatpush1.bf16.msra.mxu0 %v240
  %325 = vmatprep.subr.bf16.mxu0 0
  %326 = vmatpush1.bf16.msra.mxu0 %v243
  %327 = vmatprep.subr.bf16.mxu0 0
  %328 = vmatpush1.bf16.msra.mxu0 0
  %329 = vmatprep.subr.bf16.mxu0 0
  %330 = vmatpush1.bf16.msra.mxu0 0
  %331 = vmatprep.subr.bf16.mxu0 0
  %332 = vmatpush1.bf16.msra.mxu0 0
  %333 = vmatprep.subr.bf16.mxu0 0
  %334 = vmatpush1.bf16.msra.mxu0 0
  %335 = vmatprep.subr.bf16.mxu0 0
  %336 = vmatpush1.bf16.msra.mxu0 0
  %337 = vmatprep.subr.bf16.mxu0 0
  %338 = vmatpush1.bf16.msra.mxu0 0
  %339 = vmatprep.subr.bf16.mxu0 0
  %340 = vmatpush1.bf16.msra.mxu0 0
  %341 = vmatprep.subr.bf16.mxu0 0
  %342 = vmatpush1.bf16.msra.mxu0 0
  %343 = vmatprep.mubr.bf16.mxu0 0
  %344 = vmatmul.mubr.bf16.gmra.mrb[0].mxu0 %v138
  %v345 = vpop.f32.mrb[0].mxu0
  %v346 = vadd.f32 %v130, %v345
  %v347 = vpop.f32.mrb[0].mxu0
  %v348 = vpop.f32.mrb[0].mxu0
  %v349 = vadd.f32 %v130, %v348
  %v350 = vpop.f32.mrb[0].mxu0
  %351 = vdwg.mxu0
  %v352 = vpack.c.bf16 %v307, %v303
  %v353 = vpack.c.bf16 %v309, %v305
  %v354 = vpack.c.bf16 %v349, %v346
  %v358 = vunpack.c.l.b16 %v352
  %v359 = vunpack.c.l.b16 %v353
  %v360 = vunpack.c.l.b16 %v354
  %v361 = vunpack.c.h.b16 %v352
  %v362 = vunpack.c.h.b16 %v353
  %v363 = vunpack.c.h.b16 %v354
  %v364 = vpack.c.b16 %v359, %v358
  %v365 = vpack.c.b16 %v360, %v360
  %v366 = vpack.c.b16 %v362, %v361
  %v367 = vpack.c.b16 %v363, %v363
  %372 = vst [vmem:[%s5] sm:$0xff] %v364
  %373 = vst [vmem:[%s5 + $0x8] sm:$0xf] %v365
  %374 = vst [vmem:[%s5 + $0xc] sm:$0x11] %v366
  %375 = vst [vmem:[%s5 + $0x14] sm:$0x1] %v367
  // Predicated region
  $region26: #{_lambda_.32} parent=0 // pred_check
    _
  $region27: #{_lambda_.32} parent=0 // pred_check_branch
    %377 = sbr.rel (0) target = $region29
  $region28: #{_lambda_.32} parent=0 // pred_region
    _
  $region29: #{_lambda_.32} parent=0 // pred_fallthru
    _
  // Predicated region
  $region30: #{_lambda_.32} parent=0 // pred_check
    _
  $region31: #{_lambda_.32} parent=0 // pred_check_branch
    %379 = sbr.rel (0) target = $region33
  $region32: #{_lambda_.32} parent=0 // pred_region
    _
  $region33: #{_lambda_.32} parent=0 // pred_fallthru
    _

// kernel: _lambda_.47
$region0: #{_lambda_.47}
  #allocation0 [shape = 'u32[]', space=smem, size = 0x4, offset = 0x4, fixed_abs, tag = 'smem constant byte address 0x4 - core index']
  #allocation1 [shape = 'u32[144,128]{1,0:T(1,128)}', space=vmem, size = 0x12000, scoped, tag = 'internal scratch']
  #allocation2 [shape = 'f32[10,256]{1,0:T(8,128)}', space=vmem, size = 0x4000, scoped, tag = 'scratch operand']
  %s0 = inlined_call_operand.vmem [shape: bf16[10,128], index: 0, kind: input, shape index: {}]
  %s1 = inlined_call_operand.vmem [shape: bf16[128,256], index: 1, kind: input, shape index: {}]
  %s2 = inlined_call_operand.vmem [shape: f32[1,256], index: 2, kind: input, shape index: {}]
  %s3 = inlined_call_operand.vmem [shape: bf16[10,256], index: 3, kind: output, shape index: {}]
  %s4 = sld [smem:[#allocation0]]
  $region30: #{_lambda_.47} parent=0
    _
  %s6 = ssub.s32 1, %s4
  %s7 = scalar_select 0, %s6, %s4
  // Predicated region
  $region2: #{_lambda_.47} parent=0 // pred_check
    _
  $region3: #{_lambda_.47} parent=0 // pred_check_branch
    %9 = sbr.rel (0) target = $region5
  $region4: #{_lambda_.47} parent=0 // pred_region
    _
  $region5: #{_lambda_.47} parent=0 // pred_fallthru
    _
  // Predicated region
  $region6: #{_lambda_.47} parent=0 // pred_check
    _
  $region7: #{_lambda_.47} parent=0 // pred_check_branch
    %11 = sbr.rel (0) target = $region9
  $region8: #{_lambda_.47} parent=0 // pred_region
    _
  $region9: #{_lambda_.47} parent=0 // pred_fallthru
    _
  // Predicated region
  $region10: #{_lambda_.47} parent=0 // pred_check
    _
  $region11: #{_lambda_.47} parent=0 // pred_check_branch
    %13 = sbr.rel (0) target = $region13
  $region12: #{_lambda_.47} parent=0 // pred_region
    _
  $region13: #{_lambda_.47} parent=0 // pred_fallthru
    _
  %p15 = scmp.eq.s32.totalorder 0, 0
  // Predicated region
  $region14: #{_lambda_.47} parent=0 // pred_check
    %p16 = pneg %p15
  $region15: #{_lambda_.47} parent=0 // pred_check_branch
    %18 = sbr.rel (%p16) target = $region17
  $region16: #{_lambda_.47} parent=0 // pred_region
    %19 = vst [vmem:[#allocation2] sm:$0xff] 0.0
    %20 = vst [vmem:[#allocation2 + $0x8] sm:$0xff] 0.0
    %21 = vst [vmem:[#allocation2 + $0x10] sm:$0x3] 0.0
    %22 = vst [vmem:[#allocation2 + $0x18] sm:$0x3] 0.0
  $region17: #{_lambda_.47} parent=0 // pred_fallthru
    _
  %v23 = vld [vmem:[#allocation2] sm:$0xff]
  %v24 = vld [vmem:[#allocation2 + $0x8] sm:$0xff]
  %v25 = vld [vmem:[#allocation2 + $0x10] sm:$0x3]
  %v26 = vld [vmem:[#allocation2 + $0x18] sm:$0x3]
  %v27 = vld [vmem:[%s0] sm:$0xf]
  %v28 = vld [vmem:[%s0 + $0x4] sm:$0x1]
  %v29 = vld [vmem:[%s1] sm:$0xff]
  %v30 = vld [vmem:[%s1 + $0x8] sm:$0xff]
  %v31 = vld [vmem:[%s1 + $0x10] sm:$0xff]
  %v32 = vld [vmem:[%s1 + $0x18] sm:$0xff]
  %v33 = vld [vmem:[%s1 + $0x20] sm:$0xff]
  %v34 = vld [vmem:[%s1 + $0x28] sm:$0xff]
  %v35 = vld [vmem:[%s1 + $0x30] sm:$0xff]
  %v36 = vld [vmem:[%s1 + $0x38] sm:$0xff]
  %v37 = vld [vmem:[%s1 + $0x40] sm:$0xff]
  %v38 = vld [vmem:[%s1 + $0x48] sm:$0xff]
  %v39 = vld [vmem:[%s1 + $0x50] sm:$0xff]
  %v40 = vld [vmem:[%s1 + $0x58] sm:$0xff]
  %v41 = vld [vmem:[%s1 + $0x60] sm:$0xff]
  %v42 = vld [vmem:[%s1 + $0x68] sm:$0xff]
  %v43 = vld [vmem:[%s1 + $0x70] sm:$0xff]
  %v44 = vld [vmem:[%s1 + $0x78] sm:$0xff]
  %v47 = vunpack.c.l.b16 %v27
  %v48 = vunpack.c.l.b16 %v28
  %v49 = vpack.c.b16 %v48, %v47
  %v67 = vunpack.c.l.b16 %v29
  %v68 = vunpack.c.h.b16 %v29
  %v69 = vunpack.c.l.b16 %v30
  %v70 = vunpack.c.h.b16 %v30
  %v71 = vunpack.c.l.b16 %v31
  %v72 = vunpack.c.h.b16 %v31
  %v73 = vunpack.c.l.b16 %v32
  %v74 = vunpack.c.h.b16 %v32
  %v75 = vunpack.c.l.b16 %v33
  %v76 = vunpack.c.h.b16 %v33
  %v77 = vunpack.c.l.b16 %v34
  %v78 = vunpack.c.h.b16 %v34
  %v79 = vunpack.c.l.b16 %v35
  %v80 = vunpack.c.h.b16 %v35
  %v81 = vunpack.c.l.b16 %v36
  %v82 = vunpack.c.h.b16 %v36
  %v83 = vunpack.c.l.b16 %v37
  %v84 = vunpack.c.h.b16 %v37
  %v85 = vunpack.c.l.b16 %v38
  %v86 = vunpack.c.h.b16 %v38
  %v87 = vunpack.c.l.b16 %v39
  %v88 = vunpack.c.h.b16 %v39
  %v89 = vunpack.c.l.b16 %v40
  %v90 = vunpack.c.h.b16 %v40
  %v91 = vunpack.c.l.b16 %v41
  %v92 = vunpack.c.h.b16 %v41
  %v93 = vunpack.c.l.b16 %v42
  %v94 = vunpack.c.h.b16 %v42
  %v95 = vunpack.c.l.b16 %v43
  %v96 = vunpack.c.h.b16 %v43
  %v97 = vunpack.c.l.b16 %v44
  %v98 = vunpack.c.h.b16 %v44
  %v99 = vpack.c.b16 %v69, %v67
  %v100 = vpack.c.b16 %v70, %v68
  %v101 = vpack.c.b16 %v73, %v71
  %v102 = vpack.c.b16 %v74, %v72
  %v103 = vpack.c.b16 %v77, %v75
  %v104 = vpack.c.b16 %v78, %v76
  %v105 = vpack.c.b16 %v81, %v79
  %v106 = vpack.c.b16 %v82, %v80
  %v107 = vpack.c.b16 %v85, %v83
  %v108 = vpack.c.b16 %v86, %v84
  %v109 = vpack.c.b16 %v89, %v87
  %v110 = vpack.c.b16 %v90, %v88
  %v111 = vpack.c.b16 %v93, %v91
  %v112 = vpack.c.b16 %v94, %v92
  %v113 = vpack.c.b16 %v97, %v95
  %v114 = vpack.c.b16 %v98, %v96
  %131 = vmatprep.subr.bf16.mxu0 %v100
  %132 = vmatpush1.bf16.msra.mxu0 %v99
  %133 = vmatprep.subr.bf16.mxu0 %v102
  %134 = vmatpush1.bf16.msra.mxu0 %v101
  %135 = vmatprep.subr.bf16.mxu0 %v104
  %136 = vmatpush1.bf16.msra.mxu0 %v103
  %137 = vmatprep.subr.bf16.mxu0 %v106
  %138 = vmatpush1.bf16.msra.mxu0 %v105
  %139 = vmatprep.subr.bf16.mxu0 %v108
  %140 = vmatpush1.bf16.msra.mxu0 %v107
  %141 = vmatprep.subr.bf16.mxu0 %v110
  %142 = vmatpush1.bf16.msra.mxu0 %v109
  %143 = vmatprep.subr.bf16.mxu0 %v112
  %144 = vmatpush1.bf16.msra.mxu0 %v111
  %145 = vmatprep.subr.bf16.mxu0 %v114
  %146 = vmatpush1.bf16.msra.mxu0 %v113
  %147 = vmatprep.subr.bf16.mxu0 0
  %148 = vmatpush1.bf16.msra.mxu0 0
  %149 = vmatprep.subr.bf16.mxu0 0
  %150 = vmatpush1.bf16.msra.mxu0 0
  %151 = vmatprep.subr.bf16.mxu0 0
  %152 = vmatpush1.bf16.msra.mxu0 0
  %153 = vmatprep.subr.bf16.mxu0 0
  %154 = vmatpush1.bf16.msra.mxu0 0
  %155 = vmatprep.subr.bf16.mxu0 0
  %156 = vmatpush1.bf16.msra.mxu0 0
  %157 = vmatprep.subr.bf16.mxu0 0
  %158 = vmatpush1.bf16.msra.mxu0 0
  %159 = vmatprep.subr.bf16.mxu0 0
  %160 = vmatpush1.bf16.msra.mxu0 0
  %161 = vmatprep.subr.bf16.mxu0 0
  %162 = vmatpush1.bf16.msra.mxu0 0
  %163 = vmatprep.mubr.bf16.mxu0 0
  %164 = vmatmul.mubr.bf16.gmra.mrb[0].mxu0 %v49
  %v165 = vpop.f32.mrb[0].mxu0
  %v166 = vadd.f32 0.0, %v165
  %v167 = vpop.f32.mrb[0].mxu0
  %v168 = vadd.f32 0.0, %v167
  %v169 = vpop.f32.mrb[0].mxu0
  %v170 = vadd.f32 0.0, %v169
  %v171 = vpop.f32.mrb[0].mxu0
  %v172 = vadd.f32 0.0, %v171
  %173 = vdwg.mxu0
  %v174 = vadd.f32 %v23, %v166
  %v175 = vadd.f32 %v24, %v168
  %v176 = vadd.f32 %v25, %v170
  %v177 = vadd.f32 %v26, %v172
  %178 = vst [vmem:[#allocation2] sm:$0xff] %v174
  %179 = vst [vmem:[#allocation2 + $0x8] sm:$0xff] %v175
  %180 = vst [vmem:[#allocation2 + $0x10] sm:$0x3] %v176
  %181 = vst [vmem:[#allocation2 + $0x18] sm:$0x3] %v177
  // Predicated region
  $region18: #{_lambda_.47} parent=0 // pred_check
    %p182 = pneg %p15
  $region19: #{_lambda_.47} parent=0 // pred_check_branch
    %184 = sbr.rel (%p182) target = $region21
  $region20: #{_lambda_.47} parent=0 // pred_region
    %v185 = vld [vmem:[#allocation2] sm:$0xff]
    %v186 = vld [vmem:[#allocation2 + $0x8] sm:$0xff]
    %v187 = vld [vmem:[#allocation2 + $0x10] sm:$0x3]
    %v188 = vld [vmem:[#allocation2 + $0x18] sm:$0x3]
    %v189 = vld [vmem:[%s2] sm:$0x3]
    %v191 = vlaneseq
    %v192 = vshrl.u32 %v191, 7
    %v193 = vsub.s32 0, %v192
    %v194 = vrot.slane %v189, %v193
    %v195 = vlaneseq
    %v196 = vshrl.u32 %v195, 7
    %v197 = vsub.s32 1, %v196
    %v198 = vrot.slane %v189, %v197
    %v201 = vadd.f32 %v185, %v194
    %v202 = vadd.f32 %v186, %v198
    %v203 = vadd.f32 %v187, %v194
    %v204 = vadd.f32 %v188, %v198
    %v205 = vpack.c.bf16 %v203, %v201
    %v206 = vpack.c.bf16 %v204, %v202
    %v209 = vunpack.c.l.b16 %v205
    %v210 = vunpack.c.l.b16 %v206
    %v211 = vunpack.c.h.b16 %v205
    %v212 = vunpack.c.h.b16 %v206
    %v213 = vpack.c.b16 %v210, %v209
    %v214 = vpack.c.b16 %v212, %v211
    %217 = vst [vmem:[%s3] sm:$0xff] %v213
    %218 = vst [vmem:[%s3 + $0x8] sm:$0x11] %v214
  $region21: #{_lambda_.47} parent=0 // pred_fallthru
    _
  // Predicated region
  $region22: #{_lambda_.47} parent=0 // pred_check
    _
  $region23: #{_lambda_.47} parent=0 // pred_check_branch
    %220 = sbr.rel (0) target = $region25
  $region24: #{_lambda_.47} parent=0 // pred_region
    _
  $region25: #{_lambda_.47} parent=0 // pred_fallthru
    _
  // Predicated region
  $region26: #{_lambda_.47} parent=0 // pred_check
    _
  $region27: #{_lambda_.47} parent=0 // pred_check_branch
    %222 = sbr.rel (0) target = $region29
  $region28: #{_lambda_.47} parent=0 // pred_region
    _
  $region29: #{_lambda_.47} parent=0 // pred_fallthru
    _

// kernel: _lambda_.42
$region0: #{_lambda_.42}
  #allocation0 [shape = 'u32[]', space=smem, size = 0x4, offset = 0x4, fixed_abs, tag = 'smem constant byte address 0x4 - core index']
  #allocation1 [shape = 'u32[144,128]{1,0:T(1,128)}', space=vmem, size = 0x12000, scoped, tag = 'internal scratch']
  #allocation2 [shape = 'bf16[10,128]{1,0:T(8,128)(2,1)}', space=vmem, size = 0x1000, scoped, tag = 'scratch operand']
  %s0 = inlined_call_operand.vmem [shape: bf16[10,128], index: 0, kind: input, shape index: {}]
  %s1 = inlined_call_operand.vmem [shape: f32[1,128], index: 1, kind: input, shape index: {}]
  %s2 = inlined_call_operand.vmem [shape: f32[1,128], index: 2, kind: input, shape index: {}]
  %s3 = inlined_call_operand.vmem [shape: bf16[128,128], index: 3, kind: input, shape index: {}]
  %s4 = inlined_call_operand.vmem [shape: f32[1,128], index: 4, kind: input, shape index: {}]
  %s5 = inlined_call_operand.vmem [shape: bf16[10,128], index: 5, kind: output, shape index: {}]
  %s6 = sld [smem:[#allocation0]]
  $region34: #{_lambda_.42} parent=0
    _
  %s8 = ssub.s32 1, %s6
  %s9 = scalar_select 0, %s8, %s6
  // Predicated region
  $region2: #{_lambda_.42} parent=0 // pred_check
    _
  $region3: #{_lambda_.42} parent=0 // pred_check_branch
    %11 = sbr.rel (0) target = $region5
  $region4: #{_lambda_.42} parent=0 // pred_region
    _
  $region5: #{_lambda_.42} parent=0 // pred_fallthru
    _
  // Predicated region
  $region6: #{_lambda_.42} parent=0 // pred_check
    _
  $region7: #{_lambda_.42} parent=0 // pred_check_branch
    %13 = sbr.rel (0) target = $region9
  $region8: #{_lambda_.42} parent=0 // pred_region
    _
  $region9: #{_lambda_.42} parent=0 // pred_fallthru
    _
  // Predicated region
  $region10: #{_lambda_.42} parent=0 // pred_check
    _
  $region11: #{_lambda_.42} parent=0 // pred_check_branch
    %15 = sbr.rel (0) target = $region13
  $region12: #{_lambda_.42} parent=0 // pred_region
    _
  $region13: #{_lambda_.42} parent=0 // pred_fallthru
    _
  // Predicated region
  $region14: #{_lambda_.42} parent=0 // pred_check
    _
  $region15: #{_lambda_.42} parent=0 // pred_check_branch
    %17 = sbr.rel (0) target = $region17
  $region16: #{_lambda_.42} parent=0 // pred_region
    _
  $region17: #{_lambda_.42} parent=0 // pred_fallthru
    _
  // Predicated region
  $region18: #{_lambda_.42} parent=0 // pred_check
    _
  $region19: #{_lambda_.42} parent=0 // pred_check_branch
    %19 = sbr.rel (0) target = $region21
  $region20: #{_lambda_.42} parent=0 // pred_region
    _
  $region21: #{_lambda_.42} parent=0 // pred_fallthru
    _
  %p21 = scmp.eq.s32.totalorder 0, 0
  // Predicated region
  $region22: #{_lambda_.42} parent=0 // pred_check
    %p22 = pneg %p21
  $region23: #{_lambda_.42} parent=0 // pred_check_branch
    %24 = sbr.rel (%p22) target = $region25
  $region24: #{_lambda_.42} parent=0 // pred_region
    %v25 = vld [vmem:[%s0] sm:$0xf]
    %v26 = vld [vmem:[%s0 + $0x4] sm:$0x1]
    %v27 = vunpack.c.l.bf16 %v25
    %v28 = vunpack.c.l.bf16 %v26
    %29 = vadd.xlane.f32.xlu0 %v27
    %v30 = vpop.xlane.xlu0 %29
    %vm31 = vcmask 1041408
    %v32 = vsel %vm31, %v28, 0.0
    %33 = vadd.xlane.f32.xlu0 %v32
    %v34 = vpop.xlane.xlu0 %33
    %v35 = vrcp.pop 128.0
    %v36 = vmul.f32 %v30, %v35
    %v37 = vmul.f32 %v34, %v35
    %v38 = vsub.f32 %v27, %v36
    %v39 = vsub.f32 %v28, %v37
    %v40 = vmul.f32 %v38, %v38
    %v41 = vmul.f32 %v39, %v39
    %42 = vadd.xlane.f32.xlu0 %v40
    %v43 = vpop.xlane.xlu0 %42
    %v44 = vsel %vm31, %v41, 0.0
    %45 = vadd.xlane.f32.xlu0 %v44
    %v46 = vpop.xlane.xlu0 %45
    %v47 = vmul.f32 %v43, %v35
    %v48 = vmul.f32 %v46, %v35
    %v49 = vadd.f32 %v47, 1e-05
    %v50 = vadd.f32 %v48, 1e-05
    %v51 = vrsqrt.pop %v49
    %v52 = vrsqrt.pop %v50
    %v53 = vmul.f32 %v38, %v51
    %v54 = vmul.f32 %v39, %v52
    %v55 = vld [vmem:[%s1] sm:$0x1]
    %v57 = vlaneseq
    %v58 = vshrl.u32 %v57, 7
    %v59 = vsub.s32 0, %v58
    %v60 = vrot.slane %v55, %v59
    %v62 = vmul.f32 %v53, %v60
    %v63 = vmul.f32 %v54, %v60
    %v64 = vld [vmem:[%s2] sm:$0x1]
    %v66 = vlaneseq
    %v67 = vshrl.u32 %v66, 7
    %v68 = vsub.s32 0, %v67
    %v69 = vrot.slane %v64, %v68
    %v71 = vadd.f32 %v62, %v69
    %v72 = vadd.f32 %v63, %v69
    %v73 = vpack.c.bf16 %v72, %v71
    %v75 = vunpack.c.l.b16 %v73
    %v76 = vunpack.c.h.b16 %v73
    %v77 = vpack.c.b16 %v75, %v75
    %v78 = vpack.c.b16 %v76, %v76
    %81 = vst [vmem:[#allocation2] sm:$0xf] %v77
    %82 = vst [vmem:[#allocation2 + $0x4] sm:$0x1] %v78
  $region25: #{_lambda_.42} parent=0 // pred_fallthru
    _
  %v83 = vld [vmem:[#allocation2] sm:$0xf]
  %v84 = vld [vmem:[#allocation2 + $0x4] sm:$0x1]
  %v85 = vld [vmem:[%s3] sm:$0xf]
  %v86 = vld [vmem:[%s3 + $0x4] sm:$0xf]
  %v87 = vld [vmem:[%s3 + $0x8] sm:$0xf]
  %v88 = vld [vmem:[%s3 + $0xc] sm:$0xf]
  %v89 = vld [vmem:[%s3 + $0x10] sm:$0xf]
  %v90 = vld [vmem:[%s3 + $0x14] sm:$0xf]
  %v91 = vld [vmem:[%s3 + $0x18] sm:$0xf]
  %v92 = vld [vmem:[%s3 + $0x1c] sm:$0xf]
  %v93 = vld [vmem:[%s3 + $0x20] sm:$0xf]
  %v94 = vld [vmem:[%s3 + $0x24] sm:$0xf]
  %v95 = vld [vmem:[%s3 + $0x28] sm:$0xf]
  %v96 = vld [vmem:[%s3 + $0x2c] sm:$0xf]
  %v97 = vld [vmem:[%s3 + $0x30] sm:$0xf]
  %v98 = vld [vmem:[%s3 + $0x34] sm:$0xf]
  %v99 = vld [vmem:[%s3 + $0x38] sm:$0xf]
  %v100 = vld [vmem:[%s3 + $0x3c] sm:$0xf]
  %v101 = vld [vmem:[%s4] sm:$0x1]
  %v103 = vlaneseq
  %v104 = vshrl.u32 %v103, 7
  %v105 = vsub.s32 0, %v104
  %v106 = vrot.slane %v101, %v105
  %v110 = vunpack.c.l.b16 %v83
  %v111 = vunpack.c.l.b16 %v84
  %v112 = vpack.c.b16 %v111, %v110
  %v130 = vunpack.c.l.b16 %v85
  %v131 = vunpack.c.l.b16 %v86
  %v132 = vunpack.c.l.b16 %v87
  %v133 = vunpack.c.l.b16 %v88
  %v134 = vunpack.c.l.b16 %v89
  %v135 = vunpack.c.l.b16 %v90
  %v136 = vunpack.c.l.b16 %v91
  %v137 = vunpack.c.l.b16 %v92
  %v138 = vunpack.c.l.b16 %v93
  %v139 = vunpack.c.l.b16 %v94
  %v140 = vunpack.c.l.b16 %v95
  %v141 = vunpack.c.l.b16 %v96
  %v142 = vunpack.c.l.b16 %v97
  %v143 = vunpack.c.l.b16 %v98
  %v144 = vunpack.c.l.b16 %v99
  %v145 = vunpack.c.l.b16 %v100
  %v146 = vpack.c.b16 %v131, %v130
  %v147 = vpack.c.b16 %v133, %v132
  %v148 = vpack.c.b16 %v135, %v134
  %v149 = vpack.c.b16 %v137, %v136
  %v150 = vpack.c.b16 %v139, %v138
  %v151 = vpack.c.b16 %v141, %v140
  %v152 = vpack.c.b16 %v143, %v142
  %v153 = vpack.c.b16 %v145, %v144
  %162 = vmatprep.subr.bf16.mxu0 0
  %163 = vmatpush1.bf16.msra.mxu0 %v146
  %164 = vmatprep.subr.bf16.mxu0 0
  %165 = vmatpush1.bf16.msra.mxu0 %v147
  %166 = vmatprep.subr.bf16.mxu0 0
  %167 = vmatpush1.bf16.msra.mxu0 %v148
  %168 = vmatprep.subr.bf16.mxu0 0
  %169 = vmatpush1.bf16.msra.mxu0 %v149
  %170 = vmatprep.subr.bf16.mxu0 0
  %171 = vmatpush1.bf16.msra.mxu0 %v150
  %172 = vmatprep.subr.bf16.mxu0 0
  %173 = vmatpush1.bf16.msra.mxu0 %v151
  %174 = vmatprep.subr.bf16.mxu0 0
  %175 = vmatpush1.bf16.msra.mxu0 %v152
  %176 = vmatprep.subr.bf16.mxu0 0
  %177 = vmatpush1.bf16.msra.mxu0 %v153
  %178 = vmatprep.subr.bf16.mxu0 0
  %179 = vmatpush1.bf16.msra.mxu0 0
  %180 = vmatprep.subr.bf16.mxu0 0
  %181 = vmatpush1.bf16.msra.mxu0 0
  %182 = vmatprep.subr.bf16.mxu0 0
  %183 = vmatpush1.bf16.msra.mxu0 0
  %184 = vmatprep.subr.bf16.mxu0 0
  %185 = vmatpush1.bf16.msra.mxu0 0
  %186 = vmatprep.subr.bf16.mxu0 0
  %187 = vmatpush1.bf16.msra.mxu0 0
  %188 = vmatprep.subr.bf16.mxu0 0
  %189 = vmatpush1.bf16.msra.mxu0 0
  %190 = vmatprep.subr.bf16.mxu0 0
  %191 = vmatpush1.bf16.msra.mxu0 0
  %192 = vmatprep.subr.bf16.mxu0 0
  %193 = vmatpush1.bf16.msra.mxu0 0
  %194 = vmatprep.mubr.bf16.mxu0 0
  %195 = vmatmul.mubr.bf16.gmra.mrb[0].mxu0 %v112
  %v196 = vpop.f32.mrb[0].mxu0
  %v197 = vadd.f32 %v106, %v196
  %v198 = vpop.f32.mrb[0].mxu0
  %v199 = vpop.f32.mrb[0].mxu0
  %v200 = vadd.f32 %v106, %v199
  %v201 = vpop.f32.mrb[0].mxu0
  %202 = vdwg.mxu0
  %v203 = vpack.c.bf16 %v200, %v197
  %v205 = vunpack.c.l.b16 %v203
  %v206 = vunpack.c.h.b16 %v203
  %v207 = vpack.c.b16 %v205, %v205
  %v208 = vpack.c.b16 %v206, %v206
  %211 = vst [vmem:[%s5] sm:$0xf] %v207
  %212 = vst [vmem:[%s5 + $0x4] sm:$0x1] %v208
  // Predicated region
  $region26: #{_lambda_.42} parent=0 // pred_check
    _
  $region27: #{_lambda_.42} parent=0 // pred_check_branch
    %214 = sbr.rel (0) target = $region29
  $region28: #{_lambda_.42} parent=0 // pred_region
    _
  $region29: #{_lambda_.42} parent=0 // pred_fallthru
    _
  // Predicated region
  $region30: #{_lambda_.42} parent=0 // pred_check
    _
  $region31: #{_lambda_.42} parent=0 // pred_check_branch
    %216 = sbr.rel (0) target = $region33
  $region32: #{_lambda_.42} parent=0 // pred_region
    _
  $region33: #{_lambda_.42} parent=0 // pred_fallthru
    _

// kernel: _lambda_.35
$region0: #{_lambda_.35}
  #allocation0 [shape = 'u32[]', space=smem, size = 0x4, offset = 0x4, fixed_abs, tag = 'smem constant byte address 0x4 - core index']
  #allocation1 [shape = 'u32[144,128]{1,0:T(1,128)}', space=vmem, size = 0x12000, scoped, tag = 'internal scratch']
  #allocation2 [shape = 'bf16[10,128]{1,0:T(8,128)(2,1)}', space=vmem, size = 0x1000, scoped, tag = 'scratch operand']
  %s0 = inlined_call_operand.vmem [shape: bf16[10,128], index: 0, kind: input, shape index: {}]
  %s1 = inlined_call_operand.vmem [shape: f32[1,128], index: 1, kind: input, shape index: {}]
  %s2 = inlined_call_operand.vmem [shape: f32[1,128], index: 2, kind: input, shape index: {}]
  %s3 = inlined_call_operand.vmem [shape: bf16[128,512], index: 3, kind: input, shape index: {}]
  %s4 = inlined_call_operand.vmem [shape: f32[1,512], index: 4, kind: input, shape index: {}]
  %s5 = inlined_call_operand.vmem [shape: bf16[10,512], index: 5, kind: output, shape index: {}]
  %s6 = sld [smem:[#allocation0]]
  $region34: #{_lambda_.35} parent=0
    _
  %s8 = ssub.s32 1, %s6
  %s9 = scalar_select 0, %s8, %s6
  // Predicated region
  $region2: #{_lambda_.35} parent=0 // pred_check
    _
  $region3: #{_lambda_.35} parent=0 // pred_check_branch
    %11 = sbr.rel (0) target = $region5
  $region4: #{_lambda_.35} parent=0 // pred_region
    _
  $region5: #{_lambda_.35} parent=0 // pred_fallthru
    _
  // Predicated region
  $region6: #{_lambda_.35} parent=0 // pred_check
    _
  $region7: #{_lambda_.35} parent=0 // pred_check_branch
    %13 = sbr.rel (0) target = $region9
  $region8: #{_lambda_.35} parent=0 // pred_region
    _
  $region9: #{_lambda_.35} parent=0 // pred_fallthru
    _
  // Predicated region
  $region10: #{_lambda_.35} parent=0 // pred_check
    _
  $region11: #{_lambda_.35} parent=0 // pred_check_branch
    %15 = sbr.rel (0) target = $region13
  $region12: #{_lambda_.35} parent=0 // pred_region
    _
  $region13: #{_lambda_.35} parent=0 // pred_fallthru
    _
  // Predicated region
  $region14: #{_lambda_.35} parent=0 // pred_check
    _
  $region15: #{_lambda_.35} parent=0 // pred_check_branch
    %17 = sbr.rel (0) target = $region17
  $region16: #{_lambda_.35} parent=0 // pred_region
    _
  $region17: #{_lambda_.35} parent=0 // pred_fallthru
    _
  // Predicated region
  $region18: #{_lambda_.35} parent=0 // pred_check
    _
  $region19: #{_lambda_.35} parent=0 // pred_check_branch
    %19 = sbr.rel (0) target = $region21
  $region20: #{_lambda_.35} parent=0 // pred_region
    _
  $region21: #{_lambda_.35} parent=0 // pred_fallthru
    _
  %p21 = scmp.eq.s32.totalorder 0, 0
  // Predicated region
  $region22: #{_lambda_.35} parent=0 // pred_check
    %p22 = pneg %p21
  $region23: #{_lambda_.35} parent=0 // pred_check_branch
    %24 = sbr.rel (%p22) target = $region25
  $region24: #{_lambda_.35} parent=0 // pred_region
    %v25 = vld [vmem:[%s0] sm:$0xf]
    %v26 = vld [vmem:[%s0 + $0x4] sm:$0x1]
    %v27 = vunpack.c.l.bf16 %v25
    %v28 = vunpack.c.l.bf16 %v26
    %29 = vadd.xlane.f32.xlu0 %v27
    %v30 = vpop.xlane.xlu0 %29
    %vm31 = vcmask 1041408
    %v32 = vsel %vm31, %v28, 0.0
    %33 = vadd.xlane.f32.xlu0 %v32
    %v34 = vpop.xlane.xlu0 %33
    %v35 = vrcp.pop 128.0
    %v36 = vmul.f32 %v30, %v35
    %v37 = vmul.f32 %v34, %v35
    %v38 = vsub.f32 %v27, %v36
    %v39 = vsub.f32 %v28, %v37
    %v40 = vmul.f32 %v38, %v38
    %v41 = vmul.f32 %v39, %v39
    %42 = vadd.xlane.f32.xlu0 %v40
    %v43 = vpop.xlane.xlu0 %42
    %v44 = vsel %vm31, %v41, 0.0
    %45 = vadd.xlane.f32.xlu0 %v44
    %v46 = vpop.xlane.xlu0 %45
    %v47 = vmul.f32 %v43, %v35
    %v48 = vmul.f32 %v46, %v35
    %v49 = vadd.f32 %v47, 1e-05
    %v50 = vadd.f32 %v48, 1e-05
    %v51 = vrsqrt.pop %v49
    %v52 = vrsqrt.pop %v50
    %v53 = vmul.f32 %v38, %v51
    %v54 = vmul.f32 %v39, %v52
    %v55 = vld [vmem:[%s1] sm:$0x1]
    %v57 = vlaneseq
    %v58 = vshrl.u32 %v57, 7
    %v59 = vsub.s32 0, %v58
    %v60 = vrot.slane %v55, %v59
    %v62 = vmul.f32 %v53, %v60
    %v63 = vmul.f32 %v54, %v60
    %v64 = vld [vmem:[%s2] sm:$0x1]
    %v66 = vlaneseq
    %v67 = vshrl.u32 %v66, 7
    %v68 = vsub.s32 0, %v67
    %v69 = vrot.slane %v64, %v68
    %v71 = vadd.f32 %v62, %v69
    %v72 = vadd.f32 %v63, %v69
    %v73 = vpack.c.bf16 %v72, %v71
    %v75 = vunpack.c.l.b16 %v73
    %v76 = vunpack.c.h.b16 %v73
    %v77 = vpack.c.b16 %v75, %v75
    %v78 = vpack.c.b16 %v76, %v76
    %81 = vst [vmem:[#allocation2] sm:$0xf] %v77
    %82 = vst [vmem:[#allocation2 + $0x4] sm:$0x1] %v78
  $region25: #{_lambda_.35} parent=0 // pred_fallthru
    _
  %v83 = vld [vmem:[#allocation2] sm:$0xf]
  %v84 = vld [vmem:[#allocation2 + $0x4] sm:$0x1]
  %v85 = vld [vmem:[%s3] sm:$0xff]
  %v86 = vld [vmem:[%s3 + $0x8] sm:$0xff]
  %v87 = vld [vmem:[%s3 + $0x10] sm:$0xff]
  %v88 = vld [vmem:[%s3 + $0x18] sm:$0xff]
  %v89 = vld [vmem:[%s3 + $0x20] sm:$0xff]
  %v90 = vld [vmem:[%s3 + $0x28] sm:$0xff]
  %v91 = vld [vmem:[%s3 + $0x30] sm:$0xff]
  %v92 = vld [vmem:[%s3 + $0x38] sm:$0xff]
  %v93 = vld [vmem:[%s3 + $0x40] sm:$0xff]
  %v94 = vld [vmem:[%s3 + $0x48] sm:$0xff]
  %v95 = vld [vmem:[%s3 + $0x50] sm:$0xff]
  %v96 = vld [vmem:[%s3 + $0x58] sm:$0xff]
  %v97 = vld [vmem:[%s3 + $0x60] sm:$0xff]
  %v98 = vld [vmem:[%s3 + $0x68] sm:$0xff]
  %v99 = vld [vmem:[%s3 + $0x70] sm:$0xff]
  %v100 = vld [vmem:[%s3 + $0x78] sm:$0xff]
  %v101 = vld [vmem:[%s3 + $0x80] sm:$0xff]
  %v102 = vld [vmem:[%s3 + $0x88] sm:$0xff]
  %v103 = vld [vmem:[%s3 + $0x90] sm:$0xff]
  %v104 = vld [vmem:[%s3 + $0x98] sm:$0xff]
  %v105 = vld [vmem:[%s3 + $0xa0] sm:$0xff]
  %v106 = vld [vmem:[%s3 + $0xa8] sm:$0xff]
  %v107 = vld [vmem:[%s3 + $0xb0] sm:$0xff]
  %v108 = vld [vmem:[%s3 + $0xb8] sm:$0xff]
  %v109 = vld [vmem:[%s3 + $0xc0] sm:$0xff]
  %v110 = vld [vmem:[%s3 + $0xc8] sm:$0xff]
  %v111 = vld [vmem:[%s3 + $0xd0] sm:$0xff]
  %v112 = vld [vmem:[%s3 + $0xd8] sm:$0xff]
  %v113 = vld [vmem:[%s3 + $0xe0] sm:$0xff]
  %v114 = vld [vmem:[%s3 + $0xe8] sm:$0xff]
  %v115 = vld [vmem:[%s3 + $0xf0] sm:$0xff]
  %v116 = vld [vmem:[%s3 + $0xf8] sm:$0xff]
  %v117 = vld [vmem:[%s4] sm:$0xf]
  %v119 = vlaneseq
  %v120 = vshrl.u32 %v119, 7
  %v121 = vsub.s32 0, %v120
  %v122 = vrot.slane %v117, %v121
  %v123 = vlaneseq
  %v124 = vshrl.u32 %v123, 7
  %v125 = vsub.s32 1, %v124
  %v126 = vrot.slane %v117, %v125
  %v127 = vlaneseq
  %v128 = vshrl.u32 %v127, 7
  %v129 = vsub.s32 2, %v128
  %v130 = vrot.slane %v117, %v129
  %v131 = vlaneseq
  %v132 = vshrl.u32 %v131, 7
  %v133 = vsub.s32 3, %v132
  %v134 = vrot.slane %v117, %v133
  %v141 = vunpack.c.l.b16 %v83
  %v142 = vunpack.c.l.b16 %v84
  %v143 = vpack.c.b16 %v142, %v141
  %v177 = vunpack.c.l.b16 %v85
  %v178 = vunpack.c.h.b16 %v85
  %v179 = vunpack.c.l.b16 %v86
  %v180 = vunpack.c.h.b16 %v86
  %v181 = vunpack.c.l.b16 %v87
  %v182 = vunpack.c.h.b16 %v87
  %v183 = vunpack.c.l.b16 %v88
  %v184 = vunpack.c.h.b16 %v88
  %v185 = vunpack.c.l.b16 %v89
  %v186 = vunpack.c.h.b16 %v89
  %v187 = vunpack.c.l.b16 %v90
  %v188 = vunpack.c.h.b16 %v90
  %v189 = vunpack.c.l.b16 %v91
  %v190 = vunpack.c.h.b16 %v91
  %v191 = vunpack.c.l.b16 %v92
  %v192 = vunpack.c.h.b16 %v92
  %v193 = vunpack.c.l.b16 %v93
  %v194 = vunpack.c.h.b16 %v93
  %v195 = vunpack.c.l.b16 %v94
  %v196 = vunpack.c.h.b16 %v94
  %v197 = vunpack.c.l.b16 %v95
  %v198 = vunpack.c.h.b16 %v95
  %v199 = vunpack.c.l.b16 %v96
  %v200 = vunpack.c.h.b16 %v96
  %v201 = vunpack.c.l.b16 %v97
  %v202 = vunpack.c.h.b16 %v97
  %v203 = vunpack.c.l.b16 %v98
  %v204 = vunpack.c.h.b16 %v98
  %v205 = vunpack.c.l.b16 %v99
  %v206 = vunpack.c.h.b16 %v99
  %v207 = vunpack.c.l.b16 %v100
  %v208 = vunpack.c.h.b16 %v100
  %v209 = vunpack.c.l.b16 %v101
  %v210 = vunpack.c.h.b16 %v101
  %v211 = vunpack.c.l.b16 %v102
  %v212 = vunpack.c.h.b16 %v102
  %v213 = vunpack.c.l.b16 %v103
  %v214 = vunpack.c.h.b16 %v103
  %v215 = vunpack.c.l.b16 %v104
  %v216 = vunpack.c.h.b16 %v104
  %v217 = vunpack.c.l.b16 %v105
  %v218 = vunpack.c.h.b16 %v105
  %v219 = vunpack.c.l.b16 %v106
  %v220 = vunpack.c.h.b16 %v106
  %v221 = vunpack.c.l.b16 %v107
  %v222 = vunpack.c.h.b16 %v107
  %v223 = vunpack.c.l.b16 %v108
  %v224 = vunpack.c.h.b16 %v108
  %v225 = vunpack.c.l.b16 %v109
  %v226 = vunpack.c.h.b16 %v109
  %v227 = vunpack.c.l.b16 %v110
  %v228 = vunpack.c.h.b16 %v110
  %v229 = vunpack.c.l.b16 %v111
  %v230 = vunpack.c.h.b16 %v111
  %v231 = vunpack.c.l.b16 %v112
  %v232 = vunpack.c.h.b16 %v112
  %v233 = vunpack.c.l.b16 %v113
  %v234 = vunpack.c.h.b16 %v113
  %v235 = vunpack.c.l.b16 %v114
  %v236 = vunpack.c.h.b16 %v114
  %v237 = vunpack.c.l.b16 %v115
  %v238 = vunpack.c.h.b16 %v115
  %v239 = vunpack.c.l.b16 %v116
  %v240 = vunpack.c.h.b16 %v116
  %v241 = vpack.c.b16 %v181, %v177
  %v242 = vpack.c.b16 %v182, %v178
  %v243 = vpack.c.b16 %v183, %v179
  %v244 = vpack.c.b16 %v184, %v180
  %v245 = vpack.c.b16 %v189, %v185
  %v246 = vpack.c.b16 %v190, %v186
  %v247 = vpack.c.b16 %v191, %v187
  %v248 = vpack.c.b16 %v192, %v188
  %v249 = vpack.c.b16 %v197, %v193
  %v250 = vpack.c.b16 %v198, %v194
  %v251 = vpack.c.b16 %v199, %v195
  %v252 = vpack.c.b16 %v200, %v196
  %v253 = vpack.c.b16 %v205, %v201
  %v254 = vpack.c.b16 %v206, %v202
  %v255 = vpack.c.b16 %v207, %v203
  %v256 = vpack.c.b16 %v208, %v204
  %v257 = vpack.c.b16 %v213, %v209
  %v258 = vpack.c.b16 %v214, %v210
  %v259 = vpack.c.b16 %v215, %v211
  %v260 = vpack.c.b16 %v216, %v212
  %v261 = vpack.c.b16 %v221, %v217
  %v262 = vpack.c.b16 %v222, %v218
  %v263 = vpack.c.b16 %v223, %v219
  %v264 = vpack.c.b16 %v224, %v220
  %v265 = vpack.c.b16 %v229, %v225
  %v266 = vpack.c.b16 %v230, %v226
  %v267 = vpack.c.b16 %v231, %v227
  %v268 = vpack.c.b16 %v232, %v228
  %v269 = vpack.c.b16 %v237, %v233
  %v270 = vpack.c.b16 %v238, %v234
  %v271 = vpack.c.b16 %v239, %v235
  %v272 = vpack.c.b16 %v240, %v236
  %305 = vmatprep.subr.bf16.mxu0 %v242
  %306 = vmatpush1.bf16.msra.mxu0 %v241
  %307 = vmatprep.subr.bf16.mxu0 %v246
  %308 = vmatpush1.bf16.msra.mxu0 %v245
  %309 = vmatprep.subr.bf16.mxu0 %v250
  %310 = vmatpush1.bf16.msra.mxu0 %v249
  %311 = vmatprep.subr.bf16.mxu0 %v254
  %312 = vmatpush1.bf16.msra.mxu0 %v253
  %313 = vmatprep.subr.bf16.mxu0 %v258
  %314 = vmatpush1.bf16.msra.mxu0 %v257
  %315 = vmatprep.subr.bf16.mxu0 %v262
  %316 = vmatpush1.bf16.msra.mxu0 %v261
  %317 = vmatprep.subr.bf16.mxu0 %v266
  %318 = vmatpush1.bf16.msra.mxu0 %v265
  %319 = vmatprep.subr.bf16.mxu0 %v270
  %320 = vmatpush1.bf16.msra.mxu0 %v269
  %321 = vmatprep.subr.bf16.mxu0 0
  %322 = vmatpush1.bf16.msra.mxu0 0
  %323 = vmatprep.subr.bf16.mxu0 0
  %324 = vmatpush1.bf16.msra.mxu0 0
  %325 = vmatprep.subr.bf16.mxu0 0
  %326 = vmatpush1.bf16.msra.mxu0 0
  %327 = vmatprep.subr.bf16.mxu0 0
  %328 = vmatpush1.bf16.msra.mxu0 0
  %329 = vmatprep.subr.bf16.mxu0 0
  %330 = vmatpush1.bf16.msra.mxu0 0
  %331 = vmatprep.subr.bf16.mxu0 0
  %332 = vmatpush1.bf16.msra.mxu0 0
  %333 = vmatprep.subr.bf16.mxu0 0
  %334 = vmatpush1.bf16.msra.mxu0 0
  %335 = vmatprep.subr.bf16.mxu0 0
  %336 = vmatpush1.bf16.msra.mxu0 0
  %337 = vmatprep.mubr.bf16.mxu0 0
  %338 = vmatmul.mubr.bf16.gmra.mrb[0].mxu0 %v143
  %v339 = vpop.f32.mrb[0].mxu0
  %v340 = vadd.f32 %v122, %v339
  %v341 = vpop.f32.mrb[0].mxu0
  %v342 = vadd.f32 %v126, %v341
  %v343 = vpop.f32.mrb[0].mxu0
  %v344 = vadd.f32 %v122, %v343
  %v345 = vpop.f32.mrb[0].mxu0
  %v346 = vadd.f32 %v126, %v345
  %347 = vdwg.mxu0
  %348 = vmatprep.subr.bf16.mxu0 %v244
  %349 = vmatpush1.bf16.msra.mxu0 %v243
  %350 = vmatprep.subr.bf16.mxu0 %v248
  %351 = vmatpush1.bf16.msra.mxu0 %v247
  %352 = vmatprep.subr.bf16.mxu0 %v252
  %353 = vmatpush1.bf16.msra.mxu0 %v251
  %354 = vmatprep.subr.bf16.mxu0 %v256
  %355 = vmatpush1.bf16.msra.mxu0 %v255
  %356 = vmatprep.subr.bf16.mxu0 %v260
  %357 = vmatpush1.bf16.msra.mxu0 %v259
  %358 = vmatprep.subr.bf16.mxu0 %v264
  %359 = vmatpush1.bf16.msra.mxu0 %v263
  %360 = vmatprep.subr.bf16.mxu0 %v268
  %361 = vmatpush1.bf16.msra.mxu0 %v267
  %362 = vmatprep.subr.bf16.mxu0 %v272
  %363 = vmatpush1.bf16.msra.mxu0 %v271
  %364 = vmatprep.subr.bf16.mxu0 0
  %365 = vmatpush1.bf16.msra.mxu0 0
  %366 = vmatprep.subr.bf16.mxu0 0
  %367 = vmatpush1.bf16.msra.mxu0 0
  %368 = vmatprep.subr.bf16.mxu0 0
  %369 = vmatpush1.bf16.msra.mxu0 0
  %370 = vmatprep.subr.bf16.mxu0 0
  %371 = vmatpush1.bf16.msra.mxu0 0
  %372 = vmatprep.subr.bf16.mxu0 0
  %373 = vmatpush1.bf16.msra.mxu0 0
  %374 = vmatprep.subr.bf16.mxu0 0
  %375 = vmatpush1.bf16.msra.mxu0 0
  %376 = vmatprep.subr.bf16.mxu0 0
  %377 = vmatpush1.bf16.msra.mxu0 0
  %378 = vmatprep.subr.bf16.mxu0 0
  %379 = vmatpush1.bf16.msra.mxu0 0
  %380 = vmatprep.mubr.bf16.mxu0 0
  %381 = vmatmul.mubr.bf16.gmra.mrb[0].mxu0 %v143
  %v382 = vpop.f32.mrb[0].mxu0
  %v383 = vadd.f32 %v130, %v382
  %v384 = vpop.f32.mrb[0].mxu0
  %v385 = vadd.f32 %v134, %v384
  %v386 = vpop.f32.mrb[0].mxu0
  %v387 = vadd.f32 %v130, %v386
  %v388 = vpop.f32.mrb[0].mxu0
  %v389 = vadd.f32 %v134, %v388
  %390 = vdwg.mxu0
  %v391 = vmul.f32 %v340, %v340
  %v392 = vmul.f32 %v342, %v342
  %v393 = vmul.f32 %v383, %v383
  %v394 = vmul.f32 %v385, %v385
  %v395 = vmul.f32 %v344, %v344
  %v396 = vmul.f32 %v346, %v346
  %v397 = vmul.f32 %v387, %v387
  %v398 = vmul.f32 %v389, %v389
  %v399 = vmul.f32 %v340, %v391
  %v400 = vmul.f32 %v342, %v392
  %v401 = vmul.f32 %v383, %v393
  %v402 = vmul.f32 %v385, %v394
  %v403 = vmul.f32 %v344, %v395
  %v404 = vmul.f32 %v346, %v396
  %v405 = vmul.f32 %v387, %v397
  %v406 = vmul.f32 %v389, %v398
  %v407 = vmul.f32 %v399, 0.044715
  %v408 = vmul.f32 %v400, 0.044715
  %v409 = vmul.f32 %v401, 0.044715
  %v410 = vmul.f32 %v402, 0.044715
  %v411 = vmul.f32 %v403, 0.044715
  %v412 = vmul.f32 %v404, 0.044715
  %v413 = vmul.f32 %v405, 0.044715
  %v414 = vmul.f32 %v406, 0.044715
  %v415 = vadd.f32 %v340, %v407
  %v416 = vadd.f32 %v342, %v408
  %v417 = vadd.f32 %v383, %v409
  %v418 = vadd.f32 %v385, %v410
  %v419 = vadd.f32 %v344, %v411
  %v420 = vadd.f32 %v346, %v412
  %v421 = vadd.f32 %v387, %v413
  %v422 = vadd.f32 %v389, %v414
  %v423 = vmul.f32 %v415, 0.7978846
  %v424 = vmul.f32 %v416, 0.7978846
  %v425 = vmul.f32 %v417, 0.7978846
  %v426 = vmul.f32 %v418, 0.7978846
  %v427 = vmul.f32 %v419, 0.7978846
  %v428 = vmul.f32 %v420, 0.7978846
  %v429 = vmul.f32 %v421, 0.7978846
  %v430 = vmul.f32 %v422, 0.7978846
  %v431 = vtanh.pop %v423
  %v432 = vtanh.pop %v424
  %v433 = vtanh.pop %v425
  %v434 = vtanh.pop %v426
  %v435 = vtanh.pop %v427
  %v436 = vtanh.pop %v428
  %v437 = vtanh.pop %v429
  %v438 = vtanh.pop %v430
  %v439 = vadd.f32 %v431, 1.0
  %v440 = vadd.f32 %v432, 1.0
  %v441 = vadd.f32 %v433, 1.0
  %v442 = vadd.f32 %v434, 1.0
  %v443 = vadd.f32 %v435, 1.0
  %v444 = vadd.f32 %v436, 1.0
  %v445 = vadd.f32 %v437, 1.0
  %v446 = vadd.f32 %v438, 1.0
  %v447 = vmul.f32 %v439, 0.5
  %v448 = vmul.f32 %v440, 0.5
  %v449 = vmul.f32 %v441, 0.5
  %v450 = vmul.f32 %v442, 0.5
  %v451 = vmul.f32 %v443, 0.5
  %v452 = vmul.f32 %v444, 0.5
  %v453 = vmul.f32 %v445, 0.5
  %v454 = vmul.f32 %v446, 0.5
  %v455 = vmul.f32 %v340, %v447
  %v456 = vmul.f32 %v342, %v448
  %v457 = vmul.f32 %v383, %v449
  %v458 = vmul.f32 %v385, %v450
  %v459 = vmul.f32 %v344, %v451
  %v460 = vmul.f32 %v346, %v452
  %v461 = vmul.f32 %v387, %v453
  %v462 = vmul.f32 %v389, %v454
  %v463 = vpack.c.bf16 %v459, %v455
  %v464 = vpack.c.bf16 %v460, %v456
  %v465 = vpack.c.bf16 %v461, %v457
  %v466 = vpack.c.bf16 %v462, %v458
  %v471 = vunpack.c.l.b16 %v463
  %v472 = vunpack.c.l.b16 %v464
  %v473 = vunpack.c.l.b16 %v465
  %v474 = vunpack.c.l.b16 %v466
  %v475 = vunpack.c.h.b16 %v463
  %v476 = vunpack.c.h.b16 %v464
  %v477 = vunpack.c.h.b16 %v465
  %v478 = vunpack.c.h.b16 %v466
  %v479 = vpack.c.b16 %v472, %v471
  %v480 = vpack.c.b16 %v474, %v473
  %v481 = vpack.c.b16 %v476, %v475
  %v482 = vpack.c.b16 %v478, %v477
  %487 = vst [vmem:[%s5] sm:$0xff] %v479
  %488 = vst [vmem:[%s5 + $0x8] sm:$0xff] %v480
  %489 = vst [vmem:[%s5 + $0x10] sm:$0x11] %v481
  %490 = vst [vmem:[%s5 + $0x18] sm:$0x11] %v482
  // Predicated region
  $region26: #{_lambda_.35} parent=0 // pred_check
    _
  $region27: #{_lambda_.35} parent=0 // pred_check_branch
    %492 = sbr.rel (0) target = $region29
  $region28: #{_lambda_.35} parent=0 // pred_region
    _
  $region29: #{_lambda_.35} parent=0 // pred_fallthru
    _
  // Predicated region
  $region30: #{_lambda_.35} parent=0 // pred_check
    _
  $region31: #{_lambda_.35} parent=0 // pred_check_branch
    %494 = sbr.rel (0) target = $region33
  $region32: #{_lambda_.35} parent=0 // pred_region
    _
  $region33: #{_lambda_.35} parent=0 // pred_fallthru
    _

// kernel: _lambda_.36
$region0: #{_lambda_.36}
  #allocation0 [shape = 'u32[]', space=smem, size = 0x4, offset = 0x4, fixed_abs, tag = 'smem constant byte address 0x4 - core index']
  #allocation1 [shape = 'u32[144,128]{1,0:T(1,128)}', space=vmem, size = 0x12000, scoped, tag = 'internal scratch']
  #allocation2 [shape = 'f32[10,128]{1,0:T(8,128)}', space=vmem, size = 0x2000, scoped, tag = 'scratch operand']
  %s0 = inlined_call_operand.vmem [shape: bf16[10,512], index: 0, kind: input, shape index: {}]
  %s1 = inlined_call_operand.vmem [shape: bf16[512,128], index: 1, kind: input, shape index: {}]
  %s2 = inlined_call_operand.vmem [shape: f32[1,128], index: 2, kind: input, shape index: {}]
  %s3 = inlined_call_operand.vmem [shape: bf16[10,128], index: 3, kind: input, shape index: {}]
  %s4 = inlined_call_operand.vmem [shape: bf16[10,128], index: 4, kind: output, shape index: {}]
  %s5 = sld [smem:[#allocation0]]
  $region34: #{_lambda_.36} parent=0
    _
  %s7 = ssub.s32 1, %s5
  %s8 = scalar_select 0, %s7, %s5
  // Predicated region
  $region2: #{_lambda_.36} parent=0 // pred_check
    _
  $region3: #{_lambda_.36} parent=0 // pred_check_branch
    %10 = sbr.rel (0) target = $region5
  $region4: #{_lambda_.36} parent=0 // pred_region
    _
  $region5: #{_lambda_.36} parent=0 // pred_fallthru
    _
  // Predicated region
  $region6: #{_lambda_.36} parent=0 // pred_check
    _
  $region7: #{_lambda_.36} parent=0 // pred_check_branch
    %12 = sbr.rel (0) target = $region9
  $region8: #{_lambda_.36} parent=0 // pred_region
    _
  $region9: #{_lambda_.36} parent=0 // pred_fallthru
    _
  // Predicated region
  $region10: #{_lambda_.36} parent=0 // pred_check
    _
  $region11: #{_lambda_.36} parent=0 // pred_check_branch
    %14 = sbr.rel (0) target = $region13
  $region12: #{_lambda_.36} parent=0 // pred_region
    _
  $region13: #{_lambda_.36} parent=0 // pred_fallthru
    _
  // Predicated region
  $region14: #{_lambda_.36} parent=0 // pred_check
    _
  $region15: #{_lambda_.36} parent=0 // pred_check_branch
    %16 = sbr.rel (0) target = $region17
  $region16: #{_lambda_.36} parent=0 // pred_region
    _
  $region17: #{_lambda_.36} parent=0 // pred_fallthru
    _
  %p18 = scmp.eq.s32.totalorder 0, 0
  // Predicated region
  $region18: #{_lambda_.36} parent=0 // pred_check
    %p19 = pneg %p18
  $region19: #{_lambda_.36} parent=0 // pred_check_branch
    %21 = sbr.rel (%p19) target = $region21
  $region20: #{_lambda_.36} parent=0 // pred_region
    %22 = vst [vmem:[#allocation2] sm:$0xff] 0.0
    %23 = vst [vmem:[#allocation2 + $0x8] sm:$0x3] 0.0
  $region21: #{_lambda_.36} parent=0 // pred_fallthru
    _
  %v24 = vld [vmem:[#allocation2] sm:$0xff]
  %v25 = vld [vmem:[#allocation2 + $0x8] sm:$0x3]
  %v26 = vld [vmem:[%s0] sm:$0xff]
  %v27 = vld [vmem:[%s0 + $0x8] sm:$0xff]
  %v28 = vld [vmem:[%s0 + $0x10] sm:$0x11]
  %v29 = vld [vmem:[%s0 + $0x18] sm:$0x11]
  %v30 = vld [vmem:[%s1] sm:$0xf]
  %v31 = vld [vmem:[%s1 + $0x4] sm:$0xf]
  %v32 = vld [vmem:[%s1 + $0x8] sm:$0xf]
  %v33 = vld [vmem:[%s1 + $0xc] sm:$0xf]
  %v34 = vld [vmem:[%s1 + $0x10] sm:$0xf]
  %v35 = vld [vmem:[%s1 + $0x14] sm:$0xf]
  %v36 = vld [vmem:[%s1 + $0x18] sm:$0xf]
  %v37 = vld [vmem:[%s1 + $0x1c] sm:$0xf]
  %v38 = vld [vmem:[%s1 + $0x20] sm:$0xf]
  %v39 = vld [vmem:[%s1 + $0x24] sm:$0xf]
  %v40 = vld [vmem:[%s1 + $0x28] sm:$0xf]
  %v41 = vld [vmem:[%s1 + $0x2c] sm:$0xf]
  %v42 = vld [vmem:[%s1 + $0x30] sm:$0xf]
  %v43 = vld [vmem:[%s1 + $0x34] sm:$0xf]
  %v44 = vld [vmem:[%s1 + $0x38] sm:$0xf]
  %v45 = vld [vmem:[%s1 + $0x3c] sm:$0xf]
  %v46 = vld [vmem:[%s1 + $0x40] sm:$0xf]
  %v47 = vld [vmem:[%s1 + $0x44] sm:$0xf]
  %v48 = vld [vmem:[%s1 + $0x48] sm:$0xf]
  %v49 = vld [vmem:[%s1 + $0x4c] sm:$0xf]
  %v50 = vld [vmem:[%s1 + $0x50] sm:$0xf]
  %v51 = vld [vmem:[%s1 + $0x54] sm:$0xf]
  %v52 = vld [vmem:[%s1 + $0x58] sm:$0xf]
  %v53 = vld [vmem:[%s1 + $0x5c] sm:$0xf]
  %v54 = vld [vmem:[%s1 + $0x60] sm:$0xf]
  %v55 = vld [vmem:[%s1 + $0x64] sm:$0xf]
  %v56 = vld [vmem:[%s1 + $0x68] sm:$0xf]
  %v57 = vld [vmem:[%s1 + $0x6c] sm:$0xf]
  %v58 = vld [vmem:[%s1 + $0x70] sm:$0xf]
  %v59 = vld [vmem:[%s1 + $0x74] sm:$0xf]
  %v60 = vld [vmem:[%s1 + $0x78] sm:$0xf]
  %v61 = vld [vmem:[%s1 + $0x7c] sm:$0xf]
  %v62 = vld [vmem:[%s1 + $0x80] sm:$0xf]
  %v63 = vld [vmem:[%s1 + $0x84] sm:$0xf]
  %v64 = vld [vmem:[%s1 + $0x88] sm:$0xf]
  %v65 = vld [vmem:[%s1 + $0x8c] sm:$0xf]
  %v66 = vld [vmem:[%s1 + $0x90] sm:$0xf]
  %v67 = vld [vmem:[%s1 + $0x94] sm:$0xf]
  %v68 = vld [vmem:[%s1 + $0x98] sm:$0xf]
  %v69 = vld [vmem:[%s1 + $0x9c] sm:$0xf]
  %v70 = vld [vmem:[%s1 + $0xa0] sm:$0xf]
  %v71 = vld [vmem:[%s1 + $0xa4] sm:$0xf]
  %v72 = vld [vmem:[%s1 + $0xa8] sm:$0xf]
  %v73 = vld [vmem:[%s1 + $0xac] sm:$0xf]
  %v74 = vld [vmem:[%s1 + $0xb0] sm:$0xf]
  %v75 = vld [vmem:[%s1 + $0xb4] sm:$0xf]
  %v76 = vld [vmem:[%s1 + $0xb8] sm:$0xf]
  %v77 = vld [vmem:[%s1 + $0xbc] sm:$0xf]
  %v78 = vld [vmem:[%s1 + $0xc0] sm:$0xf]
  %v79 = vld [vmem:[%s1 + $0xc4] sm:$0xf]
  %v80 = vld [vmem:[%s1 + $0xc8] sm:$0xf]
  %v81 = vld [vmem:[%s1 + $0xcc] sm:$0xf]
  %v82 = vld [vmem:[%s1 + $0xd0] sm:$0xf]
  %v83 = vld [vmem:[%s1 + $0xd4] sm:$0xf]
  %v84 = vld [vmem:[%s1 + $0xd8] sm:$0xf]
  %v85 = vld [vmem:[%s1 + $0xdc] sm:$0xf]
  %v86 = vld [vmem:[%s1 + $0xe0] sm:$0xf]
  %v87 = vld [vmem:[%s1 + $0xe4] sm:$0xf]
  %v88 = vld [vmem:[%s1 + $0xe8] sm:$0xf]
  %v89 = vld [vmem:[%s1 + $0xec] sm:$0xf]
  %v90 = vld [vmem:[%s1 + $0xf0] sm:$0xf]
  %v91 = vld [vmem:[%s1 + $0xf4] sm:$0xf]
  %v92 = vld [vmem:[%s1 + $0xf8] sm:$0xf]
  %v93 = vld [vmem:[%s1 + $0xfc] sm:$0xf]
  %v98 = vunpack.c.l.b16 %v26
  %v99 = vunpack.c.h.b16 %v26
  %v100 = vunpack.c.l.b16 %v27
  %v101 = vunpack.c.h.b16 %v27
  %v102 = vunpack.c.l.b16 %v28
  %v103 = vunpack.c.h.b16 %v28
  %v104 = vunpack.c.l.b16 %v29
  %v105 = vunpack.c.h.b16 %v29
  %v106 = vpack.c.b16 %v102, %v98
  %v107 = vpack.c.b16 %v103, %v99
  %v108 = vpack.c.b16 %v104, %v100
  %v109 = vpack.c.b16 %v105, %v101
  %v178 = vunpack.c.l.b16 %v30
  %v179 = vunpack.c.l.b16 %v31
  %v180 = vunpack.c.l.b16 %v32
  %v181 = vunpack.c.l.b16 %v33
  %v182 = vunpack.c.l.b16 %v34
  %v183 = vunpack.c.l.b16 %v35
  %v184 = vunpack.c.l.b16 %v36
  %v185 = vunpack.c.l.b16 %v37
  %v186 = vunpack.c.l.b16 %v38
  %v187 = vunpack.c.l.b16 %v39
  %v188 = vunpack.c.l.b16 %v40
  %v189 = vunpack.c.l.b16 %v41
  %v190 = vunpack.c.l.b16 %v42
  %v191 = vunpack.c.l.b16 %v43
  %v192 = vunpack.c.l.b16 %v44
  %v193 = vunpack.c.l.b16 %v45
  %v194 = vunpack.c.l.b16 %v46
  %v195 = vunpack.c.l.b16 %v47
  %v196 = vunpack.c.l.b16 %v48
  %v197 = vunpack.c.l.b16 %v49
  %v198 = vunpack.c.l.b16 %v50
  %v199 = vunpack.c.l.b16 %v51
  %v200 = vunpack.c.l.b16 %v52
  %v201 = vunpack.c.l.b16 %v53
  %v202 = vunpack.c.l.b16 %v54
  %v203 = vunpack.c.l.b16 %v55
  %v204 = vunpack.c.l.b16 %v56
  %v205 = vunpack.c.l.b16 %v57
  %v206 = vunpack.c.l.b16 %v58
  %v207 = vunpack.c.l.b16 %v59
  %v208 = vunpack.c.l.b16 %v60
  %v209 = vunpack.c.l.b16 %v61
  %v210 = vunpack.c.l.b16 %v62
  %v211 = vunpack.c.l.b16 %v63
  %v212 = vunpack.c.l.b16 %v64
  %v213 = vunpack.c.l.b16 %v65
  %v214 = vunpack.c.l.b16 %v66
  %v215 = vunpack.c.l.b16 %v67
  %v216 = vunpack.c.l.b16 %v68
  %v217 = vunpack.c.l.b16 %v69
  %v218 = vunpack.c.l.b16 %v70
  %v219 = vunpack.c.l.b16 %v71
  %v220 = vunpack.c.l.b16 %v72
  %v221 = vunpack.c.l.b16 %v73
  %v222 = vunpack.c.l.b16 %v74
  %v223 = vunpack.c.l.b16 %v75
  %v224 = vunpack.c.l.b16 %v76
  %v225 = vunpack.c.l.b16 %v77
  %v226 = vunpack.c.l.b16 %v78
  %v227 = vunpack.c.l.b16 %v79
  %v228 = vunpack.c.l.b16 %v80
  %v229 = vunpack.c.l.b16 %v81
  %v230 = vunpack.c.l.b16 %v82
  %v231 = vunpack.c.l.b16 %v83
  %v232 = vunpack.c.l.b16 %v84
  %v233 = vunpack.c.l.b16 %v85
  %v234 = vunpack.c.l.b16 %v86
  %v235 = vunpack.c.l.b16 %v87
  %v236 = vunpack.c.l.b16 %v88
  %v237 = vunpack.c.l.b16 %v89
  %v238 = vunpack.c.l.b16 %v90
  %v239 = vunpack.c.l.b16 %v91
  %v240 = vunpack.c.l.b16 %v92
  %v241 = vunpack.c.l.b16 %v93
  %v242 = vpack.c.b16 %v179, %v178
  %v243 = vpack.c.b16 %v181, %v180
  %v244 = vpack.c.b16 %v183, %v182
  %v245 = vpack.c.b16 %v185, %v184
  %v246 = vpack.c.b16 %v187, %v186
  %v247 = vpack.c.b16 %v189, %v188
  %v248 = vpack.c.b16 %v191, %v190
  %v249 = vpack.c.b16 %v193, %v192
  %v250 = vpack.c.b16 %v195, %v194
  %v251 = vpack.c.b16 %v197, %v196
  %v252 = vpack.c.b16 %v199, %v198
  %v253 = vpack.c.b16 %v201, %v200
  %v254 = vpack.c.b16 %v203, %v202
  %v255 = vpack.c.b16 %v205, %v204
  %v256 = vpack.c.b16 %v207, %v206
  %v257 = vpack.c.b16 %v209, %v208
  %v258 = vpack.c.b16 %v211, %v210
  %v259 = vpack.c.b16 %v213, %v212
  %v260 = vpack.c.b16 %v215, %v214
  %v261 = vpack.c.b16 %v217, %v216
  %v262 = vpack.c.b16 %v219, %v218
  %v263 = vpack.c.b16 %v221, %v220
  %v264 = vpack.c.b16 %v223, %v222
  %v265 = vpack.c.b16 %v225, %v224
  %v266 = vpack.c.b16 %v227, %v226
  %v267 = vpack.c.b16 %v229, %v228
  %v268 = vpack.c.b16 %v231, %v230
  %v269 = vpack.c.b16 %v233, %v232
  %v270 = vpack.c.b16 %v235, %v234
  %v271 = vpack.c.b16 %v237, %v236
  %v272 = vpack.c.b16 %v239, %v238
  %v273 = vpack.c.b16 %v241, %v240
  %306 = vmatprep.subr.bf16.mxu0 0
  %307 = vmatpush1.bf16.msra.mxu0 %v242
  %308 = vmatprep.subr.bf16.mxu0 0
  %309 = vmatpush1.bf16.msra.mxu0 %v243
  %310 = vmatprep.subr.bf16.mxu0 0
  %311 = vmatpush1.bf16.msra.mxu0 %v244
  %312 = vmatprep.subr.bf16.mxu0 0
  %313 = vmatpush1.bf16.msra.mxu0 %v245
  %314 = vmatprep.subr.bf16.mxu0 0
  %315 = vmatpush1.bf16.msra.mxu0 %v246
  %316 = vmatprep.subr.bf16.mxu0 0
  %317 = vmatpush1.bf16.msra.mxu0 %v247
  %318 = vmatprep.subr.bf16.mxu0 0
  %319 = vmatpush1.bf16.msra.mxu0 %v248
  %320 = vmatprep.subr.bf16.mxu0 0
  %321 = vmatpush1.bf16.msra.mxu0 %v249
  %322 = vmatprep.subr.bf16.mxu0 0
  %323 = vmatpush1.bf16.msra.mxu0 %v250
  %324 = vmatprep.subr.bf16.mxu0 0
  %325 = vmatpush1.bf16.msra.mxu0 %v251
  %326 = vmatprep.subr.bf16.mxu0 0
  %327 = vmatpush1.bf16.msra.mxu0 %v252
  %328 = vmatprep.subr.bf16.mxu0 0
  %329 = vmatpush1.bf16.msra.mxu0 %v253
  %330 = vmatprep.subr.bf16.mxu0 0
  %331 = vmatpush1.bf16.msra.mxu0 %v254
  %332 = vmatprep.subr.bf16.mxu0 0
  %333 = vmatpush1.bf16.msra.mxu0 %v255
  %334 = vmatprep.subr.bf16.mxu0 0
  %335 = vmatpush1.bf16.msra.mxu0 %v256
  %336 = vmatprep.subr.bf16.mxu0 0
  %337 = vmatpush1.bf16.msra.mxu0 %v257
  %338 = vmatprep.mubr.bf16.mxu0 %v107
  %339 = vmatmul.mubr.bf16.gmra.mrb[0].mxu0 %v106
  %v340 = vpop.f32.mrb[0].mxu0
  %v341 = vadd.f32 0.0, %v340
  %v342 = vpop.f32.mrb[0].mxu0
  %v343 = vpop.f32.mrb[0].mxu0
  %v344 = vadd.f32 0.0, %v343
  %v345 = vpop.f32.mrb[0].mxu0
  %346 = vdwg.mxu0
  %347 = vmatprep.subr.bf16.mxu0 0
  %348 = vmatpush1.bf16.msra.mxu0 %v258
  %349 = vmatprep.subr.bf16.mxu0 0
  %350 = vmatpush1.bf16.msra.mxu0 %v259
  %351 = vmatprep.subr.bf16.mxu0 0
  %352 = vmatpush1.bf16.msra.mxu0 %v260
  %353 = vmatprep.subr.bf16.mxu0 0
  %354 = vmatpush1.bf16.msra.mxu0 %v261
  %355 = vmatprep.subr.bf16.mxu0 0
  %356 = vmatpush1.bf16.msra.mxu0 %v262
  %357 = vmatprep.subr.bf16.mxu0 0
  %358 = vmatpush1.bf16.msra.mxu0 %v263
  %359 = vmatprep.subr.bf16.mxu0 0
  %360 = vmatpush1.bf16.msra.mxu0 %v264
  %361 = vmatprep.subr.bf16.mxu0 0
  %362 = vmatpush1.bf16.msra.mxu0 %v265
  %363 = vmatprep.subr.bf16.mxu0 0
  %364 = vmatpush1.bf16.msra.mxu0 %v266
  %365 = vmatprep.subr.bf16.mxu0 0
  %366 = vmatpush1.bf16.msra.mxu0 %v267
  %367 = vmatprep.subr.bf16.mxu0 0
  %368 = vmatpush1.bf16.msra.mxu0 %v268
  %369 = vmatprep.subr.bf16.mxu0 0
  %370 = vmatpush1.bf16.msra.mxu0 %v269
  %371 = vmatprep.subr.bf16.mxu0 0
  %372 = vmatpush1.bf16.msra.mxu0 %v270
  %373 = vmatprep.subr.bf16.mxu0 0
  %374 = vmatpush1.bf16.msra.mxu0 %v271
  %375 = vmatprep.subr.bf16.mxu0 0
  %376 = vmatpush1.bf16.msra.mxu0 %v272
  %377 = vmatprep.subr.bf16.mxu0 0
  %378 = vmatpush1.bf16.msra.mxu0 %v273
  %379 = vmatprep.mubr.bf16.mxu0 %v109
  %380 = vmatmul.mubr.bf16.gmra.mrb[0].mxu0 %v108
  %v381 = vpop.f32.mrb[0].mxu0
  %v382 = vadd.f32 %v341, %v381
  %v383 = vpop.f32.mrb[0].mxu0
  %v384 = vpop.f32.mrb[0].mxu0
  %v385 = vadd.f32 %v344, %v384
  %v386 = vpop.f32.mrb[0].mxu0
  %387 = vdwg.mxu0
  %v388 = vadd.f32 %v24, %v382
  %v389 = vadd.f32 %v25, %v385
  %390 = vst [vmem:[#allocation2] sm:$0xff] %v388
  %391 = vst [vmem:[#allocation2 + $0x8] sm:$0x3] %v389
  // Predicated region
  $region22: #{_lambda_.36} parent=0 // pred_check
    %p392 = pneg %p18
  $region23: #{_lambda_.36} parent=0 // pred_check_branch
    %394 = sbr.rel (%p392) target = $region25
  $region24: #{_lambda_.36} parent=0 // pred_region
    %v395 = vld [vmem:[#allocation2] sm:$0xff]
    %v396 = vld [vmem:[#allocation2 + $0x8] sm:$0x3]
    %v397 = vld [vmem:[%s2] sm:$0x1]
    %v399 = vlaneseq
    %v400 = vshrl.u32 %v399, 7
    %v401 = vsub.s32 0, %v400
    %v402 = vrot.slane %v397, %v401
    %v404 = vadd.f32 %v395, %v402
    %v405 = vadd.f32 %v396, %v402
    %v406 = vld [vmem:[%s3] sm:$0xf]
    %v407 = vld [vmem:[%s3 + $0x4] sm:$0x1]
    %v408 = vunpack.c.l.bf16 %v406
    %v409 = vunpack.c.l.bf16 %v407
    %v410 = vadd.f32 %v404, %v408
    %v411 = vadd.f32 %v405, %v409
    %v412 = vpack.c.bf16 %v411, %v410
    %v414 = vunpack.c.l.b16 %v412
    %v415 = vunpack.c.h.b16 %v412
    %v416 = vpack.c.b16 %v414, %v414
    %v417 = vpack.c.b16 %v415, %v415
    %420 = vst [vmem:[%s4] sm:$0xf] %v416
    %421 = vst [vmem:[%s4 + $0x4] sm:$0x1] %v417
  $region25: #{_lambda_.36} parent=0 // pred_fallthru
    _
  // Predicated region
  $region26: #{_lambda_.36} parent=0 // pred_check
    _
  $region27: #{_lambda_.36} parent=0 // pred_check_branch
    %423 = sbr.rel (0) target = $region29
  $region28: #{_lambda_.36} parent=0 // pred_region
    _
  $region29: #{_lambda_.36} parent=0 // pred_fallthru
    _
  // Predicated region
  $region30: #{_lambda_.36} parent=0 // pred_check
    _
  $region31: #{_lambda_.36} parent=0 // pred_check_branch
    %425 = sbr.rel (0) target = $region33
  $region32: #{_lambda_.36} parent=0 // pred_region
    _
  $region33: #{_lambda_.36} parent=0 // pred_fallthru
    _

// kernel: _lambda_.44
$region0: #{_lambda_.44}
  #allocation0 [shape = 'u32[]', space=smem, size = 0x4, offset = 0x4, fixed_abs, tag = 'smem constant byte address 0x4 - core index']
  #allocation1 [shape = 'u32[144,128]{1,0:T(1,128)}', space=vmem, size = 0x12000, scoped, tag = 'internal scratch']
  %s0 = inlined_call_operand.vmem [shape: bf16[2,2,8,64], index: 0, kind: input, shape index: {}]
  %s1 = inlined_call_operand.vmem [shape: bf16[2,2,8,64], index: 1, kind: input, shape index: {}]
  %s2 = inlined_call_operand.vmem [shape: bf16[2,2,8,64], index: 2, kind: input, shape index: {}]
  %s3 = inlined_call_operand.vmem [shape: bf16[2,2,8,64], index: 3, kind: output, shape index: {}]
  %s4 = sld [smem:[#allocation0]]
  $region45: #{_lambda_.44} parent=0
    _
  %s6 = ssub.s32 1, %s4
  %s7 = scalar_select 0, %s6, %s4
  loop: start=0, step=1, limit=6
  $region2: #{_lambda_.44} parent=0 // loop_pre_header
    _
  $region3: #{_lambda_.44} parent=0 // loop_header
    %s9 = sphi 0, %s13
    %p10 = scmp.ge.s32.totalorder %s9, 6
    %s16 = sphi 0, %s28
    %s17 = sphi 0, %s24
    %s18 = sphi 0, %s16
    %s19 = sphi 0, %s17
    %s20 = sphi 0, %s18
    %s21 = sphi 0, %s19
    %s33 = sphi 0, %s35
    %s36 = sphi 0, %s33
    %s37 = sphi 0, %s36
    %s53 = sphi 0, %s37
    %s61 = sphi 0, %s63
    %s64 = sphi 0, %s61
    %s65 = sphi 0, %s64
    %s81 = sphi 0, %s65
    %s89 = sphi 0, %s91
    %s92 = sphi 0, %s89
    %s93 = sphi 0, %s92
    %s109 = sphi 0, %s93
    %s117 = sphi 0, %s119
    %s120 = sphi 0, %s117
    %s121 = sphi 0, %s120
    %s137 = sphi 0, %s121
  $region4: #{_lambda_.44} parent=0 // loop_header_branch
    %12 = sbr.rel (%p10) target = $region8
  $region5: #{_lambda_.44} parent=0 // loop_body
    %s14 = ssub.s32 %s9, 1
    %s15 = ssub.s32 %s9, 2
    %s22 = sadd.s32 1, %s17
    %p23 = scmp.ge.s32.totalorder %s22, 2
    %s24 = scalar_select %p23, 0, %s22
    %s25 = sadd.s32 1, %s16
    %s26 = scalar_select %p23, %s25, %s16
    %p27 = scmp.ge.s32.totalorder %s26, 2
    %s28 = scalar_select %p27, 0, %s26
    %s29 = ssub.s32 %s16, %s28
    %s30 = ssub.s32 %s17, %s24
    %s31 = sor.u32 %s29, %s30
    %p32 = scmp.eq.s32.totalorder %s31, 0
    %s34 = sadd.s32 %s33, 1
    %s35 = scalar_select %p32, %s33, %s34
    %p38 = pneg %p32
    %p39 = scmp.eq.s32.totalorder %s9, 3
    %p40 = por %p38, %p39
    %p41 = scmp.ne.s32.totalorder %s33, %s36
    %p42 = scmp.eq.s32.totalorder %s9, 0
    %p43 = por %p41, %p42
    %p44 = scmp.ne.s32.totalorder %s33, %s36
    %p45 = scmp.eq.s32.totalorder %s14, 3
    %p46 = por %p44, %p45
    %p47 = scmp.ne.s32.totalorder %s36, %s37
    %p48 = scmp.eq.s32.totalorder %s14, 0
    %p49 = por %p47, %p48
    %p50 = scmp.ne.s32.totalorder %s36, %s37
    %p51 = scmp.eq.s32.totalorder %s15, 3
    %p52 = por %p50, %p51
    %p54 = scmp.ne.s32.totalorder %s37, %s53
    %p55 = scmp.eq.s32.totalorder %s15, 0
    %p56 = por %p54, %p55
    %s57 = ssub.s32 %s16, %s28
    %s58 = ssub.s32 %s17, %s24
    %s59 = sor.u32 %s57, %s58
    %p60 = scmp.eq.s32.totalorder %s59, 0
    %s62 = sadd.s32 %s61, 1
    %s63 = scalar_select %p60, %s61, %s62
    %p66 = pneg %p60
    %p67 = scmp.eq.s32.totalorder %s9, 3
    %p68 = por %p66, %p67
    %p69 = scmp.ne.s32.totalorder %s61, %s64
    %p70 = scmp.eq.s32.totalorder %s9, 0
    %p71 = por %p69, %p70
    %p72 = scmp.ne.s32.totalorder %s61, %s64
    %p73 = scmp.eq.s32.totalorder %s14, 3
    %p74 = por %p72, %p73
    %p75 = scmp.ne.s32.totalorder %s64, %s65
    %p76 = scmp.eq.s32.totalorder %s14, 0
    %p77 = por %p75, %p76
    %p78 = scmp.ne.s32.totalorder %s64, %s65
    %p79 = scmp.eq.s32.totalorder %s15, 3
    %p80 = por %p78, %p79
    %p82 = scmp.ne.s32.totalorder %s65, %s81
    %p83 = scmp.eq.s32.totalorder %s15, 0
    %p84 = por %p82, %p83
    %s85 = ssub.s32 %s16, %s28
    %s86 = ssub.s32 %s17, %s24
    %s87 = sor.u32 %s85, %s86
    %p88 = scmp.eq.s32.totalorder %s87, 0
    %s90 = sadd.s32 %s89, 1
    %s91 = scalar_select %p88, %s89, %s90
    %p94 = pneg %p88
    %p95 = scmp.eq.s32.totalorder %s9, 3
    %p96 = por %p94, %p95
    %p97 = scmp.ne.s32.totalorder %s89, %s92
    %p98 = scmp.eq.s32.totalorder %s9, 0
    %p99 = por %p97, %p98
    %p100 = scmp.ne.s32.totalorder %s89, %s92
    %p101 = scmp.eq.s32.totalorder %s14, 3
    %p102 = por %p100, %p101
    %p103 = scmp.ne.s32.totalorder %s92, %s93
    %p104 = scmp.eq.s32.totalorder %s14, 0
    %p105 = por %p103, %p104
    %p106 = scmp.ne.s32.totalorder %s92, %s93
    %p107 = scmp.eq.s32.totalorder %s15, 3
    %p108 = por %p106, %p107
    %p110 = scmp.ne.s32.totalorder %s93, %s109
    %p111 = scmp.eq.s32.totalorder %s15, 0
    %p112 = por %p110, %p111
    %s113 = ssub.s32 %s16, %s28
    %s114 = ssub.s32 %s17, %s24
    %s115 = sor.u32 %s113, %s114
    %p116 = scmp.eq.s32.totalorder %s115, 0
    %s118 = sadd.s32 %s117, 1
    %s119 = scalar_select %p116, %s117, %s118
    %p122 = pneg %p116
    %p123 = scmp.eq.s32.totalorder %s9, 3
    %p124 = por %p122, %p123
    %p125 = scmp.ne.s32.totalorder %s117, %s120
    %p126 = scmp.eq.s32.totalorder %s9, 0
    %p127 = por %p125, %p126
    %p128 = scmp.ne.s32.totalorder %s117, %s120
    %p129 = scmp.eq.s32.totalorder %s14, 3
    %p130 = por %p128, %p129
    %p131 = scmp.ne.s32.totalorder %s120, %s121
    %p132 = scmp.eq.s32.totalorder %s14, 0
    %p133 = por %p131, %p132
    %p134 = scmp.ne.s32.totalorder %s120, %s121
    %p135 = scmp.eq.s32.totalorder %s15, 3
    %p136 = por %p134, %p135
    %p138 = scmp.ne.s32.totalorder %s121, %s137
    %p139 = scmp.eq.s32.totalorder %s15, 0
    %p140 = por %p138, %p139
    %p141 = scmp.le.s32.totalorder 1, %s9
    %p142 = scmp.lt.s32.totalorder %s9, 5
    %p143 = pnand %p141, %p142
    %p144 = pneg %p143
    // Predicated region
    $region9: #{_lambda_.44} parent=5 // pred_check
      _
    $region10: #{_lambda_.44} parent=5 // pred_check_branch
      %146 = sbr.rel (%p143) target = $region12
    $region11: #{_lambda_.44} parent=5 // pred_region
      %s147 = ssub.s32 %s9, 1
    $region12: #{_lambda_.44} parent=5 // pred_fallthru
      _
    %p148 = scmp.lt.s32.totalorder %s9, 4
    // Predicated region
    $region13: #{_lambda_.44} parent=5 // pred_check
      %p149 = pneg %p148
    $region14: #{_lambda_.44} parent=5 // pred_check_branch
      %151 = sbr.rel (%p149) target = $region16
    $region15: #{_lambda_.44} parent=5 // pred_region
      // Predicated region
      $region17: #{_lambda_.44} parent=15 // pred_check
        %p152 = pneg %p43
      $region18: #{_lambda_.44} parent=15 // pred_check_branch
        %154 = sbr.rel (%p152) target = $region20
      $region19: #{_lambda_.44} parent=15 // pred_region
        %p155 = scmp.lt.s32.totalorder %s16, 1
        %s156 = scalar_select %p155, %s16, 1
        %p157 = scmp.lt.s32.totalorder %s17, 1
        %s158 = scalar_select %p157, %s17, 1
        %s159 = smul.addr %s156, 2
        %s160 = sadd.s32 %s158, %s159
        %s161 = smul.addr %s160, 4
        %s162 = scalar_lea.vmem %s0, %s161
      $region20: #{_lambda_.44} parent=15 // pred_fallthru
        _
      // Predicated region
      $region21: #{_lambda_.44} parent=15 // pred_check
        %p163 = pneg %p71
      $region22: #{_lambda_.44} parent=15 // pred_check_branch
        %165 = sbr.rel (%p163) target = $region24
      $region23: #{_lambda_.44} parent=15 // pred_region
        %p166 = scmp.lt.s32.totalorder %s16, 1
        %s167 = scalar_select %p166, %s16, 1
        %p168 = scmp.lt.s32.totalorder %s17, 1
        %s169 = scalar_select %p168, %s17, 1
        %s170 = smul.addr %s167, 2
        %s171 = sadd.s32 %s169, %s170
        %s172 = smul.addr %s171, 4
        %s173 = scalar_lea.vmem %s1, %s172
      $region24: #{_lambda_.44} parent=15 // pred_fallthru
        _
      // Predicated region
      $region25: #{_lambda_.44} parent=15 // pred_check
        %p174 = pneg %p99
      $region26: #{_lambda_.44} parent=15 // pred_check_branch
        %176 = sbr.rel (%p174) target = $region28
      $region27: #{_lambda_.44} parent=15 // pred_region
        %p177 = scmp.lt.s32.totalorder %s16, 1
        %s178 = scalar_select %p177, %s16, 1
        %p179 = scmp.lt.s32.totalorder %s17, 1
        %s180 = scalar_select %p179, %s17, 1
        %s181 = smul.addr %s178, 2
        %s182 = sadd.s32 %s180, %s181
        %s183 = smul.addr %s182, 4
        %s184 = scalar_lea.vmem %s2, %s183
      $region28: #{_lambda_.44} parent=15 // pred_fallthru
        _
    $region16: #{_lambda_.44} parent=5 // pred_fallthru
      _
    %p185 = scmp.le.s32.totalorder 1, %s9
    %p186 = scmp.lt.s32.totalorder %s9, 5
    %p187 = pnand %p185, %p186
    %p188 = pneg %p187
    // Predicated region
    $region29: #{_lambda_.44} parent=5 // pred_check
      _
    $region30: #{_lambda_.44} parent=5 // pred_check_branch
      %190 = sbr.rel (%p187) target = $region32
    $region31: #{_lambda_.44} parent=5 // pred_region
      %s191 = ssub.s32 %s9, 1
      %p192 = scmp.lt.s32.totalorder %s18, 1
      %s193 = scalar_select %p192, %s18, 1
      %p194 = scmp.lt.s32.totalorder %s19, 1
      %s195 = scalar_select %p194, %s19, 1
      %s196 = smul.addr %s193, 2
      %s197 = sadd.s32 %s195, %s196
      %s198 = smul.addr %s197, 4
      %s199 = scalar_lea.vmem %s0, %s198
      %p200 = pneg %p49
      %p201 = pneg %p46
      %p202 = scmp.lt.s32.totalorder %s18, 1
      %s203 = scalar_select %p202, %s18, 1
      %p204 = scmp.lt.s32.totalorder %s19, 1
      %s205 = scalar_select %p204, %s19, 1
      %s206 = smul.addr %s203, 2
      %s207 = sadd.s32 %s205, %s206
      %s208 = smul.addr %s207, 4
      %s209 = scalar_lea.vmem %s1, %s208
      %p210 = pneg %p77
      %p211 = pneg %p74
      %p212 = scmp.lt.s32.totalorder %s18, 1
      %s213 = scalar_select %p212, %s18, 1
      %p214 = scmp.lt.s32.totalorder %s19, 1
      %s215 = scalar_select %p214, %s19, 1
      %s216 = smul.addr %s213, 2
      %s217 = sadd.s32 %s215, %s216
      %s218 = smul.addr %s217, 4
      %s219 = scalar_lea.vmem %s2, %s218
      %p220 = pneg %p105
      %p221 = pneg %p102
      %p222 = pneg %p133
      %p223 = pneg %p130
      %p224 = scmp.lt.s32.totalorder %s18, 1
      %s225 = scalar_select %p224, %s18, 1
      %p226 = scmp.lt.s32.totalorder %s19, 1
      %s227 = scalar_select %p226, %s19, 1
      %s228 = smul.addr %s225, 2
      %s229 = sadd.s32 %s227, %s228
      %s230 = smul.addr %s229, 4
      %s231 = scalar_lea.vmem %s3, %s230
      %p232 = scmp.lt.s32.totalorder %s18, 1
      %s233 = scalar_select %p232, %s18, 1
      %p234 = scmp.lt.s32.totalorder %s19, 1
      %s235 = scalar_select %p234, %s19, 1
      %s236 = smul.addr %s233, 2
      %s237 = sadd.s32 %s235, %s236
      %s238 = smul.addr %s237, 4
      %s239 = scalar_lea.vmem %s0, %s238
      %p240 = scmp.lt.s32.totalorder %s18, 1
      %s241 = scalar_select %p240, %s18, 1
      %p242 = scmp.lt.s32.totalorder %s19, 1
      %s243 = scalar_select %p242, %s19, 1
      %s244 = smul.addr %s241, 2
      %s245 = sadd.s32 %s243, %s244
      %s246 = smul.addr %s245, 4
      %s247 = scalar_lea.vmem %s1, %s246
      %p248 = scmp.lt.s32.totalorder %s18, 1
      %s249 = scalar_select %p248, %s18, 1
      %p250 = scmp.lt.s32.totalorder %s19, 1
      %s251 = scalar_select %p250, %s19, 1
      %s252 = smul.addr %s249, 2
      %s253 = sadd.s32 %s251, %s252
      %s254 = smul.addr %s253, 4
      %s255 = scalar_lea.vmem %s2, %s254
      %p256 = scmp.lt.s32.totalorder %s18, 1
      %s257 = scalar_select %p256, %s18, 1
      %p258 = scmp.lt.s32.totalorder %s19, 1
      %s259 = scalar_select %p258, %s19, 1
      %s260 = smul.addr %s257, 2
      %s261 = sadd.s32 %s259, %s260
      %s262 = smul.addr %s261, 4
      %s263 = scalar_lea.vmem %s3, %s262
      %v265 = vld [vmem:[%s239] sm:$0xf]
      %v266 = vld [vmem:[%s247] sm:$0xf]
      %v267 = vld [vmem:[%s255] sm:$0xf]
      %vm268 = vcmask 523264
      %v270 = vsel %vm268, %v265, 0
      %v273 = vsel %vm268, %v266, 0
      %275 = vmatprep.subr.bf16.mxu0 0
      %276 = vmatpush1.bf16.xpose.msra.mxu0 %v273
      %277 = vmatprep.subr.bf16.mxu0 0
      %278 = vmatpush1.bf16.xpose.msra.mxu0 0
      %279 = vmatprep.subr.bf16.mxu0 0
      %280 = vmatpush1.bf16.xpose.msra.mxu0 0
      %281 = vmatprep.subr.bf16.mxu0 0
      %282 = vmatpush1.bf16.xpose.msra.mxu0 0
      %283 = vmatprep.subr.bf16.mxu0 0
      %284 = vmatpush1.bf16.xpose.msra.mxu0 0
      %285 = vmatprep.subr.bf16.mxu0 0
      %286 = vmatpush1.bf16.xpose.msra.mxu0 0
      %287 = vmatprep.subr.bf16.mxu0 0
      %288 = vmatpush1.bf16.xpose.msra.mxu0 0
      %289 = vmatprep.subr.bf16.mxu0 0
      %290 = vmatpush1.bf16.xpose.msra.mxu0 0
      %291 = vmatprep.subr.bf16.mxu0 0
      %292 = vmatpush1.bf16.xpose.msra.mxu0 0
      %293 = vmatprep.subr.bf16.mxu0 0
      %294 = vmatpush1.bf16.xpose.msra.mxu0 0
      %295 = vmatprep.subr.bf16.mxu0 0
      %296 = vmatpush1.bf16.xpose.msra.mxu0 0
      %297 = vmatprep.subr.bf16.mxu0 0
      %298 = vmatpush1.bf16.xpose.msra.mxu0 0
      %299 = vmatprep.subr.bf16.mxu0 0
      %300 = vmatpush1.bf16.xpose.msra.mxu0 0
      %301 = vmatprep.subr.bf16.mxu0 0
      %302 = vmatpush1.bf16.xpose.msra.mxu0 0
      %303 = vmatprep.subr.bf16.mxu0 0
      %304 = vmatpush1.bf16.xpose.msra.mxu0 0
      %305 = vmatprep.subr.bf16.mxu0 0
      %306 = vmatpush1.bf16.xpose.msra.mxu0 0
      %307 = vmatprep.mubr.bf16.mxu0 0
      %308 = vmatmul.mubr.bf16.gmra.mrb[0].mxu0 %v270
      %v309 = vpop.f32.mrb[0].mxu0
      %v310 = vadd.f32 0.0, %v309
      %v311 = vpop.f32.mrb[0].mxu0
      %v312 = vpop.f32.mrb[0].mxu0
      %v313 = vpop.f32.mrb[0].mxu0
      %314 = vdwg.mxu0
      %v315 = vmul.f32 %v310, 0.125
      %v316 = vlaneseq
      %v317 = vshrl.u32 %v316, 7
      %v318 = vlaneseq
      %v319 = vand.u32 %v318, 127
      %vm320 = vcmp.ge.s32.totalorder %v317, %v319
      %v321 = vsel %vm320, %v315, -1e+09
      %vm322 = vcmask 64512
      %v323 = vsel %vm322, %v321, -inf
      %324 = vmax.xlane.f32.xlu0 %v323
      %v325 = vpop.xlane.xlu0 %324
      %v326 = vsub.f32 %v321, %v325
      %v327 = vmul.f32 %v326, 1.442695
      %v328 = vpow.pop %v327
      %v329 = vsel %vm322, %v328, 0.0
      %330 = vadd.xlane.f32.xlu0 %v329
      %v331 = vpop.xlane.xlu0 %330
      %v332 = vrcp.pop %v331
      %v333 = vmul.f32 %v328, %v332
      %v334 = vpack.c.bf16 %v333, %v333
      %v336 = vsel %vm322, %v334, 0
      %vm338 = vcmask 1043456
      %v340 = vsel %vm338, %v267, 0
      %342 = vmatprep.subr.bf16.mxu0 0
      %343 = vmatpush1.bf16.msra.mxu0 %v340
      %344 = vmatprep.subr.bf16.mxu0 0
      %345 = vmatpush1.bf16.msra.mxu0 0
      %346 = vmatprep.subr.bf16.mxu0 0
      %347 = vmatpush1.bf16.msra.mxu0 0
      %348 = vmatprep.subr.bf16.mxu0 0
      %349 = vmatpush1.bf16.msra.mxu0 0
      %350 = vmatprep.subr.bf16.mxu0 0
      %351 = vmatpush1.bf16.msra.mxu0 0
      %352 = vmatprep.subr.bf16.mxu0 0
      %353 = vmatpush1.bf16.msra.mxu0 0
      %354 = vmatprep.subr.bf16.mxu0 0
      %355 = vmatpush1.bf16.msra.mxu0 0
      %356 = vmatprep.subr.bf16.mxu0 0
      %357 = vmatpush1.bf16.msra.mxu0 0
      %358 = vmatprep.subr.bf16.mxu0 0
      %359 = vmatpush1.bf16.msra.mxu0 0
      %360 = vmatprep.subr.bf16.mxu0 0
      %361 = vmatpush1.bf16.msra.mxu0 0
      %362 = vmatprep.subr.bf16.mxu0 0
      %363 = vmatpush1.bf16.msra.mxu0 0
      %364 = vmatprep.subr.bf16.mxu0 0
      %365 = vmatpush1.bf16.msra.mxu0 0
      %366 = vmatprep.subr.bf16.mxu0 0
      %367 = vmatpush1.bf16.msra.mxu0 0
      %368 = vmatprep.subr.bf16.mxu0 0
      %369 = vmatpush1.bf16.msra.mxu0 0
      %370 = vmatprep.subr.bf16.mxu0 0
      %371 = vmatpush1.bf16.msra.mxu0 0
      %372 = vmatprep.subr.bf16.mxu0 0
      %373 = vmatpush1.bf16.msra.mxu0 0
      %374 = vmatprep.mubr.bf16.mxu0 0
      %375 = vmatmul.mubr.bf16.gmra.mrb[0].mxu0 %v336
      %v376 = vpop.f32.mrb[0].mxu0
      %v377 = vadd.f32 0.0, %v376
      %v378 = vpop.f32.mrb[0].mxu0
      %v379 = vpop.f32.mrb[0].mxu0
      %v380 = vpop.f32.mrb[0].mxu0
      %381 = vdwg.mxu0
      %v382 = vpack.c.bf16 %v377, %v377
      %vm383 = vcmask 519168
      %384 = vst.msk [vmem:[%s263] sm:$0xf] %vm383, %v382
      %p385 = scmp.lt.s32.totalorder %s18, 1
      %s386 = scalar_select %p385, %s18, 1
      %p387 = scmp.lt.s32.totalorder %s19, 1
      %s388 = scalar_select %p387, %s19, 1
      %s389 = smul.addr %s386, 2
      %s390 = sadd.s32 %s388, %s389
      %s391 = smul.addr %s390, 4
      %s392 = scalar_lea.vmem %s3, %s391
      // Predicated region
      $region33: #{_lambda_.44} parent=31 // pred_check
        %p393 = pneg %p130
      $region34: #{_lambda_.44} parent=31 // pred_check_branch
        %395 = sbr.rel (%p393) target = $region36
      $region35: #{_lambda_.44} parent=31 // pred_region
        _
      $region36: #{_lambda_.44} parent=31 // pred_fallthru
        _
    $region32: #{_lambda_.44} parent=5 // pred_fallthru
      _
    %p396 = scmp.le.s32.totalorder 2, %s9
    // Predicated region
    $region37: #{_lambda_.44} parent=5 // pred_check
      %p397 = pneg %p396
    $region38: #{_lambda_.44} parent=5 // pred_check_branch
      %399 = sbr.rel (%p397) target = $region40
    $region39: #{_lambda_.44} parent=5 // pred_region
      %s400 = ssub.s32 %s9, 2
      // Predicated region
      $region41: #{_lambda_.44} parent=39 // pred_check
        %p401 = pneg %p136
      $region42: #{_lambda_.44} parent=39 // pred_check_branch
        %403 = sbr.rel (%p401) target = $region44
      $region43: #{_lambda_.44} parent=39 // pred_region
        %p404 = scmp.lt.s32.totalorder %s20, 1
        %s405 = scalar_select %p404, %s20, 1
        %p406 = scmp.lt.s32.totalorder %s21, 1
        %s407 = scalar_select %p406, %s21, 1
        %s408 = smul.addr %s405, 2
        %s409 = sadd.s32 %s407, %s408
        %s410 = smul.addr %s409, 4
        %s411 = scalar_lea.vmem %s3, %s410
      $region44: #{_lambda_.44} parent=39 // pred_fallthru
        _
    $region40: #{_lambda_.44} parent=5 // pred_fallthru
      _
  $region6: #{_lambda_.44} parent=0 // loop_footer
    %s13 = sadd.s32 1, %s9
  $region7: #{_lambda_.44} parent=0 // loop_footer_branch
    %8 = sbr.rel target = $region3
  $region8: #{_lambda_.44} parent=0 // loop_exit
    _

// kernel: _lambda_.43
$region0: #{_lambda_.43}
  #allocation0 [shape = 'u32[]', space=smem, size = 0x4, offset = 0x4, fixed_abs, tag = 'smem constant byte address 0x4 - core index']
  #allocation1 [shape = 'u32[144,128]{1,0:T(1,128)}', space=vmem, size = 0x12000, scoped, tag = 'internal scratch']
  #allocation2 [shape = 'bf16[16,128]{1,0:T(16,128)(2,1)}', space=vmem, size = 0x1000, scoped, tag = 'scratch operand']
  %s0 = inlined_call_operand.vmem [shape: bf16[16,128], index: 0, kind: input, shape index: {}]
  %s1 = inlined_call_operand.vmem [shape: f32[1,128], index: 1, kind: input, shape index: {}]
  %s2 = inlined_call_operand.vmem [shape: f32[1,128], index: 2, kind: input, shape index: {}]
  %s3 = inlined_call_operand.vmem [shape: bf16[128,384], index: 3, kind: input, shape index: {}]
  %s4 = inlined_call_operand.vmem [shape: f32[1,384], index: 4, kind: input, shape index: {}]
  %s5 = inlined_call_operand.vmem [shape: bf16[16,384], index: 5, kind: output, shape index: {}]
  %s6 = sld [smem:[#allocation0]]
  $region34: #{_lambda_.43} parent=0
    _
  %s8 = ssub.s32 1, %s6
  %s9 = scalar_select 0, %s8, %s6
  // Predicated region
  $region2: #{_lambda_.43} parent=0 // pred_check
    _
  $region3: #{_lambda_.43} parent=0 // pred_check_branch
    %11 = sbr.rel (0) target = $region5
  $region4: #{_lambda_.43} parent=0 // pred_region
    _
  $region5: #{_lambda_.43} parent=0 // pred_fallthru
    _
  // Predicated region
  $region6: #{_lambda_.43} parent=0 // pred_check
    _
  $region7: #{_lambda_.43} parent=0 // pred_check_branch
    %13 = sbr.rel (0) target = $region9
  $region8: #{_lambda_.43} parent=0 // pred_region
    _
  $region9: #{_lambda_.43} parent=0 // pred_fallthru
    _
  // Predicated region
  $region10: #{_lambda_.43} parent=0 // pred_check
    _
  $region11: #{_lambda_.43} parent=0 // pred_check_branch
    %15 = sbr.rel (0) target = $region13
  $region12: #{_lambda_.43} parent=0 // pred_region
    _
  $region13: #{_lambda_.43} parent=0 // pred_fallthru
    _
  // Predicated region
  $region14: #{_lambda_.43} parent=0 // pred_check
    _
  $region15: #{_lambda_.43} parent=0 // pred_check_branch
    %17 = sbr.rel (0) target = $region17
  $region16: #{_lambda_.43} parent=0 // pred_region
    _
  $region17: #{_lambda_.43} parent=0 // pred_fallthru
    _
  // Predicated region
  $region18: #{_lambda_.43} parent=0 // pred_check
    _
  $region19: #{_lambda_.43} parent=0 // pred_check_branch
    %19 = sbr.rel (0) target = $region21
  $region20: #{_lambda_.43} parent=0 // pred_region
    _
  $region21: #{_lambda_.43} parent=0 // pred_fallthru
    _
  %p21 = scmp.eq.s32.totalorder 0, 0
  // Predicated region
  $region22: #{_lambda_.43} parent=0 // pred_check
    %p22 = pneg %p21
  $region23: #{_lambda_.43} parent=0 // pred_check_branch
    %24 = sbr.rel (%p22) target = $region25
  $region24: #{_lambda_.43} parent=0 // pred_region
    %v25 = vld [vmem:[%s0] sm:$0xf]
    %v26 = vld [vmem:[%s0 + $0x4] sm:$0xf]
    %v27 = vunpack.c.l.bf16 %v25
    %v28 = vunpack.c.l.bf16 %v26
    %29 = vadd.xlane.f32.xlu0 %v27
    %v30 = vpop.xlane.xlu0 %29
    %31 = vadd.xlane.f32.xlu0 %v28
    %v32 = vpop.xlane.xlu0 %31
    %v33 = vrcp.pop 128.0
    %v34 = vmul.f32 %v30, %v33
    %v35 = vmul.f32 %v32, %v33
    %v36 = vsub.f32 %v27, %v34
    %v37 = vsub.f32 %v28, %v35
    %v38 = vmul.f32 %v36, %v36
    %v39 = vmul.f32 %v37, %v37
    %40 = vadd.xlane.f32.xlu0 %v38
    %v41 = vpop.xlane.xlu0 %40
    %42 = vadd.xlane.f32.xlu0 %v39
    %v43 = vpop.xlane.xlu0 %42
    %v44 = vmul.f32 %v41, %v33
    %v45 = vmul.f32 %v43, %v33
    %v46 = vadd.f32 %v44, 1e-05
    %v47 = vadd.f32 %v45, 1e-05
    %v48 = vrsqrt.pop %v46
    %v49 = vrsqrt.pop %v47
    %v50 = vmul.f32 %v36, %v48
    %v51 = vmul.f32 %v37, %v49
    %v52 = vld [vmem:[%s1] sm:$0x1]
    %v54 = vlaneseq
    %v55 = vshrl.u32 %v54, 7
    %v56 = vsub.s32 0, %v55
    %v57 = vrot.slane %v52, %v56
    %v59 = vmul.f32 %v50, %v57
    %v60 = vmul.f32 %v51, %v57
    %v61 = vld [vmem:[%s2] sm:$0x1]
    %v63 = vlaneseq
    %v64 = vshrl.u32 %v63, 7
    %v65 = vsub.s32 0, %v64
    %v66 = vrot.slane %v61, %v65
    %v68 = vadd.f32 %v59, %v66
    %v69 = vadd.f32 %v60, %v66
    %v70 = vpack.c.bf16 %v69, %v68
    %71 = vst [vmem:[#allocation2] sm:$0xff] %v70
  $region25: #{_lambda_.43} parent=0 // pred_fallthru
    _
  %v72 = vld [vmem:[#allocation2] sm:$0xff]
  %v73 = vld [vmem:[%s3] sm:$0xff]
  %v74 = vld [vmem:[%s3 + $0x8] sm:$0xf]
  %v75 = vld [vmem:[%s3 + $0xc] sm:$0xff]
  %v76 = vld [vmem:[%s3 + $0x14] sm:$0xf]
  %v77 = vld [vmem:[%s3 + $0x18] sm:$0xff]
  %v78 = vld [vmem:[%s3 + $0x20] sm:$0xf]
  %v79 = vld [vmem:[%s3 + $0x24] sm:$0xff]
  %v80 = vld [vmem:[%s3 + $0x2c] sm:$0xf]
  %v81 = vld [vmem:[%s3 + $0x30] sm:$0xff]
  %v82 = vld [vmem:[%s3 + $0x38] sm:$0xf]
  %v83 = vld [vmem:[%s3 + $0x3c] sm:$0xff]
  %v84 = vld [vmem:[%s3 + $0x44] sm:$0xf]
  %v85 = vld [vmem:[%s3 + $0x48] sm:$0xff]
  %v86 = vld [vmem:[%s3 + $0x50] sm:$0xf]
  %v87 = vld [vmem:[%s3 + $0x54] sm:$0xff]
  %v88 = vld [vmem:[%s3 + $0x5c] sm:$0xf]
  %v89 = vld [vmem:[%s3 + $0x60] sm:$0xff]
  %v90 = vld [vmem:[%s3 + $0x68] sm:$0xf]
  %v91 = vld [vmem:[%s3 + $0x6c] sm:$0xff]
  %v92 = vld [vmem:[%s3 + $0x74] sm:$0xf]
  %v93 = vld [vmem:[%s3 + $0x78] sm:$0xff]
  %v94 = vld [vmem:[%s3 + $0x80] sm:$0xf]
  %v95 = vld [vmem:[%s3 + $0x84] sm:$0xff]
  %v96 = vld [vmem:[%s3 + $0x8c] sm:$0xf]
  %v97 = vld [vmem:[%s3 + $0x90] sm:$0xff]
  %v98 = vld [vmem:[%s3 + $0x98] sm:$0xf]
  %v99 = vld [vmem:[%s3 + $0x9c] sm:$0xff]
  %v100 = vld [vmem:[%s3 + $0xa4] sm:$0xf]
  %v101 = vld [vmem:[%s3 + $0xa8] sm:$0xff]
  %v102 = vld [vmem:[%s3 + $0xb0] sm:$0xf]
  %v103 = vld [vmem:[%s3 + $0xb4] sm:$0xff]
  %v104 = vld [vmem:[%s3 + $0xbc] sm:$0xf]
  %v105 = vld [vmem:[%s4] sm:$0x7]
  %v107 = vlaneseq
  %v108 = vshrl.u32 %v107, 7
  %v109 = vsub.s32 0, %v108
  %v110 = vrot.slane %v105, %v109
  %v111 = vlaneseq
  %v112 = vshrl.u32 %v111, 7
  %v113 = vsub.s32 1, %v112
  %v114 = vrot.slane %v105, %v113
  %v115 = vlaneseq
  %v116 = vshrl.u32 %v115, 7
  %v117 = vsub.s32 2, %v116
  %v118 = vrot.slane %v105, %v117
  %v154 = vunpack.c.l.b16 %v73
  %v155 = vunpack.c.h.b16 %v73
  %v156 = vunpack.c.l.b16 %v74
  %v157 = vunpack.c.l.b16 %v75
  %v158 = vunpack.c.h.b16 %v75
  %v159 = vunpack.c.l.b16 %v76
  %v160 = vunpack.c.l.b16 %v77
  %v161 = vunpack.c.h.b16 %v77
  %v162 = vunpack.c.l.b16 %v78
  %v163 = vunpack.c.l.b16 %v79
  %v164 = vunpack.c.h.b16 %v79
  %v165 = vunpack.c.l.b16 %v80
  %v166 = vunpack.c.l.b16 %v81
  %v167 = vunpack.c.h.b16 %v81
  %v168 = vunpack.c.l.b16 %v82
  %v169 = vunpack.c.l.b16 %v83
  %v170 = vunpack.c.h.b16 %v83
  %v171 = vunpack.c.l.b16 %v84
  %v172 = vunpack.c.l.b16 %v85
  %v173 = vunpack.c.h.b16 %v85
  %v174 = vunpack.c.l.b16 %v86
  %v175 = vunpack.c.l.b16 %v87
  %v176 = vunpack.c.h.b16 %v87
  %v177 = vunpack.c.l.b16 %v88
  %v178 = vunpack.c.l.b16 %v89
  %v179 = vunpack.c.h.b16 %v89
  %v180 = vunpack.c.l.b16 %v90
  %v181 = vunpack.c.l.b16 %v91
  %v182 = vunpack.c.h.b16 %v91
  %v183 = vunpack.c.l.b16 %v92
  %v184 = vunpack.c.l.b16 %v93
  %v185 = vunpack.c.h.b16 %v93
  %v186 = vunpack.c.l.b16 %v94
  %v187 = vunpack.c.l.b16 %v95
  %v188 = vunpack.c.h.b16 %v95
  %v189 = vunpack.c.l.b16 %v96
  %v190 = vunpack.c.l.b16 %v97
  %v191 = vunpack.c.h.b16 %v97
  %v192 = vunpack.c.l.b16 %v98
  %v193 = vunpack.c.l.b16 %v99
  %v194 = vunpack.c.h.b16 %v99
  %v195 = vunpack.c.l.b16 %v100
  %v196 = vunpack.c.l.b16 %v101
  %v197 = vunpack.c.h.b16 %v101
  %v198 = vunpack.c.l.b16 %v102
  %v199 = vunpack.c.l.b16 %v103
  %v200 = vunpack.c.h.b16 %v103
  %v201 = vunpack.c.l.b16 %v104
  %v202 = vpack.c.b16 %v157, %v154
  %v203 = vpack.c.b16 %v158, %v155
  %v204 = vpack.c.b16 %v159, %v156
  %v205 = vpack.c.b16 %v163, %v160
  %v206 = vpack.c.b16 %v164, %v161
  %v207 = vpack.c.b16 %v165, %v162
  %v208 = vpack.c.b16 %v169, %v166
  %v209 = vpack.c.b16 %v170, %v167
  %v210 = vpack.c.b16 %v171, %v168
  %v211 = vpack.c.b16 %v175, %v172
  %v212 = vpack.c.b16 %v176, %v173
  %v213 = vpack.c.b16 %v177, %v174
  %v214 = vpack.c.b16 %v181, %v178
  %v215 = vpack.c.b16 %v182, %v179
  %v216 = vpack.c.b16 %v183, %v180
  %v217 = vpack.c.b16 %v187, %v184
  %v218 = vpack.c.b16 %v188, %v185
  %v219 = vpack.c.b16 %v189, %v186
  %v220 = vpack.c.b16 %v193, %v190
  %v221 = vpack.c.b16 %v194, %v191
  %v222 = vpack.c.b16 %v195, %v192
  %v223 = vpack.c.b16 %v199, %v196
  %v224 = vpack.c.b16 %v200, %v197
  %v225 = vpack.c.b16 %v201, %v198
  %250 = vmatprep.subr.bf16.mxu0 %v203
  %251 = vmatpush1.bf16.msra.mxu0 %v202
  %252 = vmatprep.subr.bf16.mxu0 %v206
  %253 = vmatpush1.bf16.msra.mxu0 %v205
  %254 = vmatprep.subr.bf16.mxu0 %v209
  %255 = vmatpush1.bf16.msra.mxu0 %v208
  %256 = vmatprep.subr.bf16.mxu0 %v212
  %257 = vmatpush1.bf16.msra.mxu0 %v211
  %258 = vmatprep.subr.bf16.mxu0 %v215
  %259 = vmatpush1.bf16.msra.mxu0 %v214
  %260 = vmatprep.subr.bf16.mxu0 %v218
  %261 = vmatpush1.bf16.msra.mxu0 %v217
  %262 = vmatprep.subr.bf16.mxu0 %v221
  %263 = vmatpush1.bf16.msra.mxu0 %v220
  %264 = vmatprep.subr.bf16.mxu0 %v224
  %265 = vmatpush1.bf16.msra.mxu0 %v223
  %266 = vmatprep.subr.bf16.mxu0 0
  %267 = vmatpush1.bf16.msra.mxu0 0
  %268 = vmatprep.subr.bf16.mxu0 0
  %269 = vmatpush1.bf16.msra.mxu0 0
  %270 = vmatprep.subr.bf16.mxu0 0
  %271 = vmatpush1.bf16.msra.mxu0 0
  %272 = vmatprep.subr.bf16.mxu0 0
  %273 = vmatpush1.bf16.msra.mxu0 0
  %274 = vmatprep.subr.bf16.mxu0 0
  %275 = vmatpush1.bf16.msra.mxu0 0
  %276 = vmatprep.subr.bf16.mxu0 0
  %277 = vmatpush1.bf16.msra.mxu0 0
  %278 = vmatprep.subr.bf16.mxu0 0
  %279 = vmatpush1.bf16.msra.mxu0 0
  %280 = vmatprep.subr.bf16.mxu0 0
  %281 = vmatpush1.bf16.msra.mxu0 0
  %282 = vmatprep.mubr.bf16.mxu0 0
  %283 = vmatmul.mubr.bf16.gmra.mrb[0].mxu0 %v72
  %v284 = vpop.f32.mrb[0].mxu0
  %v285 = vadd.f32 %v110, %v284
  %v286 = vpop.f32.mrb[0].mxu0
  %v287 = vadd.f32 %v114, %v286
  %v288 = vpop.f32.mrb[0].mxu0
  %v289 = vadd.f32 %v110, %v288
  %v290 = vpop.f32.mrb[0].mxu0
  %v291 = vadd.f32 %v114, %v290
  %292 = vdwg.mxu0
  %293 = vmatprep.subr.bf16.mxu0 0
  %294 = vmatpush1.bf16.msra.mxu0 %v204
  %295 = vmatprep.subr.bf16.mxu0 0
  %296 = vmatpush1.bf16.msra.mxu0 %v207
  %297 = vmatprep.subr.bf16.mxu0 0
  %298 = vmatpush1.bf16.msra.mxu0 %v210
  %299 = vmatprep.subr.bf16.mxu0 0
  %300 = vmatpush1.bf16.msra.mxu0 %v213
  %301 = vmatprep.subr.bf16.mxu0 0
  %302 = vmatpush1.bf16.msra.mxu0 %v216
  %303 = vmatprep.subr.bf16.mxu0 0
  %304 = vmatpush1.bf16.msra.mxu0 %v219
  %305 = vmatprep.subr.bf16.mxu0 0
  %306 = vmatpush1.bf16.msra.mxu0 %v222
  %307 = vmatprep.subr.bf16.mxu0 0
  %308 = vmatpush1.bf16.msra.mxu0 %v225
  %309 = vmatprep.subr.bf16.mxu0 0
  %310 = vmatpush1.bf16.msra.mxu0 0
  %311 = vmatprep.subr.bf16.mxu0 0
  %312 = vmatpush1.bf16.msra.mxu0 0
  %313 = vmatprep.subr.bf16.mxu0 0
  %314 = vmatpush1.bf16.msra.mxu0 0
  %315 = vmatprep.subr.bf16.mxu0 0
  %316 = vmatpush1.bf16.msra.mxu0 0
  %317 = vmatprep.subr.bf16.mxu0 0
  %318 = vmatpush1.bf16.msra.mxu0 0
  %319 = vmatprep.subr.bf16.mxu0 0
  %320 = vmatpush1.bf16.msra.mxu0 0
  %321 = vmatprep.subr.bf16.mxu0 0
  %322 = vmatpush1.bf16.msra.mxu0 0
  %323 = vmatprep.subr.bf16.mxu0 0
  %324 = vmatpush1.bf16.msra.mxu0 0
  %325 = vmatprep.mubr.bf16.mxu0 0
  %326 = vmatmul.mubr.bf16.gmra.mrb[0].mxu0 %v72
  %v327 = vpop.f32.mrb[0].mxu0
  %v328 = vadd.f32 %v118, %v327
  %v329 = vpop.f32.mrb[0].mxu0
  %v330 = vpop.f32.mrb[0].mxu0
  %v331 = vadd.f32 %v118, %v330
  %v332 = vpop.f32.mrb[0].mxu0
  %333 = vdwg.mxu0
  %v334 = vpack.c.bf16 %v289, %v285
  %v335 = vpack.c.bf16 %v291, %v287
  %v336 = vpack.c.bf16 %v331, %v328
  %v340 = vunpack.c.l.b16 %v334
  %v341 = vunpack.c.l.b16 %v335
  %v342 = vunpack.c.l.b16 %v336
  %v343 = vunpack.c.h.b16 %v334
  %v344 = vunpack.c.h.b16 %v335
  %v345 = vunpack.c.h.b16 %v336
  %v346 = vpack.c.b16 %v341, %v340
  %v347 = vpack.c.b16 %v342, %v342
  %v348 = vpack.c.b16 %v344, %v343
  %v349 = vpack.c.b16 %v345, %v345
  %354 = vst [vmem:[%s5] sm:$0xff] %v346
  %355 = vst [vmem:[%s5 + $0x8] sm:$0xf] %v347
  %356 = vst [vmem:[%s5 + $0xc] sm:$0xff] %v348
  %357 = vst [vmem:[%s5 + $0x14] sm:$0xf] %v349
  // Predicated region
  $region26: #{_lambda_.43} parent=0 // pred_check
    _
  $region27: #{_lambda_.43} parent=0 // pred_check_branch
    %359 = sbr.rel (0) target = $region29
  $region28: #{_lambda_.43} parent=0 // pred_region
    _
  $region29: #{_lambda_.43} parent=0 // pred_fallthru
    _
  // Predicated region
  $region30: #{_lambda_.43} parent=0 // pred_check
    _
  $region31: #{_lambda_.43} parent=0 // pred_check_branch
    %361 = sbr.rel (0) target = $region33
  $region32: #{_lambda_.43} parent=0 // pred_region
    _
  $region33: #{_lambda_.43} parent=0 // pred_fallthru
    _

// kernel: _lambda_.46
$region0: #{_lambda_.46}
  #allocation0 [shape = 'u32[]', space=smem, size = 0x4, offset = 0x4, fixed_abs, tag = 'smem constant byte address 0x4 - core index']
  #allocation1 [shape = 'u32[144,128]{1,0:T(1,128)}', space=vmem, size = 0x12000, scoped, tag = 'internal scratch']
  #allocation2 [shape = 'bf16[16,128]{1,0:T(16,128)(2,1)}', space=vmem, size = 0x1000, scoped, tag = 'scratch operand']
  %s0 = inlined_call_operand.vmem [shape: bf16[16,128], index: 0, kind: input, shape index: {}]
  %s1 = inlined_call_operand.vmem [shape: f32[1,128], index: 1, kind: input, shape index: {}]
  %s2 = inlined_call_operand.vmem [shape: f32[1,128], index: 2, kind: input, shape index: {}]
  %s3 = inlined_call_operand.vmem [shape: bf16[128,128], index: 3, kind: input, shape index: {}]
  %s4 = inlined_call_operand.vmem [shape: f32[1,128], index: 4, kind: input, shape index: {}]
  %s5 = inlined_call_operand.vmem [shape: bf16[16,128], index: 5, kind: output, shape index: {}]
  %s6 = sld [smem:[#allocation0]]
  $region34: #{_lambda_.46} parent=0
    _
  %s8 = ssub.s32 1, %s6
  %s9 = scalar_select 0, %s8, %s6
  // Predicated region
  $region2: #{_lambda_.46} parent=0 // pred_check
    _
  $region3: #{_lambda_.46} parent=0 // pred_check_branch
    %11 = sbr.rel (0) target = $region5
  $region4: #{_lambda_.46} parent=0 // pred_region
    _
  $region5: #{_lambda_.46} parent=0 // pred_fallthru
    _
  // Predicated region
  $region6: #{_lambda_.46} parent=0 // pred_check
    _
  $region7: #{_lambda_.46} parent=0 // pred_check_branch
    %13 = sbr.rel (0) target = $region9
  $region8: #{_lambda_.46} parent=0 // pred_region
    _
  $region9: #{_lambda_.46} parent=0 // pred_fallthru
    _
  // Predicated region
  $region10: #{_lambda_.46} parent=0 // pred_check
    _
  $region11: #{_lambda_.46} parent=0 // pred_check_branch
    %15 = sbr.rel (0) target = $region13
  $region12: #{_lambda_.46} parent=0 // pred_region
    _
  $region13: #{_lambda_.46} parent=0 // pred_fallthru
    _
  // Predicated region
  $region14: #{_lambda_.46} parent=0 // pred_check
    _
  $region15: #{_lambda_.46} parent=0 // pred_check_branch
    %17 = sbr.rel (0) target = $region17
  $region16: #{_lambda_.46} parent=0 // pred_region
    _
  $region17: #{_lambda_.46} parent=0 // pred_fallthru
    _
  // Predicated region
  $region18: #{_lambda_.46} parent=0 // pred_check
    _
  $region19: #{_lambda_.46} parent=0 // pred_check_branch
    %19 = sbr.rel (0) target = $region21
  $region20: #{_lambda_.46} parent=0 // pred_region
    _
  $region21: #{_lambda_.46} parent=0 // pred_fallthru
    _
  %p21 = scmp.eq.s32.totalorder 0, 0
  // Predicated region
  $region22: #{_lambda_.46} parent=0 // pred_check
    %p22 = pneg %p21
  $region23: #{_lambda_.46} parent=0 // pred_check_branch
    %24 = sbr.rel (%p22) target = $region25
  $region24: #{_lambda_.46} parent=0 // pred_region
    %v25 = vld [vmem:[%s0] sm:$0xf]
    %v26 = vld [vmem:[%s0 + $0x4] sm:$0xf]
    %v27 = vunpack.c.l.bf16 %v25
    %v28 = vunpack.c.l.bf16 %v26
    %29 = vadd.xlane.f32.xlu0 %v27
    %v30 = vpop.xlane.xlu0 %29
    %31 = vadd.xlane.f32.xlu0 %v28
    %v32 = vpop.xlane.xlu0 %31
    %v33 = vrcp.pop 128.0
    %v34 = vmul.f32 %v30, %v33
    %v35 = vmul.f32 %v32, %v33
    %v36 = vsub.f32 %v27, %v34
    %v37 = vsub.f32 %v28, %v35
    %v38 = vmul.f32 %v36, %v36
    %v39 = vmul.f32 %v37, %v37
    %40 = vadd.xlane.f32.xlu0 %v38
    %v41 = vpop.xlane.xlu0 %40
    %42 = vadd.xlane.f32.xlu0 %v39
    %v43 = vpop.xlane.xlu0 %42
    %v44 = vmul.f32 %v41, %v33
    %v45 = vmul.f32 %v43, %v33
    %v46 = vadd.f32 %v44, 1e-05
    %v47 = vadd.f32 %v45, 1e-05
    %v48 = vrsqrt.pop %v46
    %v49 = vrsqrt.pop %v47
    %v50 = vmul.f32 %v36, %v48
    %v51 = vmul.f32 %v37, %v49
    %v52 = vld [vmem:[%s1] sm:$0x1]
    %v54 = vlaneseq
    %v55 = vshrl.u32 %v54, 7
    %v56 = vsub.s32 0, %v55
    %v57 = vrot.slane %v52, %v56
    %v59 = vmul.f32 %v50, %v57
    %v60 = vmul.f32 %v51, %v57
    %v61 = vld [vmem:[%s2] sm:$0x1]
    %v63 = vlaneseq
    %v64 = vshrl.u32 %v63, 7
    %v65 = vsub.s32 0, %v64
    %v66 = vrot.slane %v61, %v65
    %v68 = vadd.f32 %v59, %v66
    %v69 = vadd.f32 %v60, %v66
    %v70 = vpack.c.bf16 %v69, %v68
    %71 = vst [vmem:[#allocation2] sm:$0xff] %v70
  $region25: #{_lambda_.46} parent=0 // pred_fallthru
    _
  %v72 = vld [vmem:[#allocation2] sm:$0xff]
  %v73 = vld [vmem:[%s3] sm:$0xf]
  %v74 = vld [vmem:[%s3 + $0x4] sm:$0xf]
  %v75 = vld [vmem:[%s3 + $0x8] sm:$0xf]
  %v76 = vld [vmem:[%s3 + $0xc] sm:$0xf]
  %v77 = vld [vmem:[%s3 + $0x10] sm:$0xf]
  %v78 = vld [vmem:[%s3 + $0x14] sm:$0xf]
  %v79 = vld [vmem:[%s3 + $0x18] sm:$0xf]
  %v80 = vld [vmem:[%s3 + $0x1c] sm:$0xf]
  %v81 = vld [vmem:[%s3 + $0x20] sm:$0xf]
  %v82 = vld [vmem:[%s3 + $0x24] sm:$0xf]
  %v83 = vld [vmem:[%s3 + $0x28] sm:$0xf]
  %v84 = vld [vmem:[%s3 + $0x2c] sm:$0xf]
  %v85 = vld [vmem:[%s3 + $0x30] sm:$0xf]
  %v86 = vld [vmem:[%s3 + $0x34] sm:$0xf]
  %v87 = vld [vmem:[%s3 + $0x38] sm:$0xf]
  %v88 = vld [vmem:[%s3 + $0x3c] sm:$0xf]
  %v89 = vld [vmem:[%s4] sm:$0x1]
  %v91 = vlaneseq
  %v92 = vshrl.u32 %v91, 7
  %v93 = vsub.s32 0, %v92
  %v94 = vrot.slane %v89, %v93
  %v112 = vunpack.c.l.b16 %v73
  %v113 = vunpack.c.l.b16 %v74
  %v114 = vunpack.c.l.b16 %v75
  %v115 = vunpack.c.l.b16 %v76
  %v116 = vunpack.c.l.b16 %v77
  %v117 = vunpack.c.l.b16 %v78
  %v118 = vunpack.c.l.b16 %v79
  %v119 = vunpack.c.l.b16 %v80
  %v120 = vunpack.c.l.b16 %v81
  %v121 = vunpack.c.l.b16 %v82
  %v122 = vunpack.c.l.b16 %v83
  %v123 = vunpack.c.l.b16 %v84
  %v124 = vunpack.c.l.b16 %v85
  %v125 = vunpack.c.l.b16 %v86
  %v126 = vunpack.c.l.b16 %v87
  %v127 = vunpack.c.l.b16 %v88
  %v128 = vpack.c.b16 %v113, %v112
  %v129 = vpack.c.b16 %v115, %v114
  %v130 = vpack.c.b16 %v117, %v116
  %v131 = vpack.c.b16 %v119, %v118
  %v132 = vpack.c.b16 %v121, %v120
  %v133 = vpack.c.b16 %v123, %v122
  %v134 = vpack.c.b16 %v125, %v124
  %v135 = vpack.c.b16 %v127, %v126
  %144 = vmatprep.subr.bf16.mxu0 0
  %145 = vmatpush1.bf16.msra.mxu0 %v128
  %146 = vmatprep.subr.bf16.mxu0 0
  %147 = vmatpush1.bf16.msra.mxu0 %v129
  %148 = vmatprep.subr.bf16.mxu0 0
  %149 = vmatpush1.bf16.msra.mxu0 %v130
  %150 = vmatprep.subr.bf16.mxu0 0
  %151 = vmatpush1.bf16.msra.mxu0 %v131
  %152 = vmatprep.subr.bf16.mxu0 0
  %153 = vmatpush1.bf16.msra.mxu0 %v132
  %154 = vmatprep.subr.bf16.mxu0 0
  %155 = vmatpush1.bf16.msra.mxu0 %v133
  %156 = vmatprep.subr.bf16.mxu0 0
  %157 = vmatpush1.bf16.msra.mxu0 %v134
  %158 = vmatprep.subr.bf16.mxu0 0
  %159 = vmatpush1.bf16.msra.mxu0 %v135
  %160 = vmatprep.subr.bf16.mxu0 0
  %161 = vmatpush1.bf16.msra.mxu0 0
  %162 = vmatprep.subr.bf16.mxu0 0
  %163 = vmatpush1.bf16.msra.mxu0 0
  %164 = vmatprep.subr.bf16.mxu0 0
  %165 = vmatpush1.bf16.msra.mxu0 0
  %166 = vmatprep.subr.bf16.mxu0 0
  %167 = vmatpush1.bf16.msra.mxu0 0
  %168 = vmatprep.subr.bf16.mxu0 0
  %169 = vmatpush1.bf16.msra.mxu0 0
  %170 = vmatprep.subr.bf16.mxu0 0
  %171 = vmatpush1.bf16.msra.mxu0 0
  %172 = vmatprep.subr.bf16.mxu0 0
  %173 = vmatpush1.bf16.msra.mxu0 0
  %174 = vmatprep.subr.bf16.mxu0 0
  %175 = vmatpush1.bf16.msra.mxu0 0
  %176 = vmatprep.mubr.bf16.mxu0 0
  %177 = vmatmul.mubr.bf16.gmra.mrb[0].mxu0 %v72
  %v178 = vpop.f32.mrb[0].mxu0
  %v179 = vadd.f32 %v94, %v178
  %v180 = vpop.f32.mrb[0].mxu0
  %v181 = vpop.f32.mrb[0].mxu0
  %v182 = vadd.f32 %v94, %v181
  %v183 = vpop.f32.mrb[0].mxu0
  %184 = vdwg.mxu0
  %v185 = vpack.c.bf16 %v182, %v179
  %v187 = vunpack.c.l.b16 %v185
  %v188 = vunpack.c.h.b16 %v185
  %v189 = vpack.c.b16 %v187, %v187
  %v190 = vpack.c.b16 %v188, %v188
  %193 = vst [vmem:[%s5] sm:$0xf] %v189
  %194 = vst [vmem:[%s5 + $0x4] sm:$0xf] %v190
  // Predicated region
  $region26: #{_lambda_.46} parent=0 // pred_check
    _
  $region27: #{_lambda_.46} parent=0 // pred_check_branch
    %196 = sbr.rel (0) target = $region29
  $region28: #{_lambda_.46} parent=0 // pred_region
    _
  $region29: #{_lambda_.46} parent=0 // pred_fallthru
    _
  // Predicated region
  $region30: #{_lambda_.46} parent=0 // pred_check
    _
  $region31: #{_lambda_.46} parent=0 // pred_check_branch
    %198 = sbr.rel (0) target = $region33
  $region32: #{_lambda_.46} parent=0 // pred_region
    _
  $region33: #{_lambda_.46} parent=0 // pred_fallthru
    _

// kernel: _lambda_.45
$region0: #{_lambda_.45}
  #allocation0 [shape = 'u32[]', space=smem, size = 0x4, offset = 0x4, fixed_abs, tag = 'smem constant byte address 0x4 - core index']
  #allocation1 [shape = 'u32[144,128]{1,0:T(1,128)}', space=vmem, size = 0x12000, scoped, tag = 'internal scratch']
  #allocation2 [shape = 'f32[16,128]{1,0:T(8,128)}', space=vmem, size = 0x2000, scoped, tag = 'scratch operand']
  %s0 = inlined_call_operand.vmem [shape: bf16[16,128], index: 0, kind: input, shape index: {}]
  %s1 = inlined_call_operand.vmem [shape: bf16[128,128], index: 1, kind: input, shape index: {}]
  %s2 = inlined_call_operand.vmem [shape: f32[1,128], index: 2, kind: input, shape index: {}]
  %s3 = inlined_call_operand.vmem [shape: bf16[16,128], index: 3, kind: input, shape index: {}]
  %s4 = inlined_call_operand.vmem [shape: bf16[16,128], index: 4, kind: output, shape index: {}]
  %s5 = sld [smem:[#allocation0]]
  $region34: #{_lambda_.45} parent=0
    _
  %s7 = ssub.s32 1, %s5
  %s8 = scalar_select 0, %s7, %s5
  // Predicated region
  $region2: #{_lambda_.45} parent=0 // pred_check
    _
  $region3: #{_lambda_.45} parent=0 // pred_check_branch
    %10 = sbr.rel (0) target = $region5
  $region4: #{_lambda_.45} parent=0 // pred_region
    _
  $region5: #{_lambda_.45} parent=0 // pred_fallthru
    _
  // Predicated region
  $region6: #{_lambda_.45} parent=0 // pred_check
    _
  $region7: #{_lambda_.45} parent=0 // pred_check_branch
    %12 = sbr.rel (0) target = $region9
  $region8: #{_lambda_.45} parent=0 // pred_region
    _
  $region9: #{_lambda_.45} parent=0 // pred_fallthru
    _
  // Predicated region
  $region10: #{_lambda_.45} parent=0 // pred_check
    _
  $region11: #{_lambda_.45} parent=0 // pred_check_branch
    %14 = sbr.rel (0) target = $region13
  $region12: #{_lambda_.45} parent=0 // pred_region
    _
  $region13: #{_lambda_.45} parent=0 // pred_fallthru
    _
  // Predicated region
  $region14: #{_lambda_.45} parent=0 // pred_check
    _
  $region15: #{_lambda_.45} parent=0 // pred_check_branch
    %16 = sbr.rel (0) target = $region17
  $region16: #{_lambda_.45} parent=0 // pred_region
    _
  $region17: #{_lambda_.45} parent=0 // pred_fallthru
    _
  %p18 = scmp.eq.s32.totalorder 0, 0
  // Predicated region
  $region18: #{_lambda_.45} parent=0 // pred_check
    %p19 = pneg %p18
  $region19: #{_lambda_.45} parent=0 // pred_check_branch
    %21 = sbr.rel (%p19) target = $region21
  $region20: #{_lambda_.45} parent=0 // pred_region
    %22 = vst [vmem:[#allocation2] sm:$0xff] 0.0
    %23 = vst [vmem:[#allocation2 + $0x8] sm:$0xff] 0.0
  $region21: #{_lambda_.45} parent=0 // pred_fallthru
    _
  %v24 = vld [vmem:[#allocation2] sm:$0xff]
  %v25 = vld [vmem:[#allocation2 + $0x8] sm:$0xff]
  %v26 = vld [vmem:[%s0] sm:$0xf]
  %v27 = vld [vmem:[%s0 + $0x4] sm:$0xf]
  %v28 = vld [vmem:[%s1] sm:$0xf]
  %v29 = vld [vmem:[%s1 + $0x4] sm:$0xf]
  %v30 = vld [vmem:[%s1 + $0x8] sm:$0xf]
  %v31 = vld [vmem:[%s1 + $0xc] sm:$0xf]
  %v32 = vld [vmem:[%s1 + $0x10] sm:$0xf]
  %v33 = vld [vmem:[%s1 + $0x14] sm:$0xf]
  %v34 = vld [vmem:[%s1 + $0x18] sm:$0xf]
  %v35 = vld [vmem:[%s1 + $0x1c] sm:$0xf]
  %v36 = vld [vmem:[%s1 + $0x20] sm:$0xf]
  %v37 = vld [vmem:[%s1 + $0x24] sm:$0xf]
  %v38 = vld [vmem:[%s1 + $0x28] sm:$0xf]
  %v39 = vld [vmem:[%s1 + $0x2c] sm:$0xf]
  %v40 = vld [vmem:[%s1 + $0x30] sm:$0xf]
  %v41 = vld [vmem:[%s1 + $0x34] sm:$0xf]
  %v42 = vld [vmem:[%s1 + $0x38] sm:$0xf]
  %v43 = vld [vmem:[%s1 + $0x3c] sm:$0xf]
  %v46 = vunpack.c.l.b16 %v26
  %v47 = vunpack.c.l.b16 %v27
  %v48 = vpack.c.b16 %v47, %v46
  %v66 = vunpack.c.l.b16 %v28
  %v67 = vunpack.c.l.b16 %v29
  %v68 = vunpack.c.l.b16 %v30
  %v69 = vunpack.c.l.b16 %v31
  %v70 = vunpack.c.l.b16 %v32
  %v71 = vunpack.c.l.b16 %v33
  %v72 = vunpack.c.l.b16 %v34
  %v73 = vunpack.c.l.b16 %v35
  %v74 = vunpack.c.l.b16 %v36
  %v75 = vunpack.c.l.b16 %v37
  %v76 = vunpack.c.l.b16 %v38
  %v77 = vunpack.c.l.b16 %v39
  %v78 = vunpack.c.l.b16 %v40
  %v79 = vunpack.c.l.b16 %v41
  %v80 = vunpack.c.l.b16 %v42
  %v81 = vunpack.c.l.b16 %v43
  %v82 = vpack.c.b16 %v67, %v66
  %v83 = vpack.c.b16 %v69, %v68
  %v84 = vpack.c.b16 %v71, %v70
  %v85 = vpack.c.b16 %v73, %v72
  %v86 = vpack.c.b16 %v75, %v74
  %v87 = vpack.c.b16 %v77, %v76
  %v88 = vpack.c.b16 %v79, %v78
  %v89 = vpack.c.b16 %v81, %v80
  %98 = vmatprep.subr.bf16.mxu0 0
  %99 = vmatpush1.bf16.msra.mxu0 %v82
  %100 = vmatprep.subr.bf16.mxu0 0
  %101 = vmatpush1.bf16.msra.mxu0 %v83
  %102 = vmatprep.subr.bf16.mxu0 0
  %103 = vmatpush1.bf16.msra.mxu0 %v84
  %104 = vmatprep.subr.bf16.mxu0 0
  %105 = vmatpush1.bf16.msra.mxu0 %v85
  %106 = vmatprep.subr.bf16.mxu0 0
  %107 = vmatpush1.bf16.msra.mxu0 %v86
  %108 = vmatprep.subr.bf16.mxu0 0
  %109 = vmatpush1.bf16.msra.mxu0 %v87
  %110 = vmatprep.subr.bf16.mxu0 0
  %111 = vmatpush1.bf16.msra.mxu0 %v88
  %112 = vmatprep.subr.bf16.mxu0 0
  %113 = vmatpush1.bf16.msra.mxu0 %v89
  %114 = vmatprep.subr.bf16.mxu0 0
  %115 = vmatpush1.bf16.msra.mxu0 0
  %116 = vmatprep.subr.bf16.mxu0 0
  %117 = vmatpush1.bf16.msra.mxu0 0
  %118 = vmatprep.subr.bf16.mxu0 0
  %119 = vmatpush1.bf16.msra.mxu0 0
  %120 = vmatprep.subr.bf16.mxu0 0
  %121 = vmatpush1.bf16.msra.mxu0 0
  %122 = vmatprep.subr.bf16.mxu0 0
  %123 = vmatpush1.bf16.msra.mxu0 0
  %124 = vmatprep.subr.bf16.mxu0 0
  %125 = vmatpush1.bf16.msra.mxu0 0
  %126 = vmatprep.subr.bf16.mxu0 0
  %127 = vmatpush1.bf16.msra.mxu0 0
  %128 = vmatprep.subr.bf16.mxu0 0
  %129 = vmatpush1.bf16.msra.mxu0 0
  %130 = vmatprep.mubr.bf16.mxu0 0
  %131 = vmatmul.mubr.bf16.gmra.mrb[0].mxu0 %v48
  %v132 = vpop.f32.mrb[0].mxu0
  %v133 = vadd.f32 0.0, %v132
  %v134 = vpop.f32.mrb[0].mxu0
  %v135 = vpop.f32.mrb[0].mxu0
  %v136 = vadd.f32 0.0, %v135
  %v137 = vpop.f32.mrb[0].mxu0
  %138 = vdwg.mxu0
  %v139 = vadd.f32 %v24, %v133
  %v140 = vadd.f32 %v25, %v136
  %141 = vst [vmem:[#allocation2] sm:$0xff] %v139
  %142 = vst [vmem:[#allocation2 + $0x8] sm:$0xff] %v140
  // Predicated region
  $region22: #{_lambda_.45} parent=0 // pred_check
    %p143 = pneg %p18
  $region23: #{_lambda_.45} parent=0 // pred_check_branch
    %145 = sbr.rel (%p143) target = $region25
  $region24: #{_lambda_.45} parent=0 // pred_region
    %v146 = vld [vmem:[#allocation2] sm:$0xff]
    %v147 = vld [vmem:[#allocation2 + $0x8] sm:$0xff]
    %v148 = vld [vmem:[%s2] sm:$0x1]
    %v150 = vlaneseq
    %v151 = vshrl.u32 %v150, 7
    %v152 = vsub.s32 0, %v151
    %v153 = vrot.slane %v148, %v152
    %v155 = vadd.f32 %v146, %v153
    %v156 = vadd.f32 %v147, %v153
    %v157 = vld [vmem:[%s3] sm:$0xf]
    %v158 = vld [vmem:[%s3 + $0x4] sm:$0xf]
    %v159 = vunpack.c.l.bf16 %v157
    %v160 = vunpack.c.l.bf16 %v158
    %v161 = vadd.f32 %v155, %v159
    %v162 = vadd.f32 %v156, %v160
    %v163 = vpack.c.bf16 %v162, %v161
    %v165 = vunpack.c.l.b16 %v163
    %v166 = vunpack.c.h.b16 %v163
    %v167 = vpack.c.b16 %v165, %v165
    %v168 = vpack.c.b16 %v166, %v166
    %171 = vst [vmem:[%s4] sm:$0xf] %v167
    %172 = vst [vmem:[%s4 + $0x4] sm:$0xf] %v168
  $region25: #{_lambda_.45} parent=0 // pred_fallthru
    _
  // Predicated region
  $region26: #{_lambda_.45} parent=0 // pred_check
    _
  $region27: #{_lambda_.45} parent=0 // pred_check_branch
    %174 = sbr.rel (0) target = $region29
  $region28: #{_lambda_.45} parent=0 // pred_region
    _
  $region29: #{_lambda_.45} parent=0 // pred_fallthru
    _
  // Predicated region
  $region30: #{_lambda_.45} parent=0 // pred_check
    _
  $region31: #{_lambda_.45} parent=0 // pred_check_branch
    %176 = sbr.rel (0) target = $region33
  $region32: #{_lambda_.45} parent=0 // pred_region
    _
  $region33: #{_lambda_.45} parent=0 // pred_fallthru
    _

// kernel: _lambda_.48
$region0: #{_lambda_.48}
  #allocation0 [shape = 'u32[]', space=smem, size = 0x4, offset = 0x4, fixed_abs, tag = 'smem constant byte address 0x4 - core index']
  #allocation1 [shape = 'u32[144,128]{1,0:T(1,128)}', space=vmem, size = 0x12000, scoped, tag = 'internal scratch']
  %s0 = inlined_call_operand.vmem [shape: bf16[2,2,8,64], index: 0, kind: input, shape index: {}]
  %s1 = inlined_call_operand.vmem [shape: bf16[2,2,5,64], index: 1, kind: input, shape index: {}]
  %s2 = inlined_call_operand.vmem [shape: bf16[2,2,5,64], index: 2, kind: input, shape index: {}]
  %s3 = inlined_call_operand.vmem [shape: bf16[2,2,8,64], index: 3, kind: output, shape index: {}]
  %s4 = sld [smem:[#allocation0]]
  $region45: #{_lambda_.48} parent=0
    _
  %s6 = ssub.s32 1, %s4
  %s7 = scalar_select 0, %s6, %s4
  loop: start=0, step=1, limit=6
  $region2: #{_lambda_.48} parent=0 // loop_pre_header
    _
  $region3: #{_lambda_.48} parent=0 // loop_header
    %s9 = sphi 0, %s13
    %p10 = scmp.ge.s32.totalorder %s9, 6
    %s16 = sphi 0, %s28
    %s17 = sphi 0, %s24
    %s18 = sphi 0, %s16
    %s19 = sphi 0, %s17
    %s20 = sphi 0, %s18
    %s21 = sphi 0, %s19
    %s33 = sphi 0, %s35
    %s36 = sphi 0, %s33
    %s37 = sphi 0, %s36
    %s53 = sphi 0, %s37
    %s61 = sphi 0, %s63
    %s64 = sphi 0, %s61
    %s65 = sphi 0, %s64
    %s81 = sphi 0, %s65
    %s89 = sphi 0, %s91
    %s92 = sphi 0, %s89
    %s93 = sphi 0, %s92
    %s109 = sphi 0, %s93
    %s117 = sphi 0, %s119
    %s120 = sphi 0, %s117
    %s121 = sphi 0, %s120
    %s137 = sphi 0, %s121
  $region4: #{_lambda_.48} parent=0 // loop_header_branch
    %12 = sbr.rel (%p10) target = $region8
  $region5: #{_lambda_.48} parent=0 // loop_body
    %s14 = ssub.s32 %s9, 1
    %s15 = ssub.s32 %s9, 2
    %s22 = sadd.s32 1, %s17
    %p23 = scmp.ge.s32.totalorder %s22, 2
    %s24 = scalar_select %p23, 0, %s22
    %s25 = sadd.s32 1, %s16
    %s26 = scalar_select %p23, %s25, %s16
    %p27 = scmp.ge.s32.totalorder %s26, 2
    %s28 = scalar_select %p27, 0, %s26
    %s29 = ssub.s32 %s16, %s28
    %s30 = ssub.s32 %s17, %s24
    %s31 = sor.u32 %s29, %s30
    %p32 = scmp.eq.s32.totalorder %s31, 0
    %s34 = sadd.s32 %s33, 1
    %s35 = scalar_select %p32, %s33, %s34
    %p38 = pneg %p32
    %p39 = scmp.eq.s32.totalorder %s9, 3
    %p40 = por %p38, %p39
    %p41 = scmp.ne.s32.totalorder %s33, %s36
    %p42 = scmp.eq.s32.totalorder %s9, 0
    %p43 = por %p41, %p42
    %p44 = scmp.ne.s32.totalorder %s33, %s36
    %p45 = scmp.eq.s32.totalorder %s14, 3
    %p46 = por %p44, %p45
    %p47 = scmp.ne.s32.totalorder %s36, %s37
    %p48 = scmp.eq.s32.totalorder %s14, 0
    %p49 = por %p47, %p48
    %p50 = scmp.ne.s32.totalorder %s36, %s37
    %p51 = scmp.eq.s32.totalorder %s15, 3
    %p52 = por %p50, %p51
    %p54 = scmp.ne.s32.totalorder %s37, %s53
    %p55 = scmp.eq.s32.totalorder %s15, 0
    %p56 = por %p54, %p55
    %s57 = ssub.s32 %s16, %s28
    %s58 = ssub.s32 %s17, %s24
    %s59 = sor.u32 %s57, %s58
    %p60 = scmp.eq.s32.totalorder %s59, 0
    %s62 = sadd.s32 %s61, 1
    %s63 = scalar_select %p60, %s61, %s62
    %p66 = pneg %p60
    %p67 = scmp.eq.s32.totalorder %s9, 3
    %p68 = por %p66, %p67
    %p69 = scmp.ne.s32.totalorder %s61, %s64
    %p70 = scmp.eq.s32.totalorder %s9, 0
    %p71 = por %p69, %p70
    %p72 = scmp.ne.s32.totalorder %s61, %s64
    %p73 = scmp.eq.s32.totalorder %s14, 3
    %p74 = por %p72, %p73
    %p75 = scmp.ne.s32.totalorder %s64, %s65
    %p76 = scmp.eq.s32.totalorder %s14, 0
    %p77 = por %p75, %p76
    %p78 = scmp.ne.s32.totalorder %s64, %s65
    %p79 = scmp.eq.s32.totalorder %s15, 3
    %p80 = por %p78, %p79
    %p82 = scmp.ne.s32.totalorder %s65, %s81
    %p83 = scmp.eq.s32.totalorder %s15, 0
    %p84 = por %p82, %p83
    %s85 = ssub.s32 %s16, %s28
    %s86 = ssub.s32 %s17, %s24
    %s87 = sor.u32 %s85, %s86
    %p88 = scmp.eq.s32.totalorder %s87, 0
    %s90 = sadd.s32 %s89, 1
    %s91 = scalar_select %p88, %s89, %s90
    %p94 = pneg %p88
    %p95 = scmp.eq.s32.totalorder %s9, 3
    %p96 = por %p94, %p95
    %p97 = scmp.ne.s32.totalorder %s89, %s92
    %p98 = scmp.eq.s32.totalorder %s9, 0
    %p99 = por %p97, %p98
    %p100 = scmp.ne.s32.totalorder %s89, %s92
    %p101 = scmp.eq.s32.totalorder %s14, 3
    %p102 = por %p100, %p101
    %p103 = scmp.ne.s32.totalorder %s92, %s93
    %p104 = scmp.eq.s32.totalorder %s14, 0
    %p105 = por %p103, %p104
    %p106 = scmp.ne.s32.totalorder %s92, %s93
    %p107 = scmp.eq.s32.totalorder %s15, 3
    %p108 = por %p106, %p107
    %p110 = scmp.ne.s32.totalorder %s93, %s109
    %p111 = scmp.eq.s32.totalorder %s15, 0
    %p112 = por %p110, %p111
    %s113 = ssub.s32 %s16, %s28
    %s114 = ssub.s32 %s17, %s24
    %s115 = sor.u32 %s113, %s114
    %p116 = scmp.eq.s32.totalorder %s115, 0
    %s118 = sadd.s32 %s117, 1
    %s119 = scalar_select %p116, %s117, %s118
    %p122 = pneg %p116
    %p123 = scmp.eq.s32.totalorder %s9, 3
    %p124 = por %p122, %p123
    %p125 = scmp.ne.s32.totalorder %s117, %s120
    %p126 = scmp.eq.s32.totalorder %s9, 0
    %p127 = por %p125, %p126
    %p128 = scmp.ne.s32.totalorder %s117, %s120
    %p129 = scmp.eq.s32.totalorder %s14, 3
    %p130 = por %p128, %p129
    %p131 = scmp.ne.s32.totalorder %s120, %s121
    %p132 = scmp.eq.s32.totalorder %s14, 0
    %p133 = por %p131, %p132
    %p134 = scmp.ne.s32.totalorder %s120, %s121
    %p135 = scmp.eq.s32.totalorder %s15, 3
    %p136 = por %p134, %p135
    %p138 = scmp.ne.s32.totalorder %s121, %s137
    %p139 = scmp.eq.s32.totalorder %s15, 0
    %p140 = por %p138, %p139
    %p141 = scmp.le.s32.totalorder 1, %s9
    %p142 = scmp.lt.s32.totalorder %s9, 5
    %p143 = pnand %p141, %p142
    %p144 = pneg %p143
    // Predicated region
    $region9: #{_lambda_.48} parent=5 // pred_check
      _
    $region10: #{_lambda_.48} parent=5 // pred_check_branch
      %146 = sbr.rel (%p143) target = $region12
    $region11: #{_lambda_.48} parent=5 // pred_region
      %s147 = ssub.s32 %s9, 1
    $region12: #{_lambda_.48} parent=5 // pred_fallthru
      _
    %p148 = scmp.lt.s32.totalorder %s9, 4
    // Predicated region
    $region13: #{_lambda_.48} parent=5 // pred_check
      %p149 = pneg %p148
    $region14: #{_lambda_.48} parent=5 // pred_check_branch
      %151 = sbr.rel (%p149) target = $region16
    $region15: #{_lambda_.48} parent=5 // pred_region
      // Predicated region
      $region17: #{_lambda_.48} parent=15 // pred_check
        %p152 = pneg %p43
      $region18: #{_lambda_.48} parent=15 // pred_check_branch
        %154 = sbr.rel (%p152) target = $region20
      $region19: #{_lambda_.48} parent=15 // pred_region
        %p155 = scmp.lt.s32.totalorder %s16, 1
        %s156 = scalar_select %p155, %s16, 1
        %p157 = scmp.lt.s32.totalorder %s17, 1
        %s158 = scalar_select %p157, %s17, 1
        %s159 = smul.addr %s156, 2
        %s160 = sadd.s32 %s158, %s159
        %s161 = smul.addr %s160, 4
        %s162 = scalar_lea.vmem %s0, %s161
      $region20: #{_lambda_.48} parent=15 // pred_fallthru
        _
      // Predicated region
      $region21: #{_lambda_.48} parent=15 // pred_check
        %p163 = pneg %p71
      $region22: #{_lambda_.48} parent=15 // pred_check_branch
        %165 = sbr.rel (%p163) target = $region24
      $region23: #{_lambda_.48} parent=15 // pred_region
        %p166 = scmp.lt.s32.totalorder %s16, 1
        %s167 = scalar_select %p166, %s16, 1
        %p168 = scmp.lt.s32.totalorder %s17, 1
        %s169 = scalar_select %p168, %s17, 1
        %s170 = smul.addr %s167, 2
        %s171 = sadd.s32 %s169, %s170
        %s172 = smul.addr %s171, 4
        %s173 = scalar_lea.vmem %s1, %s172
      $region24: #{_lambda_.48} parent=15 // pred_fallthru
        _
      // Predicated region
      $region25: #{_lambda_.48} parent=15 // pred_check
        %p174 = pneg %p99
      $region26: #{_lambda_.48} parent=15 // pred_check_branch
        %176 = sbr.rel (%p174) target = $region28
      $region27: #{_lambda_.48} parent=15 // pred_region
        %p177 = scmp.lt.s32.totalorder %s16, 1
        %s178 = scalar_select %p177, %s16, 1
        %p179 = scmp.lt.s32.totalorder %s17, 1
        %s180 = scalar_select %p179, %s17, 1
        %s181 = smul.addr %s178, 2
        %s182 = sadd.s32 %s180, %s181
        %s183 = smul.addr %s182, 4
        %s184 = scalar_lea.vmem %s2, %s183
      $region28: #{_lambda_.48} parent=15 // pred_fallthru
        _
    $region16: #{_lambda_.48} parent=5 // pred_fallthru
      _
    %p185 = scmp.le.s32.totalorder 1, %s9
    %p186 = scmp.lt.s32.totalorder %s9, 5
    %p187 = pnand %p185, %p186
    %p188 = pneg %p187
    // Predicated region
    $region29: #{_lambda_.48} parent=5 // pred_check
      _
    $region30: #{_lambda_.48} parent=5 // pred_check_branch
      %190 = sbr.rel (%p187) target = $region32
    $region31: #{_lambda_.48} parent=5 // pred_region
      %s191 = ssub.s32 %s9, 1
      %p192 = scmp.lt.s32.totalorder %s18, 1
      %s193 = scalar_select %p192, %s18, 1
      %p194 = scmp.lt.s32.totalorder %s19, 1
      %s195 = scalar_select %p194, %s19, 1
      %s196 = smul.addr %s193, 2
      %s197 = sadd.s32 %s195, %s196
      %s198 = smul.addr %s197, 4
      %s199 = scalar_lea.vmem %s0, %s198
      %p200 = pneg %p49
      %p201 = pneg %p46
      %p202 = scmp.lt.s32.totalorder %s18, 1
      %s203 = scalar_select %p202, %s18, 1
      %p204 = scmp.lt.s32.totalorder %s19, 1
      %s205 = scalar_select %p204, %s19, 1
      %s206 = smul.addr %s203, 2
      %s207 = sadd.s32 %s205, %s206
      %s208 = smul.addr %s207, 4
      %s209 = scalar_lea.vmem %s1, %s208
      %p210 = pneg %p77
      %p211 = pneg %p74
      %p212 = scmp.lt.s32.totalorder %s18, 1
      %s213 = scalar_select %p212, %s18, 1
      %p214 = scmp.lt.s32.totalorder %s19, 1
      %s215 = scalar_select %p214, %s19, 1
      %s216 = smul.addr %s213, 2
      %s217 = sadd.s32 %s215, %s216
      %s218 = smul.addr %s217, 4
      %s219 = scalar_lea.vmem %s2, %s218
      %p220 = pneg %p105
      %p221 = pneg %p102
      %p222 = pneg %p133
      %p223 = pneg %p130
      %p224 = scmp.lt.s32.totalorder %s18, 1
      %s225 = scalar_select %p224, %s18, 1
      %p226 = scmp.lt.s32.totalorder %s19, 1
      %s227 = scalar_select %p226, %s19, 1
      %s228 = smul.addr %s225, 2
      %s229 = sadd.s32 %s227, %s228
      %s230 = smul.addr %s229, 4
      %s231 = scalar_lea.vmem %s3, %s230
      %p232 = scmp.lt.s32.totalorder %s18, 1
      %s233 = scalar_select %p232, %s18, 1
      %p234 = scmp.lt.s32.totalorder %s19, 1
      %s235 = scalar_select %p234, %s19, 1
      %s236 = smul.addr %s233, 2
      %s237 = sadd.s32 %s235, %s236
      %s238 = smul.addr %s237, 4
      %s239 = scalar_lea.vmem %s0, %s238
      %p240 = scmp.lt.s32.totalorder %s18, 1
      %s241 = scalar_select %p240, %s18, 1
      %p242 = scmp.lt.s32.totalorder %s19, 1
      %s243 = scalar_select %p242, %s19, 1
      %s244 = smul.addr %s241, 2
      %s245 = sadd.s32 %s243, %s244
      %s246 = smul.addr %s245, 4
      %s247 = scalar_lea.vmem %s1, %s246
      %p248 = scmp.lt.s32.totalorder %s18, 1
      %s249 = scalar_select %p248, %s18, 1
      %p250 = scmp.lt.s32.totalorder %s19, 1
      %s251 = scalar_select %p250, %s19, 1
      %s252 = smul.addr %s249, 2
      %s253 = sadd.s32 %s251, %s252
      %s254 = smul.addr %s253, 4
      %s255 = scalar_lea.vmem %s2, %s254
      %p256 = scmp.lt.s32.totalorder %s18, 1
      %s257 = scalar_select %p256, %s18, 1
      %p258 = scmp.lt.s32.totalorder %s19, 1
      %s259 = scalar_select %p258, %s19, 1
      %s260 = smul.addr %s257, 2
      %s261 = sadd.s32 %s259, %s260
      %s262 = smul.addr %s261, 4
      %s263 = scalar_lea.vmem %s3, %s262
      %v265 = vld [vmem:[%s239] sm:$0xf]
      %v266 = vld [vmem:[%s247] sm:$0x7]
      %v267 = vld [vmem:[%s255] sm:$0x7]
      %vm268 = vcmask 523264
      %v270 = vsel %vm268, %v265, 0
      %v273 = vsel %vm268, %v266, 0
      %275 = vmatprep.subr.bf16.mxu0 0
      %276 = vmatpush1.bf16.xpose.msra.mxu0 %v273
      %277 = vmatprep.subr.bf16.mxu0 0
      %278 = vmatpush1.bf16.xpose.msra.mxu0 0
      %279 = vmatprep.subr.bf16.mxu0 0
      %280 = vmatpush1.bf16.xpose.msra.mxu0 0
      %281 = vmatprep.subr.bf16.mxu0 0
      %282 = vmatpush1.bf16.xpose.msra.mxu0 0
      %283 = vmatprep.subr.bf16.mxu0 0
      %284 = vmatpush1.bf16.xpose.msra.mxu0 0
      %285 = vmatprep.subr.bf16.mxu0 0
      %286 = vmatpush1.bf16.xpose.msra.mxu0 0
      %287 = vmatprep.subr.bf16.mxu0 0
      %288 = vmatpush1.bf16.xpose.msra.mxu0 0
      %289 = vmatprep.subr.bf16.mxu0 0
      %290 = vmatpush1.bf16.xpose.msra.mxu0 0
      %291 = vmatprep.subr.bf16.mxu0 0
      %292 = vmatpush1.bf16.xpose.msra.mxu0 0
      %293 = vmatprep.subr.bf16.mxu0 0
      %294 = vmatpush1.bf16.xpose.msra.mxu0 0
      %295 = vmatprep.subr.bf16.mxu0 0
      %296 = vmatpush1.bf16.xpose.msra.mxu0 0
      %297 = vmatprep.subr.bf16.mxu0 0
      %298 = vmatpush1.bf16.xpose.msra.mxu0 0
      %299 = vmatprep.subr.bf16.mxu0 0
      %300 = vmatpush1.bf16.xpose.msra.mxu0 0
      %301 = vmatprep.subr.bf16.mxu0 0
      %302 = vmatpush1.bf16.xpose.msra.mxu0 0
      %303 = vmatprep.subr.bf16.mxu0 0
      %304 = vmatpush1.bf16.xpose.msra.mxu0 0
      %305 = vmatprep.subr.bf16.mxu0 0
      %306 = vmatpush1.bf16.xpose.msra.mxu0 0
      %307 = vmatprep.mubr.bf16.mxu0 0
      %308 = vmatmul.mubr.bf16.gmra.mrb[0].mxu0 %v270
      %v309 = vpop.f32.mrb[0].mxu0
      %v310 = vadd.f32 0.0, %v309
      %v311 = vpop.f32.mrb[0].mxu0
      %v312 = vpop.f32.mrb[0].mxu0
      %v313 = vpop.f32.mrb[0].mxu0
      %314 = vdwg.mxu0
      %v315 = vmul.f32 %v310, 0.125
      %vm316 = vcmask 39936
      %v317 = vsel %vm316, %v315, -inf
      %318 = vmax.xlane.f32.xlu0 %v317
      %v319 = vpop.xlane.xlu0 %318
      %v320 = vsub.f32 %v315, %v319
      %v321 = vmul.f32 %v320, 1.442695
      %v322 = vpow.pop %v321
      %v323 = vsel %vm316, %v322, 0.0
      %324 = vadd.xlane.f32.xlu0 %v323
      %v325 = vpop.xlane.xlu0 %324
      %v326 = vrcp.pop %v325
      %v327 = vmul.f32 %v322, %v326
      %v328 = vpack.c.bf16 %v327, %v327
      %v330 = vsel %vm316, %v328, 0
      %vm332 = vcmask 1041408
      %vm333 = vcmask 1042432
      %v334 = vsel %vm332, 4294967295, 65535
      %v335 = vsel %vm333, %v334, 0
      %v337 = vand.u32 %v267, %v335
      %339 = vmatprep.subr.bf16.mxu0 0
      %340 = vmatpush1.bf16.msra.mxu0 %v337
      %341 = vmatprep.subr.bf16.mxu0 0
      %342 = vmatpush1.bf16.msra.mxu0 0
      %343 = vmatprep.subr.bf16.mxu0 0
      %344 = vmatpush1.bf16.msra.mxu0 0
      %345 = vmatprep.subr.bf16.mxu0 0
      %346 = vmatpush1.bf16.msra.mxu0 0
      %347 = vmatprep.subr.bf16.mxu0 0
      %348 = vmatpush1.bf16.msra.mxu0 0
      %349 = vmatprep.subr.bf16.mxu0 0
      %350 = vmatpush1.bf16.msra.mxu0 0
      %351 = vmatprep.subr.bf16.mxu0 0
      %352 = vmatpush1.bf16.msra.mxu0 0
      %353 = vmatprep.subr.bf16.mxu0 0
      %354 = vmatpush1.bf16.msra.mxu0 0
      %355 = vmatprep.subr.bf16.mxu0 0
      %356 = vmatpush1.bf16.msra.mxu0 0
      %357 = vmatprep.subr.bf16.mxu0 0
      %358 = vmatpush1.bf16.msra.mxu0 0
      %359 = vmatprep.subr.bf16.mxu0 0
      %360 = vmatpush1.bf16.msra.mxu0 0
      %361 = vmatprep.subr.bf16.mxu0 0
      %362 = vmatpush1.bf16.msra.mxu0 0
      %363 = vmatprep.subr.bf16.mxu0 0
      %364 = vmatpush1.bf16.msra.mxu0 0
      %365 = vmatprep.subr.bf16.mxu0 0
      %366 = vmatpush1.bf16.msra.mxu0 0
      %367 = vmatprep.subr.bf16.mxu0 0
      %368 = vmatpush1.bf16.msra.mxu0 0
      %369 = vmatprep.subr.bf16.mxu0 0
      %370 = vmatpush1.bf16.msra.mxu0 0
      %371 = vmatprep.mubr.bf16.mxu0 0
      %372 = vmatmul.mubr.bf16.gmra.mrb[0].mxu0 %v330
      %v373 = vpop.f32.mrb[0].mxu0
      %v374 = vadd.f32 0.0, %v373
      %v375 = vpop.f32.mrb[0].mxu0
      %v376 = vpop.f32.mrb[0].mxu0
      %v377 = vpop.f32.mrb[0].mxu0
      %378 = vdwg.mxu0
      %v379 = vpack.c.bf16 %v374, %v374
      %vm380 = vcmask 519168
      %381 = vst.msk [vmem:[%s263] sm:$0xf] %vm380, %v379
      %p382 = scmp.lt.s32.totalorder %s18, 1
      %s383 = scalar_select %p382, %s18, 1
      %p384 = scmp.lt.s32.totalorder %s19, 1
      %s385 = scalar_select %p384, %s19, 1
      %s386 = smul.addr %s383, 2
      %s387 = sadd.s32 %s385, %s386
      %s388 = smul.addr %s387, 4
      %s389 = scalar_lea.vmem %s3, %s388
      // Predicated region
      $region33: #{_lambda_.48} parent=31 // pred_check
        %p390 = pneg %p130
      $region34: #{_lambda_.48} parent=31 // pred_check_branch
        %392 = sbr.rel (%p390) target = $region36
      $region35: #{_lambda_.48} parent=31 // pred_region
        _
      $region36: #{_lambda_.48} parent=31 // pred_fallthru
        _
    $region32: #{_lambda_.48} parent=5 // pred_fallthru
      _
    %p393 = scmp.le.s32.totalorder 2, %s9
    // Predicated region
    $region37: #{_lambda_.48} parent=5 // pred_check
      %p394 = pneg %p393
    $region38: #{_lambda_.48} parent=5 // pred_check_branch
      %396 = sbr.rel (%p394) target = $region40
    $region39: #{_lambda_.48} parent=5 // pred_region
      %s397 = ssub.s32 %s9, 2
      // Predicated region
      $region41: #{_lambda_.48} parent=39 // pred_check
        %p398 = pneg %p136
      $region42: #{_lambda_.48} parent=39 // pred_check_branch
        %400 = sbr.rel (%p398) target = $region44
      $region43: #{_lambda_.48} parent=39 // pred_region
        %p401 = scmp.lt.s32.totalorder %s20, 1
        %s402 = scalar_select %p401, %s20, 1
        %p403 = scmp.lt.s32.totalorder %s21, 1
        %s404 = scalar_select %p403, %s21, 1
        %s405 = smul.addr %s402, 2
        %s406 = sadd.s32 %s404, %s405
        %s407 = smul.addr %s406, 4
        %s408 = scalar_lea.vmem %s3, %s407
      $region44: #{_lambda_.48} parent=39 // pred_fallthru
        _
    $region40: #{_lambda_.48} parent=5 // pred_fallthru
      _
  $region6: #{_lambda_.48} parent=0 // loop_footer
    %s13 = sadd.s32 1, %s9
  $region7: #{_lambda_.48} parent=0 // loop_footer_branch
    %8 = sbr.rel target = $region3
  $region8: #{_lambda_.48} parent=0 // loop_exit
    _

// kernel: _lambda_.50
$region0: #{_lambda_.50}
  #allocation0 [shape = 'u32[]', space=smem, size = 0x4, offset = 0x4, fixed_abs, tag = 'smem constant byte address 0x4 - core index']
  #allocation1 [shape = 'u32[144,128]{1,0:T(1,128)}', space=vmem, size = 0x12000, scoped, tag = 'internal scratch']
  #allocation2 [shape = 'bf16[16,128]{1,0:T(16,128)(2,1)}', space=vmem, size = 0x1000, scoped, tag = 'scratch operand']
  %s0 = inlined_call_operand.vmem [shape: bf16[16,128], index: 0, kind: input, shape index: {}]
  %s1 = inlined_call_operand.vmem [shape: f32[1,128], index: 1, kind: input, shape index: {}]
  %s2 = inlined_call_operand.vmem [shape: f32[1,128], index: 2, kind: input, shape index: {}]
  %s3 = inlined_call_operand.vmem [shape: bf16[128,512], index: 3, kind: input, shape index: {}]
  %s4 = inlined_call_operand.vmem [shape: f32[1,512], index: 4, kind: input, shape index: {}]
  %s5 = inlined_call_operand.vmem [shape: bf16[16,512], index: 5, kind: output, shape index: {}]
  %s6 = sld [smem:[#allocation0]]
  $region34: #{_lambda_.50} parent=0
    _
  %s8 = ssub.s32 1, %s6
  %s9 = scalar_select 0, %s8, %s6
  // Predicated region
  $region2: #{_lambda_.50} parent=0 // pred_check
    _
  $region3: #{_lambda_.50} parent=0 // pred_check_branch
    %11 = sbr.rel (0) target = $region5
  $region4: #{_lambda_.50} parent=0 // pred_region
    _
  $region5: #{_lambda_.50} parent=0 // pred_fallthru
    _
  // Predicated region
  $region6: #{_lambda_.50} parent=0 // pred_check
    _
  $region7: #{_lambda_.50} parent=0 // pred_check_branch
    %13 = sbr.rel (0) target = $region9
  $region8: #{_lambda_.50} parent=0 // pred_region
    _
  $region9: #{_lambda_.50} parent=0 // pred_fallthru
    _
  // Predicated region
  $region10: #{_lambda_.50} parent=0 // pred_check
    _
  $region11: #{_lambda_.50} parent=0 // pred_check_branch
    %15 = sbr.rel (0) target = $region13
  $region12: #{_lambda_.50} parent=0 // pred_region
    _
  $region13: #{_lambda_.50} parent=0 // pred_fallthru
    _
  // Predicated region
  $region14: #{_lambda_.50} parent=0 // pred_check
    _
  $region15: #{_lambda_.50} parent=0 // pred_check_branch
    %17 = sbr.rel (0) target = $region17
  $region16: #{_lambda_.50} parent=0 // pred_region
    _
  $region17: #{_lambda_.50} parent=0 // pred_fallthru
    _
  // Predicated region
  $region18: #{_lambda_.50} parent=0 // pred_check
    _
  $region19: #{_lambda_.50} parent=0 // pred_check_branch
    %19 = sbr.rel (0) target = $region21
  $region20: #{_lambda_.50} parent=0 // pred_region
    _
  $region21: #{_lambda_.50} parent=0 // pred_fallthru
    _
  %p21 = scmp.eq.s32.totalorder 0, 0
  // Predicated region
  $region22: #{_lambda_.50} parent=0 // pred_check
    %p22 = pneg %p21
  $region23: #{_lambda_.50} parent=0 // pred_check_branch
    %24 = sbr.rel (%p22) target = $region25
  $region24: #{_lambda_.50} parent=0 // pred_region
    %v25 = vld [vmem:[%s0] sm:$0xf]
    %v26 = vld [vmem:[%s0 + $0x4] sm:$0xf]
    %v27 = vunpack.c.l.bf16 %v25
    %v28 = vunpack.c.l.bf16 %v26
    %29 = vadd.xlane.f32.xlu0 %v27
    %v30 = vpop.xlane.xlu0 %29
    %31 = vadd.xlane.f32.xlu0 %v28
    %v32 = vpop.xlane.xlu0 %31
    %v33 = vrcp.pop 128.0
    %v34 = vmul.f32 %v30, %v33
    %v35 = vmul.f32 %v32, %v33
    %v36 = vsub.f32 %v27, %v34
    %v37 = vsub.f32 %v28, %v35
    %v38 = vmul.f32 %v36, %v36
    %v39 = vmul.f32 %v37, %v37
    %40 = vadd.xlane.f32.xlu0 %v38
    %v41 = vpop.xlane.xlu0 %40
    %42 = vadd.xlane.f32.xlu0 %v39
    %v43 = vpop.xlane.xlu0 %42
    %v44 = vmul.f32 %v41, %v33
    %v45 = vmul.f32 %v43, %v33
    %v46 = vadd.f32 %v44, 1e-05
    %v47 = vadd.f32 %v45, 1e-05
    %v48 = vrsqrt.pop %v46
    %v49 = vrsqrt.pop %v47
    %v50 = vmul.f32 %v36, %v48
    %v51 = vmul.f32 %v37, %v49
    %v52 = vld [vmem:[%s1] sm:$0x1]
    %v54 = vlaneseq
    %v55 = vshrl.u32 %v54, 7
    %v56 = vsub.s32 0, %v55
    %v57 = vrot.slane %v52, %v56
    %v59 = vmul.f32 %v50, %v57
    %v60 = vmul.f32 %v51, %v57
    %v61 = vld [vmem:[%s2] sm:$0x1]
    %v63 = vlaneseq
    %v64 = vshrl.u32 %v63, 7
    %v65 = vsub.s32 0, %v64
    %v66 = vrot.slane %v61, %v65
    %v68 = vadd.f32 %v59, %v66
    %v69 = vadd.f32 %v60, %v66
    %v70 = vpack.c.bf16 %v69, %v68
    %71 = vst [vmem:[#allocation2] sm:$0xff] %v70
  $region25: #{_lambda_.50} parent=0 // pred_fallthru
    _
  %v72 = vld [vmem:[#allocation2] sm:$0xff]
  %v73 = vld [vmem:[%s3] sm:$0xff]
  %v74 = vld [vmem:[%s3 + $0x8] sm:$0xff]
  %v75 = vld [vmem:[%s3 + $0x10] sm:$0xff]
  %v76 = vld [vmem:[%s3 + $0x18] sm:$0xff]
  %v77 = vld [vmem:[%s3 + $0x20] sm:$0xff]
  %v78 = vld [vmem:[%s3 + $0x28] sm:$0xff]
  %v79 = vld [vmem:[%s3 + $0x30] sm:$0xff]
  %v80 = vld [vmem:[%s3 + $0x38] sm:$0xff]
  %v81 = vld [vmem:[%s3 + $0x40] sm:$0xff]
  %v82 = vld [vmem:[%s3 + $0x48] sm:$0xff]
  %v83 = vld [vmem:[%s3 + $0x50] sm:$0xff]
  %v84 = vld [vmem:[%s3 + $0x58] sm:$0xff]
  %v85 = vld [vmem:[%s3 + $0x60] sm:$0xff]
  %v86 = vld [vmem:[%s3 + $0x68] sm:$0xff]
  %v87 = vld [vmem:[%s3 + $0x70] sm:$0xff]
  %v88 = vld [vmem:[%s3 + $0x78] sm:$0xff]
  %v89 = vld [vmem:[%s3 + $0x80] sm:$0xff]
  %v90 = vld [vmem:[%s3 + $0x88] sm:$0xff]
  %v91 = vld [vmem:[%s3 + $0x90] sm:$0xff]
  %v92 = vld [vmem:[%s3 + $0x98] sm:$0xff]
  %v93 = vld [vmem:[%s3 + $0xa0] sm:$0xff]
  %v94 = vld [vmem:[%s3 + $0xa8] sm:$0xff]
  %v95 = vld [vmem:[%s3 + $0xb0] sm:$0xff]
  %v96 = vld [vmem:[%s3 + $0xb8] sm:$0xff]
  %v97 = vld [vmem:[%s3 + $0xc0] sm:$0xff]
  %v98 = vld [vmem:[%s3 + $0xc8] sm:$0xff]
  %v99 = vld [vmem:[%s3 + $0xd0] sm:$0xff]
  %v100 = vld [vmem:[%s3 + $0xd8] sm:$0xff]
  %v101 = vld [vmem:[%s3 + $0xe0] sm:$0xff]
  %v102 = vld [vmem:[%s3 + $0xe8] sm:$0xff]
  %v103 = vld [vmem:[%s3 + $0xf0] sm:$0xff]
  %v104 = vld [vmem:[%s3 + $0xf8] sm:$0xff]
  %v105 = vld [vmem:[%s4] sm:$0xf]
  %v107 = vlaneseq
  %v108 = vshrl.u32 %v107, 7
  %v109 = vsub.s32 0, %v108
  %v110 = vrot.slane %v105, %v109
  %v111 = vlaneseq
  %v112 = vshrl.u32 %v111, 7
  %v113 = vsub.s32 1, %v112
  %v114 = vrot.slane %v105, %v113
  %v115 = vlaneseq
  %v116 = vshrl.u32 %v115, 7
  %v117 = vsub.s32 2, %v116
  %v118 = vrot.slane %v105, %v117
  %v119 = vlaneseq
  %v120 = vshrl.u32 %v119, 7
  %v121 = vsub.s32 3, %v120
  %v122 = vrot.slane %v105, %v121
  %v159 = vunpack.c.l.b16 %v73
  %v160 = vunpack.c.h.b16 %v73
  %v161 = vunpack.c.l.b16 %v74
  %v162 = vunpack.c.h.b16 %v74
  %v163 = vunpack.c.l.b16 %v75
  %v164 = vunpack.c.h.b16 %v75
  %v165 = vunpack.c.l.b16 %v76
  %v166 = vunpack.c.h.b16 %v76
  %v167 = vunpack.c.l.b16 %v77
  %v168 = vunpack.c.h.b16 %v77
  %v169 = vunpack.c.l.b16 %v78
  %v170 = vunpack.c.h.b16 %v78
  %v171 = vunpack.c.l.b16 %v79
  %v172 = vunpack.c.h.b16 %v79
  %v173 = vunpack.c.l.b16 %v80
  %v174 = vunpack.c.h.b16 %v80
  %v175 = vunpack.c.l.b16 %v81
  %v176 = vunpack.c.h.b16 %v81
  %v177 = vunpack.c.l.b16 %v82
  %v178 = vunpack.c.h.b16 %v82
  %v179 = vunpack.c.l.b16 %v83
  %v180 = vunpack.c.h.b16 %v83
  %v181 = vunpack.c.l.b16 %v84
  %v182 = vunpack.c.h.b16 %v84
  %v183 = vunpack.c.l.b16 %v85
  %v184 = vunpack.c.h.b16 %v85
  %v185 = vunpack.c.l.b16 %v86
  %v186 = vunpack.c.h.b16 %v86
  %v187 = vunpack.c.l.b16 %v87
  %v188 = vunpack.c.h.b16 %v87
  %v189 = vunpack.c.l.b16 %v88
  %v190 = vunpack.c.h.b16 %v88
  %v191 = vunpack.c.l.b16 %v89
  %v192 = vunpack.c.h.b16 %v89
  %v193 = vunpack.c.l.b16 %v90
  %v194 = vunpack.c.h.b16 %v90
  %v195 = vunpack.c.l.b16 %v91
  %v196 = vunpack.c.h.b16 %v91
  %v197 = vunpack.c.l.b16 %v92
  %v198 = vunpack.c.h.b16 %v92
  %v199 = vunpack.c.l.b16 %v93
  %v200 = vunpack.c.h.b16 %v93
  %v201 = vunpack.c.l.b16 %v94
  %v202 = vunpack.c.h.b16 %v94
  %v203 = vunpack.c.l.b16 %v95
  %v204 = vunpack.c.h.b16 %v95
  %v205 = vunpack.c.l.b16 %v96
  %v206 = vunpack.c.h.b16 %v96
  %v207 = vunpack.c.l.b16 %v97
  %v208 = vunpack.c.h.b16 %v97
  %v209 = vunpack.c.l.b16 %v98
  %v210 = vunpack.c.h.b16 %v98
  %v211 = vunpack.c.l.b16 %v99
  %v212 = vunpack.c.h.b16 %v99
  %v213 = vunpack.c.l.b16 %v100
  %v214 = vunpack.c.h.b16 %v100
  %v215 = vunpack.c.l.b16 %v101
  %v216 = vunpack.c.h.b16 %v101
  %v217 = vunpack.c.l.b16 %v102
  %v218 = vunpack.c.h.b16 %v102
  %v219 = vunpack.c.l.b16 %v103
  %v220 = vunpack.c.h.b16 %v103
  %v221 = vunpack.c.l.b16 %v104
  %v222 = vunpack.c.h.b16 %v104
  %v223 = vpack.c.b16 %v163, %v159
  %v224 = vpack.c.b16 %v164, %v160
  %v225 = vpack.c.b16 %v165, %v161
  %v226 = vpack.c.b16 %v166, %v162
  %v227 = vpack.c.b16 %v171, %v167
  %v228 = vpack.c.b16 %v172, %v168
  %v229 = vpack.c.b16 %v173, %v169
  %v230 = vpack.c.b16 %v174, %v170
  %v231 = vpack.c.b16 %v179, %v175
  %v232 = vpack.c.b16 %v180, %v176
  %v233 = vpack.c.b16 %v181, %v177
  %v234 = vpack.c.b16 %v182, %v178
  %v235 = vpack.c.b16 %v187, %v183
  %v236 = vpack.c.b16 %v188, %v184
  %v237 = vpack.c.b16 %v189, %v185
  %v238 = vpack.c.b16 %v190, %v186
  %v239 = vpack.c.b16 %v195, %v191
  %v240 = vpack.c.b16 %v196, %v192
  %v241 = vpack.c.b16 %v197, %v193
  %v242 = vpack.c.b16 %v198, %v194
  %v243 = vpack.c.b16 %v203, %v199
  %v244 = vpack.c.b16 %v204, %v200
  %v245 = vpack.c.b16 %v205, %v201
  %v246 = vpack.c.b16 %v206, %v202
  %v247 = vpack.c.b16 %v211, %v207
  %v248 = vpack.c.b16 %v212, %v208
  %v249 = vpack.c.b16 %v213, %v209
  %v250 = vpack.c.b16 %v214, %v210
  %v251 = vpack.c.b16 %v219, %v215
  %v252 = vpack.c.b16 %v220, %v216
  %v253 = vpack.c.b16 %v221, %v217
  %v254 = vpack.c.b16 %v222, %v218
  %287 = vmatprep.subr.bf16.mxu0 %v224
  %288 = vmatpush1.bf16.msra.mxu0 %v223
  %289 = vmatprep.subr.bf16.mxu0 %v228
  %290 = vmatpush1.bf16.msra.mxu0 %v227
  %291 = vmatprep.subr.bf16.mxu0 %v232
  %292 = vmatpush1.bf16.msra.mxu0 %v231
  %293 = vmatprep.subr.bf16.mxu0 %v236
  %294 = vmatpush1.bf16.msra.mxu0 %v235
  %295 = vmatprep.subr.bf16.mxu0 %v240
  %296 = vmatpush1.bf16.msra.mxu0 %v239
  %297 = vmatprep.subr.bf16.mxu0 %v244
  %298 = vmatpush1.bf16.msra.mxu0 %v243
  %299 = vmatprep.subr.bf16.mxu0 %v248
  %300 = vmatpush1.bf16.msra.mxu0 %v247
  %301 = vmatprep.subr.bf16.mxu0 %v252
  %302 = vmatpush1.bf16.msra.mxu0 %v251
  %303 = vmatprep.subr.bf16.mxu0 0
  %304 = vmatpush1.bf16.msra.mxu0 0
  %305 = vmatprep.subr.bf16.mxu0 0
  %306 = vmatpush1.bf16.msra.mxu0 0
  %307 = vmatprep.subr.bf16.mxu0 0
  %308 = vmatpush1.bf16.msra.mxu0 0
  %309 = vmatprep.subr.bf16.mxu0 0
  %310 = vmatpush1.bf16.msra.mxu0 0
  %311 = vmatprep.subr.bf16.mxu0 0
  %312 = vmatpush1.bf16.msra.mxu0 0
  %313 = vmatprep.subr.bf16.mxu0 0
  %314 = vmatpush1.bf16.msra.mxu0 0
  %315 = vmatprep.subr.bf16.mxu0 0
  %316 = vmatpush1.bf16.msra.mxu0 0
  %317 = vmatprep.subr.bf16.mxu0 0
  %318 = vmatpush1.bf16.msra.mxu0 0
  %319 = vmatprep.mubr.bf16.mxu0 0
  %320 = vmatmul.mubr.bf16.gmra.mrb[0].mxu0 %v72
  %v321 = vpop.f32.mrb[0].mxu0
  %v322 = vadd.f32 %v110, %v321
  %v323 = vpop.f32.mrb[0].mxu0
  %v324 = vadd.f32 %v114, %v323
  %v325 = vpop.f32.mrb[0].mxu0
  %v326 = vadd.f32 %v110, %v325
  %v327 = vpop.f32.mrb[0].mxu0
  %v328 = vadd.f32 %v114, %v327
  %329 = vdwg.mxu0
  %330 = vmatprep.subr.bf16.mxu0 %v226
  %331 = vmatpush1.bf16.msra.mxu0 %v225
  %332 = vmatprep.subr.bf16.mxu0 %v230
  %333 = vmatpush1.bf16.msra.mxu0 %v229
  %334 = vmatprep.subr.bf16.mxu0 %v234
  %335 = vmatpush1.bf16.msra.mxu0 %v233
  %336 = vmatprep.subr.bf16.mxu0 %v238
  %337 = vmatpush1.bf16.msra.mxu0 %v237
  %338 = vmatprep.subr.bf16.mxu0 %v242
  %339 = vmatpush1.bf16.msra.mxu0 %v241
  %340 = vmatprep.subr.bf16.mxu0 %v246
  %341 = vmatpush1.bf16.msra.mxu0 %v245
  %342 = vmatprep.subr.bf16.mxu0 %v250
  %343 = vmatpush1.bf16.msra.mxu0 %v249
  %344 = vmatprep.subr.bf16.mxu0 %v254
  %345 = vmatpush1.bf16.msra.mxu0 %v253
  %346 = vmatprep.subr.bf16.mxu0 0
  %347 = vmatpush1.bf16.msra.mxu0 0
  %348 = vmatprep.subr.bf16.mxu0 0
  %349 = vmatpush1.bf16.msra.mxu0 0
  %350 = vmatprep.subr.bf16.mxu0 0
  %351 = vmatpush1.bf16.msra.mxu0 0
  %352 = vmatprep.subr.bf16.mxu0 0
  %353 = vmatpush1.bf16.msra.mxu0 0
  %354 = vmatprep.subr.bf16.mxu0 0
  %355 = vmatpush1.bf16.msra.mxu0 0
  %356 = vmatprep.subr.bf16.mxu0 0
  %357 = vmatpush1.bf16.msra.mxu0 0
  %358 = vmatprep.subr.bf16.mxu0 0
  %359 = vmatpush1.bf16.msra.mxu0 0
  %360 = vmatprep.subr.bf16.mxu0 0
  %361 = vmatpush1.bf16.msra.mxu0 0
  %362 = vmatprep.mubr.bf16.mxu0 0
  %363 = vmatmul.mubr.bf16.gmra.mrb[0].mxu0 %v72
  %v364 = vpop.f32.mrb[0].mxu0
  %v365 = vadd.f32 %v118, %v364
  %v366 = vpop.f32.mrb[0].mxu0
  %v367 = vadd.f32 %v122, %v366
  %v368 = vpop.f32.mrb[0].mxu0
  %v369 = vadd.f32 %v118, %v368
  %v370 = vpop.f32.mrb[0].mxu0
  %v371 = vadd.f32 %v122, %v370
  %372 = vdwg.mxu0
  %v373 = vmul.f32 %v322, %v322
  %v374 = vmul.f32 %v324, %v324
  %v375 = vmul.f32 %v365, %v365
  %v376 = vmul.f32 %v367, %v367
  %v377 = vmul.f32 %v326, %v326
  %v378 = vmul.f32 %v328, %v328
  %v379 = vmul.f32 %v369, %v369
  %v380 = vmul.f32 %v371, %v371
  %v381 = vmul.f32 %v322, %v373
  %v382 = vmul.f32 %v324, %v374
  %v383 = vmul.f32 %v365, %v375
  %v384 = vmul.f32 %v367, %v376
  %v385 = vmul.f32 %v326, %v377
  %v386 = vmul.f32 %v328, %v378
  %v387 = vmul.f32 %v369, %v379
  %v388 = vmul.f32 %v371, %v380
  %v389 = vmul.f32 %v381, 0.044715
  %v390 = vmul.f32 %v382, 0.044715
  %v391 = vmul.f32 %v383, 0.044715
  %v392 = vmul.f32 %v384, 0.044715
  %v393 = vmul.f32 %v385, 0.044715
  %v394 = vmul.f32 %v386, 0.044715
  %v395 = vmul.f32 %v387, 0.044715
  %v396 = vmul.f32 %v388, 0.044715
  %v397 = vadd.f32 %v322, %v389
  %v398 = vadd.f32 %v324, %v390
  %v399 = vadd.f32 %v365, %v391
  %v400 = vadd.f32 %v367, %v392
  %v401 = vadd.f32 %v326, %v393
  %v402 = vadd.f32 %v328, %v394
  %v403 = vadd.f32 %v369, %v395
  %v404 = vadd.f32 %v371, %v396
  %v405 = vmul.f32 %v397, 0.7978846
  %v406 = vmul.f32 %v398, 0.7978846
  %v407 = vmul.f32 %v399, 0.7978846
  %v408 = vmul.f32 %v400, 0.7978846
  %v409 = vmul.f32 %v401, 0.7978846
  %v410 = vmul.f32 %v402, 0.7978846
  %v411 = vmul.f32 %v403, 0.7978846
  %v412 = vmul.f32 %v404, 0.7978846
  %v413 = vtanh.pop %v405
  %v414 = vtanh.pop %v406
  %v415 = vtanh.pop %v407
  %v416 = vtanh.pop %v408
  %v417 = vtanh.pop %v409
  %v418 = vtanh.pop %v410
  %v419 = vtanh.pop %v411
  %v420 = vtanh.pop %v412
  %v421 = vadd.f32 %v413, 1.0
  %v422 = vadd.f32 %v414, 1.0
  %v423 = vadd.f32 %v415, 1.0
  %v424 = vadd.f32 %v416, 1.0
  %v425 = vadd.f32 %v417, 1.0
  %v426 = vadd.f32 %v418, 1.0
  %v427 = vadd.f32 %v419, 1.0
  %v428 = vadd.f32 %v420, 1.0
  %v429 = vmul.f32 %v421, 0.5
  %v430 = vmul.f32 %v422, 0.5
  %v431 = vmul.f32 %v423, 0.5
  %v432 = vmul.f32 %v424, 0.5
  %v433 = vmul.f32 %v425, 0.5
  %v434 = vmul.f32 %v426, 0.5
  %v435 = vmul.f32 %v427, 0.5
  %v436 = vmul.f32 %v428, 0.5
  %v437 = vmul.f32 %v322, %v429
  %v438 = vmul.f32 %v324, %v430
  %v439 = vmul.f32 %v365, %v431
  %v440 = vmul.f32 %v367, %v432
  %v441 = vmul.f32 %v326, %v433
  %v442 = vmul.f32 %v328, %v434
  %v443 = vmul.f32 %v369, %v435
  %v444 = vmul.f32 %v371, %v436
  %v445 = vpack.c.bf16 %v441, %v437
  %v446 = vpack.c.bf16 %v442, %v438
  %v447 = vpack.c.bf16 %v443, %v439
  %v448 = vpack.c.bf16 %v444, %v440
  %v453 = vunpack.c.l.b16 %v445
  %v454 = vunpack.c.l.b16 %v446
  %v455 = vunpack.c.l.b16 %v447
  %v456 = vunpack.c.l.b16 %v448
  %v457 = vunpack.c.h.b16 %v445
  %v458 = vunpack.c.h.b16 %v446
  %v459 = vunpack.c.h.b16 %v447
  %v460 = vunpack.c.h.b16 %v448
  %v461 = vpack.c.b16 %v454, %v453
  %v462 = vpack.c.b16 %v456, %v455
  %v463 = vpack.c.b16 %v458, %v457
  %v464 = vpack.c.b16 %v460, %v459
  %469 = vst [vmem:[%s5] sm:$0xff] %v461
  %470 = vst [vmem:[%s5 + $0x8] sm:$0xff] %v462
  %471 = vst [vmem:[%s5 + $0x10] sm:$0xff] %v463
  %472 = vst [vmem:[%s5 + $0x18] sm:$0xff] %v464
  // Predicated region
  $region26: #{_lambda_.50} parent=0 // pred_check
    _
  $region27: #{_lambda_.50} parent=0 // pred_check_branch
    %474 = sbr.rel (0) target = $region29
  $region28: #{_lambda_.50} parent=0 // pred_region
    _
  $region29: #{_lambda_.50} parent=0 // pred_fallthru
    _
  // Predicated region
  $region30: #{_lambda_.50} parent=0 // pred_check
    _
  $region31: #{_lambda_.50} parent=0 // pred_check_branch
    %476 = sbr.rel (0) target = $region33
  $region32: #{_lambda_.50} parent=0 // pred_region
    _
  $region33: #{_lambda_.50} parent=0 // pred_fallthru
    _

// kernel: _lambda_.51
$region0: #{_lambda_.51}
  #allocation0 [shape = 'u32[]', space=smem, size = 0x4, offset = 0x4, fixed_abs, tag = 'smem constant byte address 0x4 - core index']
  #allocation1 [shape = 'u32[144,128]{1,0:T(1,128)}', space=vmem, size = 0x12000, scoped, tag = 'internal scratch']
  #allocation2 [shape = 'f32[16,128]{1,0:T(8,128)}', space=vmem, size = 0x2000, scoped, tag = 'scratch operand']
  %s0 = inlined_call_operand.vmem [shape: bf16[16,512], index: 0, kind: input, shape index: {}]
  %s1 = inlined_call_operand.vmem [shape: bf16[512,128], index: 1, kind: input, shape index: {}]
  %s2 = inlined_call_operand.vmem [shape: f32[1,128], index: 2, kind: input, shape index: {}]
  %s3 = inlined_call_operand.vmem [shape: bf16[16,128], index: 3, kind: input, shape index: {}]
  %s4 = inlined_call_operand.vmem [shape: bf16[16,128], index: 4, kind: output, shape index: {}]
  %s5 = sld [smem:[#allocation0]]
  $region34: #{_lambda_.51} parent=0
    _
  %s7 = ssub.s32 1, %s5
  %s8 = scalar_select 0, %s7, %s5
  // Predicated region
  $region2: #{_lambda_.51} parent=0 // pred_check
    _
  $region3: #{_lambda_.51} parent=0 // pred_check_branch
    %10 = sbr.rel (0) target = $region5
  $region4: #{_lambda_.51} parent=0 // pred_region
    _
  $region5: #{_lambda_.51} parent=0 // pred_fallthru
    _
  // Predicated region
  $region6: #{_lambda_.51} parent=0 // pred_check
    _
  $region7: #{_lambda_.51} parent=0 // pred_check_branch
    %12 = sbr.rel (0) target = $region9
  $region8: #{_lambda_.51} parent=0 // pred_region
    _
  $region9: #{_lambda_.51} parent=0 // pred_fallthru
    _
  // Predicated region
  $region10: #{_lambda_.51} parent=0 // pred_check
    _
  $region11: #{_lambda_.51} parent=0 // pred_check_branch
    %14 = sbr.rel (0) target = $region13
  $region12: #{_lambda_.51} parent=0 // pred_region
    _
  $region13: #{_lambda_.51} parent=0 // pred_fallthru
    _
  // Predicated region
  $region14: #{_lambda_.51} parent=0 // pred_check
    _
  $region15: #{_lambda_.51} parent=0 // pred_check_branch
    %16 = sbr.rel (0) target = $region17
  $region16: #{_lambda_.51} parent=0 // pred_region
    _
  $region17: #{_lambda_.51} parent=0 // pred_fallthru
    _
  %p18 = scmp.eq.s32.totalorder 0, 0
  // Predicated region
  $region18: #{_lambda_.51} parent=0 // pred_check
    %p19 = pneg %p18
  $region19: #{_lambda_.51} parent=0 // pred_check_branch
    %21 = sbr.rel (%p19) target = $region21
  $region20: #{_lambda_.51} parent=0 // pred_region
    %22 = vst [vmem:[#allocation2] sm:$0xff] 0.0
    %23 = vst [vmem:[#allocation2 + $0x8] sm:$0xff] 0.0
  $region21: #{_lambda_.51} parent=0 // pred_fallthru
    _
  %v24 = vld [vmem:[#allocation2] sm:$0xff]
  %v25 = vld [vmem:[#allocation2 + $0x8] sm:$0xff]
  %v26 = vld [vmem:[%s0] sm:$0xff]
  %v27 = vld [vmem:[%s0 + $0x8] sm:$0xff]
  %v28 = vld [vmem:[%s0 + $0x10] sm:$0xff]
  %v29 = vld [vmem:[%s0 + $0x18] sm:$0xff]
  %v30 = vld [vmem:[%s1] sm:$0xf]
  %v31 = vld [vmem:[%s1 + $0x4] sm:$0xf]
  %v32 = vld [vmem:[%s1 + $0x8] sm:$0xf]
  %v33 = vld [vmem:[%s1 + $0xc] sm:$0xf]
  %v34 = vld [vmem:[%s1 + $0x10] sm:$0xf]
  %v35 = vld [vmem:[%s1 + $0x14] sm:$0xf]
  %v36 = vld [vmem:[%s1 + $0x18] sm:$0xf]
  %v37 = vld [vmem:[%s1 + $0x1c] sm:$0xf]
  %v38 = vld [vmem:[%s1 + $0x20] sm:$0xf]
  %v39 = vld [vmem:[%s1 + $0x24] sm:$0xf]
  %v40 = vld [vmem:[%s1 + $0x28] sm:$0xf]
  %v41 = vld [vmem:[%s1 + $0x2c] sm:$0xf]
  %v42 = vld [vmem:[%s1 + $0x30] sm:$0xf]
  %v43 = vld [vmem:[%s1 + $0x34] sm:$0xf]
  %v44 = vld [vmem:[%s1 + $0x38] sm:$0xf]
  %v45 = vld [vmem:[%s1 + $0x3c] sm:$0xf]
  %v46 = vld [vmem:[%s1 + $0x40] sm:$0xf]
  %v47 = vld [vmem:[%s1 + $0x44] sm:$0xf]
  %v48 = vld [vmem:[%s1 + $0x48] sm:$0xf]
  %v49 = vld [vmem:[%s1 + $0x4c] sm:$0xf]
  %v50 = vld [vmem:[%s1 + $0x50] sm:$0xf]
  %v51 = vld [vmem:[%s1 + $0x54] sm:$0xf]
  %v52 = vld [vmem:[%s1 + $0x58] sm:$0xf]
  %v53 = vld [vmem:[%s1 + $0x5c] sm:$0xf]
  %v54 = vld [vmem:[%s1 + $0x60] sm:$0xf]
  %v55 = vld [vmem:[%s1 + $0x64] sm:$0xf]
  %v56 = vld [vmem:[%s1 + $0x68] sm:$0xf]
  %v57 = vld [vmem:[%s1 + $0x6c] sm:$0xf]
  %v58 = vld [vmem:[%s1 + $0x70] sm:$0xf]
  %v59 = vld [vmem:[%s1 + $0x74] sm:$0xf]
  %v60 = vld [vmem:[%s1 + $0x78] sm:$0xf]
  %v61 = vld [vmem:[%s1 + $0x7c] sm:$0xf]
  %v62 = vld [vmem:[%s1 + $0x80] sm:$0xf]
  %v63 = vld [vmem:[%s1 + $0x84] sm:$0xf]
  %v64 = vld [vmem:[%s1 + $0x88] sm:$0xf]
  %v65 = vld [vmem:[%s1 + $0x8c] sm:$0xf]
  %v66 = vld [vmem:[%s1 + $0x90] sm:$0xf]
  %v67 = vld [vmem:[%s1 + $0x94] sm:$0xf]
  %v68 = vld [vmem:[%s1 + $0x98] sm:$0xf]
  %v69 = vld [vmem:[%s1 + $0x9c] sm:$0xf]
  %v70 = vld [vmem:[%s1 + $0xa0] sm:$0xf]
  %v71 = vld [vmem:[%s1 + $0xa4] sm:$0xf]
  %v72 = vld [vmem:[%s1 + $0xa8] sm:$0xf]
  %v73 = vld [vmem:[%s1 + $0xac] sm:$0xf]
  %v74 = vld [vmem:[%s1 + $0xb0] sm:$0xf]
  %v75 = vld [vmem:[%s1 + $0xb4] sm:$0xf]
  %v76 = vld [vmem:[%s1 + $0xb8] sm:$0xf]
  %v77 = vld [vmem:[%s1 + $0xbc] sm:$0xf]
  %v78 = vld [vmem:[%s1 + $0xc0] sm:$0xf]
  %v79 = vld [vmem:[%s1 + $0xc4] sm:$0xf]
  %v80 = vld [vmem:[%s1 + $0xc8] sm:$0xf]
  %v81 = vld [vmem:[%s1 + $0xcc] sm:$0xf]
  %v82 = vld [vmem:[%s1 + $0xd0] sm:$0xf]
  %v83 = vld [vmem:[%s1 + $0xd4] sm:$0xf]
  %v84 = vld [vmem:[%s1 + $0xd8] sm:$0xf]
  %v85 = vld [vmem:[%s1 + $0xdc] sm:$0xf]
  %v86 = vld [vmem:[%s1 + $0xe0] sm:$0xf]
  %v87 = vld [vmem:[%s1 + $0xe4] sm:$0xf]
  %v88 = vld [vmem:[%s1 + $0xe8] sm:$0xf]
  %v89 = vld [vmem:[%s1 + $0xec] sm:$0xf]
  %v90 = vld [vmem:[%s1 + $0xf0] sm:$0xf]
  %v91 = vld [vmem:[%s1 + $0xf4] sm:$0xf]
  %v92 = vld [vmem:[%s1 + $0xf8] sm:$0xf]
  %v93 = vld [vmem:[%s1 + $0xfc] sm:$0xf]
  %v98 = vunpack.c.l.b16 %v26
  %v99 = vunpack.c.h.b16 %v26
  %v100 = vunpack.c.l.b16 %v27
  %v101 = vunpack.c.h.b16 %v27
  %v102 = vunpack.c.l.b16 %v28
  %v103 = vunpack.c.h.b16 %v28
  %v104 = vunpack.c.l.b16 %v29
  %v105 = vunpack.c.h.b16 %v29
  %v106 = vpack.c.b16 %v102, %v98
  %v107 = vpack.c.b16 %v103, %v99
  %v108 = vpack.c.b16 %v104, %v100
  %v109 = vpack.c.b16 %v105, %v101
  %v178 = vunpack.c.l.b16 %v30
  %v179 = vunpack.c.l.b16 %v31
  %v180 = vunpack.c.l.b16 %v32
  %v181 = vunpack.c.l.b16 %v33
  %v182 = vunpack.c.l.b16 %v34
  %v183 = vunpack.c.l.b16 %v35
  %v184 = vunpack.c.l.b16 %v36
  %v185 = vunpack.c.l.b16 %v37
  %v186 = vunpack.c.l.b16 %v38
  %v187 = vunpack.c.l.b16 %v39
  %v188 = vunpack.c.l.b16 %v40
  %v189 = vunpack.c.l.b16 %v41
  %v190 = vunpack.c.l.b16 %v42
  %v191 = vunpack.c.l.b16 %v43
  %v192 = vunpack.c.l.b16 %v44
  %v193 = vunpack.c.l.b16 %v45
  %v194 = vunpack.c.l.b16 %v46
  %v195 = vunpack.c.l.b16 %v47
  %v196 = vunpack.c.l.b16 %v48
  %v197 = vunpack.c.l.b16 %v49
  %v198 = vunpack.c.l.b16 %v50
  %v199 = vunpack.c.l.b16 %v51
  %v200 = vunpack.c.l.b16 %v52
  %v201 = vunpack.c.l.b16 %v53
  %v202 = vunpack.c.l.b16 %v54
  %v203 = vunpack.c.l.b16 %v55
  %v204 = vunpack.c.l.b16 %v56
  %v205 = vunpack.c.l.b16 %v57
  %v206 = vunpack.c.l.b16 %v58
  %v207 = vunpack.c.l.b16 %v59
  %v208 = vunpack.c.l.b16 %v60
  %v209 = vunpack.c.l.b16 %v61
  %v210 = vunpack.c.l.b16 %v62
  %v211 = vunpack.c.l.b16 %v63
  %v212 = vunpack.c.l.b16 %v64
  %v213 = vunpack.c.l.b16 %v65
  %v214 = vunpack.c.l.b16 %v66
  %v215 = vunpack.c.l.b16 %v67
  %v216 = vunpack.c.l.b16 %v68
  %v217 = vunpack.c.l.b16 %v69
  %v218 = vunpack.c.l.b16 %v70
  %v219 = vunpack.c.l.b16 %v71
  %v220 = vunpack.c.l.b16 %v72
  %v221 = vunpack.c.l.b16 %v73
  %v222 = vunpack.c.l.b16 %v74
  %v223 = vunpack.c.l.b16 %v75
  %v224 = vunpack.c.l.b16 %v76
  %v225 = vunpack.c.l.b16 %v77
  %v226 = vunpack.c.l.b16 %v78
  %v227 = vunpack.c.l.b16 %v79
  %v228 = vunpack.c.l.b16 %v80
  %v229 = vunpack.c.l.b16 %v81
  %v230 = vunpack.c.l.b16 %v82
  %v231 = vunpack.c.l.b16 %v83
  %v232 = vunpack.c.l.b16 %v84
  %v233 = vunpack.c.l.b16 %v85
  %v234 = vunpack.c.l.b16 %v86
  %v235 = vunpack.c.l.b16 %v87
  %v236 = vunpack.c.l.b16 %v88
  %v237 = vunpack.c.l.b16 %v89
  %v238 = vunpack.c.l.b16 %v90
  %v239 = vunpack.c.l.b16 %v91
  %v240 = vunpack.c.l.b16 %v92
  %v241 = vunpack.c.l.b16 %v93
  %v242 = vpack.c.b16 %v179, %v178
  %v243 = vpack.c.b16 %v181, %v180
  %v244 = vpack.c.b16 %v183, %v182
  %v245 = vpack.c.b16 %v185, %v184
  %v246 = vpack.c.b16 %v187, %v186
  %v247 = vpack.c.b16 %v189, %v188
  %v248 = vpack.c.b16 %v191, %v190
  %v249 = vpack.c.b16 %v193, %v192
  %v250 = vpack.c.b16 %v195, %v194
  %v251 = vpack.c.b16 %v197, %v196
  %v252 = vpack.c.b16 %v199, %v198
  %v253 = vpack.c.b16 %v201, %v200
  %v254 = vpack.c.b16 %v203, %v202
  %v255 = vpack.c.b16 %v205, %v204
  %v256 = vpack.c.b16 %v207, %v206
  %v257 = vpack.c.b16 %v209, %v208
  %v258 = vpack.c.b16 %v211, %v210
  %v259 = vpack.c.b16 %v213, %v212
  %v260 = vpack.c.b16 %v215, %v214
  %v261 = vpack.c.b16 %v217, %v216
  %v262 = vpack.c.b16 %v219, %v218
  %v263 = vpack.c.b16 %v221, %v220
  %v264 = vpack.c.b16 %v223, %v222
  %v265 = vpack.c.b16 %v225, %v224
  %v266 = vpack.c.b16 %v227, %v226
  %v267 = vpack.c.b16 %v229, %v228
  %v268 = vpack.c.b16 %v231, %v230
  %v269 = vpack.c.b16 %v233, %v232
  %v270 = vpack.c.b16 %v235, %v234
  %v271 = vpack.c.b16 %v237, %v236
  %v272 = vpack.c.b16 %v239, %v238
  %v273 = vpack.c.b16 %v241, %v240
  %306 = vmatprep.subr.bf16.mxu0 0
  %307 = vmatpush1.bf16.msra.mxu0 %v242
  %308 = vmatprep.subr.bf16.mxu0 0
  %309 = vmatpush1.bf16.msra.mxu0 %v243
  %310 = vmatprep.subr.bf16.mxu0 0
  %311 = vmatpush1.bf16.msra.mxu0 %v244
  %312 = vmatprep.subr.bf16.mxu0 0
  %313 = vmatpush1.bf16.msra.mxu0 %v245
  %314 = vmatprep.subr.bf16.mxu0 0
  %315 = vmatpush1.bf16.msra.mxu0 %v246
  %316 = vmatprep.subr.bf16.mxu0 0
  %317 = vmatpush1.bf16.msra.mxu0 %v247
  %318 = vmatprep.subr.bf16.mxu0 0
  %319 = vmatpush1.bf16.msra.mxu0 %v248
  %320 = vmatprep.subr.bf16.mxu0 0
  %321 = vmatpush1.bf16.msra.mxu0 %v249
  %322 = vmatprep.subr.bf16.mxu0 0
  %323 = vmatpush1.bf16.msra.mxu0 %v250
  %324 = vmatprep.subr.bf16.mxu0 0
  %325 = vmatpush1.bf16.msra.mxu0 %v251
  %326 = vmatprep.subr.bf16.mxu0 0
  %327 = vmatpush1.bf16.msra.mxu0 %v252
  %328 = vmatprep.subr.bf16.mxu0 0
  %329 = vmatpush1.bf16.msra.mxu0 %v253
  %330 = vmatprep.subr.bf16.mxu0 0
  %331 = vmatpush1.bf16.msra.mxu0 %v254
  %332 = vmatprep.subr.bf16.mxu0 0
  %333 = vmatpush1.bf16.msra.mxu0 %v255
  %334 = vmatprep.subr.bf16.mxu0 0
  %335 = vmatpush1.bf16.msra.mxu0 %v256
  %336 = vmatprep.subr.bf16.mxu0 0
  %337 = vmatpush1.bf16.msra.mxu0 %v257
  %338 = vmatprep.mubr.bf16.mxu0 %v107
  %339 = vmatmul.mubr.bf16.gmra.mrb[0].mxu0 %v106
  %v340 = vpop.f32.mrb[0].mxu0
  %v341 = vadd.f32 0.0, %v340
  %v342 = vpop.f32.mrb[0].mxu0
  %v343 = vpop.f32.mrb[0].mxu0
  %v344 = vadd.f32 0.0, %v343
  %v345 = vpop.f32.mrb[0].mxu0
  %346 = vdwg.mxu0
  %347 = vmatprep.subr.bf16.mxu0 0
  %348 = vmatpush1.bf16.msra.mxu0 %v258
  %349 = vmatprep.subr.bf16.mxu0 0
  %350 = vmatpush1.bf16.msra.mxu0 %v259
  %351 = vmatprep.subr.bf16.mxu0 0
  %352 = vmatpush1.bf16.msra.mxu0 %v260
  %353 = vmatprep.subr.bf16.mxu0 0
  %354 = vmatpush1.bf16.msra.mxu0 %v261
  %355 = vmatprep.subr.bf16.mxu0 0
  %356 = vmatpush1.bf16.msra.mxu0 %v262
  %357 = vmatprep.subr.bf16.mxu0 0
  %358 = vmatpush1.bf16.msra.mxu0 %v263
  %359 = vmatprep.subr.bf16.mxu0 0
  %360 = vmatpush1.bf16.msra.mxu0 %v264
  %361 = vmatprep.subr.bf16.mxu0 0
  %362 = vmatpush1.bf16.msra.mxu0 %v265
  %363 = vmatprep.subr.bf16.mxu0 0
  %364 = vmatpush1.bf16.msra.mxu0 %v266
  %365 = vmatprep.subr.bf16.mxu0 0
  %366 = vmatpush1.bf16.msra.mxu0 %v267
  %367 = vmatprep.subr.bf16.mxu0 0
  %368 = vmatpush1.bf16.msra.mxu0 %v268
  %369 = vmatprep.subr.bf16.mxu0 0
  %370 = vmatpush1.bf16.msra.mxu0 %v269
  %371 = vmatprep.subr.bf16.mxu0 0
  %372 = vmatpush1.bf16.msra.mxu0 %v270
  %373 = vmatprep.subr.bf16.mxu0 0
  %374 = vmatpush1.bf16.msra.mxu0 %v271
  %375 = vmatprep.subr.bf16.mxu0 0
  %376 = vmatpush1.bf16.msra.mxu0 %v272
  %377 = vmatprep.subr.bf16.mxu0 0
  %378 = vmatpush1.bf16.msra.mxu0 %v273
  %379 = vmatprep.mubr.bf16.mxu0 %v109
  %380 = vmatmul.mubr.bf16.gmra.mrb[0].mxu0 %v108
  %v381 = vpop.f32.mrb[0].mxu0
  %v382 = vadd.f32 %v341, %v381
  %v383 = vpop.f32.mrb[0].mxu0
  %v384 = vpop.f32.mrb[0].mxu0
  %v385 = vadd.f32 %v344, %v384
  %v386 = vpop.f32.mrb[0].mxu0
  %387 = vdwg.mxu0
  %v388 = vadd.f32 %v24, %v382
  %v389 = vadd.f32 %v25, %v385
  %390 = vst [vmem:[#allocation2] sm:$0xff] %v388
  %391 = vst [vmem:[#allocation2 + $0x8] sm:$0xff] %v389
  // Predicated region
  $region22: #{_lambda_.51} parent=0 // pred_check
    %p392 = pneg %p18
  $region23: #{_lambda_.51} parent=0 // pred_check_branch
    %394 = sbr.rel (%p392) target = $region25
  $region24: #{_lambda_.51} parent=0 // pred_region
    %v395 = vld [vmem:[#allocation2] sm:$0xff]
    %v396 = vld [vmem:[#allocation2 + $0x8] sm:$0xff]
    %v397 = vld [vmem:[%s2] sm:$0x1]
    %v399 = vlaneseq
    %v400 = vshrl.u32 %v399, 7
    %v401 = vsub.s32 0, %v400
    %v402 = vrot.slane %v397, %v401
    %v404 = vadd.f32 %v395, %v402
    %v405 = vadd.f32 %v396, %v402
    %v406 = vld [vmem:[%s3] sm:$0xf]
    %v407 = vld [vmem:[%s3 + $0x4] sm:$0xf]
    %v408 = vunpack.c.l.bf16 %v406
    %v409 = vunpack.c.l.bf16 %v407
    %v410 = vadd.f32 %v404, %v408
    %v411 = vadd.f32 %v405, %v409
    %v412 = vpack.c.bf16 %v411, %v410
    %v414 = vunpack.c.l.b16 %v412
    %v415 = vunpack.c.h.b16 %v412
    %v416 = vpack.c.b16 %v414, %v414
    %v417 = vpack.c.b16 %v415, %v415
    %420 = vst [vmem:[%s4] sm:$0xf] %v416
    %421 = vst [vmem:[%s4 + $0x4] sm:$0xf] %v417
  $region25: #{_lambda_.51} parent=0 // pred_fallthru
    _
  // Predicated region
  $region26: #{_lambda_.51} parent=0 // pred_check
    _
  $region27: #{_lambda_.51} parent=0 // pred_check_branch
    %423 = sbr.rel (0) target = $region29
  $region28: #{_lambda_.51} parent=0 // pred_region
    _
  $region29: #{_lambda_.51} parent=0 // pred_fallthru
    _
  // Predicated region
  $region30: #{_lambda_.51} parent=0 // pred_check
    _
  $region31: #{_lambda_.51} parent=0 // pred_check_branch
    %425 = sbr.rel (0) target = $region33
  $region32: #{_lambda_.51} parent=0 // pred_region
    _
  $region33: #{_lambda_.51} parent=0 // pred_fallthru
    _

// kernel: _lambda_.61
$region0: #{_lambda_.61}
  #allocation0 [shape = 'u32[]', space=smem, size = 0x4, offset = 0x4, fixed_abs, tag = 'smem constant byte address 0x4 - core index']
  #allocation1 [shape = 'u32[144,128]{1,0:T(1,128)}', space=vmem, size = 0x12000, scoped, tag = 'internal scratch']
  #allocation2 [shape = 'bf16[16,128]{1,0:T(16,128)(2,1)}', space=vmem, size = 0x1000, scoped, tag = 'scratch operand']
  %s0 = inlined_call_operand.vmem [shape: bf16[16,128], index: 0, kind: input, shape index: {}]
  %s1 = inlined_call_operand.vmem [shape: f32[1,128], index: 1, kind: input, shape index: {}]
  %s2 = inlined_call_operand.vmem [shape: f32[1,128], index: 2, kind: input, shape index: {}]
  %s3 = inlined_call_operand.vmem [shape: bf16[128,512], index: 3, kind: input, shape index: {}]
  %s4 = inlined_call_operand.vmem [shape: f32[1,512], index: 4, kind: input, shape index: {}]
  %s5 = inlined_call_operand.hbm [shape: f32[16,512], index: 5, kind: output, shape index: {}]
  %s6 = sld [smem:[#allocation0]]
  $region34: #{_lambda_.61} parent=0
    _
  %s8 = ssub.s32 1, %s6
  %s9 = scalar_select 0, %s8, %s6
  $region1: #{_lambda_.61} parent=0
    #allocation3 [shape = 'u8[32768]{0}', space=vmem, size = 0x8000, scoped, tag = 'output window, operand 0, single buffered']
    #allocation4 [shape = 's32[1]{0}', space=sflag, size = 0x4, scoped, tag = 'scoped memory for _lambda_.61']
    %10 = vsyncpa [#allocation4], 0
    // Predicated region
    $region2: #{_lambda_.61} parent=1 // pred_check
      _
    $region3: #{_lambda_.61} parent=1 // pred_check_branch
      %12 = sbr.rel (0) target = $region5
    $region4: #{_lambda_.61} parent=1 // pred_region
      _
    $region5: #{_lambda_.61} parent=1 // pred_fallthru
      _
    // Predicated region
    $region6: #{_lambda_.61} parent=1 // pred_check
      _
    $region7: #{_lambda_.61} parent=1 // pred_check_branch
      %14 = sbr.rel (0) target = $region9
    $region8: #{_lambda_.61} parent=1 // pred_region
      _
    $region9: #{_lambda_.61} parent=1 // pred_fallthru
      _
    // Predicated region
    $region10: #{_lambda_.61} parent=1 // pred_check
      _
    $region11: #{_lambda_.61} parent=1 // pred_check_branch
      %16 = sbr.rel (0) target = $region13
    $region12: #{_lambda_.61} parent=1 // pred_region
      _
    $region13: #{_lambda_.61} parent=1 // pred_fallthru
      _
    // Predicated region
    $region14: #{_lambda_.61} parent=1 // pred_check
      _
    $region15: #{_lambda_.61} parent=1 // pred_check_branch
      %18 = sbr.rel (0) target = $region17
    $region16: #{_lambda_.61} parent=1 // pred_region
      _
    $region17: #{_lambda_.61} parent=1 // pred_fallthru
      _
    // Predicated region
    $region18: #{_lambda_.61} parent=1 // pred_check
      _
    $region19: #{_lambda_.61} parent=1 // pred_check_branch
      %20 = sbr.rel (0) target = $region21
    $region20: #{_lambda_.61} parent=1 // pred_region
      _
    $region21: #{_lambda_.61} parent=1 // pred_fallthru
      _
    %p22 = scmp.eq.s32.totalorder 0, 0
    // Predicated region
    $region22: #{_lambda_.61} parent=1 // pred_check
      %p23 = pneg %p22
    $region23: #{_lambda_.61} parent=1 // pred_check_branch
      %25 = sbr.rel (%p23) target = $region25
    $region24: #{_lambda_.61} parent=1 // pred_region
      %v26 = vld [vmem:[%s0] sm:$0xf]
      %v27 = vld [vmem:[%s0 + $0x4] sm:$0xf]
      %v28 = vunpack.c.l.bf16 %v26
      %v29 = vunpack.c.l.bf16 %v27
      %30 = vadd.xlane.f32.xlu0 %v28
      %v31 = vpop.xlane.xlu0 %30
      %32 = vadd.xlane.f32.xlu0 %v29
      %v33 = vpop.xlane.xlu0 %32
      %v34 = vrcp.pop 128.0
      %v35 = vmul.f32 %v31, %v34
      %v36 = vmul.f32 %v33, %v34
      %v37 = vsub.f32 %v28, %v35
      %v38 = vsub.f32 %v29, %v36
      %v39 = vmul.f32 %v37, %v37
      %v40 = vmul.f32 %v38, %v38
      %41 = vadd.xlane.f32.xlu0 %v39
      %v42 = vpop.xlane.xlu0 %41
      %43 = vadd.xlane.f32.xlu0 %v40
      %v44 = vpop.xlane.xlu0 %43
      %v45 = vmul.f32 %v42, %v34
      %v46 = vmul.f32 %v44, %v34
      %v47 = vadd.f32 %v45, 1e-05
      %v48 = vadd.f32 %v46, 1e-05
      %v49 = vrsqrt.pop %v47
      %v50 = vrsqrt.pop %v48
      %v51 = vmul.f32 %v37, %v49
      %v52 = vmul.f32 %v38, %v50
      %v53 = vld [vmem:[%s1] sm:$0x1]
      %v55 = vlaneseq
      %v56 = vshrl.u32 %v55, 7
      %v57 = vsub.s32 0, %v56
      %v58 = vrot.slane %v53, %v57
      %v60 = vmul.f32 %v51, %v58
      %v61 = vmul.f32 %v52, %v58
      %v62 = vld [vmem:[%s2] sm:$0x1]
      %v64 = vlaneseq
      %v65 = vshrl.u32 %v64, 7
      %v66 = vsub.s32 0, %v65
      %v67 = vrot.slane %v62, %v66
      %v69 = vadd.f32 %v60, %v67
      %v70 = vadd.f32 %v61, %v67
      %v71 = vpack.c.bf16 %v70, %v69
      %72 = vst [vmem:[#allocation2] sm:$0xff] %v71
    $region25: #{_lambda_.61} parent=1 // pred_fallthru
      _
    %v73 = vld [vmem:[#allocation2] sm:$0xff]
    %v74 = vld [vmem:[%s3] sm:$0xff]
    %v75 = vld [vmem:[%s3 + $0x8] sm:$0xff]
    %v76 = vld [vmem:[%s3 + $0x10] sm:$0xff]
    %v77 = vld [vmem:[%s3 + $0x18] sm:$0xff]
    %v78 = vld [vmem:[%s3 + $0x20] sm:$0xff]
    %v79 = vld [vmem:[%s3 + $0x28] sm:$0xff]
    %v80 = vld [vmem:[%s3 + $0x30] sm:$0xff]
    %v81 = vld [vmem:[%s3 + $0x38] sm:$0xff]
    %v82 = vld [vmem:[%s3 + $0x40] sm:$0xff]
    %v83 = vld [vmem:[%s3 + $0x48] sm:$0xff]
    %v84 = vld [vmem:[%s3 + $0x50] sm:$0xff]
    %v85 = vld [vmem:[%s3 + $0x58] sm:$0xff]
    %v86 = vld [vmem:[%s3 + $0x60] sm:$0xff]
    %v87 = vld [vmem:[%s3 + $0x68] sm:$0xff]
    %v88 = vld [vmem:[%s3 + $0x70] sm:$0xff]
    %v89 = vld [vmem:[%s3 + $0x78] sm:$0xff]
    %v90 = vld [vmem:[%s3 + $0x80] sm:$0xff]
    %v91 = vld [vmem:[%s3 + $0x88] sm:$0xff]
    %v92 = vld [vmem:[%s3 + $0x90] sm:$0xff]
    %v93 = vld [vmem:[%s3 + $0x98] sm:$0xff]
    %v94 = vld [vmem:[%s3 + $0xa0] sm:$0xff]
    %v95 = vld [vmem:[%s3 + $0xa8] sm:$0xff]
    %v96 = vld [vmem:[%s3 + $0xb0] sm:$0xff]
    %v97 = vld [vmem:[%s3 + $0xb8] sm:$0xff]
    %v98 = vld [vmem:[%s3 + $0xc0] sm:$0xff]
    %v99 = vld [vmem:[%s3 + $0xc8] sm:$0xff]
    %v100 = vld [vmem:[%s3 + $0xd0] sm:$0xff]
    %v101 = vld [vmem:[%s3 + $0xd8] sm:$0xff]
    %v102 = vld [vmem:[%s3 + $0xe0] sm:$0xff]
    %v103 = vld [vmem:[%s3 + $0xe8] sm:$0xff]
    %v104 = vld [vmem:[%s3 + $0xf0] sm:$0xff]
    %v105 = vld [vmem:[%s3 + $0xf8] sm:$0xff]
    %v106 = vld [vmem:[%s4] sm:$0xf]
    %v108 = vlaneseq
    %v109 = vshrl.u32 %v108, 7
    %v110 = vsub.s32 0, %v109
    %v111 = vrot.slane %v106, %v110
    %v112 = vlaneseq
    %v113 = vshrl.u32 %v112, 7
    %v114 = vsub.s32 1, %v113
    %v115 = vrot.slane %v106, %v114
    %v116 = vlaneseq
    %v117 = vshrl.u32 %v116, 7
    %v118 = vsub.s32 2, %v117
    %v119 = vrot.slane %v106, %v118
    %v120 = vlaneseq
    %v121 = vshrl.u32 %v120, 7
    %v122 = vsub.s32 3, %v121
    %v123 = vrot.slane %v106, %v122
    %v160 = vunpack.c.l.b16 %v74
    %v161 = vunpack.c.h.b16 %v74
    %v162 = vunpack.c.l.b16 %v75
    %v163 = vunpack.c.h.b16 %v75
    %v164 = vunpack.c.l.b16 %v76
    %v165 = vunpack.c.h.b16 %v76
    %v166 = vunpack.c.l.b16 %v77
    %v167 = vunpack.c.h.b16 %v77
    %v168 = vunpack.c.l.b16 %v78
    %v169 = vunpack.c.h.b16 %v78
    %v170 = vunpack.c.l.b16 %v79
    %v171 = vunpack.c.h.b16 %v79
    %v172 = vunpack.c.l.b16 %v80
    %v173 = vunpack.c.h.b16 %v80
    %v174 = vunpack.c.l.b16 %v81
    %v175 = vunpack.c.h.b16 %v81
    %v176 = vunpack.c.l.b16 %v82
    %v177 = vunpack.c.h.b16 %v82
    %v178 = vunpack.c.l.b16 %v83
    %v179 = vunpack.c.h.b16 %v83
    %v180 = vunpack.c.l.b16 %v84
    %v181 = vunpack.c.h.b16 %v84
    %v182 = vunpack.c.l.b16 %v85
    %v183 = vunpack.c.h.b16 %v85
    %v184 = vunpack.c.l.b16 %v86
    %v185 = vunpack.c.h.b16 %v86
    %v186 = vunpack.c.l.b16 %v87
    %v187 = vunpack.c.h.b16 %v87
    %v188 = vunpack.c.l.b16 %v88
    %v189 = vunpack.c.h.b16 %v88
    %v190 = vunpack.c.l.b16 %v89
    %v191 = vunpack.c.h.b16 %v89
    %v192 = vunpack.c.l.b16 %v90
    %v193 = vunpack.c.h.b16 %v90
    %v194 = vunpack.c.l.b16 %v91
    %v195 = vunpack.c.h.b16 %v91
    %v196 = vunpack.c.l.b16 %v92
    %v197 = vunpack.c.h.b16 %v92
    %v198 = vunpack.c.l.b16 %v93
    %v199 = vunpack.c.h.b16 %v93
    %v200 = vunpack.c.l.b16 %v94
    %v201 = vunpack.c.h.b16 %v94
    %v202 = vunpack.c.l.b16 %v95
    %v203 = vunpack.c.h.b16 %v95
    %v204 = vunpack.c.l.b16 %v96
    %v205 = vunpack.c.h.b16 %v96
    %v206 = vunpack.c.l.b16 %v97
    %v207 = vunpack.c.h.b16 %v97
    %v208 = vunpack.c.l.b16 %v98
    %v209 = vunpack.c.h.b16 %v98
    %v210 = vunpack.c.l.b16 %v99
    %v211 = vunpack.c.h.b16 %v99
    %v212 = vunpack.c.l.b16 %v100
    %v213 = vunpack.c.h.b16 %v100
    %v214 = vunpack.c.l.b16 %v101
    %v215 = vunpack.c.h.b16 %v101
    %v216 = vunpack.c.l.b16 %v102
    %v217 = vunpack.c.h.b16 %v102
    %v218 = vunpack.c.l.b16 %v103
    %v219 = vunpack.c.h.b16 %v103
    %v220 = vunpack.c.l.b16 %v104
    %v221 = vunpack.c.h.b16 %v104
    %v222 = vunpack.c.l.b16 %v105
    %v223 = vunpack.c.h.b16 %v105
    %v224 = vpack.c.b16 %v164, %v160
    %v225 = vpack.c.b16 %v165, %v161
    %v226 = vpack.c.b16 %v166, %v162
    %v227 = vpack.c.b16 %v167, %v163
    %v228 = vpack.c.b16 %v172, %v168
    %v229 = vpack.c.b16 %v173, %v169
    %v230 = vpack.c.b16 %v174, %v170
    %v231 = vpack.c.b16 %v175, %v171
    %v232 = vpack.c.b16 %v180, %v176
    %v233 = vpack.c.b16 %v181, %v177
    %v234 = vpack.c.b16 %v182, %v178
    %v235 = vpack.c.b16 %v183, %v179
    %v236 = vpack.c.b16 %v188, %v184
    %v237 = vpack.c.b16 %v189, %v185
    %v238 = vpack.c.b16 %v190, %v186
    %v239 = vpack.c.b16 %v191, %v187
    %v240 = vpack.c.b16 %v196, %v192
    %v241 = vpack.c.b16 %v197, %v193
    %v242 = vpack.c.b16 %v198, %v194
    %v243 = vpack.c.b16 %v199, %v195
    %v244 = vpack.c.b16 %v204, %v200
    %v245 = vpack.c.b16 %v205, %v201
    %v246 = vpack.c.b16 %v206, %v202
    %v247 = vpack.c.b16 %v207, %v203
    %v248 = vpack.c.b16 %v212, %v208
    %v249 = vpack.c.b16 %v213, %v209
    %v250 = vpack.c.b16 %v214, %v210
    %v251 = vpack.c.b16 %v215, %v211
    %v252 = vpack.c.b16 %v220, %v216
    %v253 = vpack.c.b16 %v221, %v217
    %v254 = vpack.c.b16 %v222, %v218
    %v255 = vpack.c.b16 %v223, %v219
    %288 = vmatprep.subr.bf16.mxu0 %v225
    %289 = vmatpush1.bf16.msra.mxu0 %v224
    %290 = vmatprep.subr.bf16.mxu0 %v229
    %291 = vmatpush1.bf16.msra.mxu0 %v228
    %292 = vmatprep.subr.bf16.mxu0 %v233
    %293 = vmatpush1.bf16.msra.mxu0 %v232
    %294 = vmatprep.subr.bf16.mxu0 %v237
    %295 = vmatpush1.bf16.msra.mxu0 %v236
    %296 = vmatprep.subr.bf16.mxu0 %v241
    %297 = vmatpush1.bf16.msra.mxu0 %v240
    %298 = vmatprep.subr.bf16.mxu0 %v245
    %299 = vmatpush1.bf16.msra.mxu0 %v244
    %300 = vmatprep.subr.bf16.mxu0 %v249
    %301 = vmatpush1.bf16.msra.mxu0 %v248
    %302 = vmatprep.subr.bf16.mxu0 %v253
    %303 = vmatpush1.bf16.msra.mxu0 %v252
    %304 = vmatprep.subr.bf16.mxu0 0
    %305 = vmatpush1.bf16.msra.mxu0 0
    %306 = vmatprep.subr.bf16.mxu0 0
    %307 = vmatpush1.bf16.msra.mxu0 0
    %308 = vmatprep.subr.bf16.mxu0 0
    %309 = vmatpush1.bf16.msra.mxu0 0
    %310 = vmatprep.subr.bf16.mxu0 0
    %311 = vmatpush1.bf16.msra.mxu0 0
    %312 = vmatprep.subr.bf16.mxu0 0
    %313 = vmatpush1.bf16.msra.mxu0 0
    %314 = vmatprep.subr.bf16.mxu0 0
    %315 = vmatpush1.bf16.msra.mxu0 0
    %316 = vmatprep.subr.bf16.mxu0 0
    %317 = vmatpush1.bf16.msra.mxu0 0
    %318 = vmatprep.subr.bf16.mxu0 0
    %319 = vmatpush1.bf16.msra.mxu0 0
    %320 = vmatprep.mubr.bf16.mxu0 0
    %321 = vmatmul.mubr.bf16.gmra.mrb[0].mxu0 %v73
    %v322 = vpop.f32.mrb[0].mxu0
    %v323 = vadd.f32 %v111, %v322
    %v324 = vpop.f32.mrb[0].mxu0
    %v325 = vadd.f32 %v115, %v324
    %v326 = vpop.f32.mrb[0].mxu0
    %v327 = vadd.f32 %v111, %v326
    %v328 = vpop.f32.mrb[0].mxu0
    %v329 = vadd.f32 %v115, %v328
    %330 = vdwg.mxu0
    %331 = vmatprep.subr.bf16.mxu0 %v227
    %332 = vmatpush1.bf16.msra.mxu0 %v226
    %333 = vmatprep.subr.bf16.mxu0 %v231
    %334 = vmatpush1.bf16.msra.mxu0 %v230
    %335 = vmatprep.subr.bf16.mxu0 %v235
    %336 = vmatpush1.bf16.msra.mxu0 %v234
    %337 = vmatprep.subr.bf16.mxu0 %v239
    %338 = vmatpush1.bf16.msra.mxu0 %v238
    %339 = vmatprep.subr.bf16.mxu0 %v243
    %340 = vmatpush1.bf16.msra.mxu0 %v242
    %341 = vmatprep.subr.bf16.mxu0 %v247
    %342 = vmatpush1.bf16.msra.mxu0 %v246
    %343 = vmatprep.subr.bf16.mxu0 %v251
    %344 = vmatpush1.bf16.msra.mxu0 %v250
    %345 = vmatprep.subr.bf16.mxu0 %v255
    %346 = vmatpush1.bf16.msra.mxu0 %v254
    %347 = vmatprep.subr.bf16.mxu0 0
    %348 = vmatpush1.bf16.msra.mxu0 0
    %349 = vmatprep.subr.bf16.mxu0 0
    %350 = vmatpush1.bf16.msra.mxu0 0
    %351 = vmatprep.subr.bf16.mxu0 0
    %352 = vmatpush1.bf16.msra.mxu0 0
    %353 = vmatprep.subr.bf16.mxu0 0
    %354 = vmatpush1.bf16.msra.mxu0 0
    %355 = vmatprep.subr.bf16.mxu0 0
    %356 = vmatpush1.bf16.msra.mxu0 0
    %357 = vmatprep.subr.bf16.mxu0 0
    %358 = vmatpush1.bf16.msra.mxu0 0
    %359 = vmatprep.subr.bf16.mxu0 0
    %360 = vmatpush1.bf16.msra.mxu0 0
    %361 = vmatprep.subr.bf16.mxu0 0
    %362 = vmatpush1.bf16.msra.mxu0 0
    %363 = vmatprep.mubr.bf16.mxu0 0
    %364 = vmatmul.mubr.bf16.gmra.mrb[0].mxu0 %v73
    %v365 = vpop.f32.mrb[0].mxu0
    %v366 = vadd.f32 %v119, %v365
    %v367 = vpop.f32.mrb[0].mxu0
    %v368 = vadd.f32 %v123, %v367
    %v369 = vpop.f32.mrb[0].mxu0
    %v370 = vadd.f32 %v119, %v369
    %v371 = vpop.f32.mrb[0].mxu0
    %v372 = vadd.f32 %v123, %v371
    %373 = vdwg.mxu0
    %374 = vst [vmem:[#allocation3] sm:$0xff] %v323
    %375 = vst [vmem:[#allocation3 + $0x8] sm:$0xff] %v325
    %376 = vst [vmem:[#allocation3 + $0x10] sm:$0xff] %v366
    %377 = vst [vmem:[#allocation3 + $0x18] sm:$0xff] %v368
    %378 = vst [vmem:[#allocation3 + $0x20] sm:$0xff] %v327
    %379 = vst [vmem:[#allocation3 + $0x28] sm:$0xff] %v329
    %380 = vst [vmem:[#allocation3 + $0x30] sm:$0xff] %v370
    %381 = vst [vmem:[#allocation3 + $0x38] sm:$0xff] %v372
    // Predicated region
    $region26: #{_lambda_.61} parent=1 // pred_check
      _
    $region27: #{_lambda_.61} parent=1 // pred_check_branch
      %383 = sbr.rel (0) target = $region29
    $region28: #{_lambda_.61} parent=1 // pred_region
      %s385 = ssub.s32 1024, 1024
      %386 = vsyncadd [#allocation4], %s385
      %s387 = sshll.u32 [#allocation3], 4
      %s388 = int_to_ptr.vmem [resolvable:$true] %s387
      %393 = dma.vmem_to_hbm [thread:$0]  %s388, 1024, %s5, [#allocation4], 512, 512, 32
    $region29: #{_lambda_.61} parent=1 // pred_fallthru
      _
    // Predicated region
    $region30: #{_lambda_.61} parent=1 // pred_check
      _
    $region31: #{_lambda_.61} parent=1 // pred_check_branch
      %395 = sbr.rel (0) target = $region33
    $region32: #{_lambda_.61} parent=1 // pred_region
      %396 = dma.done [#allocation4], 1024
    $region33: #{_lambda_.61} parent=1 // pred_fallthru
      _
    %397 = vsyncpa [#allocation4], 1

</llo_original>
